<compile_context>
chip_gen: v6e
topology: v6e:2x2x1
jax: 0.10.0
libtpu: 0.0.40
codegen_flags: <defaults>
</compile_context>

<pallas_src>
import functools
from math import log2

import jax
import jax.numpy as jnp
from jax.experimental import pallas as pl
from jax.experimental.pallas import tpu as pltpu

LANE = 128              # TPU lane width; every matmul N dim is padded to this
_TILE_ROWS = 512        # default M-tile (rows) for the matmul-style kernels


def _round_up(x, m):
    return ((x + m - 1) // m) * m


_VMEM_LIMIT_CACHE = [None]


def _vmem_limit_bytes():
    """Generation-aware scoped-VMEM limit (feedback: derive from get_tpu_info)."""
    if _VMEM_LIMIT_CACHE[0] is None:
        cap = 64 * 1024 * 1024
        try:
            cap = int(getattr(pltpu.get_tpu_info(), "vmem_capacity_bytes", cap)
                      or cap)
        except Exception:
            pass
        _VMEM_LIMIT_CACHE[0] = int(min(cap * 3 // 4, 100 * 1024 * 1024))
    return _VMEM_LIMIT_CACHE[0]


def _compiler_params():
    return pltpu.CompilerParams(
        dimension_semantics=("parallel",),
        vmem_limit_bytes=_vmem_limit_bytes())


def _upsample2x(x):
    """Nearest-neighbour 2x spatial upsample of an NHWC map (one XLA fusion)."""
    B, H, W, C = x.shape
    x = jnp.broadcast_to(x[:, :, None, :, None, :], (B, H, 2, W, 2, C))
    return x.reshape(B, 2 * H, 2 * W, C)


# ----------------------------- Pallas kernels ------------------------------

def _conv3x3_kernel(x_ref, xh_ref, w_ref, b_ref, o_ref, *, tap_offsets, relu):
    """Fused 3x3 'SAME' conv tile: 9 shifted-window MXU matmuls + bias + ReLU.

    x_ref  : (tm, Cin)     current row tile of the halo-flattened map
    xh_ref : (hblk, Cin)   halo rows (start of the next row tile)
    w_ref  : (9, Cin, Npad) per-tap weights, Cout zero-padded to the lane width
    b_ref  : (1, Npad)     f32 bias
    o_ref  : (tm, Npad)
    """
    tm = o_ref.shape[0]
    xw = jnp.concatenate([x_ref[...], xh_ref[...]], axis=0)   # (tm + hblk, Cin)
    acc = jnp.zeros(o_ref.shape, jnp.float32)
    for tap, off in enumerate(tap_offsets):        # static unroll: 9 MXU pushes
        acc = acc + jnp.dot(xw[off:off + tm, :], w_ref[tap],
                            preferred_element_type=jnp.float32)
    acc = acc + b_ref[...]                         # bias / ReLU once, in f32
    if relu:
        acc = jnp.maximum(acc, 0.0)
    o_ref[...] = acc.astype(o_ref.dtype)


def conv3x3(x, w9, b, *, relu, compute_dtype, upsample=False,
            tile_rows=_TILE_ROWS):
    """[optional 2x nearest upsample] -> 3x3 SAME conv -> bias -> optional ReLU.

    x  : (B, H, W, Cin) NHWC (any float dtype; cast to compute_dtype here)
    w9 : (9, Cin, Npad) weights (Npad = Cout rounded up to 128, zero padded)
    b  : (1, Npad) float32
    Returns (flat, meta): flat is the (n_rows_out, Npad) halo-flattened result
    in compute_dtype; use `_flat_to_nhwc(flat, meta)` for the NHWC view.
    """
    cd = compute_dtype
    if upsample:
        x = _upsample2x(x)
    B, H, W, C = x.shape
    assert w9.shape[1] == C, (w9.shape, C)
    Hp = H + 2
    Wrow = _round_up(W + 2, 8)            # 8-aligned row pitch -> aligned ky taps
    n_pad = w9.shape[-1]

    rows = B * Hp * Wrow                  # flattened rows of the padded map
    hblk = _round_up(2 * Wrow + 2, 16)    # halo block height (covers max tap)
    tm = min(tile_rows, _round_up(rows, hblk))
    tm = max(hblk, (tm // hblk) * hblk)   # tm must be a multiple of hblk
    while tm > hblk and (rows + tm - 1) // tm < 4:   # keep >= 4 tiles (megacore)
        tm -= hblk
    n_rows_out = _round_up(rows, tm)
    grid = n_rows_out // tm
    n_rows_in = n_rows_out + hblk         # halo block of the last tile
    hb_per_tile = tm // hblk

    # One XLA producer fusion: (upsample) + halo pad + cast + flatten + tail pad.
    x_pad = jnp.pad(x, ((0, 0), (1, 1), (1, Wrow - W - 1), (0, 0))).astype(cd)
    x_flat = jnp.pad(x_pad.reshape(rows, C), ((0, n_rows_in - rows), (0, 0)))

    # Output row r holds the conv result for pixel (b, y, x) at flat index
    # r = b*Hp*Wrow + y*Wrow + x; it reads padded positions r + ky*Wrow + kx.
    tap_offsets = tuple(ky * Wrow + kx for ky in range(3) for kx in range(3))

    flat = pl.pallas_call(
        functools.partial(_conv3x3_kernel, tap_offsets=tap_offsets, relu=relu),
        out_shape=jax.ShapeDtypeStruct((n_rows_out, n_pad), cd),
        grid=(grid,),
        in_specs=[
            pl.BlockSpec((tm, C), lambda i: (i, 0)),                        # tile
            pl.BlockSpec((hblk, C), lambda i: ((i + 1) * hb_per_tile, 0)),  # halo
            pl.BlockSpec(w9.shape, lambda i: (0, 0, 0)),                    # weights
            pl.BlockSpec((1, n_pad), lambda i: (0, 0)),                     # bias
        ],
        out_specs=pl.BlockSpec((tm, n_pad), lambda i: (i, 0)),
        compiler_params=_compiler_params(),
    )(x_flat, x_flat, w9, b)
    meta = (B, H, W, Hp, Wrow, rows)
    return flat, meta


def _flat_to_nhwc(flat, meta):
    """Lazy NHWC view of a halo-flattened conv result (fuses into consumers)."""
    B, H, W, Hp, Wrow, rows = meta
    return flat[:rows].reshape(B, Hp, Wrow, flat.shape[-1])[:, :H, :W, :]


def _matmul_bias_kernel(x_ref, w_ref, b_ref, o_ref, *, relu):
    acc = jnp.dot(x_ref[...], w_ref[...], preferred_element_type=jnp.float32)
    acc = acc + b_ref[...]
    if relu:
        acc = jnp.maximum(acc, 0.0)
    o_ref[...] = acc.astype(o_ref.dtype)


def matmul_bias(x, w, b, *, relu=False, out_dtype=None, tile_rows=_TILE_ROWS):
    """y = relu?(x @ w + b): M-tiled, lane-dense N, f32 accumulation."""
    M, K = x.shape
    K2, N = w.shape
    assert K == K2 and N % LANE == 0
    out_dtype = x.dtype if out_dtype is None else out_dtype
    tm = min(tile_rows, max(16, _round_up((M + 3) // 4, 16)))   # >= 4 tiles if possible
    Mp = _round_up(M, tm)
    if Mp != M:
        x = jnp.pad(x, ((0, Mp - M), (0, 0)))
    out = pl.pallas_call(
        functools.partial(_matmul_bias_kernel, relu=relu),
        out_shape=jax.ShapeDtypeStruct((Mp, N), out_dtype),
        grid=(Mp // tm,),
        in_specs=[
            pl.BlockSpec((tm, K), lambda i: (i, 0)),
            pl.BlockSpec((K, N), lambda i: (0, 0)),
            pl.BlockSpec((1, N), lambda i: (0, 0)),
        ],
        out_specs=pl.BlockSpec((tm, N), lambda i: (i, 0)),
        compiler_params=_compiler_params(),
    )(x, w, b)
    return out[:M]


# --------------------------- plain-JAX reference ----------------------------

def _conv3x3_ref(x, w, b, *, relu, cd):
    y = jax.lax.conv_general_dilated(
        x.astype(cd), w.astype(cd), window_strides=(1, 1), padding='SAME',
        dimension_numbers=('NHWC', 'HWIO', 'NHWC'),
        preferred_element_type=jnp.float32)
    y = y + b
    if relu:
        y = jnp.maximum(y, 0.0)
    return y


# -------------------------------- Generator ---------------------------------

class PallasGenerator:
    """Pallas/TPU forward-pass re-implementation of the ProGAN Generator.

    # TODO(synk): GFB / GMB / PGtoRGB sources were not provided; they are
    # implemented as the canonical ProGAN blocks they stand for (latent ->
    # dense 4x4 + 3x3 conv, nearest-upsample + two 3x3 convs, 1x1 to-RGB).
    # TODO(synk): torch.load/save checkpoint I/O and the os.getcwd()/'ProGan'
    # directory assertion have no in-script equivalent; weights are synthetic
    # and deterministic (save_checkpoint / load_final_block are ignored).
    """

    def __init__(self, spatial_resolution, configuration, transition=True,
                 transition_coef=0.5, save_checkpoint=True,
                 load_final_block=True, key=None):
        del save_checkpoint, load_final_block
        if key is None:
            key = jax.random.PRNGKey(0)
        self.spatial_resolution = spatial_resolution
        self.channels = configuration['channels']
        self.latent_size = int(configuration['latent_size'])
        self.min_res = 4
        self.transition_coef = float(transition_coef)
        self.levels = int(log2(spatial_resolution) - log2(self.min_res))
        self.transition = transition if spatial_resolution != self.min_res else False
        self.transition_level = (-1 if (self.levels == 0 or not self.transition)
                                 else self.levels)

        def init(k, shape, fan_in):
            return (jax.random.normal(k, shape, jnp.float32)
                    / jnp.sqrt(jnp.float32(fan_in)))

        keys = iter(jax.random.split(key, 64))
        c0 = self.channels[0]
        raw = {}
        raw['gfb_dense_w'] = init(next(keys), (self.latent_size, 16 * c0),
                                  self.latent_size)
        raw['gfb_dense_b'] = 0.1 * jax.random.normal(next(keys), (16 * c0,),
                                                     jnp.float32)
        raw['gfb_conv_w'] = init(next(keys), (3, 3, c0, c0), 9 * c0)
        raw['gfb_conv_b'] = 0.1 * jax.random.normal(next(keys), (c0,), jnp.float32)
        raw['gmb'] = []
        for level in range(1, self.levels + 1):
            cin, cout = self.channels[level - 1], self.channels[level]
            raw['gmb'].append((
                init(next(keys), (3, 3, cin, cout), 9 * cin),
                0.1 * jax.random.normal(next(keys), (cout,), jnp.float32),
                init(next(keys), (3, 3, cout, cout), 9 * cout),
                0.1 * jax.random.normal(next(keys), (cout,), jnp.float32)))
        ct = self.channels[self.levels]
        raw['torgb_w'] = init(next(keys), (ct, 3), ct)
        raw['torgb_b'] = 0.1 * jax.random.normal(next(keys), (3,), jnp.float32)
        if self.transition_level != -1:
            cskip = self.channels[self.levels - 1]   # channels of the skip branch
            raw['trans_torgb_w'] = init(next(keys), (cskip, 3), cskip)
            raw['trans_torgb_b'] = 0.1 * jax.random.normal(next(keys), (3,),
                                                           jnp.float32)
        self.raw = raw

        # Lane-padded parameter copies used by the Pallas kernels.  Cin is also
        # zero-padded to the 128-padded channel count produced by the previous
        # layer, so activations keep their lane-dense padded channels between
        # layers (no per-layer channel slicing / re-padding HBM passes).
        def pad_mat(w, cin_pad=None):     # (K, N) -> (cin_pad, round_up(N,128))
            k, n = w.shape
            kp = k if cin_pad is None else cin_pad
            return jnp.pad(w, ((0, kp - k), (0, _round_up(n, LANE) - n)))

        def pad_bias(bv):                 # (N,) -> (1, round_up(N,128)) float32
            n = bv.shape[0]
            return jnp.pad(bv, (0, _round_up(n, LANE) - n)).reshape(1, -1)

        def pack_conv(w, cin_pad=None):   # (3,3,Cin,Cout)->(9,cin_pad,roundN)
            kh, kw, cin, cout = w.shape
            cp = cin if cin_pad is None else cin_pad
            w9 = w.reshape(kh * kw, cin, cout)
            return jnp.pad(w9, ((0, 0), (0, cp - cin),
                                (0, _round_up(cout, LANE) - cout)))

        self.gfb_dense_w_p = pad_mat(raw['gfb_dense_w'])
        self.gfb_dense_b_p = pad_bias(raw['gfb_dense_b'])
        self.gfb_conv_w_p = pack_conv(raw['gfb_conv_w'])            # Cin = c0 exact
        self.gfb_conv_b_p = pad_bias(raw['gfb_conv_b'])
        self.gmb_p = []
        for level in range(1, self.levels + 1):
            w1, b1, w2, b2 = raw['gmb'][level - 1]
            cin1 = _round_up(self.channels[level - 1], LANE)
            cin2 = _round_up(self.channels[level], LANE)
            self.gmb_p.append((pack_conv(w1, cin1), pad_bias(b1),
                               pack_conv(w2, cin2), pad_bias(b2)))
        self.torgb_w_p = pad_mat(raw['torgb_w'],
                                 _round_up(self.channels[self.levels], LANE))
        self.torgb_b_p = pad_bias(raw['torgb_b'])
        if self.transition_level != -1:
            self.trans_torgb_w_p = pad_mat(
                raw['trans_torgb_w'],
                _round_up(self.channels[self.levels - 1], LANE))
            self.trans_torgb_b_p = pad_bias(raw['trans_torgb_b'])

    # --------------------------- Pallas forward ----------------------------

    def forward(self, z, compute_dtype=jnp.float32, transition_coef=None):
        """Activations are carried in `compute_dtype` (bf16 on v6e/v7x);
        accumulation, bias, ReLU and the blend are always f32.  The blend
        coefficient is a traced operand (runtime-variable, no retrace)."""
        cd = compute_dtype
        coef = self.transition_coef if transition_coef is None else transition_coef
        B = z.shape[0]
        c0 = self.channels[0]

        # GFB: latent -> dense 4x4 feature map -> 3x3 conv
        h = matmul_bias(z.astype(cd), self.gfb_dense_w_p.astype(cd),
                        self.gfb_dense_b_p, relu=True, out_dtype=cd)[:, :16 * c0]
        x = h.reshape(B, 4, 4, c0)
        flat, meta = conv3x3(x, self.gfb_conv_w_p.astype(cd), self.gfb_conv_b_p,
                             relu=True, compute_dtype=cd)

        # GMB chain: 2x upsample (fused into the conv producer) + two 3x3 convs
        skip_flat, skip_meta = None, None
        for level in range(1, self.levels + 1):
            w1, b1, w2, b2 = self.gmb_p[level - 1]
            if level == self.transition_level:
                skip_flat, skip_meta = flat, meta     # small map feeding the skip
            x_nhwc = _flat_to_nhwc(flat, meta)
            flat, meta = conv3x3(x_nhwc, w1.astype(cd), b1, relu=True,
                                 compute_dtype=cd, upsample=True)
            x_nhwc = _flat_to_nhwc(flat, meta)
            flat, meta = conv3x3(x_nhwc, w2.astype(cd), b2, relu=True,
                                 compute_dtype=cd)

        # to-RGB head directly on the halo-flattened layout (garbage rows are
        # sliced off afterwards); lane-dense 128-wide stores, f32 output.
        # TODO(synk): packing several RGB pixels per 128-lane output row would
        # cut the head's store bandwidth further at high resolutions.
        rgb_hi_full = matmul_bias(flat, self.torgb_w_p.astype(cd),
                                  self.torgb_b_p, relu=False,
                                  out_dtype=jnp.float32)
        rgb_hi = _flat_to_nhwc(rgb_hi_full, meta)[..., :3]

        if self.transition_level != -1:
            # torgb(upsample(x)) == upsample(torgb(x)) for a 1x1 conv + nearest
            # upsample: evaluate the skip to-RGB on the SMALL map.
            rgb_lo_full = matmul_bias(skip_flat, self.trans_torgb_w_p.astype(cd),
                                      self.trans_torgb_b_p, relu=False,
                                      out_dtype=jnp.float32)
            rgb_lo = _flat_to_nhwc(rgb_lo_full, skip_meta)[..., :3]
            rgb_lo = _upsample2x(rgb_lo)
            c = jnp.asarray(coef, jnp.float32)
            rgb = c * rgb_hi + (1.0 - c) * rgb_lo
        else:
            rgb = rgb_hi
        # back to NCHW to match the PyTorch module's output convention
        return jnp.transpose(rgb, (0, 3, 1, 2))

    # -------------------------- plain-JAX reference -------------------------

    def forward_ref(self, z, compute_dtype=jnp.float32, transition_coef=None):
        cd = compute_dtype
        coef = self.transition_coef if transition_coef is None else transition_coef
        p = self.raw
        B = z.shape[0]
        c0 = self.channels[0]
        h = jnp.dot(z.astype(cd), p['gfb_dense_w'].astype(cd),
                    preferred_element_type=jnp.float32) + p['gfb_dense_b']
        h = jnp.maximum(h, 0.0).astype(cd)           # mirror bf16 activation carry
        x = h.reshape(B, 4, 4, c0)
        x = _conv3x3_ref(x, p['gfb_conv_w'], p['gfb_conv_b'],
                         relu=True, cd=cd).astype(cd)
        x1 = None
        for level in range(1, self.levels + 1):
            w1, b1, w2, b2 = p['gmb'][level - 1]
            xu = jnp.repeat(jnp.repeat(x, 2, axis=1), 2, axis=2)
            if level == self.transition_level:
                x1 = xu
            y = _conv3x3_ref(xu, w1, b1, relu=True, cd=cd).astype(cd)
            x = _conv3x3_ref(y, w2, b2, relu=True, cd=cd).astype(cd)

        def to_rgb(xin, w, b):
            y = jnp.dot(xin.reshape(-1, xin.shape[-1]).astype(cd), w.astype(cd),
                        preferred_element_type=jnp.float32) + b
            return y.reshape(xin.shape[:-1] + (3,))

        if self.transition and self.spatial_resolution != self.min_res:
            c = jnp.asarray(coef, jnp.float32)
            rgb = (c * to_rgb(x, p['torgb_w'], p['torgb_b'])
                   + (1.0 - c) * to_rgb(x1, p['trans_torgb_w'],
                                        p['trans_torgb_b']))
        else:
            rgb = to_rgb(x, p['torgb_w'], p['torgb_b'])
        return jnp.transpose(rgb, (0, 3, 1, 2))


# ----------------------------------- main ------------------------------------

if __name__ == "__main__":
    # transition path at 16x16: exercises the fused upsample-conv producer, the
    # halo-tiled conv input, the small-map skip to-RGB and the traced blend coef
    config = {"channels": [16, 16, 16], "latent_size": 32}
    gen = PallasGenerator(spatial_resolution=16, configuration=config,
                          transition=True, transition_coef=0.5,
                          key=jax.random.PRNGKey(1))
    z = jax.random.normal(jax.random.PRNGKey(0), (2, 32), jnp.float32)

    fwd_f32 = jax.jit(lambda zz, c: gen.forward(zz, jnp.float32, c))
    out = jax.block_until_ready(fwd_f32(z, 0.5))
    ref = jax.block_until_ready(gen.forward_ref(z, jnp.float32, 0.5))
    assert out.shape == (2, 3, 16, 16), out.shape
    assert bool(jnp.all(jnp.isfinite(out)))
    assert bool(jnp.allclose(out, ref, atol=2e-3, rtol=2e-3)), \
        float(jnp.max(jnp.abs(out - ref)))

    # bf16-operand / bf16-activation / f32-accumulate path (v6e / v7x MXU);
    # a different, runtime-supplied blend coefficient exercises the traced coef.
    fwd_bf16 = jax.jit(lambda zz, c: gen.forward(zz, jnp.bfloat16, c))
    out_bf = jax.block_until_ready(fwd_bf16(z, 0.3))
    ref_bf = jax.block_until_ready(gen.forward_ref(z, jnp.bfloat16, 0.3))
    assert out_bf.shape == (2, 3, 16, 16), out_bf.shape
    assert bool(jnp.all(jnp.isfinite(out_bf)))
    assert bool(jnp.allclose(out_bf, ref_bf, atol=2e-2, rtol=2e-2)), \
        float(jnp.max(jnp.abs(out_bf - ref_bf)))

    # minimum-resolution / no-transition path (plain to-RGB matmul kernel)
    gen4 = PallasGenerator(spatial_resolution=4,
                           configuration={"channels": [16], "latent_size": 32},
                           transition=True, key=jax.random.PRNGKey(2))
    fwd4 = jax.jit(lambda zz: gen4.forward(zz))
    out4 = jax.block_until_ready(fwd4(z))
    ref4 = jax.block_until_ready(gen4.forward_ref(z))
    assert out4.shape == (2, 3, 4, 4), out4.shape
    assert bool(jnp.allclose(out4, ref4, atol=2e-3, rtol=2e-3)), \
        float(jnp.max(jnp.abs(out4 - ref4)))

    print("KERNEL_OK")
</pallas_src>

<mosaic_0001>
module attributes {stable_mosaic.version = 11 : i64} {
  func.func @_matmul_bias_kernel(%arg0: i32, %arg1: memref<16x32xf32, #tpu.memory_space<vmem>>, %arg2: memref<32x256xf32, #tpu.memory_space<vmem>>, %arg3: memref<1x256xf32, #tpu.memory_space<vmem>>, %arg4: memref<16x256xf32, #tpu.memory_space<vmem>>) attributes {dimension_semantics = [#tpu.dimension_semantics<parallel>], iteration_bounds = array<i64: 1>, scalar_prefetch = 0 : i64, scratch_operands = 0 : i64, tpu.core_type = #tpu.core_type<tc>, window_params = [{transform_indices = @transform_0, window_bounds = array<i64: 16, 32>}, {pipeline_mode = #tpu.pipeline_mode<synchronous>, transform_indices = @transform_1, window_bounds = array<i64: 32, 256>}, {pipeline_mode = #tpu.pipeline_mode<synchronous>, transform_indices = @transform_2, window_bounds = array<i64: 1, 256>}, {transform_indices = @transform_3, window_bounds = array<i64: 16, 256>}]} {
    %c0 = arith.constant 0 : index
    %c0_0 = arith.constant 0 : index
    %0 = vector.load %arg1[%c0, %c0_0] : memref<16x32xf32, #tpu.memory_space<vmem>>, vector<16x32xf32>
    %c0_1 = arith.constant 0 : index
    %c0_2 = arith.constant 0 : index
    %1 = vector.load %arg2[%c0_1, %c0_2] : memref<32x256xf32, #tpu.memory_space<vmem>>, vector<32x256xf32>
    %cst = arith.constant dense<0.000000e+00> : vector<16x256xf32>
    %2 = tpu.matmul %0, %1, %cst {dimension_numbers = #tpu.dot_dimension_numbers<[1], [0], [0], [1], [0, 0, 1, 1], [], []>} : vector<16x32xf32>, vector<32x256xf32>, vector<16x256xf32> -> vector<16x256xf32>
    %c0_3 = arith.constant 0 : index
    %c0_4 = arith.constant 0 : index
    %3 = vector.load %arg3[%c0_3, %c0_4] : memref<1x256xf32, #tpu.memory_space<vmem>>, vector<1x256xf32>
    %4 = vector.broadcast %3 : vector<1x256xf32> to vector<16x256xf32>
    %5 = arith.addf %2, %4 : vector<16x256xf32>
    %cst_5 = arith.constant 0.000000e+00 : f32
    %6 = vector.broadcast %cst_5 : f32 to vector<16x256xf32>
    %7 = arith.maximumf %5, %6 : vector<16x256xf32>
    %c0_6 = arith.constant 0 : index
    %c0_7 = arith.constant 0 : index
    %8 = vector.load %arg4[%c0_6, %c0_7] : memref<16x256xf32, #tpu.memory_space<vmem>>, vector<16x256xf32>
    tpu.vector_store %arg4[%c0_6, %c0_7], %7 {strides = array<i32>} : memref<16x256xf32, #tpu.memory_space<vmem>>, vector<16x256xf32>,
    return
  }
  func.func @transform_0(%arg0: i32) -> (i32, i32) {
    %c0_i32 = arith.constant 0 : i32
    %c0_i32_0 = arith.constant 0 : i32
    return %arg0, %c0_i32 : i32, i32
  }
  func.func @transform_1(%arg0: i32) -> (i32, i32) {
    %c0_i32 = arith.constant 0 : i32
    %c0_i32_0 = arith.constant 0 : i32
    %c0_i32_1 = arith.constant 0 : i32
    return %c0_i32, %c0_i32_0 : i32, i32
  }
  func.func @transform_2(%arg0: i32) -> (i32, i32) {
    %c0_i32 = arith.constant 0 : i32
    %c0_i32_0 = arith.constant 0 : i32
    %c0_i32_1 = arith.constant 0 : i32
    return %c0_i32, %c0_i32_0 : i32, i32
  }
  func.func @transform_3(%arg0: i32) -> (i32, i32) {
    %c0_i32 = arith.constant 0 : i32
    %c0_i32_0 = arith.constant 0 : i32
    return %arg0, %c0_i32 : i32, i32
  }
}

module attributes {stable_mosaic.version = 11 : i64} {
  func.func @_conv3x3_kernel(%arg0: i32, %arg1: memref<32x16xf32, #tpu.memory_space<vmem>>, %arg2: memref<32x16xf32, #tpu.memory_space<vmem>>, %arg3: memref<9x16x128xf32, #tpu.memory_space<vmem>>, %arg4: memref<1x128xf32, #tpu.memory_space<vmem>>, %arg5: memref<32x128xf32, #tpu.memory_space<vmem>>) attributes {dimension_semantics = [#tpu.dimension_semantics<parallel>], iteration_bounds = array<i64: 3>, scalar_prefetch = 0 : i64, scratch_operands = 0 : i64, tpu.core_type = #tpu.core_type<tc>, window_params = [{transform_indices = @transform_0, window_bounds = array<i64: 32, 16>}, {transform_indices = @transform_1, window_bounds = array<i64: 32, 16>}, {pipeline_mode = #tpu.pipeline_mode<synchronous>, transform_indices = @transform_2, window_bounds = array<i64: 9, 16, 128>}, {pipeline_mode = #tpu.pipeline_mode<synchronous>, transform_indices = @transform_3, window_bounds = array<i64: 1, 128>}, {transform_indices = @transform_4, window_bounds = array<i64: 32, 128>}]} {
    %c0 = arith.constant 0 : index
    %c0_0 = arith.constant 0 : index
    %0 = vector.load %arg1[%c0, %c0_0] : memref<32x16xf32, #tpu.memory_space<vmem>>, vector<32x16xf32>
    %c0_1 = arith.constant 0 : index
    %c0_2 = arith.constant 0 : index
    %1 = vector.load %arg2[%c0_1, %c0_2] : memref<32x16xf32, #tpu.memory_space<vmem>>, vector<32x16xf32>
    %2 = tpu.concatenate %0, %1 in 0 : vector<32x16xf32>, vector<32x16xf32> -> vector<64x16xf32>
    %cst = arith.constant 0.000000e+00 : f32
    %3 = vector.broadcast %cst : f32 to vector<32x128xf32>
    %4 = vector.extract_strided_slice %2 {offsets = [0, 0], sizes = [32, 16], strides = [1, 1]} : vector<64x16xf32> to vector<32x16xf32>
    %c0_3 = arith.constant 0 : index
    %c0_4 = arith.constant 0 : index
    %c0_5 = arith.constant 0 : index
    %5 = vector.load %arg3[%c0_3, %c0_4, %c0_5] : memref<9x16x128xf32, #tpu.memory_space<vmem>>, vector<1x16x128xf32>
    %6 = vector.shape_cast %5 : vector<1x16x128xf32> to vector<16x128xf32>
    %cst_6 = arith.constant dense<0.000000e+00> : vector<32x128xf32>
    %7 = tpu.matmul %4, %6, %cst_6 {dimension_numbers = #tpu.dot_dimension_numbers<[1], [0], [0], [1], [0, 0, 1, 1], [], []>} : vector<32x16xf32>, vector<16x128xf32>, vector<32x128xf32> -> vector<32x128xf32>
    %8 = arith.addf %3, %7 : vector<32x128xf32>
    %9 = vector.extract_strided_slice %2 {offsets = [1, 0], sizes = [32, 16], strides = [1, 1]} : vector<64x16xf32> to vector<32x16xf32>
    %c1 = arith.constant 1 : index
    %c0_7 = arith.constant 0 : index
    %c0_8 = arith.constant 0 : index
    %10 = vector.load %arg3[%c1, %c0_7, %c0_8] : memref<9x16x128xf32, #tpu.memory_space<vmem>>, vector<1x16x128xf32>
    %11 = vector.shape_cast %10 : vector<1x16x128xf32> to vector<16x128xf32>
    %cst_9 = arith.constant dense<0.000000e+00> : vector<32x128xf32>
    %12 = tpu.matmul %9, %11, %cst_9 {dimension_numbers = #tpu.dot_dimension_numbers<[1], [0], [0], [1], [0, 0, 1, 1], [], []>} : vector<32x16xf32>, vector<16x128xf32>, vector<32x128xf32> -> vector<32x128xf32>
    %13 = arith.addf %8, %12 : vector<32x128xf32>
    %14 = vector.extract_strided_slice %2 {offsets = [2, 0], sizes = [32, 16], strides = [1, 1]} : vector<64x16xf32> to vector<32x16xf32>
    %c2 = arith.constant 2 : index
    %c0_10 = arith.constant 0 : index
    %c0_11 = arith.constant 0 : index
    %15 = vector.load %arg3[%c2, %c0_10, %c0_11] : memref<9x16x128xf32, #tpu.memory_space<vmem>>, vector<1x16x128xf32>
    %16 = vector.shape_cast %15 : vector<1x16x128xf32> to vector<16x128xf32>
    %cst_12 = arith.constant dense<0.000000e+00> : vector<32x128xf32>
    %17 = tpu.matmul %14, %16, %cst_12 {dimension_numbers = #tpu.dot_dimension_numbers<[1], [0], [0], [1], [0, 0, 1, 1], [], []>} : vector<32x16xf32>, vector<16x128xf32>, vector<32x128xf32> -> vector<32x128xf32>
    %18 = arith.addf %13, %17 : vector<32x128xf32>
    %19 = vector.extract_strided_slice %2 {offsets = [8, 0], sizes = [32, 16], strides = [1, 1]} : vector<64x16xf32> to vector<32x16xf32>
    %c3 = arith.constant 3 : index
    %c0_13 = arith.constant 0 : index
    %c0_14 = arith.constant 0 : index
    %20 = vector.load %arg3[%c3, %c0_13, %c0_14] : memref<9x16x128xf32, #tpu.memory_space<vmem>>, vector<1x16x128xf32>
    %21 = vector.shape_cast %20 : vector<1x16x128xf32> to vector<16x128xf32>
    %cst_15 = arith.constant dense<0.000000e+00> : vector<32x128xf32>
    %22 = tpu.matmul %19, %21, %cst_15 {dimension_numbers = #tpu.dot_dimension_numbers<[1], [0], [0], [1], [0, 0, 1, 1], [], []>} : vector<32x16xf32>, vector<16x128xf32>, vector<32x128xf32> -> vector<32x128xf32>
    %23 = arith.addf %18, %22 : vector<32x128xf32>
    %24 = vector.extract_strided_slice %2 {offsets = [9, 0], sizes = [32, 16], strides = [1, 1]} : vector<64x16xf32> to vector<32x16xf32>
    %c4 = arith.constant 4 : index
    %c0_16 = arith.constant 0 : index
    %c0_17 = arith.constant 0 : index
    %25 = vector.load %arg3[%c4, %c0_16, %c0_17] : memref<9x16x128xf32, #tpu.memory_space<vmem>>, vector<1x16x128xf32>
    %26 = vector.shape_cast %25 : vector<1x16x128xf32> to vector<16x128xf32>
    %cst_18 = arith.constant dense<0.000000e+00> : vector<32x128xf32>
    %27 = tpu.matmul %24, %26, %cst_18 {dimension_numbers = #tpu.dot_dimension_numbers<[1], [0], [0], [1], [0, 0, 1, 1], [], []>} : vector<32x16xf32>, vector<16x128xf32>, vector<32x128xf32> -> vector<32x128xf32>
    %28 = arith.addf %23, %27 : vector<32x128xf32>
    %29 = vector.extract_strided_slice %2 {offsets = [10, 0], sizes = [32, 16], strides = [1, 1]} : vector<64x16xf32> to vector<32x16xf32>
    %c5 = arith.constant 5 : index
    %c0_19 = arith.constant 0 : index
    %c0_20 = arith.constant 0 : index
    %30 = vector.load %arg3[%c5, %c0_19, %c0_20] : memref<9x16x128xf32, #tpu.memory_space<vmem>>, vector<1x16x128xf32>
    %31 = vector.shape_cast %30 : vector<1x16x128xf32> to vector<16x128xf32>
    %cst_21 = arith.constant dense<0.000000e+00> : vector<32x128xf32>
    %32 = tpu.matmul %29, %31, %cst_21 {dimension_numbers = #tpu.dot_dimension_numbers<[1], [0], [0], [1], [0, 0, 1, 1], [], []>} : vector<32x16xf32>, vector<16x128xf32>, vector<32x128xf32> -> vector<32x128xf32>
    %33 = arith.addf %28, %32 : vector<32x128xf32>
    %34 = vector.extract_strided_slice %2 {offsets = [16, 0], sizes = [32, 16], strides = [1, 1]} : vector<64x16xf32> to vector<32x16xf32>
    %c6 = arith.constant 6 : index
    %c0_22 = arith.constant 0 : index
    %c0_23 = arith.constant 0 : index
    %35 = vector.load %arg3[%c6, %c0_22, %c0_23] : memref<9x16x128xf32, #tpu.memory_space<vmem>>, vector<1x16x128xf32>
    %36 = vector.shape_cast %35 : vector<1x16x128xf32> to vector<16x128xf32>
    %cst_24 = arith.constant dense<0.000000e+00> : vector<32x128xf32>
    %37 = tpu.matmul %34, %36, %cst_24 {dimension_numbers = #tpu.dot_dimension_numbers<[1], [0], [0], [1], [0, 0, 1, 1], [], []>} : vector<32x16xf32>, vector<16x128xf32>, vector<32x128xf32> -> vector<32x128xf32>
    %38 = arith.addf %33, %37 : vector<32x128xf32>
    %39 = vector.extract_strided_slice %2 {offsets = [17, 0], sizes = [32, 16], strides = [1, 1]} : vector<64x16xf32> to vector<32x16xf32>
    %c7 = arith.constant 7 : index
    %c0_25 = arith.constant 0 : index
    %c0_26 = arith.constant 0 : index
    %40 = vector.load %arg3[%c7, %c0_25, %c0_26] : memref<9x16x128xf32, #tpu.memory_space<vmem>>, vector<1x16x128xf32>
    %41 = vector.shape_cast %40 : vector<1x16x128xf32> to vector<16x128xf32>
    %cst_27 = arith.constant dense<0.000000e+00> : vector<32x128xf32>
    %42 = tpu.matmul %39, %41, %cst_27 {dimension_numbers = #tpu.dot_dimension_numbers<[1], [0], [0], [1], [0, 0, 1, 1], [], []>} : vector<32x16xf32>, vector<16x128xf32>, vector<32x128xf32> -> vector<32x128xf32>
    %43 = arith.addf %38, %42 : vector<32x128xf32>
    %44 = vector.extract_strided_slice %2 {offsets = [18, 0], sizes = [32, 16], strides = [1, 1]} : vector<64x16xf32> to vector<32x16xf32>
    %c8 = arith.constant 8 : index
    %c0_28 = arith.constant 0 : index
    %c0_29 = arith.constant 0 : index
    %45 = vector.load %arg3[%c8, %c0_28, %c0_29] : memref<9x16x128xf32, #tpu.memory_space<vmem>>, vector<1x16x128xf32>
    %46 = vector.shape_cast %45 : vector<1x16x128xf32> to vector<16x128xf32>
    %cst_30 = arith.constant dense<0.000000e+00> : vector<32x128xf32>
    %47 = tpu.matmul %44, %46, %cst_30 {dimension_numbers = #tpu.dot_dimension_numbers<[1], [0], [0], [1], [0, 0, 1, 1], [], []>} : vector<32x16xf32>, vector<16x128xf32>, vector<32x128xf32> -> vector<32x128xf32>
    %48 = arith.addf %43, %47 : vector<32x128xf32>
    %c0_31 = arith.constant 0 : index
    %c0_32 = arith.constant 0 : index
    %49 = vector.load %arg4[%c0_31, %c0_32] : memref<1x128xf32, #tpu.memory_space<vmem>>, vector<1x128xf32>
    %50 = vector.broadcast %49 : vector<1x128xf32> to vector<32x128xf32>
    %51 = arith.addf %48, %50 : vector<32x128xf32>
    %cst_33 = arith.constant 0.000000e+00 : f32
    %52 = vector.broadcast %cst_33 : f32 to vector<32x128xf32>
    %53 = arith.maximumf %51, %52 : vector<32x128xf32>
    %c0_34 = arith.constant 0 : index
    %c0_35 = arith.constant 0 : index
    %54 = vector.load %arg5[%c0_34, %c0_35] : memref<32x128xf32, #tpu.memory_space<vmem>>, vector<32x128xf32>
    tpu.vector_store %arg5[%c0_34, %c0_35], %53 {strides = array<i32>} : memref<32x128xf32, #tpu.memory_space<vmem>>, vector<32x128xf32>,
    return
  }
  func.func @transform_0(%arg0: i32) -> (i32, i32) {
    %c0_i32 = arith.constant 0 : i32
    %c0_i32_0 = arith.constant 0 : i32
    return %arg0, %c0_i32 : i32, i32
  }
  func.func @transform_1(%arg0: i32) -> (i32, i32) {
    %c1_i32 = arith.constant 1 : i32
    %0 = arith.addi %arg0, %c1_i32 : i32
    %c1_i32_0 = arith.constant 1 : i32
    %1 = arith.muli %0, %c1_i32_0 : i32
    %c0_i32 = arith.constant 0 : i32
    %c0_i32_1 = arith.constant 0 : i32
    return %1, %c0_i32 : i32, i32
  }
  func.func @transform_2(%arg0: i32) -> (i32, i32, i32) {
    %c0_i32 = arith.constant 0 : i32
    %c0_i32_0 = arith.constant 0 : i32
    %c0_i32_1 = arith.constant 0 : i32
    %c0_i32_2 = arith.constant 0 : i32
    return %c0_i32, %c0_i32_0, %c0_i32_1 : i32, i32, i32
  }
  func.func @transform_3(%arg0: i32) -> (i32, i32) {
    %c0_i32 = arith.constant 0 : i32
    %c0_i32_0 = arith.constant 0 : i32
    %c0_i32_1 = arith.constant 0 : i32
    return %c0_i32, %c0_i32_0 : i32, i32
  }
  func.func @transform_4(%arg0: i32) -> (i32, i32) {
    %c0_i32 = arith.constant 0 : i32
    %c0_i32_0 = arith.constant 0 : i32
    return %arg0, %c0_i32 : i32, i32
  }
}

module attributes {stable_mosaic.version = 11 : i64} {
  func.func @_conv3x3_kernel(%arg0: i32, %arg1: memref<96x128xf32, #tpu.memory_space<vmem>>, %arg2: memref<48x128xf32, #tpu.memory_space<vmem>>, %arg3: memref<9x128x128xf32, #tpu.memory_space<vmem>>, %arg4: memref<1x128xf32, #tpu.memory_space<vmem>>, %arg5: memref<96x128xf32, #tpu.memory_space<vmem>>) attributes {dimension_semantics = [#tpu.dimension_semantics<parallel>], iteration_bounds = array<i64: 4>, scalar_prefetch = 0 : i64, scratch_operands = 0 : i64, tpu.core_type = #tpu.core_type<tc>, window_params = [{transform_indices = @transform_0, window_bounds = array<i64: 96, 128>}, {transform_indices = @transform_1, window_bounds = array<i64: 48, 128>}, {pipeline_mode = #tpu.pipeline_mode<synchronous>, transform_indices = @transform_2, window_bounds = array<i64: 9, 128, 128>}, {pipeline_mode = #tpu.pipeline_mode<synchronous>, transform_indices = @transform_3, window_bounds = array<i64: 1, 128>}, {transform_indices = @transform_4, window_bounds = array<i64: 96, 128>}]} {
    %c0 = arith.constant 0 : index
    %c0_0 = arith.constant 0 : index
    %0 = vector.load %arg1[%c0, %c0_0] : memref<96x128xf32, #tpu.memory_space<vmem>>, vector<96x128xf32>
    %c0_1 = arith.constant 0 : index
    %c0_2 = arith.constant 0 : index
    %1 = vector.load %arg2[%c0_1, %c0_2] : memref<48x128xf32, #tpu.memory_space<vmem>>, vector<48x128xf32>
    %2 = tpu.concatenate %0, %1 in 0 : vector<96x128xf32>, vector<48x128xf32> -> vector<144x128xf32>
    %cst = arith.constant 0.000000e+00 : f32
    %3 = vector.broadcast %cst : f32 to vector<96x128xf32>
    %4 = vector.extract_strided_slice %2 {offsets = [0, 0], sizes = [96, 128], strides = [1, 1]} : vector<144x128xf32> to vector<96x128xf32>
    %c0_3 = arith.constant 0 : index
    %c0_4 = arith.constant 0 : index
    %c0_5 = arith.constant 0 : index
    %5 = vector.load %arg3[%c0_3, %c0_4, %c0_5] : memref<9x128x128xf32, #tpu.memory_space<vmem>>, vector<1x128x128xf32>
    %6 = vector.shape_cast %5 : vector<1x128x128xf32> to vector<128x128xf32>
    %cst_6 = arith.constant dense<0.000000e+00> : vector<96x128xf32>
    %7 = tpu.matmul %4, %6, %cst_6 {dimension_numbers = #tpu.dot_dimension_numbers<[1], [0], [0], [1], [0, 0, 1, 1], [], []>} : vector<96x128xf32>, vector<128x128xf32>, vector<96x128xf32> -> vector<96x128xf32>
    %8 = arith.addf %3, %7 : vector<96x128xf32>
    %9 = vector.extract_strided_slice %2 {offsets = [1, 0], sizes = [96, 128], strides = [1, 1]} : vector<144x128xf32> to vector<96x128xf32>
    %c1 = arith.constant 1 : index
    %c0_7 = arith.constant 0 : index
    %c0_8 = arith.constant 0 : index
    %10 = vector.load %arg3[%c1, %c0_7, %c0_8] : memref<9x128x128xf32, #tpu.memory_space<vmem>>, vector<1x128x128xf32>
    %11 = vector.shape_cast %10 : vector<1x128x128xf32> to vector<128x128xf32>
    %cst_9 = arith.constant dense<0.000000e+00> : vector<96x128xf32>
    %12 = tpu.matmul %9, %11, %cst_9 {dimension_numbers = #tpu.dot_dimension_numbers<[1], [0], [0], [1], [0, 0, 1, 1], [], []>} : vector<96x128xf32>, vector<128x128xf32>, vector<96x128xf32> -> vector<96x128xf32>
    %13 = arith.addf %8, %12 : vector<96x128xf32>
    %14 = vector.extract_strided_slice %2 {offsets = [2, 0], sizes = [96, 128], strides = [1, 1]} : vector<144x128xf32> to vector<96x128xf32>
    %c2 = arith.constant 2 : index
    %c0_10 = arith.constant 0 : index
    %c0_11 = arith.constant 0 : index
    %15 = vector.load %arg3[%c2, %c0_10, %c0_11] : memref<9x128x128xf32, #tpu.memory_space<vmem>>, vector<1x128x128xf32>
    %16 = vector.shape_cast %15 : vector<1x128x128xf32> to vector<128x128xf32>
    %cst_12 = arith.constant dense<0.000000e+00> : vector<96x128xf32>
    %17 = tpu.matmul %14, %16, %cst_12 {dimension_numbers = #tpu.dot_dimension_numbers<[1], [0], [0], [1], [0, 0, 1, 1], [], []>} : vector<96x128xf32>, vector<128x128xf32>, vector<96x128xf32> -> vector<96x128xf32>
    %18 = arith.addf %13, %17 : vector<96x128xf32>
    %19 = vector.extract_strided_slice %2 {offsets = [16, 0], sizes = [96, 128], strides = [1, 1]} : vector<144x128xf32> to vector<96x128xf32>
    %c3 = arith.constant 3 : index
    %c0_13 = arith.constant 0 : index
    %c0_14 = arith.constant 0 : index
    %20 = vector.load %arg3[%c3, %c0_13, %c0_14] : memref<9x128x128xf32, #tpu.memory_space<vmem>>, vector<1x128x128xf32>
    %21 = vector.shape_cast %20 : vector<1x128x128xf32> to vector<128x128xf32>
    %cst_15 = arith.constant dense<0.000000e+00> : vector<96x128xf32>
    %22 = tpu.matmul %19, %21, %cst_15 {dimension_numbers = #tpu.dot_dimension_numbers<[1], [0], [0], [1], [0, 0, 1, 1], [], []>} : vector<96x128xf32>, vector<128x128xf32>, vector<96x128xf32> -> vector<96x128xf32>
    %23 = arith.addf %18, %22 : vector<96x128xf32>
    %24 = vector.extract_strided_slice %2 {offsets = [17, 0], sizes = [96, 128], strides = [1, 1]} : vector<144x128xf32> to vector<96x128xf32>
    %c4 = arith.constant 4 : index
    %c0_16 = arith.constant 0 : index
    %c0_17 = arith.constant 0 : index
    %25 = vector.load %arg3[%c4, %c0_16, %c0_17] : memref<9x128x128xf32, #tpu.memory_space<vmem>>, vector<1x128x128xf32>
    %26 = vector.shape_cast %25 : vector<1x128x128xf32> to vector<128x128xf32>
    %cst_18 = arith.constant dense<0.000000e+00> : vector<96x128xf32>
    %27 = tpu.matmul %24, %26, %cst_18 {dimension_numbers = #tpu.dot_dimension_numbers<[1], [0], [0], [1], [0, 0, 1, 1], [], []>} : vector<96x128xf32>, vector<128x128xf32>, vector<96x128xf32> -> vector<96x128xf32>
    %28 = arith.addf %23, %27 : vector<96x128xf32>
    %29 = vector.extract_strided_slice %2 {offsets = [18, 0], sizes = [96, 128], strides = [1, 1]} : vector<144x128xf32> to vector<96x128xf32>
    %c5 = arith.constant 5 : index
    %c0_19 = arith.constant 0 : index
    %c0_20 = arith.constant 0 : index
    %30 = vector.load %arg3[%c5, %c0_19, %c0_20] : memref<9x128x128xf32, #tpu.memory_space<vmem>>, vector<1x128x128xf32>
    %31 = vector.shape_cast %30 : vector<1x128x128xf32> to vector<128x128xf32>
    %cst_21 = arith.constant dense<0.000000e+00> : vector<96x128xf32>
    %32 = tpu.matmul %29, %31, %cst_21 {dimension_numbers = #tpu.dot_dimension_numbers<[1], [0], [0], [1], [0, 0, 1, 1], [], []>} : vector<96x128xf32>, vector<128x128xf32>, vector<96x128xf32> -> vector<96x128xf32>
    %33 = arith.addf %28, %32 : vector<96x128xf32>
    %34 = vector.extract_strided_slice %2 {offsets = [32, 0], sizes = [96, 128], strides = [1, 1]} : vector<144x128xf32> to vector<96x128xf32>
    %c6 = arith.constant 6 : index
    %c0_22 = arith.constant 0 : index
    %c0_23 = arith.constant 0 : index
    %35 = vector.load %arg3[%c6, %c0_22, %c0_23] : memref<9x128x128xf32, #tpu.memory_space<vmem>>, vector<1x128x128xf32>
    %36 = vector.shape_cast %35 : vector<1x128x128xf32> to vector<128x128xf32>
    %cst_24 = arith.constant dense<0.000000e+00> : vector<96x128xf32>
    %37 = tpu.matmul %34, %36, %cst_24 {dimension_numbers = #tpu.dot_dimension_numbers<[1], [0], [0], [1], [0, 0, 1, 1], [], []>} : vector<96x128xf32>, vector<128x128xf32>, vector<96x128xf32> -> vector<96x128xf32>
    %38 = arith.addf %33, %37 : vector<96x128xf32>
    %39 = vector.extract_strided_slice %2 {offsets = [33, 0], sizes = [96, 128], strides = [1, 1]} : vector<144x128xf32> to vector<96x128xf32>
    %c7 = arith.constant 7 : index
    %c0_25 = arith.constant 0 : index
    %c0_26 = arith.constant 0 : index
    %40 = vector.load %arg3[%c7, %c0_25, %c0_26] : memref<9x128x128xf32, #tpu.memory_space<vmem>>, vector<1x128x128xf32>
    %41 = vector.shape_cast %40 : vector<1x128x128xf32> to vector<128x128xf32>
    %cst_27 = arith.constant dense<0.000000e+00> : vector<96x128xf32>
    %42 = tpu.matmul %39, %41, %cst_27 {dimension_numbers = #tpu.dot_dimension_numbers<[1], [0], [0], [1], [0, 0, 1, 1], [], []>} : vector<96x128xf32>, vector<128x128xf32>, vector<96x128xf32> -> vector<96x128xf32>
    %43 = arith.addf %38, %42 : vector<96x128xf32>
    %44 = vector.extract_strided_slice %2 {offsets = [34, 0], sizes = [96, 128], strides = [1, 1]} : vector<144x128xf32> to vector<96x128xf32>
    %c8 = arith.constant 8 : index
    %c0_28 = arith.constant 0 : index
    %c0_29 = arith.constant 0 : index
    %45 = vector.load %arg3[%c8, %c0_28, %c0_29] : memref<9x128x128xf32, #tpu.memory_space<vmem>>, vector<1x128x128xf32>
    %46 = vector.shape_cast %45 : vector<1x128x128xf32> to vector<128x128xf32>
    %cst_30 = arith.constant dense<0.000000e+00> : vector<96x128xf32>
    %47 = tpu.matmul %44, %46, %cst_30 {dimension_numbers = #tpu.dot_dimension_numbers<[1], [0], [0], [1], [0, 0, 1, 1], [], []>} : vector<96x128xf32>, vector<128x128xf32>, vector<96x128xf32> -> vector<96x128xf32>
    %48 = arith.addf %43, %47 : vector<96x128xf32>
    %c0_31 = arith.constant 0 : index
    %c0_32 = arith.constant 0 : index
    %49 = vector.load %arg4[%c0_31, %c0_32] : memref<1x128xf32, #tpu.memory_space<vmem>>, vector<1x128xf32>
    %50 = vector.broadcast %49 : vector<1x128xf32> to vector<96x128xf32>
    %51 = arith.addf %48, %50 : vector<96x128xf32>
    %cst_33 = arith.constant 0.000000e+00 : f32
    %52 = vector.broadcast %cst_33 : f32 to vector<96x128xf32>
    %53 = arith.maximumf %51, %52 : vector<96x128xf32>
    %c0_34 = arith.constant 0 : index
    %c0_35 = arith.constant 0 : index
    %54 = vector.load %arg5[%c0_34, %c0_35] : memref<96x128xf32, #tpu.memory_space<vmem>>, vector<96x128xf32>
    tpu.vector_store %arg5[%c0_34, %c0_35], %53 {strides = array<i32>} : memref<96x128xf32, #tpu.memory_space<vmem>>, vector<96x128xf32>,
    return
  }
  func.func @transform_0(%arg0: i32) -> (i32, i32) {
    %c0_i32 = arith.constant 0 : i32
    %c0_i32_0 = arith.constant 0 : i32
    return %arg0, %c0_i32 : i32, i32
  }
  func.func @transform_1(%arg0: i32) -> (i32, i32) {
    %c1_i32 = arith.constant 1 : i32
    %0 = arith.addi %arg0, %c1_i32 : i32
    %c2_i32 = arith.constant 2 : i32
    %1 = arith.muli %0, %c2_i32 : i32
    %c0_i32 = arith.constant 0 : i32
    %c0_i32_0 = arith.constant 0 : i32
    return %1, %c0_i32 : i32, i32
  }
  func.func @transform_2(%arg0: i32) -> (i32, i32, i32) {
    %c0_i32 = arith.constant 0 : i32
    %c0_i32_0 = arith.constant 0 : i32
    %c0_i32_1 = arith.constant 0 : i32
    %c0_i32_2 = arith.constant 0 : i32
    return %c0_i32, %c0_i32_0, %c0_i32_1 : i32, i32, i32
  }
  func.func @transform_3(%arg0: i32) -> (i32, i32) {
    %c0_i32 = arith.constant 0 : i32
    %c0_i32_0 = arith.constant 0 : i32
    %c0_i32_1 = arith.constant 0 : i32
    return %c0_i32, %c0_i32_0 : i32, i32
  }
  func.func @transform_4(%arg0: i32) -> (i32, i32) {
    %c0_i32 = arith.constant 0 : i32
    %c0_i32_0 = arith.constant 0 : i32
    return %arg0, %c0_i32 : i32, i32
  }
}

module attributes {stable_mosaic.version = 11 : i64} {
  func.func @_matmul_bias_kernel(%arg0: i32, %arg1: memref<96x128xf32, #tpu.memory_space<vmem>>, %arg2: memref<128x128xf32, #tpu.memory_space<vmem>>, %arg3: memref<1x128xf32, #tpu.memory_space<vmem>>, %arg4: memref<96x128xf32, #tpu.memory_space<vmem>>) attributes {dimension_semantics = [#tpu.dimension_semantics<parallel>], iteration_bounds = array<i64: 4>, scalar_prefetch = 0 : i64, scratch_operands = 0 : i64, tpu.core_type = #tpu.core_type<tc>, window_params = [{transform_indices = @transform_0, window_bounds = array<i64: 96, 128>}, {pipeline_mode = #tpu.pipeline_mode<synchronous>, transform_indices = @transform_1, window_bounds = array<i64: 128, 128>}, {pipeline_mode = #tpu.pipeline_mode<synchronous>, transform_indices = @transform_2, window_bounds = array<i64: 1, 128>}, {transform_indices = @transform_3, window_bounds = array<i64: 96, 128>}]} {
    %c0 = arith.constant 0 : index
    %c0_0 = arith.constant 0 : index
    %0 = vector.load %arg1[%c0, %c0_0] : memref<96x128xf32, #tpu.memory_space<vmem>>, vector<96x128xf32>
    %c0_1 = arith.constant 0 : index
    %c0_2 = arith.constant 0 : index
    %1 = vector.load %arg2[%c0_1, %c0_2] : memref<128x128xf32, #tpu.memory_space<vmem>>, vector<128x128xf32>
    %cst = arith.constant dense<0.000000e+00> : vector<96x128xf32>
    %2 = tpu.matmul %0, %1, %cst {dimension_numbers = #tpu.dot_dimension_numbers<[1], [0], [0], [1], [0, 0, 1, 1], [], []>} : vector<96x128xf32>, vector<128x128xf32>, vector<96x128xf32> -> vector<96x128xf32>
    %c0_3 = arith.constant 0 : index
    %c0_4 = arith.constant 0 : index
    %3 = vector.load %arg3[%c0_3, %c0_4] : memref<1x128xf32, #tpu.memory_space<vmem>>, vector<1x128xf32>
    %4 = vector.broadcast %3 : vector<1x128xf32> to vector<96x128xf32>
    %5 = arith.addf %2, %4 : vector<96x128xf32>
    %c0_5 = arith.constant 0 : index
    %c0_6 = arith.constant 0 : index
    %6 = vector.load %arg4[%c0_5, %c0_6] : memref<96x128xf32, #tpu.memory_space<vmem>>, vector<96x128xf32>
    tpu.vector_store %arg4[%c0_5, %c0_6], %5 {strides = array<i32>} : memref<96x128xf32, #tpu.memory_space<vmem>>, vector<96x128xf32>,
    return
  }
  func.func @transform_0(%arg0: i32) -> (i32, i32) {
    %c0_i32 = arith.constant 0 : i32
    %c0_i32_0 = arith.constant 0 : i32
    return %arg0, %c0_i32 : i32, i32
  }
  func.func @transform_1(%arg0: i32) -> (i32, i32) {
    %c0_i32 = arith.constant 0 : i32
    %c0_i32_0 = arith.constant 0 : i32
    %c0_i32_1 = arith.constant 0 : i32
    return %c0_i32, %c0_i32_0 : i32, i32
  }
  func.func @transform_2(%arg0: i32) -> (i32, i32) {
    %c0_i32 = arith.constant 0 : i32
    %c0_i32_0 = arith.constant 0 : i32
    %c0_i32_1 = arith.constant 0 : i32
    return %c0_i32, %c0_i32_0 : i32, i32
  }
  func.func @transform_3(%arg0: i32) -> (i32, i32) {
    %c0_i32 = arith.constant 0 : i32
    %c0_i32_0 = arith.constant 0 : i32
    return %arg0, %c0_i32 : i32, i32
  }
}

module attributes {stable_mosaic.version = 11 : i64} {
  func.func @_conv3x3_kernel(%arg0: i32, %arg1: memref<256x128xf32, #tpu.memory_space<vmem>>, %arg2: memref<64x128xf32, #tpu.memory_space<vmem>>, %arg3: memref<9x128x128xf32, #tpu.memory_space<vmem>>, %arg4: memref<1x128xf32, #tpu.memory_space<vmem>>, %arg5: memref<256x128xf32, #tpu.memory_space<vmem>>) attributes {dimension_semantics = [#tpu.dimension_semantics<parallel>], iteration_bounds = array<i64: 4>, scalar_prefetch = 0 : i64, scratch_operands = 0 : i64, tpu.core_type = #tpu.core_type<tc>, window_params = [{transform_indices = @transform_0, window_bounds = array<i64: 256, 128>}, {transform_indices = @transform_1, window_bounds = array<i64: 64, 128>}, {pipeline_mode = #tpu.pipeline_mode<synchronous>, transform_indices = @transform_2, window_bounds = array<i64: 9, 128, 128>}, {pipeline_mode = #tpu.pipeline_mode<synchronous>, transform_indices = @transform_3, window_bounds = array<i64: 1, 128>}, {transform_indices = @transform_4, window_bounds = array<i64: 256, 128>}]} {
    %c0 = arith.constant 0 : index
    %c0_0 = arith.constant 0 : index
    %0 = vector.load %arg1[%c0, %c0_0] : memref<256x128xf32, #tpu.memory_space<vmem>>, vector<256x128xf32>
    %c0_1 = arith.constant 0 : index
    %c0_2 = arith.constant 0 : index
    %1 = vector.load %arg2[%c0_1, %c0_2] : memref<64x128xf32, #tpu.memory_space<vmem>>, vector<64x128xf32>
    %2 = tpu.concatenate %0, %1 in 0 : vector<256x128xf32>, vector<64x128xf32> -> vector<320x128xf32>
    %cst = arith.constant 0.000000e+00 : f32
    %3 = vector.broadcast %cst : f32 to vector<256x128xf32>
    %4 = vector.extract_strided_slice %2 {offsets = [0, 0], sizes = [256, 128], strides = [1, 1]} : vector<320x128xf32> to vector<256x128xf32>
    %c0_3 = arith.constant 0 : index
    %c0_4 = arith.constant 0 : index
    %c0_5 = arith.constant 0 : index
    %5 = vector.load %arg3[%c0_3, %c0_4, %c0_5] : memref<9x128x128xf32, #tpu.memory_space<vmem>>, vector<1x128x128xf32>
    %6 = vector.shape_cast %5 : vector<1x128x128xf32> to vector<128x128xf32>
    %cst_6 = arith.constant dense<0.000000e+00> : vector<256x128xf32>
    %7 = tpu.matmul %4, %6, %cst_6 {dimension_numbers = #tpu.dot_dimension_numbers<[1], [0], [0], [1], [0, 0, 1, 1], [], []>} : vector<256x128xf32>, vector<128x128xf32>, vector<256x128xf32> -> vector<256x128xf32>
    %8 = arith.addf %3, %7 : vector<256x128xf32>
    %9 = vector.extract_strided_slice %2 {offsets = [1, 0], sizes = [256, 128], strides = [1, 1]} : vector<320x128xf32> to vector<256x128xf32>
    %c1 = arith.constant 1 : index
    %c0_7 = arith.constant 0 : index
    %c0_8 = arith.constant 0 : index
    %10 = vector.load %arg3[%c1, %c0_7, %c0_8] : memref<9x128x128xf32, #tpu.memory_space<vmem>>, vector<1x128x128xf32>
    %11 = vector.shape_cast %10 : vector<1x128x128xf32> to vector<128x128xf32>
    %cst_9 = arith.constant dense<0.000000e+00> : vector<256x128xf32>
    %12 = tpu.matmul %9, %11, %cst_9 {dimension_numbers = #tpu.dot_dimension_numbers<[1], [0], [0], [1], [0, 0, 1, 1], [], []>} : vector<256x128xf32>, vector<128x128xf32>, vector<256x128xf32> -> vector<256x128xf32>
    %13 = arith.addf %8, %12 : vector<256x128xf32>
    %14 = vector.extract_strided_slice %2 {offsets = [2, 0], sizes = [256, 128], strides = [1, 1]} : vector<320x128xf32> to vector<256x128xf32>
    %c2 = arith.constant 2 : index
    %c0_10 = arith.constant 0 : index
    %c0_11 = arith.constant 0 : index
    %15 = vector.load %arg3[%c2, %c0_10, %c0_11] : memref<9x128x128xf32, #tpu.memory_space<vmem>>, vector<1x128x128xf32>
    %16 = vector.shape_cast %15 : vector<1x128x128xf32> to vector<128x128xf32>
    %cst_12 = arith.constant dense<0.000000e+00> : vector<256x128xf32>
    %17 = tpu.matmul %14, %16, %cst_12 {dimension_numbers = #tpu.dot_dimension_numbers<[1], [0], [0], [1], [0, 0, 1, 1], [], []>} : vector<256x128xf32>, vector<128x128xf32>, vector<256x128xf32> -> vector<256x128xf32>
    %18 = arith.addf %13, %17 : vector<256x128xf32>
    %19 = vector.extract_strided_slice %2 {offsets = [24, 0], sizes = [256, 128], strides = [1, 1]} : vector<320x128xf32> to vector<256x128xf32>
    %c3 = arith.constant 3 : index
    %c0_13 = arith.constant 0 : index
    %c0_14 = arith.constant 0 : index
    %20 = vector.load %arg3[%c3, %c0_13, %c0_14] : memref<9x128x128xf32, #tpu.memory_space<vmem>>, vector<1x128x128xf32>
    %21 = vector.shape_cast %20 : vector<1x128x128xf32> to vector<128x128xf32>
    %cst_15 = arith.constant dense<0.000000e+00> : vector<256x128xf32>
    %22 = tpu.matmul %19, %21, %cst_15 {dimension_numbers = #tpu.dot_dimension_numbers<[1], [0], [0], [1], [0, 0, 1, 1], [], []>} : vector<256x128xf32>, vector<128x128xf32>, vector<256x128xf32> -> vector<256x128xf32>
    %23 = arith.addf %18, %22 : vector<256x128xf32>
    %24 = vector.extract_strided_slice %2 {offsets = [25, 0], sizes = [256, 128], strides = [1, 1]} : vector<320x128xf32> to vector<256x128xf32>
    %c4 = arith.constant 4 : index
    %c0_16 = arith.constant 0 : index
    %c0_17 = arith.constant 0 : index
    %25 = vector.load %arg3[%c4, %c0_16, %c0_17] : memref<9x128x128xf32, #tpu.memory_space<vmem>>, vector<1x128x128xf32>
    %26 = vector.shape_cast %25 : vector<1x128x128xf32> to vector<128x128xf32>
    %cst_18 = arith.constant dense<0.000000e+00> : vector<256x128xf32>
    %27 = tpu.matmul %24, %26, %cst_18 {dimension_numbers = #tpu.dot_dimension_numbers<[1], [0], [0], [1], [0, 0, 1, 1], [], []>} : vector<256x128xf32>, vector<128x128xf32>, vector<256x128xf32> -> vector<256x128xf32>
    %28 = arith.addf %23, %27 : vector<256x128xf32>
    %29 = vector.extract_strided_slice %2 {offsets = [26, 0], sizes = [256, 128], strides = [1, 1]} : vector<320x128xf32> to vector<256x128xf32>
    %c5 = arith.constant 5 : index
    %c0_19 = arith.constant 0 : index
    %c0_20 = arith.constant 0 : index
    %30 = vector.load %arg3[%c5, %c0_19, %c0_20] : memref<9x128x128xf32, #tpu.memory_space<vmem>>, vector<1x128x128xf32>
    %31 = vector.shape_cast %30 : vector<1x128x128xf32> to vector<128x128xf32>
    %cst_21 = arith.constant dense<0.000000e+00> : vector<256x128xf32>
    %32 = tpu.matmul %29, %31, %cst_21 {dimension_numbers = #tpu.dot_dimension_numbers<[1], [0], [0], [1], [0, 0, 1, 1], [], []>} : vector<256x128xf32>, vector<128x128xf32>, vector<256x128xf32> -> vector<256x128xf32>
    %33 = arith.addf %28, %32 : vector<256x128xf32>
    %34 = vector.extract_strided_slice %2 {offsets = [48, 0], sizes = [256, 128], strides = [1, 1]} : vector<320x128xf32> to vector<256x128xf32>
    %c6 = arith.constant 6 : index
    %c0_22 = arith.constant 0 : index
    %c0_23 = arith.constant 0 : index
    %35 = vector.load %arg3[%c6, %c0_22, %c0_23] : memref<9x128x128xf32, #tpu.memory_space<vmem>>, vector<1x128x128xf32>
    %36 = vector.shape_cast %35 : vector<1x128x128xf32> to vector<128x128xf32>
    %cst_24 = arith.constant dense<0.000000e+00> : vector<256x128xf32>
    %37 = tpu.matmul %34, %36, %cst_24 {dimension_numbers = #tpu.dot_dimension_numbers<[1], [0], [0], [1], [0, 0, 1, 1], [], []>} : vector<256x128xf32>, vector<128x128xf32>, vector<256x128xf32> -> vector<256x128xf32>
    %38 = arith.addf %33, %37 : vector<256x128xf32>
    %39 = vector.extract_strided_slice %2 {offsets = [49, 0], sizes = [256, 128], strides = [1, 1]} : vector<320x128xf32> to vector<256x128xf32>
    %c7 = arith.constant 7 : index
    %c0_25 = arith.constant 0 : index
    %c0_26 = arith.constant 0 : index
    %40 = vector.load %arg3[%c7, %c0_25, %c0_26] : memref<9x128x128xf32, #tpu.memory_space<vmem>>, vector<1x128x128xf32>
    %41 = vector.shape_cast %40 : vector<1x128x128xf32> to vector<128x128xf32>
    %cst_27 = arith.constant dense<0.000000e+00> : vector<256x128xf32>
    %42 = tpu.matmul %39, %41, %cst_27 {dimension_numbers = #tpu.dot_dimension_numbers<[1], [0], [0], [1], [0, 0, 1, 1], [], []>} : vector<256x128xf32>, vector<128x128xf32>, vector<256x128xf32> -> vector<256x128xf32>
    %43 = arith.addf %38, %42 : vector<256x128xf32>
    %44 = vector.extract_strided_slice %2 {offsets = [50, 0], sizes = [256, 128], strides = [1, 1]} : vector<320x128xf32> to vector<256x128xf32>
    %c8 = arith.constant 8 : index
    %c0_28 = arith.constant 0 : index
    %c0_29 = arith.constant 0 : index
    %45 = vector.load %arg3[%c8, %c0_28, %c0_29] : memref<9x128x128xf32, #tpu.memory_space<vmem>>, vector<1x128x128xf32>
    %46 = vector.shape_cast %45 : vector<1x128x128xf32> to vector<128x128xf32>
    %cst_30 = arith.constant dense<0.000000e+00> : vector<256x128xf32>
    %47 = tpu.matmul %44, %46, %cst_30 {dimension_numbers = #tpu.dot_dimension_numbers<[1], [0], [0], [1], [0, 0, 1, 1], [], []>} : vector<256x128xf32>, vector<128x128xf32>, vector<256x128xf32> -> vector<256x128xf32>
    %48 = arith.addf %43, %47 : vector<256x128xf32>
    %c0_31 = arith.constant 0 : index
    %c0_32 = arith.constant 0 : index
    %49 = vector.load %arg4[%c0_31, %c0_32] : memref<1x128xf32, #tpu.memory_space<vmem>>, vector<1x128xf32>
    %50 = vector.broadcast %49 : vector<1x128xf32> to vector<256x128xf32>
    %51 = arith.addf %48, %50 : vector<256x128xf32>
    %cst_33 = arith.constant 0.000000e+00 : f32
    %52 = vector.broadcast %cst_33 : f32 to vector<256x128xf32>
    %53 = arith.maximumf %51, %52 : vector<256x128xf32>
    %c0_34 = arith.constant 0 : index
    %c0_35 = arith.constant 0 : index
    %54 = vector.load %arg5[%c0_34, %c0_35] : memref<256x128xf32, #tpu.memory_space<vmem>>, vector<256x128xf32>
    tpu.vector_store %arg5[%c0_34, %c0_35], %53 {strides = array<i32>} : memref<256x128xf32, #tpu.memory_space<vmem>>, vector<256x128xf32>,
    return
  }
  func.func @transform_0(%arg0: i32) -> (i32, i32) {
    %c0_i32 = arith.constant 0 : i32
    %c0_i32_0 = arith.constant 0 : i32
    return %arg0, %c0_i32 : i32, i32
  }
  func.func @transform_1(%arg0: i32) -> (i32, i32) {
    %c1_i32 = arith.constant 1 : i32
    %0 = arith.addi %arg0, %c1_i32 : i32
    %c4_i32 = arith.constant 4 : i32
    %1 = arith.muli %0, %c4_i32 : i32
    %c0_i32 = arith.constant 0 : i32
    %c0_i32_0 = arith.constant 0 : i32
    return %1, %c0_i32 : i32, i32
  }
  func.func @transform_2(%arg0: i32) -> (i32, i32, i32) {
    %c0_i32 = arith.constant 0 : i32
    %c0_i32_0 = arith.constant 0 : i32
    %c0_i32_1 = arith.constant 0 : i32
    %c0_i32_2 = arith.constant 0 : i32
    return %c0_i32, %c0_i32_0, %c0_i32_1 : i32, i32, i32
  }
  func.func @transform_3(%arg0: i32) -> (i32, i32) {
    %c0_i32 = arith.constant 0 : i32
    %c0_i32_0 = arith.constant 0 : i32
    %c0_i32_1 = arith.constant 0 : i32
    return %c0_i32, %c0_i32_0 : i32, i32
  }
  func.func @transform_4(%arg0: i32) -> (i32, i32) {
    %c0_i32 = arith.constant 0 : i32
    %c0_i32_0 = arith.constant 0 : i32
    return %arg0, %c0_i32 : i32, i32
  }
}

module attributes {stable_mosaic.version = 11 : i64} {
  func.func @_matmul_bias_kernel(%arg0: i32, %arg1: memref<256x128xf32, #tpu.memory_space<vmem>>, %arg2: memref<128x128xf32, #tpu.memory_space<vmem>>, %arg3: memref<1x128xf32, #tpu.memory_space<vmem>>, %arg4: memref<256x128xf32, #tpu.memory_space<vmem>>) attributes {dimension_semantics = [#tpu.dimension_semantics<parallel>], iteration_bounds = array<i64: 4>, scalar_prefetch = 0 : i64, scratch_operands = 0 : i64, tpu.core_type = #tpu.core_type<tc>, window_params = [{transform_indices = @transform_0, window_bounds = array<i64: 256, 128>}, {pipeline_mode = #tpu.pipeline_mode<synchronous>, transform_indices = @transform_1, window_bounds = array<i64: 128, 128>}, {pipeline_mode = #tpu.pipeline_mode<synchronous>, transform_indices = @transform_2, window_bounds = array<i64: 1, 128>}, {transform_indices = @transform_3, window_bounds = array<i64: 256, 128>}]} {
    %c0 = arith.constant 0 : index
    %c0_0 = arith.constant 0 : index
    %0 = vector.load %arg1[%c0, %c0_0] : memref<256x128xf32, #tpu.memory_space<vmem>>, vector<256x128xf32>
    %c0_1 = arith.constant 0 : index
    %c0_2 = arith.constant 0 : index
    %1 = vector.load %arg2[%c0_1, %c0_2] : memref<128x128xf32, #tpu.memory_space<vmem>>, vector<128x128xf32>
    %cst = arith.constant dense<0.000000e+00> : vector<256x128xf32>
    %2 = tpu.matmul %0, %1, %cst {dimension_numbers = #tpu.dot_dimension_numbers<[1], [0], [0], [1], [0, 0, 1, 1], [], []>} : vector<256x128xf32>, vector<128x128xf32>, vector<256x128xf32> -> vector<256x128xf32>
    %c0_3 = arith.constant 0 : index
    %c0_4 = arith.constant 0 : index
    %3 = vector.load %arg3[%c0_3, %c0_4] : memref<1x128xf32, #tpu.memory_space<vmem>>, vector<1x128xf32>
    %4 = vector.broadcast %3 : vector<1x128xf32> to vector<256x128xf32>
    %5 = arith.addf %2, %4 : vector<256x128xf32>
    %c0_5 = arith.constant 0 : index
    %c0_6 = arith.constant 0 : index
    %6 = vector.load %arg4[%c0_5, %c0_6] : memref<256x128xf32, #tpu.memory_space<vmem>>, vector<256x128xf32>
    tpu.vector_store %arg4[%c0_5, %c0_6], %5 {strides = array<i32>} : memref<256x128xf32, #tpu.memory_space<vmem>>, vector<256x128xf32>,
    return
  }
  func.func @transform_0(%arg0: i32) -> (i32, i32) {
    %c0_i32 = arith.constant 0 : i32
    %c0_i32_0 = arith.constant 0 : i32
    return %arg0, %c0_i32 : i32, i32
  }
  func.func @transform_1(%arg0: i32) -> (i32, i32) {
    %c0_i32 = arith.constant 0 : i32
    %c0_i32_0 = arith.constant 0 : i32
    %c0_i32_1 = arith.constant 0 : i32
    return %c0_i32, %c0_i32_0 : i32, i32
  }
  func.func @transform_2(%arg0: i32) -> (i32, i32) {
    %c0_i32 = arith.constant 0 : i32
    %c0_i32_0 = arith.constant 0 : i32
    %c0_i32_1 = arith.constant 0 : i32
    return %c0_i32, %c0_i32_0 : i32, i32
  }
  func.func @transform_3(%arg0: i32) -> (i32, i32) {
    %c0_i32 = arith.constant 0 : i32
    %c0_i32_0 = arith.constant 0 : i32
    return %arg0, %c0_i32 : i32, i32
  }
}

</mosaic_0001>

<llo_original>
// kernel: _lambda_.8
$region0: #{_lambda_.8}
  #allocation0 [shape = 'u32[]', space=smem, size = 0x4, offset = 0x4, fixed_abs, tag = 'smem constant byte address 0x4 - core index']
  #allocation1 [shape = 'u32[144,128]{1,0:T(1,128)}', space=vmem, size = 0x12000, scoped, tag = 'internal scratch']
  %s0 = inlined_call_operand.vmem [shape: f32[16,32], index: 0, kind: input, shape index: {}]
  %s1 = inlined_call_operand.hbm [shape: f32[32,256], index: 1, kind: input, shape index: {}]
  %s2 = inlined_call_operand.vmem [shape: f32[1,256], index: 2, kind: input, shape index: {}]
  %s3 = inlined_call_operand.vmem [shape: f32[16,256], index: 3, kind: output, shape index: {}]
  %s4 = sld [smem:[#allocation0]]
  $region26: #{_lambda_.8} parent=0
    _
  %s6 = ssub.s32 1, %s4
  %s7 = scalar_select 0, %s6, %s4
  $region1: #{_lambda_.8} parent=0
    #allocation2 [shape = 'u8[32768]{0}', space=vmem, size = 0x8000, scoped, tag = 'input window, operand 1, single buffered']
    #allocation3 [shape = 's32[1]{0}', space=sflag, size = 0x4, scoped, tag = 'scoped memory for _lambda_.8']
    %8 = vsyncpa [#allocation3], 0
    // Predicated region
    $region2: #{_lambda_.8} parent=1 // pred_check
      _
    $region3: #{_lambda_.8} parent=1 // pred_check_branch
      %10 = sbr.rel (0) target = $region5
    $region4: #{_lambda_.8} parent=1 // pred_region
      _
    $region5: #{_lambda_.8} parent=1 // pred_fallthru
      _
    // Predicated region
    $region6: #{_lambda_.8} parent=1 // pred_check
      _
    $region7: #{_lambda_.8} parent=1 // pred_check_branch
      %12 = sbr.rel (0) target = $region9
    $region8: #{_lambda_.8} parent=1 // pred_region
      %s14 = ssub.s32 1024, 1024
      %15 = vsyncadd [#allocation3], %s14
      %s16 = sshll.u32 [#allocation2], 4
      %s17 = int_to_ptr.vmem [resolvable:$true] %s16
      %22 = dma.hbm_to_vmem [thread:$0]  %s1, 1024, %s17, [#allocation3], 256, 256, 16
    $region9: #{_lambda_.8} parent=1 // pred_fallthru
      _
    // Predicated region
    $region10: #{_lambda_.8} parent=1 // pred_check
      _
    $region11: #{_lambda_.8} parent=1 // pred_check_branch
      %24 = sbr.rel (0) target = $region13
    $region12: #{_lambda_.8} parent=1 // pred_region
      _
    $region13: #{_lambda_.8} parent=1 // pred_fallthru
      _
    // Predicated region
    $region14: #{_lambda_.8} parent=1 // pred_check
      _
    $region15: #{_lambda_.8} parent=1 // pred_check_branch
      %26 = sbr.rel (0) target = $region17
    $region16: #{_lambda_.8} parent=1 // pred_region
      %27 = dma.done [#allocation3], 1024
    $region17: #{_lambda_.8} parent=1 // pred_fallthru
      _
    %v28 = vld [vmem:[%s0] sm:$0xff]
    %v29 = vld [vmem:[%s0 + $0x8] sm:$0xff]
    %v30 = vld [vmem:[#allocation2] sm:$0xff]
    %v31 = vld [vmem:[#allocation2 + $0x8] sm:$0xff]
    %v32 = vld [vmem:[#allocation2 + $0x10] sm:$0xff]
    %v33 = vld [vmem:[#allocation2 + $0x18] sm:$0xff]
    %v34 = vld [vmem:[#allocation2 + $0x20] sm:$0xff]
    %v35 = vld [vmem:[#allocation2 + $0x28] sm:$0xff]
    %v36 = vld [vmem:[#allocation2 + $0x30] sm:$0xff]
    %v37 = vld [vmem:[#allocation2 + $0x38] sm:$0xff]
    %v38 = vld [vmem:[%s2] sm:$0x3]
    %v40 = vlaneseq
    %v41 = vshrl.u32 %v40, 7
    %v42 = vsub.s32 0, %v41
    %v43 = vrot.slane %v38, %v42
    %v44 = vlaneseq
    %v45 = vshrl.u32 %v44, 7
    %v46 = vsub.s32 1, %v45
    %v47 = vrot.slane %v38, %v46
    %vm50 = vcmask 261120
    %v52 = vsel %vm50, %v28, 0
    %v55 = vsel %vm50, %v29, 0
    %57 = vmatprep.subr.mxu0 0.0
    %58 = vmatpush1.msra.mxu0 0.0
    %59 = vmatprep.subr.mxu0 0.0
    %60 = vmatpush1.msra.mxu0 0.0
    %61 = vmatprep.subr.mxu0 0.0
    %62 = vmatpush1.msra.mxu0 0.0
    %63 = vmatprep.subr.mxu0 0.0
    %64 = vmatpush1.msra.mxu0 0.0
    %65 = vmatprep.subr.mxu0 0.0
    %66 = vmatpush1.msra.mxu0 0.0
    %67 = vmatprep.subr.mxu0 0.0
    %68 = vmatpush1.msra.mxu0 0.0
    %69 = vmatprep.subr.mxu0 0.0
    %70 = vmatpush1.msra.mxu0 0.0
    %71 = vmatprep.subr.mxu0 0.0
    %72 = vmatpush1.msra.mxu0 0.0
    %73 = vmatprep.subr.mxu0 0.0
    %74 = vmatpush1.msra.mxu0 0.0
    %75 = vmatprep.subr.mxu0 0.0
    %76 = vmatpush1.msra.mxu0 0.0
    %77 = vmatprep.subr.mxu0 0.0
    %78 = vmatpush1.msra.mxu0 0.0
    %79 = vmatprep.subr.mxu0 0.0
    %80 = vmatpush1.msra.mxu0 0.0
    %81 = vmatprep.subr.mxu0 %v37
    %82 = vmatpush1.msra.mxu0 %v36
    %83 = vmatprep.subr.mxu0 %v35
    %84 = vmatpush1.msra.mxu0 %v34
    %85 = vmatprep.subr.mxu0 %v33
    %86 = vmatpush1.msra.mxu0 %v32
    %87 = vmatprep.subr.mxu0 %v31
    %88 = vmatpush1.msra.mxu0 %v30
    %89 = vmatprep.subr.mxu0 0.0
    %90 = vmatpush2.msra.mxu0 0.0
    %91 = vmatprep.subr.mxu0 0.0
    %92 = vmatpush2.msra.mxu0 0.0
    %93 = vmatprep.subr.mxu0 0.0
    %94 = vmatpush2.msra.mxu0 0.0
    %95 = vmatprep.subr.mxu0 0.0
    %96 = vmatpush2.msra.mxu0 0.0
    %97 = vmatprep.subr.mxu0 0.0
    %98 = vmatpush2.msra.mxu0 0.0
    %99 = vmatprep.subr.mxu0 0.0
    %100 = vmatpush2.msra.mxu0 0.0
    %101 = vmatprep.subr.mxu0 0.0
    %102 = vmatpush2.msra.mxu0 0.0
    %103 = vmatprep.subr.mxu0 0.0
    %104 = vmatpush2.msra.mxu0 0.0
    %105 = vmatprep.subr.mxu0 0.0
    %106 = vmatpush2.msra.mxu0 0.0
    %107 = vmatprep.subr.mxu0 0.0
    %108 = vmatpush2.msra.mxu0 0.0
    %109 = vmatprep.subr.mxu0 0.0
    %110 = vmatpush2.msra.mxu0 0.0
    %111 = vmatprep.subr.mxu0 0.0
    %112 = vmatpush2.msra.mxu0 0.0
    %113 = vmatprep.subr.mxu0 0.0
    %114 = vmatpush2.msra.mxu0 0.0
    %115 = vmatprep.subr.mxu0 0.0
    %116 = vmatpush2.msra.mxu0 0.0
    %117 = vmatprep.subr.mxu0 0.0
    %118 = vmatpush2.msra.mxu0 0.0
    %119 = vmatprep.subr.mxu0 0.0
    %120 = vmatpush2.msra.mxu0 0.0
    %121 = vmatprep.mubr.f32.mxu0 0.0
    %122 = vmatmul.mubr.f32.gmra.mxu0 %v52
    %v123 = vpop.f32.mrf.mxu0
    %v124 = vadd.f32 %v43, %v123
    %v125 = vpop.f32.mrf.mxu0
    %v126 = vadd.f32 %v47, %v125
    %127 = vmatprep.mubr.f32.mxu0 0.0
    %128 = vmatmul.mubr.f32.gmra.mxu0 %v55
    %v129 = vpop.f32.mrf.mxu0
    %v130 = vadd.f32 %v43, %v129
    %v131 = vpop.f32.mrf.mxu0
    %v132 = vadd.f32 %v47, %v131
    %133 = vdwg.mxu0
    %v134 = vmax.f32 %v124, 0.0
    %v135 = vmax.f32 %v126, 0.0
    %v136 = vmax.f32 %v130, 0.0
    %v137 = vmax.f32 %v132, 0.0
    %138 = vst [vmem:[%s3] sm:$0xff] %v134
    %139 = vst [vmem:[%s3 + $0x8] sm:$0xff] %v135
    %140 = vst [vmem:[%s3 + $0x10] sm:$0xff] %v136
    %141 = vst [vmem:[%s3 + $0x18] sm:$0xff] %v137
    // Predicated region
    $region18: #{_lambda_.8} parent=1 // pred_check
      _
    $region19: #{_lambda_.8} parent=1 // pred_check_branch
      %143 = sbr.rel (0) target = $region21
    $region20: #{_lambda_.8} parent=1 // pred_region
      _
    $region21: #{_lambda_.8} parent=1 // pred_fallthru
      _
    // Predicated region
    $region22: #{_lambda_.8} parent=1 // pred_check
      _
    $region23: #{_lambda_.8} parent=1 // pred_check_branch
      %145 = sbr.rel (0) target = $region25
    $region24: #{_lambda_.8} parent=1 // pred_region
      _
    $region25: #{_lambda_.8} parent=1 // pred_fallthru
      _
    %146 = vsyncpa [#allocation3], 1

// kernel: _lambda_.9
$region0: #{_lambda_.9}
  #allocation0 [shape = 'u32[]', space=smem, size = 0x4, offset = 0x4, fixed_abs, tag = 'smem constant byte address 0x4 - core index']
  #allocation1 [shape = 'u32[144,128]{1,0:T(1,128)}', space=vmem, size = 0x12000, scoped, tag = 'internal scratch']
  %s0 = inlined_call_operand.vmem [shape: f32[128,16], index: 0, kind: input, shape index: {}, may-alias: {0,1}]
  %s1 = inlined_call_operand.vmem [shape: f32[128,16], index: 1, kind: input, shape index: {}, may-alias: {0,1}]
  %s2 = inlined_call_operand.vmem [shape: f32[9,16,128], index: 2, kind: input, shape index: {}]
  %s3 = inlined_call_operand.vmem [shape: f32[1,128], index: 3, kind: input, shape index: {}]
  %s4 = inlined_call_operand.vmem [shape: f32[96,128], index: 4, kind: output, shape index: {}]
  %s5 = sld [smem:[#allocation0]]
  $region49: #{_lambda_.9} parent=0
    _
  %s7 = ssub.s32 1, %s5
  %s8 = scalar_select 0, %s7, %s5
  loop: start=0, step=1, limit=5
  $region2: #{_lambda_.9} parent=0 // loop_pre_header
    _
  $region3: #{_lambda_.9} parent=0 // loop_header
    %s10 = sphi 0, %s14
    %p11 = scmp.ge.s32.totalorder %s10, 5
    %s20 = sphi 0, %s22
    %s23 = sphi 0, %s20
    %s24 = sphi 0, %s23
    %s40 = sphi 0, %s24
    %s48 = sphi 0, %s50
    %s51 = sphi 0, %s48
    %s52 = sphi 0, %s51
    %s68 = sphi 0, %s52
    %s72 = sphi 0, %s72
    %s74 = sphi 0, %s72
    %s75 = sphi 0, %s74
    %s89 = sphi 0, %s75
    %s93 = sphi 0, %s93
    %s95 = sphi 0, %s93
    %s96 = sphi 0, %s95
    %s110 = sphi 0, %s96
    %s116 = sphi 0, %s118
    %s119 = sphi 0, %s116
    %s120 = sphi 0, %s119
    %s136 = sphi 0, %s120
  $region4: #{_lambda_.9} parent=0 // loop_header_branch
    %13 = sbr.rel (%p11) target = $region8
  $region5: #{_lambda_.9} parent=0 // loop_body
    %s15 = ssub.s32 %s10, 1
    %s16 = ssub.s32 %s10, 2
    %s17 = sadd.s32 %s10, 1
    %s18 = ssub.s32 %s10, %s17
    %p19 = scmp.eq.s32.totalorder %s18, 0
    %s21 = sadd.s32 %s20, 1
    %s22 = scalar_select %p19, %s20, %s21
    %p25 = pneg %p19
    %p26 = scmp.eq.s32.totalorder %s10, 2
    %p27 = por %p25, %p26
    %p28 = scmp.ne.s32.totalorder %s20, %s23
    %p29 = scmp.eq.s32.totalorder %s10, 0
    %p30 = por %p28, %p29
    %p31 = scmp.ne.s32.totalorder %s20, %s23
    %p32 = scmp.eq.s32.totalorder %s15, 2
    %p33 = por %p31, %p32
    %p34 = scmp.ne.s32.totalorder %s23, %s24
    %p35 = scmp.eq.s32.totalorder %s15, 0
    %p36 = por %p34, %p35
    %p37 = scmp.ne.s32.totalorder %s23, %s24
    %p38 = scmp.eq.s32.totalorder %s16, 2
    %p39 = por %p37, %p38
    %p41 = scmp.ne.s32.totalorder %s24, %s40
    %p42 = scmp.eq.s32.totalorder %s16, 0
    %p43 = por %p41, %p42
    %s44 = sadd.s32 %s10, 1
    %s45 = sadd.s32 %s17, 1
    %s46 = ssub.s32 %s44, %s45
    %p47 = scmp.eq.s32.totalorder %s46, 0
    %s49 = sadd.s32 %s48, 1
    %s50 = scalar_select %p47, %s48, %s49
    %p53 = pneg %p47
    %p54 = scmp.eq.s32.totalorder %s10, 2
    %p55 = por %p53, %p54
    %p56 = scmp.ne.s32.totalorder %s48, %s51
    %p57 = scmp.eq.s32.totalorder %s10, 0
    %p58 = por %p56, %p57
    %p59 = scmp.ne.s32.totalorder %s48, %s51
    %p60 = scmp.eq.s32.totalorder %s15, 2
    %p61 = por %p59, %p60
    %p62 = scmp.ne.s32.totalorder %s51, %s52
    %p63 = scmp.eq.s32.totalorder %s15, 0
    %p64 = por %p62, %p63
    %p65 = scmp.ne.s32.totalorder %s51, %s52
    %p66 = scmp.eq.s32.totalorder %s16, 2
    %p67 = por %p65, %p66
    %p69 = scmp.ne.s32.totalorder %s52, %s68
    %p70 = scmp.eq.s32.totalorder %s16, 0
    %p71 = por %p69, %p70
    %s73 = sadd.s32 %s72, 1
    %p76 = scmp.eq.s32.totalorder %s10, 2
    %p77 = scmp.ne.s32.totalorder %s72, %s74
    %p78 = scmp.eq.s32.totalorder %s10, 0
    %p79 = por %p77, %p78
    %p80 = scmp.ne.s32.totalorder %s72, %s74
    %p81 = scmp.eq.s32.totalorder %s15, 2
    %p82 = por %p80, %p81
    %p83 = scmp.ne.s32.totalorder %s74, %s75
    %p84 = scmp.eq.s32.totalorder %s15, 0
    %p85 = por %p83, %p84
    %p86 = scmp.ne.s32.totalorder %s74, %s75
    %p87 = scmp.eq.s32.totalorder %s16, 2
    %p88 = por %p86, %p87
    %p90 = scmp.ne.s32.totalorder %s75, %s89
    %p91 = scmp.eq.s32.totalorder %s16, 0
    %p92 = por %p90, %p91
    %s94 = sadd.s32 %s93, 1
    %p97 = scmp.eq.s32.totalorder %s10, 2
    %p98 = scmp.ne.s32.totalorder %s93, %s95
    %p99 = scmp.eq.s32.totalorder %s10, 0
    %p100 = por %p98, %p99
    %p101 = scmp.ne.s32.totalorder %s93, %s95
    %p102 = scmp.eq.s32.totalorder %s15, 2
    %p103 = por %p101, %p102
    %p104 = scmp.ne.s32.totalorder %s95, %s96
    %p105 = scmp.eq.s32.totalorder %s15, 0
    %p106 = por %p104, %p105
    %p107 = scmp.ne.s32.totalorder %s95, %s96
    %p108 = scmp.eq.s32.totalorder %s16, 2
    %p109 = por %p107, %p108
    %p111 = scmp.ne.s32.totalorder %s96, %s110
    %p112 = scmp.eq.s32.totalorder %s16, 0
    %p113 = por %p111, %p112
    %s114 = ssub.s32 %s10, %s17
    %p115 = scmp.eq.s32.totalorder %s114, 0
    %s117 = sadd.s32 %s116, 1
    %s118 = scalar_select %p115, %s116, %s117
    %p121 = pneg %p115
    %p122 = scmp.eq.s32.totalorder %s10, 2
    %p123 = por %p121, %p122
    %p124 = scmp.ne.s32.totalorder %s116, %s119
    %p125 = scmp.eq.s32.totalorder %s10, 0
    %p126 = por %p124, %p125
    %p127 = scmp.ne.s32.totalorder %s116, %s119
    %p128 = scmp.eq.s32.totalorder %s15, 2
    %p129 = por %p127, %p128
    %p130 = scmp.ne.s32.totalorder %s119, %s120
    %p131 = scmp.eq.s32.totalorder %s15, 0
    %p132 = por %p130, %p131
    %p133 = scmp.ne.s32.totalorder %s119, %s120
    %p134 = scmp.eq.s32.totalorder %s16, 2
    %p135 = por %p133, %p134
    %p137 = scmp.ne.s32.totalorder %s120, %s136
    %p138 = scmp.eq.s32.totalorder %s16, 0
    %p139 = por %p137, %p138
    %p140 = scmp.le.s32.totalorder 1, %s10
    %p141 = scmp.lt.s32.totalorder %s10, 4
    %p142 = pnand %p140, %p141
    %p143 = pneg %p142
    // Predicated region
    $region9: #{_lambda_.9} parent=5 // pred_check
      _
    $region10: #{_lambda_.9} parent=5 // pred_check_branch
      %145 = sbr.rel (%p142) target = $region12
    $region11: #{_lambda_.9} parent=5 // pred_region
      %s146 = ssub.s32 %s10, 1
      // Predicated region
      $region13: #{_lambda_.9} parent=11 // pred_check
        %p147 = pneg %p85
      $region14: #{_lambda_.9} parent=11 // pred_check_branch
        %149 = sbr.rel (%p147) target = $region16
      $region15: #{_lambda_.9} parent=11 // pred_region
        _
      $region16: #{_lambda_.9} parent=11 // pred_fallthru
        _
      // Predicated region
      $region17: #{_lambda_.9} parent=11 // pred_check
        %p150 = pneg %p106
      $region18: #{_lambda_.9} parent=11 // pred_check_branch
        %152 = sbr.rel (%p150) target = $region20
      $region19: #{_lambda_.9} parent=11 // pred_region
        _
      $region20: #{_lambda_.9} parent=11 // pred_fallthru
        _
    $region12: #{_lambda_.9} parent=5 // pred_fallthru
      _
    %p153 = scmp.lt.s32.totalorder %s10, 3
    // Predicated region
    $region21: #{_lambda_.9} parent=5 // pred_check
      %p154 = pneg %p153
    $region22: #{_lambda_.9} parent=5 // pred_check_branch
      %156 = sbr.rel (%p154) target = $region24
    $region23: #{_lambda_.9} parent=5 // pred_region
      // Predicated region
      $region25: #{_lambda_.9} parent=23 // pred_check
        %p157 = pneg %p30
      $region26: #{_lambda_.9} parent=23 // pred_check_branch
        %159 = sbr.rel (%p157) target = $region28
      $region27: #{_lambda_.9} parent=23 // pred_region
        %s160 = smul.u32 4, %s10
        %p161 = scmp.lt.s32.totalorder %s160, 15
        %s162 = scalar_select %p161, %s160, 15
        %s163 = smul.addr %s162, 8
        %s164 = scalar_lea.vmem %s0, %s163
        %s165 = smul.u32 4, %s10
      $region28: #{_lambda_.9} parent=23 // pred_fallthru
        _
      // Predicated region
      $region29: #{_lambda_.9} parent=23 // pred_check
        %p166 = pneg %p58
      $region30: #{_lambda_.9} parent=23 // pred_check_branch
        %168 = sbr.rel (%p166) target = $region32
      $region31: #{_lambda_.9} parent=23 // pred_region
        %s169 = sadd.s32 %s10, 1
        %s170 = smul.u32 4, %s169
        %p171 = scmp.lt.s32.totalorder %s170, 15
        %s172 = scalar_select %p171, %s170, 15
        %s173 = smul.addr %s172, 8
        %s174 = scalar_lea.vmem %s1, %s173
        %s175 = sadd.s32 %s10, 1
        %s176 = smul.u32 4, %s175
      $region32: #{_lambda_.9} parent=23 // pred_fallthru
        _
    $region24: #{_lambda_.9} parent=5 // pred_fallthru
      _
    %p177 = scmp.le.s32.totalorder 1, %s10
    %p178 = scmp.lt.s32.totalorder %s10, 4
    %p179 = pnand %p177, %p178
    %p180 = pneg %p179
    // Predicated region
    $region33: #{_lambda_.9} parent=5 // pred_check
      _
    $region34: #{_lambda_.9} parent=5 // pred_check_branch
      %182 = sbr.rel (%p179) target = $region36
    $region35: #{_lambda_.9} parent=5 // pred_region
      %s183 = ssub.s32 %s10, 1
      %s184 = smul.u32 4, %s15
      %p185 = scmp.lt.s32.totalorder %s184, 15
      %s186 = scalar_select %p185, %s184, 15
      %s187 = smul.addr %s186, 8
      %s188 = scalar_lea.vmem %s0, %s187
      %p189 = pneg %p36
      %p190 = pneg %p33
      %s191 = sadd.s32 %s15, 1
      %s192 = smul.u32 4, %s191
      %p193 = scmp.lt.s32.totalorder %s192, 15
      %s194 = scalar_select %p193, %s192, 15
      %s195 = smul.addr %s194, 8
      %s196 = scalar_lea.vmem %s1, %s195
      %p197 = pneg %p64
      %p198 = pneg %p61
      %p199 = pneg %p85
      %p200 = pneg %p82
      %p201 = pneg %p106
      %p202 = pneg %p103
      %p203 = pneg %p132
      %p204 = pneg %p129
      %s205 = smul.u32 4, %s15
      %p206 = scmp.lt.s32.totalorder %s205, 11
      %s207 = scalar_select %p206, %s205, 11
      %s208 = smul.addr %s207, 8
      %s209 = scalar_lea.vmem %s4, %s208
      %s210 = smul.u32 4, %s15
      %p211 = scmp.lt.s32.totalorder %s210, 15
      %s212 = scalar_select %p211, %s210, 15
      %s213 = smul.addr %s212, 8
      %s214 = scalar_lea.vmem %s0, %s213
      %s215 = smul.u32 4, %s15
      %s216 = sadd.s32 %s15, 1
      %s217 = smul.u32 4, %s216
      %p218 = scmp.lt.s32.totalorder %s217, 15
      %s219 = scalar_select %p218, %s217, 15
      %s220 = smul.addr %s219, 8
      %s221 = scalar_lea.vmem %s1, %s220
      %s222 = sadd.s32 %s15, 1
      %s223 = smul.u32 4, %s222
      %s224 = smul.u32 4, %s15
      %p225 = scmp.lt.s32.totalorder %s224, 11
      %s226 = scalar_select %p225, %s224, 11
      %s227 = smul.addr %s226, 8
      %s228 = scalar_lea.vmem %s4, %s227
      %s229 = smul.u32 4, %s15
      %v230 = vld [vmem:[%s214] sm:$0xff]
      %v231 = vld [vmem:[%s214 + $0x8] sm:$0xff]
      %v232 = vld [vmem:[%s214 + $0x10] sm:$0xff]
      %v233 = vld [vmem:[%s214 + $0x18] sm:$0xff]
      %v234 = vld [vmem:[%s221] sm:$0xff]
      %v235 = vld [vmem:[%s221 + $0x8] sm:$0xff]
      %v236 = vld [vmem:[%s221 + $0x10] sm:$0xff]
      %v237 = vld [vmem:[%s2] sm:$0xff]
      %v238 = vld [vmem:[%s2 + $0x8] sm:$0xff]
      %s239 = scalar_lea.vmem %s2, 16
      %v240 = vld [vmem:[%s239] sm:$0xff]
      %v241 = vld [vmem:[%s239 + $0x8] sm:$0xff]
      %vm247 = vcmask 1046528
      %v248 = vrot.slane %v230, 1
      %v249 = vrot.slane %v231, 1
      %v250 = vsel %vm247, %v248, %v249
      %v251 = vrot.slane %v232, 1
      %v252 = vsel %vm247, %v249, %v251
      %v253 = vrot.slane %v233, 1
      %v254 = vsel %vm247, %v251, %v253
      %v255 = vrot.slane %v234, 1
      %v256 = vsel %vm247, %v253, %v255
      %vm257 = vcmask 130048
      %v258 = vsel %vm257, %v250, 0
      %v260 = vsel %vm257, %v252, 0
      %v262 = vsel %vm257, %v254, 0
      %v264 = vsel %vm257, %v256, 0
      %266 = vmatprep.subr.mxu0 0.0
      %267 = vmatpush1.msra.mxu0 0.0
      %268 = vmatprep.subr.mxu0 0.0
      %269 = vmatpush1.msra.mxu0 0.0
      %270 = vmatprep.subr.mxu0 0.0
      %271 = vmatpush1.msra.mxu0 0.0
      %272 = vmatprep.subr.mxu0 0.0
      %273 = vmatpush1.msra.mxu0 0.0
      %274 = vmatprep.subr.mxu0 0.0
      %275 = vmatpush1.msra.mxu0 0.0
      %276 = vmatprep.subr.mxu0 0.0
      %277 = vmatpush1.msra.mxu0 0.0
      %278 = vmatprep.subr.mxu0 0.0
      %279 = vmatpush1.msra.mxu0 0.0
      %280 = vmatprep.subr.mxu0 0.0
      %281 = vmatpush1.msra.mxu0 0.0
      %282 = vmatprep.subr.mxu0 0.0
      %283 = vmatpush1.msra.mxu0 0.0
      %284 = vmatprep.subr.mxu0 0.0
      %285 = vmatpush1.msra.mxu0 0.0
      %286 = vmatprep.subr.mxu0 0.0
      %287 = vmatpush1.msra.mxu0 0.0
      %288 = vmatprep.subr.mxu0 0.0
      %289 = vmatpush1.msra.mxu0 0.0
      %290 = vmatprep.subr.mxu0 0.0
      %291 = vmatpush1.msra.mxu0 0.0
      %292 = vmatprep.subr.mxu0 0.0
      %293 = vmatpush1.msra.mxu0 0.0
      %294 = vmatprep.subr.mxu0 0.0
      %295 = vmatpush1.msra.mxu0 %v241
      %296 = vmatprep.subr.mxu0 0.0
      %297 = vmatpush1.msra.mxu0 %v240
      %298 = vmatprep.subr.mxu0 0.0
      %299 = vmatpush2.msra.mxu0 0.0
      %300 = vmatprep.subr.mxu0 0.0
      %301 = vmatpush2.msra.mxu0 0.0
      %302 = vmatprep.subr.mxu0 0.0
      %303 = vmatpush2.msra.mxu0 0.0
      %304 = vmatprep.subr.mxu0 0.0
      %305 = vmatpush2.msra.mxu0 0.0
      %306 = vmatprep.subr.mxu0 0.0
      %307 = vmatpush2.msra.mxu0 0.0
      %308 = vmatprep.subr.mxu0 0.0
      %309 = vmatpush2.msra.mxu0 0.0
      %310 = vmatprep.subr.mxu0 0.0
      %311 = vmatpush2.msra.mxu0 0.0
      %312 = vmatprep.subr.mxu0 0.0
      %313 = vmatpush2.msra.mxu0 0.0
      %314 = vmatprep.subr.mxu0 0.0
      %315 = vmatpush2.msra.mxu0 0.0
      %316 = vmatprep.subr.mxu0 0.0
      %317 = vmatpush2.msra.mxu0 0.0
      %318 = vmatprep.subr.mxu0 0.0
      %319 = vmatpush2.msra.mxu0 0.0
      %320 = vmatprep.subr.mxu0 0.0
      %321 = vmatpush2.msra.mxu0 0.0
      %322 = vmatprep.subr.mxu0 0.0
      %323 = vmatpush2.msra.mxu0 0.0
      %324 = vmatprep.subr.mxu0 0.0
      %325 = vmatpush2.msra.mxu0 0.0
      %326 = vmatprep.subr.mxu0 0.0
      %327 = vmatpush2.msra.mxu0 0.0
      %328 = vmatprep.subr.mxu0 0.0
      %329 = vmatpush2.msra.mxu0 0.0
      %330 = vmatprep.mubr.f32.mxu0 0.0
      %331 = vmatmul.mubr.f32.gmra.mxu0 %v258
      %v332 = vpop.f32.mrf.mxu0
      %v333 = vadd.f32 0.0, %v332
      %v334 = vpop.f32.mrf.mxu0
      %335 = vmatprep.mubr.f32.mxu0 0.0
      %336 = vmatmul.mubr.f32.gmra.mxu0 %v260
      %v337 = vpop.f32.mrf.mxu0
      %v338 = vadd.f32 0.0, %v337
      %v339 = vpop.f32.mrf.mxu0
      %340 = vmatprep.mubr.f32.mxu0 0.0
      %341 = vmatmul.mubr.f32.gmra.mxu0 %v262
      %v342 = vpop.f32.mrf.mxu0
      %v343 = vadd.f32 0.0, %v342
      %v344 = vpop.f32.mrf.mxu0
      %345 = vmatprep.mubr.f32.mxu0 0.0
      %346 = vmatmul.mubr.f32.gmra.mxu0 %v264
      %v347 = vpop.f32.mrf.mxu0
      %v348 = vadd.f32 0.0, %v347
      %v349 = vpop.f32.mrf.mxu0
      %350 = vdwg.mxu0
      %v351 = vsel %vm257, %v230, 0
      %v353 = vsel %vm257, %v231, 0
      %v355 = vsel %vm257, %v232, 0
      %v357 = vsel %vm257, %v233, 0
      %359 = vmatprep.subr.mxu0 0.0
      %360 = vmatpush1.msra.mxu0 0.0
      %361 = vmatprep.subr.mxu0 0.0
      %362 = vmatpush1.msra.mxu0 0.0
      %363 = vmatprep.subr.mxu0 0.0
      %364 = vmatpush1.msra.mxu0 0.0
      %365 = vmatprep.subr.mxu0 0.0
      %366 = vmatpush1.msra.mxu0 0.0
      %367 = vmatprep.subr.mxu0 0.0
      %368 = vmatpush1.msra.mxu0 0.0
      %369 = vmatprep.subr.mxu0 0.0
      %370 = vmatpush1.msra.mxu0 0.0
      %371 = vmatprep.subr.mxu0 0.0
      %372 = vmatpush1.msra.mxu0 0.0
      %373 = vmatprep.subr.mxu0 0.0
      %374 = vmatpush1.msra.mxu0 0.0
      %375 = vmatprep.subr.mxu0 0.0
      %376 = vmatpush1.msra.mxu0 0.0
      %377 = vmatprep.subr.mxu0 0.0
      %378 = vmatpush1.msra.mxu0 0.0
      %379 = vmatprep.subr.mxu0 0.0
      %380 = vmatpush1.msra.mxu0 0.0
      %381 = vmatprep.subr.mxu0 0.0
      %382 = vmatpush1.msra.mxu0 0.0
      %383 = vmatprep.subr.mxu0 0.0
      %384 = vmatpush1.msra.mxu0 0.0
      %385 = vmatprep.subr.mxu0 0.0
      %386 = vmatpush1.msra.mxu0 0.0
      %387 = vmatprep.subr.mxu0 0.0
      %388 = vmatpush1.msra.mxu0 %v238
      %389 = vmatprep.subr.mxu0 0.0
      %390 = vmatpush1.msra.mxu0 %v237
      %391 = vmatprep.subr.mxu0 0.0
      %392 = vmatpush2.msra.mxu0 0.0
      %393 = vmatprep.subr.mxu0 0.0
      %394 = vmatpush2.msra.mxu0 0.0
      %395 = vmatprep.subr.mxu0 0.0
      %396 = vmatpush2.msra.mxu0 0.0
      %397 = vmatprep.subr.mxu0 0.0
      %398 = vmatpush2.msra.mxu0 0.0
      %399 = vmatprep.subr.mxu0 0.0
      %400 = vmatpush2.msra.mxu0 0.0
      %401 = vmatprep.subr.mxu0 0.0
      %402 = vmatpush2.msra.mxu0 0.0
      %403 = vmatprep.subr.mxu0 0.0
      %404 = vmatpush2.msra.mxu0 0.0
      %405 = vmatprep.subr.mxu0 0.0
      %406 = vmatpush2.msra.mxu0 0.0
      %407 = vmatprep.subr.mxu0 0.0
      %408 = vmatpush2.msra.mxu0 0.0
      %409 = vmatprep.subr.mxu0 0.0
      %410 = vmatpush2.msra.mxu0 0.0
      %411 = vmatprep.subr.mxu0 0.0
      %412 = vmatpush2.msra.mxu0 0.0
      %413 = vmatprep.subr.mxu0 0.0
      %414 = vmatpush2.msra.mxu0 0.0
      %415 = vmatprep.subr.mxu0 0.0
      %416 = vmatpush2.msra.mxu0 0.0
      %417 = vmatprep.subr.mxu0 0.0
      %418 = vmatpush2.msra.mxu0 0.0
      %419 = vmatprep.subr.mxu0 0.0
      %420 = vmatpush2.msra.mxu0 0.0
      %421 = vmatprep.subr.mxu0 0.0
      %422 = vmatpush2.msra.mxu0 0.0
      %423 = vmatprep.mubr.f32.mxu0 0.0
      %424 = vmatmul.mubr.f32.gmra.mxu0 %v351
      %v425 = vpop.f32.mrf.mxu0
      %v426 = vadd.f32 %v333, %v425
      %v427 = vpop.f32.mrf.mxu0
      %428 = vmatprep.mubr.f32.mxu0 0.0
      %429 = vmatmul.mubr.f32.gmra.mxu0 %v353
      %v430 = vpop.f32.mrf.mxu0
      %v431 = vadd.f32 %v338, %v430
      %v432 = vpop.f32.mrf.mxu0
      %433 = vmatprep.mubr.f32.mxu0 0.0
      %434 = vmatmul.mubr.f32.gmra.mxu0 %v355
      %v435 = vpop.f32.mrf.mxu0
      %v436 = vadd.f32 %v343, %v435
      %v437 = vpop.f32.mrf.mxu0
      %438 = vmatprep.mubr.f32.mxu0 0.0
      %439 = vmatmul.mubr.f32.gmra.mxu0 %v357
      %v440 = vpop.f32.mrf.mxu0
      %v441 = vadd.f32 %v348, %v440
      %v442 = vpop.f32.mrf.mxu0
      %443 = vdwg.mxu0
      %s444 = scalar_lea.vmem %s2, 32
      %v445 = vld [vmem:[%s444] sm:$0xff]
      %v446 = vld [vmem:[%s444 + $0x8] sm:$0xff]
      %vm447 = vcmask 1045504
      %v448 = vrot.slane %v230, 2
      %v449 = vrot.slane %v231, 2
      %v450 = vsel %vm447, %v448, %v449
      %v451 = vrot.slane %v232, 2
      %v452 = vsel %vm447, %v449, %v451
      %v453 = vrot.slane %v233, 2
      %v454 = vsel %vm447, %v451, %v453
      %v455 = vrot.slane %v234, 2
      %v456 = vsel %vm447, %v453, %v455
      %v457 = vsel %vm257, %v450, 0
      %v459 = vsel %vm257, %v452, 0
      %v461 = vsel %vm257, %v454, 0
      %v463 = vsel %vm257, %v456, 0
      %465 = vmatprep.subr.mxu0 0.0
      %466 = vmatpush1.msra.mxu0 0.0
      %467 = vmatprep.subr.mxu0 0.0
      %468 = vmatpush1.msra.mxu0 0.0
      %469 = vmatprep.subr.mxu0 0.0
      %470 = vmatpush1.msra.mxu0 0.0
      %471 = vmatprep.subr.mxu0 0.0
      %472 = vmatpush1.msra.mxu0 0.0
      %473 = vmatprep.subr.mxu0 0.0
      %474 = vmatpush1.msra.mxu0 0.0
      %475 = vmatprep.subr.mxu0 0.0
      %476 = vmatpush1.msra.mxu0 0.0
      %477 = vmatprep.subr.mxu0 0.0
      %478 = vmatpush1.msra.mxu0 0.0
      %479 = vmatprep.subr.mxu0 0.0
      %480 = vmatpush1.msra.mxu0 0.0
      %481 = vmatprep.subr.mxu0 0.0
      %482 = vmatpush1.msra.mxu0 0.0
      %483 = vmatprep.subr.mxu0 0.0
      %484 = vmatpush1.msra.mxu0 0.0
      %485 = vmatprep.subr.mxu0 0.0
      %486 = vmatpush1.msra.mxu0 0.0
      %487 = vmatprep.subr.mxu0 0.0
      %488 = vmatpush1.msra.mxu0 0.0
      %489 = vmatprep.subr.mxu0 0.0
      %490 = vmatpush1.msra.mxu0 0.0
      %491 = vmatprep.subr.mxu0 0.0
      %492 = vmatpush1.msra.mxu0 0.0
      %493 = vmatprep.subr.mxu0 0.0
      %494 = vmatpush1.msra.mxu0 %v446
      %495 = vmatprep.subr.mxu0 0.0
      %496 = vmatpush1.msra.mxu0 %v445
      %497 = vmatprep.subr.mxu0 0.0
      %498 = vmatpush2.msra.mxu0 0.0
      %499 = vmatprep.subr.mxu0 0.0
      %500 = vmatpush2.msra.mxu0 0.0
      %501 = vmatprep.subr.mxu0 0.0
      %502 = vmatpush2.msra.mxu0 0.0
      %503 = vmatprep.subr.mxu0 0.0
      %504 = vmatpush2.msra.mxu0 0.0
      %505 = vmatprep.subr.mxu0 0.0
      %506 = vmatpush2.msra.mxu0 0.0
      %507 = vmatprep.subr.mxu0 0.0
      %508 = vmatpush2.msra.mxu0 0.0
      %509 = vmatprep.subr.mxu0 0.0
      %510 = vmatpush2.msra.mxu0 0.0
      %511 = vmatprep.subr.mxu0 0.0
      %512 = vmatpush2.msra.mxu0 0.0
      %513 = vmatprep.subr.mxu0 0.0
      %514 = vmatpush2.msra.mxu0 0.0
      %515 = vmatprep.subr.mxu0 0.0
      %516 = vmatpush2.msra.mxu0 0.0
      %517 = vmatprep.subr.mxu0 0.0
      %518 = vmatpush2.msra.mxu0 0.0
      %519 = vmatprep.subr.mxu0 0.0
      %520 = vmatpush2.msra.mxu0 0.0
      %521 = vmatprep.subr.mxu0 0.0
      %522 = vmatpush2.msra.mxu0 0.0
      %523 = vmatprep.subr.mxu0 0.0
      %524 = vmatpush2.msra.mxu0 0.0
      %525 = vmatprep.subr.mxu0 0.0
      %526 = vmatpush2.msra.mxu0 0.0
      %527 = vmatprep.subr.mxu0 0.0
      %528 = vmatpush2.msra.mxu0 0.0
      %529 = vmatprep.mubr.f32.mxu0 0.0
      %530 = vmatmul.mubr.f32.gmra.mxu0 %v457
      %v531 = vpop.f32.mrf.mxu0
      %v532 = vadd.f32 0.0, %v531
      %v533 = vpop.f32.mrf.mxu0
      %534 = vmatprep.mubr.f32.mxu0 0.0
      %535 = vmatmul.mubr.f32.gmra.mxu0 %v459
      %v536 = vpop.f32.mrf.mxu0
      %v537 = vadd.f32 0.0, %v536
      %v538 = vpop.f32.mrf.mxu0
      %539 = vmatprep.mubr.f32.mxu0 0.0
      %540 = vmatmul.mubr.f32.gmra.mxu0 %v461
      %v541 = vpop.f32.mrf.mxu0
      %v542 = vadd.f32 0.0, %v541
      %v543 = vpop.f32.mrf.mxu0
      %544 = vmatprep.mubr.f32.mxu0 0.0
      %545 = vmatmul.mubr.f32.gmra.mxu0 %v463
      %v546 = vpop.f32.mrf.mxu0
      %v547 = vadd.f32 0.0, %v546
      %v548 = vpop.f32.mrf.mxu0
      %549 = vdwg.mxu0
      %v550 = vadd.f32 %v426, %v532
      %v551 = vadd.f32 %v431, %v537
      %v552 = vadd.f32 %v436, %v542
      %v553 = vadd.f32 %v441, %v547
      %s554 = scalar_lea.vmem %s2, 48
      %v555 = vld [vmem:[%s554] sm:$0xff]
      %v556 = vld [vmem:[%s554 + $0x8] sm:$0xff]
      %v557 = vsel %vm257, %v234, 0
      %559 = vmatprep.subr.mxu0 0.0
      %560 = vmatpush1.msra.mxu0 0.0
      %561 = vmatprep.subr.mxu0 0.0
      %562 = vmatpush1.msra.mxu0 0.0
      %563 = vmatprep.subr.mxu0 0.0
      %564 = vmatpush1.msra.mxu0 0.0
      %565 = vmatprep.subr.mxu0 0.0
      %566 = vmatpush1.msra.mxu0 0.0
      %567 = vmatprep.subr.mxu0 0.0
      %568 = vmatpush1.msra.mxu0 0.0
      %569 = vmatprep.subr.mxu0 0.0
      %570 = vmatpush1.msra.mxu0 0.0
      %571 = vmatprep.subr.mxu0 0.0
      %572 = vmatpush1.msra.mxu0 0.0
      %573 = vmatprep.subr.mxu0 0.0
      %574 = vmatpush1.msra.mxu0 0.0
      %575 = vmatprep.subr.mxu0 0.0
      %576 = vmatpush1.msra.mxu0 0.0
      %577 = vmatprep.subr.mxu0 0.0
      %578 = vmatpush1.msra.mxu0 0.0
      %579 = vmatprep.subr.mxu0 0.0
      %580 = vmatpush1.msra.mxu0 0.0
      %581 = vmatprep.subr.mxu0 0.0
      %582 = vmatpush1.msra.mxu0 0.0
      %583 = vmatprep.subr.mxu0 0.0
      %584 = vmatpush1.msra.mxu0 0.0
      %585 = vmatprep.subr.mxu0 0.0
      %586 = vmatpush1.msra.mxu0 0.0
      %587 = vmatprep.subr.mxu0 0.0
      %588 = vmatpush1.msra.mxu0 %v556
      %589 = vmatprep.subr.mxu0 0.0
      %590 = vmatpush1.msra.mxu0 %v555
      %591 = vmatprep.subr.mxu0 0.0
      %592 = vmatpush2.msra.mxu0 0.0
      %593 = vmatprep.subr.mxu0 0.0
      %594 = vmatpush2.msra.mxu0 0.0
      %595 = vmatprep.subr.mxu0 0.0
      %596 = vmatpush2.msra.mxu0 0.0
      %597 = vmatprep.subr.mxu0 0.0
      %598 = vmatpush2.msra.mxu0 0.0
      %599 = vmatprep.subr.mxu0 0.0
      %600 = vmatpush2.msra.mxu0 0.0
      %601 = vmatprep.subr.mxu0 0.0
      %602 = vmatpush2.msra.mxu0 0.0
      %603 = vmatprep.subr.mxu0 0.0
      %604 = vmatpush2.msra.mxu0 0.0
      %605 = vmatprep.subr.mxu0 0.0
      %606 = vmatpush2.msra.mxu0 0.0
      %607 = vmatprep.subr.mxu0 0.0
      %608 = vmatpush2.msra.mxu0 0.0
      %609 = vmatprep.subr.mxu0 0.0
      %610 = vmatpush2.msra.mxu0 0.0
      %611 = vmatprep.subr.mxu0 0.0
      %612 = vmatpush2.msra.mxu0 0.0
      %613 = vmatprep.subr.mxu0 0.0
      %614 = vmatpush2.msra.mxu0 0.0
      %615 = vmatprep.subr.mxu0 0.0
      %616 = vmatpush2.msra.mxu0 0.0
      %617 = vmatprep.subr.mxu0 0.0
      %618 = vmatpush2.msra.mxu0 0.0
      %619 = vmatprep.subr.mxu0 0.0
      %620 = vmatpush2.msra.mxu0 0.0
      %621 = vmatprep.subr.mxu0 0.0
      %622 = vmatpush2.msra.mxu0 0.0
      %623 = vmatprep.mubr.f32.mxu0 0.0
      %624 = vmatmul.mubr.f32.gmra.mxu0 %v353
      %v625 = vpop.f32.mrf.mxu0
      %v626 = vadd.f32 0.0, %v625
      %v627 = vpop.f32.mrf.mxu0
      %628 = vmatprep.mubr.f32.mxu0 0.0
      %629 = vmatmul.mubr.f32.gmra.mxu0 %v355
      %v630 = vpop.f32.mrf.mxu0
      %v631 = vadd.f32 0.0, %v630
      %v632 = vpop.f32.mrf.mxu0
      %633 = vmatprep.mubr.f32.mxu0 0.0
      %634 = vmatmul.mubr.f32.gmra.mxu0 %v357
      %v635 = vpop.f32.mrf.mxu0
      %v636 = vadd.f32 0.0, %v635
      %v637 = vpop.f32.mrf.mxu0
      %638 = vmatprep.mubr.f32.mxu0 0.0
      %639 = vmatmul.mubr.f32.gmra.mxu0 %v557
      %v640 = vpop.f32.mrf.mxu0
      %v641 = vadd.f32 0.0, %v640
      %v642 = vpop.f32.mrf.mxu0
      %643 = vdwg.mxu0
      %v644 = vadd.f32 %v550, %v626
      %v645 = vadd.f32 %v551, %v631
      %v646 = vadd.f32 %v552, %v636
      %v647 = vadd.f32 %v553, %v641
      %s648 = scalar_lea.vmem %s2, 64
      %v649 = vld [vmem:[%s648] sm:$0xff]
      %v650 = vld [vmem:[%s648 + $0x8] sm:$0xff]
      %v652 = vrot.slane %v235, 1
      %v653 = vsel %vm247, %v255, %v652
      %v654 = vsel %vm257, %v653, 0
      %656 = vmatprep.subr.mxu0 0.0
      %657 = vmatpush1.msra.mxu0 0.0
      %658 = vmatprep.subr.mxu0 0.0
      %659 = vmatpush1.msra.mxu0 0.0
      %660 = vmatprep.subr.mxu0 0.0
      %661 = vmatpush1.msra.mxu0 0.0
      %662 = vmatprep.subr.mxu0 0.0
      %663 = vmatpush1.msra.mxu0 0.0
      %664 = vmatprep.subr.mxu0 0.0
      %665 = vmatpush1.msra.mxu0 0.0
      %666 = vmatprep.subr.mxu0 0.0
      %667 = vmatpush1.msra.mxu0 0.0
      %668 = vmatprep.subr.mxu0 0.0
      %669 = vmatpush1.msra.mxu0 0.0
      %670 = vmatprep.subr.mxu0 0.0
      %671 = vmatpush1.msra.mxu0 0.0
      %672 = vmatprep.subr.mxu0 0.0
      %673 = vmatpush1.msra.mxu0 0.0
      %674 = vmatprep.subr.mxu0 0.0
      %675 = vmatpush1.msra.mxu0 0.0
      %676 = vmatprep.subr.mxu0 0.0
      %677 = vmatpush1.msra.mxu0 0.0
      %678 = vmatprep.subr.mxu0 0.0
      %679 = vmatpush1.msra.mxu0 0.0
      %680 = vmatprep.subr.mxu0 0.0
      %681 = vmatpush1.msra.mxu0 0.0
      %682 = vmatprep.subr.mxu0 0.0
      %683 = vmatpush1.msra.mxu0 0.0
      %684 = vmatprep.subr.mxu0 0.0
      %685 = vmatpush1.msra.mxu0 %v650
      %686 = vmatprep.subr.mxu0 0.0
      %687 = vmatpush1.msra.mxu0 %v649
      %688 = vmatprep.subr.mxu0 0.0
      %689 = vmatpush2.msra.mxu0 0.0
      %690 = vmatprep.subr.mxu0 0.0
      %691 = vmatpush2.msra.mxu0 0.0
      %692 = vmatprep.subr.mxu0 0.0
      %693 = vmatpush2.msra.mxu0 0.0
      %694 = vmatprep.subr.mxu0 0.0
      %695 = vmatpush2.msra.mxu0 0.0
      %696 = vmatprep.subr.mxu0 0.0
      %697 = vmatpush2.msra.mxu0 0.0
      %698 = vmatprep.subr.mxu0 0.0
      %699 = vmatpush2.msra.mxu0 0.0
      %700 = vmatprep.subr.mxu0 0.0
      %701 = vmatpush2.msra.mxu0 0.0
      %702 = vmatprep.subr.mxu0 0.0
      %703 = vmatpush2.msra.mxu0 0.0
      %704 = vmatprep.subr.mxu0 0.0
      %705 = vmatpush2.msra.mxu0 0.0
      %706 = vmatprep.subr.mxu0 0.0
      %707 = vmatpush2.msra.mxu0 0.0
      %708 = vmatprep.subr.mxu0 0.0
      %709 = vmatpush2.msra.mxu0 0.0
      %710 = vmatprep.subr.mxu0 0.0
      %711 = vmatpush2.msra.mxu0 0.0
      %712 = vmatprep.subr.mxu0 0.0
      %713 = vmatpush2.msra.mxu0 0.0
      %714 = vmatprep.subr.mxu0 0.0
      %715 = vmatpush2.msra.mxu0 0.0
      %716 = vmatprep.subr.mxu0 0.0
      %717 = vmatpush2.msra.mxu0 0.0
      %718 = vmatprep.subr.mxu0 0.0
      %719 = vmatpush2.msra.mxu0 0.0
      %720 = vmatprep.mubr.f32.mxu0 0.0
      %721 = vmatmul.mubr.f32.gmra.mxu0 %v260
      %v722 = vpop.f32.mrf.mxu0
      %v723 = vadd.f32 0.0, %v722
      %v724 = vpop.f32.mrf.mxu0
      %725 = vmatprep.mubr.f32.mxu0 0.0
      %726 = vmatmul.mubr.f32.gmra.mxu0 %v262
      %v727 = vpop.f32.mrf.mxu0
      %v728 = vadd.f32 0.0, %v727
      %v729 = vpop.f32.mrf.mxu0
      %730 = vmatprep.mubr.f32.mxu0 0.0
      %731 = vmatmul.mubr.f32.gmra.mxu0 %v264
      %v732 = vpop.f32.mrf.mxu0
      %v733 = vadd.f32 0.0, %v732
      %v734 = vpop.f32.mrf.mxu0
      %735 = vmatprep.mubr.f32.mxu0 0.0
      %736 = vmatmul.mubr.f32.gmra.mxu0 %v654
      %v737 = vpop.f32.mrf.mxu0
      %v738 = vadd.f32 0.0, %v737
      %v739 = vpop.f32.mrf.mxu0
      %740 = vdwg.mxu0
      %v741 = vadd.f32 %v644, %v723
      %v742 = vadd.f32 %v645, %v728
      %v743 = vadd.f32 %v646, %v733
      %v744 = vadd.f32 %v647, %v738
      %s745 = scalar_lea.vmem %s2, 80
      %v746 = vld [vmem:[%s745] sm:$0xff]
      %v747 = vld [vmem:[%s745 + $0x8] sm:$0xff]
      %v748 = vrot.slane %v235, 2
      %v749 = vsel %vm447, %v455, %v748
      %v750 = vsel %vm257, %v749, 0
      %752 = vmatprep.subr.mxu0 0.0
      %753 = vmatpush1.msra.mxu0 0.0
      %754 = vmatprep.subr.mxu0 0.0
      %755 = vmatpush1.msra.mxu0 0.0
      %756 = vmatprep.subr.mxu0 0.0
      %757 = vmatpush1.msra.mxu0 0.0
      %758 = vmatprep.subr.mxu0 0.0
      %759 = vmatpush1.msra.mxu0 0.0
      %760 = vmatprep.subr.mxu0 0.0
      %761 = vmatpush1.msra.mxu0 0.0
      %762 = vmatprep.subr.mxu0 0.0
      %763 = vmatpush1.msra.mxu0 0.0
      %764 = vmatprep.subr.mxu0 0.0
      %765 = vmatpush1.msra.mxu0 0.0
      %766 = vmatprep.subr.mxu0 0.0
      %767 = vmatpush1.msra.mxu0 0.0
      %768 = vmatprep.subr.mxu0 0.0
      %769 = vmatpush1.msra.mxu0 0.0
      %770 = vmatprep.subr.mxu0 0.0
      %771 = vmatpush1.msra.mxu0 0.0
      %772 = vmatprep.subr.mxu0 0.0
      %773 = vmatpush1.msra.mxu0 0.0
      %774 = vmatprep.subr.mxu0 0.0
      %775 = vmatpush1.msra.mxu0 0.0
      %776 = vmatprep.subr.mxu0 0.0
      %777 = vmatpush1.msra.mxu0 0.0
      %778 = vmatprep.subr.mxu0 0.0
      %779 = vmatpush1.msra.mxu0 0.0
      %780 = vmatprep.subr.mxu0 0.0
      %781 = vmatpush1.msra.mxu0 %v747
      %782 = vmatprep.subr.mxu0 0.0
      %783 = vmatpush1.msra.mxu0 %v746
      %784 = vmatprep.subr.mxu0 0.0
      %785 = vmatpush2.msra.mxu0 0.0
      %786 = vmatprep.subr.mxu0 0.0
      %787 = vmatpush2.msra.mxu0 0.0
      %788 = vmatprep.subr.mxu0 0.0
      %789 = vmatpush2.msra.mxu0 0.0
      %790 = vmatprep.subr.mxu0 0.0
      %791 = vmatpush2.msra.mxu0 0.0
      %792 = vmatprep.subr.mxu0 0.0
      %793 = vmatpush2.msra.mxu0 0.0
      %794 = vmatprep.subr.mxu0 0.0
      %795 = vmatpush2.msra.mxu0 0.0
      %796 = vmatprep.subr.mxu0 0.0
      %797 = vmatpush2.msra.mxu0 0.0
      %798 = vmatprep.subr.mxu0 0.0
      %799 = vmatpush2.msra.mxu0 0.0
      %800 = vmatprep.subr.mxu0 0.0
      %801 = vmatpush2.msra.mxu0 0.0
      %802 = vmatprep.subr.mxu0 0.0
      %803 = vmatpush2.msra.mxu0 0.0
      %804 = vmatprep.subr.mxu0 0.0
      %805 = vmatpush2.msra.mxu0 0.0
      %806 = vmatprep.subr.mxu0 0.0
      %807 = vmatpush2.msra.mxu0 0.0
      %808 = vmatprep.subr.mxu0 0.0
      %809 = vmatpush2.msra.mxu0 0.0
      %810 = vmatprep.subr.mxu0 0.0
      %811 = vmatpush2.msra.mxu0 0.0
      %812 = vmatprep.subr.mxu0 0.0
      %813 = vmatpush2.msra.mxu0 0.0
      %814 = vmatprep.subr.mxu0 0.0
      %815 = vmatpush2.msra.mxu0 0.0
      %816 = vmatprep.mubr.f32.mxu0 0.0
      %817 = vmatmul.mubr.f32.gmra.mxu0 %v459
      %v818 = vpop.f32.mrf.mxu0
      %v819 = vadd.f32 0.0, %v818
      %v820 = vpop.f32.mrf.mxu0
      %821 = vmatprep.mubr.f32.mxu0 0.0
      %822 = vmatmul.mubr.f32.gmra.mxu0 %v461
      %v823 = vpop.f32.mrf.mxu0
      %v824 = vadd.f32 0.0, %v823
      %v825 = vpop.f32.mrf.mxu0
      %826 = vmatprep.mubr.f32.mxu0 0.0
      %827 = vmatmul.mubr.f32.gmra.mxu0 %v463
      %v828 = vpop.f32.mrf.mxu0
      %v829 = vadd.f32 0.0, %v828
      %v830 = vpop.f32.mrf.mxu0
      %831 = vmatprep.mubr.f32.mxu0 0.0
      %832 = vmatmul.mubr.f32.gmra.mxu0 %v750
      %v833 = vpop.f32.mrf.mxu0
      %v834 = vadd.f32 0.0, %v833
      %v835 = vpop.f32.mrf.mxu0
      %836 = vdwg.mxu0
      %v837 = vadd.f32 %v741, %v819
      %v838 = vadd.f32 %v742, %v824
      %v839 = vadd.f32 %v743, %v829
      %v840 = vadd.f32 %v744, %v834
      %s841 = scalar_lea.vmem %s2, 96
      %v842 = vld [vmem:[%s841] sm:$0xff]
      %v843 = vld [vmem:[%s841 + $0x8] sm:$0xff]
      %v844 = vsel %vm257, %v235, 0
      %846 = vmatprep.subr.mxu0 0.0
      %847 = vmatpush1.msra.mxu0 0.0
      %848 = vmatprep.subr.mxu0 0.0
      %849 = vmatpush1.msra.mxu0 0.0
      %850 = vmatprep.subr.mxu0 0.0
      %851 = vmatpush1.msra.mxu0 0.0
      %852 = vmatprep.subr.mxu0 0.0
      %853 = vmatpush1.msra.mxu0 0.0
      %854 = vmatprep.subr.mxu0 0.0
      %855 = vmatpush1.msra.mxu0 0.0
      %856 = vmatprep.subr.mxu0 0.0
      %857 = vmatpush1.msra.mxu0 0.0
      %858 = vmatprep.subr.mxu0 0.0
      %859 = vmatpush1.msra.mxu0 0.0
      %860 = vmatprep.subr.mxu0 0.0
      %861 = vmatpush1.msra.mxu0 0.0
      %862 = vmatprep.subr.mxu0 0.0
      %863 = vmatpush1.msra.mxu0 0.0
      %864 = vmatprep.subr.mxu0 0.0
      %865 = vmatpush1.msra.mxu0 0.0
      %866 = vmatprep.subr.mxu0 0.0
      %867 = vmatpush1.msra.mxu0 0.0
      %868 = vmatprep.subr.mxu0 0.0
      %869 = vmatpush1.msra.mxu0 0.0
      %870 = vmatprep.subr.mxu0 0.0
      %871 = vmatpush1.msra.mxu0 0.0
      %872 = vmatprep.subr.mxu0 0.0
      %873 = vmatpush1.msra.mxu0 0.0
      %874 = vmatprep.subr.mxu0 0.0
      %875 = vmatpush1.msra.mxu0 %v843
      %876 = vmatprep.subr.mxu0 0.0
      %877 = vmatpush1.msra.mxu0 %v842
      %878 = vmatprep.subr.mxu0 0.0
      %879 = vmatpush2.msra.mxu0 0.0
      %880 = vmatprep.subr.mxu0 0.0
      %881 = vmatpush2.msra.mxu0 0.0
      %882 = vmatprep.subr.mxu0 0.0
      %883 = vmatpush2.msra.mxu0 0.0
      %884 = vmatprep.subr.mxu0 0.0
      %885 = vmatpush2.msra.mxu0 0.0
      %886 = vmatprep.subr.mxu0 0.0
      %887 = vmatpush2.msra.mxu0 0.0
      %888 = vmatprep.subr.mxu0 0.0
      %889 = vmatpush2.msra.mxu0 0.0
      %890 = vmatprep.subr.mxu0 0.0
      %891 = vmatpush2.msra.mxu0 0.0
      %892 = vmatprep.subr.mxu0 0.0
      %893 = vmatpush2.msra.mxu0 0.0
      %894 = vmatprep.subr.mxu0 0.0
      %895 = vmatpush2.msra.mxu0 0.0
      %896 = vmatprep.subr.mxu0 0.0
      %897 = vmatpush2.msra.mxu0 0.0
      %898 = vmatprep.subr.mxu0 0.0
      %899 = vmatpush2.msra.mxu0 0.0
      %900 = vmatprep.subr.mxu0 0.0
      %901 = vmatpush2.msra.mxu0 0.0
      %902 = vmatprep.subr.mxu0 0.0
      %903 = vmatpush2.msra.mxu0 0.0
      %904 = vmatprep.subr.mxu0 0.0
      %905 = vmatpush2.msra.mxu0 0.0
      %906 = vmatprep.subr.mxu0 0.0
      %907 = vmatpush2.msra.mxu0 0.0
      %908 = vmatprep.subr.mxu0 0.0
      %909 = vmatpush2.msra.mxu0 0.0
      %910 = vmatprep.mubr.f32.mxu0 0.0
      %911 = vmatmul.mubr.f32.gmra.mxu0 %v355
      %v912 = vpop.f32.mrf.mxu0
      %v913 = vadd.f32 0.0, %v912
      %v914 = vpop.f32.mrf.mxu0
      %915 = vmatprep.mubr.f32.mxu0 0.0
      %916 = vmatmul.mubr.f32.gmra.mxu0 %v357
      %v917 = vpop.f32.mrf.mxu0
      %v918 = vadd.f32 0.0, %v917
      %v919 = vpop.f32.mrf.mxu0
      %920 = vmatprep.mubr.f32.mxu0 0.0
      %921 = vmatmul.mubr.f32.gmra.mxu0 %v557
      %v922 = vpop.f32.mrf.mxu0
      %v923 = vadd.f32 0.0, %v922
      %v924 = vpop.f32.mrf.mxu0
      %925 = vmatprep.mubr.f32.mxu0 0.0
      %926 = vmatmul.mubr.f32.gmra.mxu0 %v844
      %v927 = vpop.f32.mrf.mxu0
      %v928 = vadd.f32 0.0, %v927
      %v929 = vpop.f32.mrf.mxu0
      %930 = vdwg.mxu0
      %v931 = vadd.f32 %v837, %v913
      %v932 = vadd.f32 %v838, %v918
      %v933 = vadd.f32 %v839, %v923
      %v934 = vadd.f32 %v840, %v928
      %s935 = scalar_lea.vmem %s2, 112
      %v936 = vld [vmem:[%s935] sm:$0xff]
      %v937 = vld [vmem:[%s935 + $0x8] sm:$0xff]
      %v939 = vrot.slane %v236, 1
      %v940 = vsel %vm247, %v652, %v939
      %v941 = vsel %vm257, %v940, 0
      %943 = vmatprep.subr.mxu0 0.0
      %944 = vmatpush1.msra.mxu0 0.0
      %945 = vmatprep.subr.mxu0 0.0
      %946 = vmatpush1.msra.mxu0 0.0
      %947 = vmatprep.subr.mxu0 0.0
      %948 = vmatpush1.msra.mxu0 0.0
      %949 = vmatprep.subr.mxu0 0.0
      %950 = vmatpush1.msra.mxu0 0.0
      %951 = vmatprep.subr.mxu0 0.0
      %952 = vmatpush1.msra.mxu0 0.0
      %953 = vmatprep.subr.mxu0 0.0
      %954 = vmatpush1.msra.mxu0 0.0
      %955 = vmatprep.subr.mxu0 0.0
      %956 = vmatpush1.msra.mxu0 0.0
      %957 = vmatprep.subr.mxu0 0.0
      %958 = vmatpush1.msra.mxu0 0.0
      %959 = vmatprep.subr.mxu0 0.0
      %960 = vmatpush1.msra.mxu0 0.0
      %961 = vmatprep.subr.mxu0 0.0
      %962 = vmatpush1.msra.mxu0 0.0
      %963 = vmatprep.subr.mxu0 0.0
      %964 = vmatpush1.msra.mxu0 0.0
      %965 = vmatprep.subr.mxu0 0.0
      %966 = vmatpush1.msra.mxu0 0.0
      %967 = vmatprep.subr.mxu0 0.0
      %968 = vmatpush1.msra.mxu0 0.0
      %969 = vmatprep.subr.mxu0 0.0
      %970 = vmatpush1.msra.mxu0 0.0
      %971 = vmatprep.subr.mxu0 0.0
      %972 = vmatpush1.msra.mxu0 %v937
      %973 = vmatprep.subr.mxu0 0.0
      %974 = vmatpush1.msra.mxu0 %v936
      %975 = vmatprep.subr.mxu0 0.0
      %976 = vmatpush2.msra.mxu0 0.0
      %977 = vmatprep.subr.mxu0 0.0
      %978 = vmatpush2.msra.mxu0 0.0
      %979 = vmatprep.subr.mxu0 0.0
      %980 = vmatpush2.msra.mxu0 0.0
      %981 = vmatprep.subr.mxu0 0.0
      %982 = vmatpush2.msra.mxu0 0.0
      %983 = vmatprep.subr.mxu0 0.0
      %984 = vmatpush2.msra.mxu0 0.0
      %985 = vmatprep.subr.mxu0 0.0
      %986 = vmatpush2.msra.mxu0 0.0
      %987 = vmatprep.subr.mxu0 0.0
      %988 = vmatpush2.msra.mxu0 0.0
      %989 = vmatprep.subr.mxu0 0.0
      %990 = vmatpush2.msra.mxu0 0.0
      %991 = vmatprep.subr.mxu0 0.0
      %992 = vmatpush2.msra.mxu0 0.0
      %993 = vmatprep.subr.mxu0 0.0
      %994 = vmatpush2.msra.mxu0 0.0
      %995 = vmatprep.subr.mxu0 0.0
      %996 = vmatpush2.msra.mxu0 0.0
      %997 = vmatprep.subr.mxu0 0.0
      %998 = vmatpush2.msra.mxu0 0.0
      %999 = vmatprep.subr.mxu0 0.0
      %1000 = vmatpush2.msra.mxu0 0.0
      %1001 = vmatprep.subr.mxu0 0.0
      %1002 = vmatpush2.msra.mxu0 0.0
      %1003 = vmatprep.subr.mxu0 0.0
      %1004 = vmatpush2.msra.mxu0 0.0
      %1005 = vmatprep.subr.mxu0 0.0
      %1006 = vmatpush2.msra.mxu0 0.0
      %1007 = vmatprep.mubr.f32.mxu0 0.0
      %1008 = vmatmul.mubr.f32.gmra.mxu0 %v262
      %v1009 = vpop.f32.mrf.mxu0
      %v1010 = vadd.f32 0.0, %v1009
      %v1011 = vpop.f32.mrf.mxu0
      %1012 = vmatprep.mubr.f32.mxu0 0.0
      %1013 = vmatmul.mubr.f32.gmra.mxu0 %v264
      %v1014 = vpop.f32.mrf.mxu0
      %v1015 = vadd.f32 0.0, %v1014
      %v1016 = vpop.f32.mrf.mxu0
      %1017 = vmatprep.mubr.f32.mxu0 0.0
      %1018 = vmatmul.mubr.f32.gmra.mxu0 %v654
      %v1019 = vpop.f32.mrf.mxu0
      %v1020 = vadd.f32 0.0, %v1019
      %v1021 = vpop.f32.mrf.mxu0
      %1022 = vmatprep.mubr.f32.mxu0 0.0
      %1023 = vmatmul.mubr.f32.gmra.mxu0 %v941
      %v1024 = vpop.f32.mrf.mxu0
      %v1025 = vadd.f32 0.0, %v1024
      %v1026 = vpop.f32.mrf.mxu0
      %1027 = vdwg.mxu0
      %v1028 = vadd.f32 %v931, %v1010
      %v1029 = vadd.f32 %v932, %v1015
      %v1030 = vadd.f32 %v933, %v1020
      %v1031 = vadd.f32 %v934, %v1025
      %s1032 = scalar_lea.vmem %s2, 128
      %v1033 = vld [vmem:[%s1032] sm:$0xff]
      %v1034 = vld [vmem:[%s1032 + $0x8] sm:$0xff]
      %v1035 = vrot.slane %v236, 2
      %v1036 = vsel %vm447, %v748, %v1035
      %v1037 = vsel %vm257, %v1036, 0
      %1039 = vmatprep.subr.mxu0 0.0
      %1040 = vmatpush1.msra.mxu0 0.0
      %1041 = vmatprep.subr.mxu0 0.0
      %1042 = vmatpush1.msra.mxu0 0.0
      %1043 = vmatprep.subr.mxu0 0.0
      %1044 = vmatpush1.msra.mxu0 0.0
      %1045 = vmatprep.subr.mxu0 0.0
      %1046 = vmatpush1.msra.mxu0 0.0
      %1047 = vmatprep.subr.mxu0 0.0
      %1048 = vmatpush1.msra.mxu0 0.0
      %1049 = vmatprep.subr.mxu0 0.0
      %1050 = vmatpush1.msra.mxu0 0.0
      %1051 = vmatprep.subr.mxu0 0.0
      %1052 = vmatpush1.msra.mxu0 0.0
      %1053 = vmatprep.subr.mxu0 0.0
      %1054 = vmatpush1.msra.mxu0 0.0
      %1055 = vmatprep.subr.mxu0 0.0
      %1056 = vmatpush1.msra.mxu0 0.0
      %1057 = vmatprep.subr.mxu0 0.0
      %1058 = vmatpush1.msra.mxu0 0.0
      %1059 = vmatprep.subr.mxu0 0.0
      %1060 = vmatpush1.msra.mxu0 0.0
      %1061 = vmatprep.subr.mxu0 0.0
      %1062 = vmatpush1.msra.mxu0 0.0
      %1063 = vmatprep.subr.mxu0 0.0
      %1064 = vmatpush1.msra.mxu0 0.0
      %1065 = vmatprep.subr.mxu0 0.0
      %1066 = vmatpush1.msra.mxu0 0.0
      %1067 = vmatprep.subr.mxu0 0.0
      %1068 = vmatpush1.msra.mxu0 %v1034
      %1069 = vmatprep.subr.mxu0 0.0
      %1070 = vmatpush1.msra.mxu0 %v1033
      %1071 = vmatprep.subr.mxu0 0.0
      %1072 = vmatpush2.msra.mxu0 0.0
      %1073 = vmatprep.subr.mxu0 0.0
      %1074 = vmatpush2.msra.mxu0 0.0
      %1075 = vmatprep.subr.mxu0 0.0
      %1076 = vmatpush2.msra.mxu0 0.0
      %1077 = vmatprep.subr.mxu0 0.0
      %1078 = vmatpush2.msra.mxu0 0.0
      %1079 = vmatprep.subr.mxu0 0.0
      %1080 = vmatpush2.msra.mxu0 0.0
      %1081 = vmatprep.subr.mxu0 0.0
      %1082 = vmatpush2.msra.mxu0 0.0
      %1083 = vmatprep.subr.mxu0 0.0
      %1084 = vmatpush2.msra.mxu0 0.0
      %1085 = vmatprep.subr.mxu0 0.0
      %1086 = vmatpush2.msra.mxu0 0.0
      %1087 = vmatprep.subr.mxu0 0.0
      %1088 = vmatpush2.msra.mxu0 0.0
      %1089 = vmatprep.subr.mxu0 0.0
      %1090 = vmatpush2.msra.mxu0 0.0
      %1091 = vmatprep.subr.mxu0 0.0
      %1092 = vmatpush2.msra.mxu0 0.0
      %1093 = vmatprep.subr.mxu0 0.0
      %1094 = vmatpush2.msra.mxu0 0.0
      %1095 = vmatprep.subr.mxu0 0.0
      %1096 = vmatpush2.msra.mxu0 0.0
      %1097 = vmatprep.subr.mxu0 0.0
      %1098 = vmatpush2.msra.mxu0 0.0
      %1099 = vmatprep.subr.mxu0 0.0
      %1100 = vmatpush2.msra.mxu0 0.0
      %1101 = vmatprep.subr.mxu0 0.0
      %1102 = vmatpush2.msra.mxu0 0.0
      %1103 = vmatprep.mubr.f32.mxu0 0.0
      %1104 = vmatmul.mubr.f32.gmra.mxu0 %v461
      %v1105 = vpop.f32.mrf.mxu0
      %v1106 = vadd.f32 0.0, %v1105
      %v1107 = vpop.f32.mrf.mxu0
      %1108 = vmatprep.mubr.f32.mxu0 0.0
      %1109 = vmatmul.mubr.f32.gmra.mxu0 %v463
      %v1110 = vpop.f32.mrf.mxu0
      %v1111 = vadd.f32 0.0, %v1110
      %v1112 = vpop.f32.mrf.mxu0
      %1113 = vmatprep.mubr.f32.mxu0 0.0
      %1114 = vmatmul.mubr.f32.gmra.mxu0 %v750
      %v1115 = vpop.f32.mrf.mxu0
      %v1116 = vadd.f32 0.0, %v1115
      %v1117 = vpop.f32.mrf.mxu0
      %1118 = vmatprep.mubr.f32.mxu0 0.0
      %1119 = vmatmul.mubr.f32.gmra.mxu0 %v1037
      %v1120 = vpop.f32.mrf.mxu0
      %v1121 = vadd.f32 0.0, %v1120
      %v1122 = vpop.f32.mrf.mxu0
      %1123 = vdwg.mxu0
      %v1124 = vadd.f32 %v1028, %v1106
      %v1125 = vadd.f32 %v1029, %v1111
      %v1126 = vadd.f32 %v1030, %v1116
      %v1127 = vadd.f32 %v1031, %v1121
      %v1128 = vld [vmem:[%s3] sm:$0x1]
      %v1130 = vlaneseq
      %v1131 = vshrl.u32 %v1130, 7
      %v1132 = vsub.s32 0, %v1131
      %v1133 = vrot.slane %v1128, %v1132
      %v1135 = vadd.f32 %v1124, %v1133
      %v1136 = vadd.f32 %v1125, %v1133
      %v1137 = vadd.f32 %v1126, %v1133
      %v1138 = vadd.f32 %v1127, %v1133
      %v1139 = vmax.f32 %v1135, 0.0
      %v1140 = vmax.f32 %v1136, 0.0
      %v1141 = vmax.f32 %v1137, 0.0
      %v1142 = vmax.f32 %v1138, 0.0
      %1143 = vst [vmem:[%s228] sm:$0xff] %v1139
      %1144 = vst [vmem:[%s228 + $0x8] sm:$0xff] %v1140
      %1145 = vst [vmem:[%s228 + $0x10] sm:$0xff] %v1141
      %1146 = vst [vmem:[%s228 + $0x18] sm:$0xff] %v1142
      %s1147 = smul.u32 4, %s15
      %p1148 = scmp.lt.s32.totalorder %s1147, 11
      %s1149 = scalar_select %p1148, %s1147, 11
      %s1150 = smul.addr %s1149, 8
      %s1151 = scalar_lea.vmem %s4, %s1150
      // Predicated region
      $region37: #{_lambda_.9} parent=35 // pred_check
        %p1152 = pneg %p129
      $region38: #{_lambda_.9} parent=35 // pred_check_branch
        %1154 = sbr.rel (%p1152) target = $region40
      $region39: #{_lambda_.9} parent=35 // pred_region
        %s1155 = smul.u32 4, %s15
      $region40: #{_lambda_.9} parent=35 // pred_fallthru
        _
    $region36: #{_lambda_.9} parent=5 // pred_fallthru
      _
    %p1156 = scmp.le.s32.totalorder 2, %s10
    // Predicated region
    $region41: #{_lambda_.9} parent=5 // pred_check
      %p1157 = pneg %p1156
    $region42: #{_lambda_.9} parent=5 // pred_check_branch
      %1159 = sbr.rel (%p1157) target = $region44
    $region43: #{_lambda_.9} parent=5 // pred_region
      %s1160 = ssub.s32 %s10, 2
      // Predicated region
      $region45: #{_lambda_.9} parent=43 // pred_check
        %p1161 = pneg %p135
      $region46: #{_lambda_.9} parent=43 // pred_check_branch
        %1163 = sbr.rel (%p1161) target = $region48
      $region47: #{_lambda_.9} parent=43 // pred_region
        %s1164 = smul.u32 4, %s16
        %p1165 = scmp.lt.s32.totalorder %s1164, 11
        %s1166 = scalar_select %p1165, %s1164, 11
        %s1167 = smul.addr %s1166, 8
        %s1168 = scalar_lea.vmem %s4, %s1167
      $region48: #{_lambda_.9} parent=43 // pred_fallthru
        _
    $region44: #{_lambda_.9} parent=5 // pred_fallthru
      _
  $region6: #{_lambda_.9} parent=0 // loop_footer
    %s14 = sadd.s32 1, %s10
  $region7: #{_lambda_.9} parent=0 // loop_footer_branch
    %9 = sbr.rel target = $region3
  $region8: #{_lambda_.9} parent=0 // loop_exit
    _

// kernel: _lambda_.15
$region0: #{_lambda_.15}
  #allocation0 [shape = 'u32[]', space=smem, size = 0x4, offset = 0x4, fixed_abs, tag = 'smem constant byte address 0x4 - core index']
  #allocation1 [shape = 'u32[144,128]{1,0:T(1,128)}', space=vmem, size = 0x12000, scoped, tag = 'internal scratch']
  %s0 = inlined_call_operand.vmem [shape: f32[384,128], index: 0, kind: input, shape index: {}]
  %s1 = inlined_call_operand.vmem [shape: f32[128,128], index: 1, kind: input, shape index: {}]
  %s2 = inlined_call_operand.vmem [shape: f32[1,128], index: 2, kind: input, shape index: {}]
  %s3 = inlined_call_operand.vmem [shape: f32[384,128], index: 3, kind: output, shape index: {}]
  %s4 = sld [smem:[#allocation0]]
  $region45: #{_lambda_.15} parent=0
    _
  %s6 = ssub.s32 1, %s4
  %s7 = scalar_select 0, %s6, %s4
  loop: start=0, step=1, limit=6
  $region2: #{_lambda_.15} parent=0 // loop_pre_header
    _
  $region3: #{_lambda_.15} parent=0 // loop_header
    %s9 = sphi 0, %s13
    %p10 = scmp.ge.s32.totalorder %s9, 6
    %s19 = sphi 0, %s21
    %s22 = sphi 0, %s19
    %s23 = sphi 0, %s22
    %s39 = sphi 0, %s23
    %s43 = sphi 0, %s43
    %s45 = sphi 0, %s43
    %s46 = sphi 0, %s45
    %s60 = sphi 0, %s46
    %s64 = sphi 0, %s64
    %s66 = sphi 0, %s64
    %s67 = sphi 0, %s66
    %s81 = sphi 0, %s67
    %s87 = sphi 0, %s89
    %s90 = sphi 0, %s87
    %s91 = sphi 0, %s90
    %s107 = sphi 0, %s91
  $region4: #{_lambda_.15} parent=0 // loop_header_branch
    %12 = sbr.rel (%p10) target = $region8
  $region5: #{_lambda_.15} parent=0 // loop_body
    %s14 = ssub.s32 %s9, 1
    %s15 = ssub.s32 %s9, 2
    %s16 = sadd.s32 %s9, 1
    %s17 = ssub.s32 %s9, %s16
    %p18 = scmp.eq.s32.totalorder %s17, 0
    %s20 = sadd.s32 %s19, 1
    %s21 = scalar_select %p18, %s19, %s20
    %p24 = pneg %p18
    %p25 = scmp.eq.s32.totalorder %s9, 3
    %p26 = por %p24, %p25
    %p27 = scmp.ne.s32.totalorder %s19, %s22
    %p28 = scmp.eq.s32.totalorder %s9, 0
    %p29 = por %p27, %p28
    %p30 = scmp.ne.s32.totalorder %s19, %s22
    %p31 = scmp.eq.s32.totalorder %s14, 3
    %p32 = por %p30, %p31
    %p33 = scmp.ne.s32.totalorder %s22, %s23
    %p34 = scmp.eq.s32.totalorder %s14, 0
    %p35 = por %p33, %p34
    %p36 = scmp.ne.s32.totalorder %s22, %s23
    %p37 = scmp.eq.s32.totalorder %s15, 3
    %p38 = por %p36, %p37
    %p40 = scmp.ne.s32.totalorder %s23, %s39
    %p41 = scmp.eq.s32.totalorder %s15, 0
    %p42 = por %p40, %p41
    %s44 = sadd.s32 %s43, 1
    %p47 = scmp.eq.s32.totalorder %s9, 3
    %p48 = scmp.ne.s32.totalorder %s43, %s45
    %p49 = scmp.eq.s32.totalorder %s9, 0
    %p50 = por %p48, %p49
    %p51 = scmp.ne.s32.totalorder %s43, %s45
    %p52 = scmp.eq.s32.totalorder %s14, 3
    %p53 = por %p51, %p52
    %p54 = scmp.ne.s32.totalorder %s45, %s46
    %p55 = scmp.eq.s32.totalorder %s14, 0
    %p56 = por %p54, %p55
    %p57 = scmp.ne.s32.totalorder %s45, %s46
    %p58 = scmp.eq.s32.totalorder %s15, 3
    %p59 = por %p57, %p58
    %p61 = scmp.ne.s32.totalorder %s46, %s60
    %p62 = scmp.eq.s32.totalorder %s15, 0
    %p63 = por %p61, %p62
    %s65 = sadd.s32 %s64, 1
    %p68 = scmp.eq.s32.totalorder %s9, 3
    %p69 = scmp.ne.s32.totalorder %s64, %s66
    %p70 = scmp.eq.s32.totalorder %s9, 0
    %p71 = por %p69, %p70
    %p72 = scmp.ne.s32.totalorder %s64, %s66
    %p73 = scmp.eq.s32.totalorder %s14, 3
    %p74 = por %p72, %p73
    %p75 = scmp.ne.s32.totalorder %s66, %s67
    %p76 = scmp.eq.s32.totalorder %s14, 0
    %p77 = por %p75, %p76
    %p78 = scmp.ne.s32.totalorder %s66, %s67
    %p79 = scmp.eq.s32.totalorder %s15, 3
    %p80 = por %p78, %p79
    %p82 = scmp.ne.s32.totalorder %s67, %s81
    %p83 = scmp.eq.s32.totalorder %s15, 0
    %p84 = por %p82, %p83
    %s85 = ssub.s32 %s9, %s16
    %p86 = scmp.eq.s32.totalorder %s85, 0
    %s88 = sadd.s32 %s87, 1
    %s89 = scalar_select %p86, %s87, %s88
    %p92 = pneg %p86
    %p93 = scmp.eq.s32.totalorder %s9, 3
    %p94 = por %p92, %p93
    %p95 = scmp.ne.s32.totalorder %s87, %s90
    %p96 = scmp.eq.s32.totalorder %s9, 0
    %p97 = por %p95, %p96
    %p98 = scmp.ne.s32.totalorder %s87, %s90
    %p99 = scmp.eq.s32.totalorder %s14, 3
    %p100 = por %p98, %p99
    %p101 = scmp.ne.s32.totalorder %s90, %s91
    %p102 = scmp.eq.s32.totalorder %s14, 0
    %p103 = por %p101, %p102
    %p104 = scmp.ne.s32.totalorder %s90, %s91
    %p105 = scmp.eq.s32.totalorder %s15, 3
    %p106 = por %p104, %p105
    %p108 = scmp.ne.s32.totalorder %s91, %s107
    %p109 = scmp.eq.s32.totalorder %s15, 0
    %p110 = por %p108, %p109
    %p111 = scmp.le.s32.totalorder 1, %s9
    %p112 = scmp.lt.s32.totalorder %s9, 5
    %p113 = pnand %p111, %p112
    %p114 = pneg %p113
    // Predicated region
    $region9: #{_lambda_.15} parent=5 // pred_check
      _
    $region10: #{_lambda_.15} parent=5 // pred_check_branch
      %116 = sbr.rel (%p113) target = $region12
    $region11: #{_lambda_.15} parent=5 // pred_region
      %s117 = ssub.s32 %s9, 1
      // Predicated region
      $region13: #{_lambda_.15} parent=11 // pred_check
        %p118 = pneg %p56
      $region14: #{_lambda_.15} parent=11 // pred_check_branch
        %120 = sbr.rel (%p118) target = $region16
      $region15: #{_lambda_.15} parent=11 // pred_region
        _
      $region16: #{_lambda_.15} parent=11 // pred_fallthru
        _
      // Predicated region
      $region17: #{_lambda_.15} parent=11 // pred_check
        %p121 = pneg %p77
      $region18: #{_lambda_.15} parent=11 // pred_check_branch
        %123 = sbr.rel (%p121) target = $region20
      $region19: #{_lambda_.15} parent=11 // pred_region
        _
      $region20: #{_lambda_.15} parent=11 // pred_fallthru
        _
    $region12: #{_lambda_.15} parent=5 // pred_fallthru
      _
    %p124 = scmp.lt.s32.totalorder %s9, 4
    // Predicated region
    $region21: #{_lambda_.15} parent=5 // pred_check
      %p125 = pneg %p124
    $region22: #{_lambda_.15} parent=5 // pred_check_branch
      %127 = sbr.rel (%p125) target = $region24
    $region23: #{_lambda_.15} parent=5 // pred_region
      // Predicated region
      $region25: #{_lambda_.15} parent=23 // pred_check
        %p128 = pneg %p29
      $region26: #{_lambda_.15} parent=23 // pred_check_branch
        %130 = sbr.rel (%p128) target = $region28
      $region27: #{_lambda_.15} parent=23 // pred_region
        %s131 = smul.u32 12, %s9
        %p132 = scmp.lt.s32.totalorder %s131, 47
        %s133 = scalar_select %p132, %s131, 47
        %s134 = smul.addr %s133, 8
        %s135 = scalar_lea.vmem %s0, %s134
        %s136 = smul.u32 12, %s9
      $region28: #{_lambda_.15} parent=23 // pred_fallthru
        _
    $region24: #{_lambda_.15} parent=5 // pred_fallthru
      _
    %p137 = scmp.le.s32.totalorder 1, %s9
    %p138 = scmp.lt.s32.totalorder %s9, 5
    %p139 = pnand %p137, %p138
    %p140 = pneg %p139
    // Predicated region
    $region29: #{_lambda_.15} parent=5 // pred_check
      _
    $region30: #{_lambda_.15} parent=5 // pred_check_branch
      %142 = sbr.rel (%p139) target = $region32
    $region31: #{_lambda_.15} parent=5 // pred_region
      %s143 = ssub.s32 %s9, 1
      %s144 = smul.u32 12, %s14
      %p145 = scmp.lt.s32.totalorder %s144, 47
      %s146 = scalar_select %p145, %s144, 47
      %s147 = smul.addr %s146, 8
      %s148 = scalar_lea.vmem %s0, %s147
      %p149 = pneg %p35
      %p150 = pneg %p32
      %p151 = pneg %p56
      %p152 = pneg %p53
      %p153 = pneg %p77
      %p154 = pneg %p74
      %p155 = pneg %p103
      %p156 = pneg %p100
      %s157 = smul.u32 12, %s14
      %p158 = scmp.lt.s32.totalorder %s157, 47
      %s159 = scalar_select %p158, %s157, 47
      %s160 = smul.addr %s159, 8
      %s161 = scalar_lea.vmem %s3, %s160
      %s162 = smul.u32 12, %s14
      %p163 = scmp.lt.s32.totalorder %s162, 47
      %s164 = scalar_select %p163, %s162, 47
      %s165 = smul.addr %s164, 8
      %s166 = scalar_lea.vmem %s0, %s165
      %s167 = smul.u32 12, %s14
      %s168 = smul.u32 12, %s14
      %p169 = scmp.lt.s32.totalorder %s168, 47
      %s170 = scalar_select %p169, %s168, 47
      %s171 = smul.addr %s170, 8
      %s172 = scalar_lea.vmem %s3, %s171
      %s173 = smul.u32 12, %s14
      %v174 = vld [vmem:[%s166] sm:$0xff]
      %v175 = vld [vmem:[%s166 + $0x8] sm:$0xff]
      %v176 = vld [vmem:[%s166 + $0x10] sm:$0xff]
      %v177 = vld [vmem:[%s166 + $0x18] sm:$0xff]
      %v178 = vld [vmem:[%s166 + $0x20] sm:$0xff]
      %v179 = vld [vmem:[%s166 + $0x28] sm:$0xff]
      %v180 = vld [vmem:[%s166 + $0x30] sm:$0xff]
      %v181 = vld [vmem:[%s166 + $0x38] sm:$0xff]
      %v182 = vld [vmem:[%s166 + $0x40] sm:$0xff]
      %v183 = vld [vmem:[%s166 + $0x48] sm:$0xff]
      %v184 = vld [vmem:[%s166 + $0x50] sm:$0xff]
      %v185 = vld [vmem:[%s166 + $0x58] sm:$0xff]
      %v186 = vld [vmem:[%s1] sm:$0xff]
      %v187 = vld [vmem:[%s1 + $0x8] sm:$0xff]
      %v188 = vld [vmem:[%s1 + $0x10] sm:$0xff]
      %v189 = vld [vmem:[%s1 + $0x18] sm:$0xff]
      %v190 = vld [vmem:[%s1 + $0x20] sm:$0xff]
      %v191 = vld [vmem:[%s1 + $0x28] sm:$0xff]
      %v192 = vld [vmem:[%s1 + $0x30] sm:$0xff]
      %v193 = vld [vmem:[%s1 + $0x38] sm:$0xff]
      %v194 = vld [vmem:[%s1 + $0x40] sm:$0xff]
      %v195 = vld [vmem:[%s1 + $0x48] sm:$0xff]
      %v196 = vld [vmem:[%s1 + $0x50] sm:$0xff]
      %v197 = vld [vmem:[%s1 + $0x58] sm:$0xff]
      %v198 = vld [vmem:[%s1 + $0x60] sm:$0xff]
      %v199 = vld [vmem:[%s1 + $0x68] sm:$0xff]
      %v200 = vld [vmem:[%s1 + $0x70] sm:$0xff]
      %v201 = vld [vmem:[%s1 + $0x78] sm:$0xff]
      %v202 = vld [vmem:[%s2] sm:$0x1]
      %v204 = vlaneseq
      %v205 = vshrl.u32 %v204, 7
      %v206 = vsub.s32 0, %v205
      %v207 = vrot.slane %v202, %v206
      %209 = vmatprep.subr.mxu0 0.0
      %210 = vmatpush1.msra.mxu0 %v201
      %211 = vmatprep.subr.mxu0 0.0
      %212 = vmatpush1.msra.mxu0 %v200
      %213 = vmatprep.subr.mxu0 0.0
      %214 = vmatpush1.msra.mxu0 %v199
      %215 = vmatprep.subr.mxu0 0.0
      %216 = vmatpush1.msra.mxu0 %v198
      %217 = vmatprep.subr.mxu0 0.0
      %218 = vmatpush1.msra.mxu0 %v197
      %219 = vmatprep.subr.mxu0 0.0
      %220 = vmatpush1.msra.mxu0 %v196
      %221 = vmatprep.subr.mxu0 0.0
      %222 = vmatpush1.msra.mxu0 %v195
      %223 = vmatprep.subr.mxu0 0.0
      %224 = vmatpush1.msra.mxu0 %v194
      %225 = vmatprep.subr.mxu0 0.0
      %226 = vmatpush1.msra.mxu0 %v193
      %227 = vmatprep.subr.mxu0 0.0
      %228 = vmatpush1.msra.mxu0 %v192
      %229 = vmatprep.subr.mxu0 0.0
      %230 = vmatpush1.msra.mxu0 %v191
      %231 = vmatprep.subr.mxu0 0.0
      %232 = vmatpush1.msra.mxu0 %v190
      %233 = vmatprep.subr.mxu0 0.0
      %234 = vmatpush1.msra.mxu0 %v189
      %235 = vmatprep.subr.mxu0 0.0
      %236 = vmatpush1.msra.mxu0 %v188
      %237 = vmatprep.subr.mxu0 0.0
      %238 = vmatpush1.msra.mxu0 %v187
      %239 = vmatprep.subr.mxu0 0.0
      %240 = vmatpush1.msra.mxu0 %v186
      %241 = vmatprep.subr.mxu0 0.0
      %242 = vmatpush2.msra.mxu0 0.0
      %243 = vmatprep.subr.mxu0 0.0
      %244 = vmatpush2.msra.mxu0 0.0
      %245 = vmatprep.subr.mxu0 0.0
      %246 = vmatpush2.msra.mxu0 0.0
      %247 = vmatprep.subr.mxu0 0.0
      %248 = vmatpush2.msra.mxu0 0.0
      %249 = vmatprep.subr.mxu0 0.0
      %250 = vmatpush2.msra.mxu0 0.0
      %251 = vmatprep.subr.mxu0 0.0
      %252 = vmatpush2.msra.mxu0 0.0
      %253 = vmatprep.subr.mxu0 0.0
      %254 = vmatpush2.msra.mxu0 0.0
      %255 = vmatprep.subr.mxu0 0.0
      %256 = vmatpush2.msra.mxu0 0.0
      %257 = vmatprep.subr.mxu0 0.0
      %258 = vmatpush2.msra.mxu0 0.0
      %259 = vmatprep.subr.mxu0 0.0
      %260 = vmatpush2.msra.mxu0 0.0
      %261 = vmatprep.subr.mxu0 0.0
      %262 = vmatpush2.msra.mxu0 0.0
      %263 = vmatprep.subr.mxu0 0.0
      %264 = vmatpush2.msra.mxu0 0.0
      %265 = vmatprep.subr.mxu0 0.0
      %266 = vmatpush2.msra.mxu0 0.0
      %267 = vmatprep.subr.mxu0 0.0
      %268 = vmatpush2.msra.mxu0 0.0
      %269 = vmatprep.subr.mxu0 0.0
      %270 = vmatpush2.msra.mxu0 0.0
      %271 = vmatprep.subr.mxu0 0.0
      %272 = vmatpush2.msra.mxu0 0.0
      %273 = vmatprep.mubr.f32.mxu0 0.0
      %274 = vmatmul.mubr.f32.gmra.mxu0 %v174
      %v275 = vpop.f32.mrf.mxu0
      %v276 = vadd.f32 %v207, %v275
      %v277 = vpop.f32.mrf.mxu0
      %278 = vmatprep.mubr.f32.mxu0 0.0
      %279 = vmatmul.mubr.f32.gmra.mxu0 %v175
      %v280 = vpop.f32.mrf.mxu0
      %v281 = vadd.f32 %v207, %v280
      %v282 = vpop.f32.mrf.mxu0
      %283 = vmatprep.mubr.f32.mxu0 0.0
      %284 = vmatmul.mubr.f32.gmra.mxu0 %v176
      %v285 = vpop.f32.mrf.mxu0
      %v286 = vadd.f32 %v207, %v285
      %v287 = vpop.f32.mrf.mxu0
      %288 = vmatprep.mubr.f32.mxu0 0.0
      %289 = vmatmul.mubr.f32.gmra.mxu0 %v177
      %v290 = vpop.f32.mrf.mxu0
      %v291 = vadd.f32 %v207, %v290
      %v292 = vpop.f32.mrf.mxu0
      %293 = vmatprep.mubr.f32.mxu0 0.0
      %294 = vmatmul.mubr.f32.gmra.mxu0 %v178
      %v295 = vpop.f32.mrf.mxu0
      %v296 = vadd.f32 %v207, %v295
      %v297 = vpop.f32.mrf.mxu0
      %298 = vmatprep.mubr.f32.mxu0 0.0
      %299 = vmatmul.mubr.f32.gmra.mxu0 %v179
      %v300 = vpop.f32.mrf.mxu0
      %v301 = vadd.f32 %v207, %v300
      %v302 = vpop.f32.mrf.mxu0
      %303 = vmatprep.mubr.f32.mxu0 0.0
      %304 = vmatmul.mubr.f32.gmra.mxu0 %v180
      %v305 = vpop.f32.mrf.mxu0
      %v306 = vadd.f32 %v207, %v305
      %v307 = vpop.f32.mrf.mxu0
      %308 = vmatprep.mubr.f32.mxu0 0.0
      %309 = vmatmul.mubr.f32.gmra.mxu0 %v181
      %v310 = vpop.f32.mrf.mxu0
      %v311 = vadd.f32 %v207, %v310
      %v312 = vpop.f32.mrf.mxu0
      %313 = vmatprep.mubr.f32.mxu0 0.0
      %314 = vmatmul.mubr.f32.gmra.mxu0 %v182
      %v315 = vpop.f32.mrf.mxu0
      %v316 = vadd.f32 %v207, %v315
      %v317 = vpop.f32.mrf.mxu0
      %318 = vmatprep.mubr.f32.mxu0 0.0
      %319 = vmatmul.mubr.f32.gmra.mxu0 %v183
      %v320 = vpop.f32.mrf.mxu0
      %v321 = vadd.f32 %v207, %v320
      %v322 = vpop.f32.mrf.mxu0
      %323 = vmatprep.mubr.f32.mxu0 0.0
      %324 = vmatmul.mubr.f32.gmra.mxu0 %v184
      %v325 = vpop.f32.mrf.mxu0
      %v326 = vadd.f32 %v207, %v325
      %v327 = vpop.f32.mrf.mxu0
      %328 = vmatprep.mubr.f32.mxu0 0.0
      %329 = vmatmul.mubr.f32.gmra.mxu0 %v185
      %v330 = vpop.f32.mrf.mxu0
      %v331 = vadd.f32 %v207, %v330
      %v332 = vpop.f32.mrf.mxu0
      %333 = vdwg.mxu0
      %334 = vst [vmem:[%s172] sm:$0xff] %v276
      %335 = vst [vmem:[%s172 + $0x8] sm:$0xff] %v281
      %336 = vst [vmem:[%s172 + $0x10] sm:$0xff] %v286
      %337 = vst [vmem:[%s172 + $0x18] sm:$0xff] %v291
      %338 = vst [vmem:[%s172 + $0x20] sm:$0xff] %v296
      %339 = vst [vmem:[%s172 + $0x28] sm:$0xff] %v301
      %340 = vst [vmem:[%s172 + $0x30] sm:$0xff] %v306
      %341 = vst [vmem:[%s172 + $0x38] sm:$0xff] %v311
      %342 = vst [vmem:[%s172 + $0x40] sm:$0xff] %v316
      %343 = vst [vmem:[%s172 + $0x48] sm:$0xff] %v321
      %344 = vst [vmem:[%s172 + $0x50] sm:$0xff] %v326
      %345 = vst [vmem:[%s172 + $0x58] sm:$0xff] %v331
      %s346 = smul.u32 12, %s14
      %p347 = scmp.lt.s32.totalorder %s346, 47
      %s348 = scalar_select %p347, %s346, 47
      %s349 = smul.addr %s348, 8
      %s350 = scalar_lea.vmem %s3, %s349
      // Predicated region
      $region33: #{_lambda_.15} parent=31 // pred_check
        %p351 = pneg %p100
      $region34: #{_lambda_.15} parent=31 // pred_check_branch
        %353 = sbr.rel (%p351) target = $region36
      $region35: #{_lambda_.15} parent=31 // pred_region
        %s354 = smul.u32 12, %s14
      $region36: #{_lambda_.15} parent=31 // pred_fallthru
        _
    $region32: #{_lambda_.15} parent=5 // pred_fallthru
      _
    %p355 = scmp.le.s32.totalorder 2, %s9
    // Predicated region
    $region37: #{_lambda_.15} parent=5 // pred_check
      %p356 = pneg %p355
    $region38: #{_lambda_.15} parent=5 // pred_check_branch
      %358 = sbr.rel (%p356) target = $region40
    $region39: #{_lambda_.15} parent=5 // pred_region
      %s359 = ssub.s32 %s9, 2
      // Predicated region
      $region41: #{_lambda_.15} parent=39 // pred_check
        %p360 = pneg %p106
      $region42: #{_lambda_.15} parent=39 // pred_check_branch
        %362 = sbr.rel (%p360) target = $region44
      $region43: #{_lambda_.15} parent=39 // pred_region
        %s363 = smul.u32 12, %s15
        %p364 = scmp.lt.s32.totalorder %s363, 47
        %s365 = scalar_select %p364, %s363, 47
        %s366 = smul.addr %s365, 8
        %s367 = scalar_lea.vmem %s3, %s366
      $region44: #{_lambda_.15} parent=39 // pred_fallthru
        _
    $region40: #{_lambda_.15} parent=5 // pred_fallthru
      _
  $region6: #{_lambda_.15} parent=0 // loop_footer
    %s13 = sadd.s32 1, %s9
  $region7: #{_lambda_.15} parent=0 // loop_footer_branch
    %8 = sbr.rel target = $region3
  $region8: #{_lambda_.15} parent=0 // loop_exit
    _

// kernel: _lambda_.10
$region0: #{_lambda_.10}
  #allocation0 [shape = 'u32[]', space=smem, size = 0x4, offset = 0x4, fixed_abs, tag = 'smem constant byte address 0x4 - core index']
  #allocation1 [shape = 'u32[144,128]{1,0:T(1,128)}', space=vmem, size = 0x12000, scoped, tag = 'internal scratch']
  %s0 = inlined_call_operand.vmem [shape: f32[432,128], index: 0, kind: input, shape index: {}, may-alias: {0,1}]
  %s1 = inlined_call_operand.vmem [shape: f32[432,128], index: 1, kind: input, shape index: {}, may-alias: {0,1}]
  %s2 = inlined_call_operand.vmem [shape: f32[9,128,128], index: 2, kind: input, shape index: {}]
  %s3 = inlined_call_operand.vmem [shape: f32[1,128], index: 3, kind: input, shape index: {}]
  %s4 = inlined_call_operand.vmem [shape: f32[384,128], index: 4, kind: output, shape index: {}]
  %s5 = sld [smem:[#allocation0]]
  $region49: #{_lambda_.10} parent=0
    _
  %s7 = ssub.s32 1, %s5
  %s8 = scalar_select 0, %s7, %s5
  loop: start=0, step=1, limit=6
  $region2: #{_lambda_.10} parent=0 // loop_pre_header
    _
  $region3: #{_lambda_.10} parent=0 // loop_header
    %s10 = sphi 0, %s14
    %p11 = scmp.ge.s32.totalorder %s10, 6
    %s20 = sphi 0, %s22
    %s23 = sphi 0, %s20
    %s24 = sphi 0, %s23
    %s40 = sphi 0, %s24
    %s50 = sphi 0, %s52
    %s53 = sphi 0, %s50
    %s54 = sphi 0, %s53
    %s70 = sphi 0, %s54
    %s74 = sphi 0, %s74
    %s76 = sphi 0, %s74
    %s77 = sphi 0, %s76
    %s91 = sphi 0, %s77
    %s95 = sphi 0, %s95
    %s97 = sphi 0, %s95
    %s98 = sphi 0, %s97
    %s112 = sphi 0, %s98
    %s118 = sphi 0, %s120
    %s121 = sphi 0, %s118
    %s122 = sphi 0, %s121
    %s138 = sphi 0, %s122
  $region4: #{_lambda_.10} parent=0 // loop_header_branch
    %13 = sbr.rel (%p11) target = $region8
  $region5: #{_lambda_.10} parent=0 // loop_body
    %s15 = ssub.s32 %s10, 1
    %s16 = ssub.s32 %s10, 2
    %s17 = sadd.s32 %s10, 1
    %s18 = ssub.s32 %s10, %s17
    %p19 = scmp.eq.s32.totalorder %s18, 0
    %s21 = sadd.s32 %s20, 1
    %s22 = scalar_select %p19, %s20, %s21
    %p25 = pneg %p19
    %p26 = scmp.eq.s32.totalorder %s10, 3
    %p27 = por %p25, %p26
    %p28 = scmp.ne.s32.totalorder %s20, %s23
    %p29 = scmp.eq.s32.totalorder %s10, 0
    %p30 = por %p28, %p29
    %p31 = scmp.ne.s32.totalorder %s20, %s23
    %p32 = scmp.eq.s32.totalorder %s15, 3
    %p33 = por %p31, %p32
    %p34 = scmp.ne.s32.totalorder %s23, %s24
    %p35 = scmp.eq.s32.totalorder %s15, 0
    %p36 = por %p34, %p35
    %p37 = scmp.ne.s32.totalorder %s23, %s24
    %p38 = scmp.eq.s32.totalorder %s16, 3
    %p39 = por %p37, %p38
    %p41 = scmp.ne.s32.totalorder %s24, %s40
    %p42 = scmp.eq.s32.totalorder %s16, 0
    %p43 = por %p41, %p42
    %s44 = sadd.s32 %s10, 1
    %s45 = smul.u32 %s44, 2
    %s46 = sadd.s32 %s17, 1
    %s47 = smul.u32 %s46, 2
    %s48 = ssub.s32 %s45, %s47
    %p49 = scmp.eq.s32.totalorder %s48, 0
    %s51 = sadd.s32 %s50, 1
    %s52 = scalar_select %p49, %s50, %s51
    %p55 = pneg %p49
    %p56 = scmp.eq.s32.totalorder %s10, 3
    %p57 = por %p55, %p56
    %p58 = scmp.ne.s32.totalorder %s50, %s53
    %p59 = scmp.eq.s32.totalorder %s10, 0
    %p60 = por %p58, %p59
    %p61 = scmp.ne.s32.totalorder %s50, %s53
    %p62 = scmp.eq.s32.totalorder %s15, 3
    %p63 = por %p61, %p62
    %p64 = scmp.ne.s32.totalorder %s53, %s54
    %p65 = scmp.eq.s32.totalorder %s15, 0
    %p66 = por %p64, %p65
    %p67 = scmp.ne.s32.totalorder %s53, %s54
    %p68 = scmp.eq.s32.totalorder %s16, 3
    %p69 = por %p67, %p68
    %p71 = scmp.ne.s32.totalorder %s54, %s70
    %p72 = scmp.eq.s32.totalorder %s16, 0
    %p73 = por %p71, %p72
    %s75 = sadd.s32 %s74, 1
    %p78 = scmp.eq.s32.totalorder %s10, 3
    %p79 = scmp.ne.s32.totalorder %s74, %s76
    %p80 = scmp.eq.s32.totalorder %s10, 0
    %p81 = por %p79, %p80
    %p82 = scmp.ne.s32.totalorder %s74, %s76
    %p83 = scmp.eq.s32.totalorder %s15, 3
    %p84 = por %p82, %p83
    %p85 = scmp.ne.s32.totalorder %s76, %s77
    %p86 = scmp.eq.s32.totalorder %s15, 0
    %p87 = por %p85, %p86
    %p88 = scmp.ne.s32.totalorder %s76, %s77
    %p89 = scmp.eq.s32.totalorder %s16, 3
    %p90 = por %p88, %p89
    %p92 = scmp.ne.s32.totalorder %s77, %s91
    %p93 = scmp.eq.s32.totalorder %s16, 0
    %p94 = por %p92, %p93
    %s96 = sadd.s32 %s95, 1
    %p99 = scmp.eq.s32.totalorder %s10, 3
    %p100 = scmp.ne.s32.totalorder %s95, %s97
    %p101 = scmp.eq.s32.totalorder %s10, 0
    %p102 = por %p100, %p101
    %p103 = scmp.ne.s32.totalorder %s95, %s97
    %p104 = scmp.eq.s32.totalorder %s15, 3
    %p105 = por %p103, %p104
    %p106 = scmp.ne.s32.totalorder %s97, %s98
    %p107 = scmp.eq.s32.totalorder %s15, 0
    %p108 = por %p106, %p107
    %p109 = scmp.ne.s32.totalorder %s97, %s98
    %p110 = scmp.eq.s32.totalorder %s16, 3
    %p111 = por %p109, %p110
    %p113 = scmp.ne.s32.totalorder %s98, %s112
    %p114 = scmp.eq.s32.totalorder %s16, 0
    %p115 = por %p113, %p114
    %s116 = ssub.s32 %s10, %s17
    %p117 = scmp.eq.s32.totalorder %s116, 0
    %s119 = sadd.s32 %s118, 1
    %s120 = scalar_select %p117, %s118, %s119
    %p123 = pneg %p117
    %p124 = scmp.eq.s32.totalorder %s10, 3
    %p125 = por %p123, %p124
    %p126 = scmp.ne.s32.totalorder %s118, %s121
    %p127 = scmp.eq.s32.totalorder %s10, 0
    %p128 = por %p126, %p127
    %p129 = scmp.ne.s32.totalorder %s118, %s121
    %p130 = scmp.eq.s32.totalorder %s15, 3
    %p131 = por %p129, %p130
    %p132 = scmp.ne.s32.totalorder %s121, %s122
    %p133 = scmp.eq.s32.totalorder %s15, 0
    %p134 = por %p132, %p133
    %p135 = scmp.ne.s32.totalorder %s121, %s122
    %p136 = scmp.eq.s32.totalorder %s16, 3
    %p137 = por %p135, %p136
    %p139 = scmp.ne.s32.totalorder %s122, %s138
    %p140 = scmp.eq.s32.totalorder %s16, 0
    %p141 = por %p139, %p140
    %p142 = scmp.le.s32.totalorder 1, %s10
    %p143 = scmp.lt.s32.totalorder %s10, 5
    %p144 = pnand %p142, %p143
    %p145 = pneg %p144
    // Predicated region
    $region9: #{_lambda_.10} parent=5 // pred_check
      _
    $region10: #{_lambda_.10} parent=5 // pred_check_branch
      %147 = sbr.rel (%p144) target = $region12
    $region11: #{_lambda_.10} parent=5 // pred_region
      %s148 = ssub.s32 %s10, 1
      // Predicated region
      $region13: #{_lambda_.10} parent=11 // pred_check
        %p149 = pneg %p87
      $region14: #{_lambda_.10} parent=11 // pred_check_branch
        %151 = sbr.rel (%p149) target = $region16
      $region15: #{_lambda_.10} parent=11 // pred_region
        _
      $region16: #{_lambda_.10} parent=11 // pred_fallthru
        _
      // Predicated region
      $region17: #{_lambda_.10} parent=11 // pred_check
        %p152 = pneg %p108
      $region18: #{_lambda_.10} parent=11 // pred_check_branch
        %154 = sbr.rel (%p152) target = $region20
      $region19: #{_lambda_.10} parent=11 // pred_region
        _
      $region20: #{_lambda_.10} parent=11 // pred_fallthru
        _
    $region12: #{_lambda_.10} parent=5 // pred_fallthru
      _
    %p155 = scmp.lt.s32.totalorder %s10, 4
    // Predicated region
    $region21: #{_lambda_.10} parent=5 // pred_check
      %p156 = pneg %p155
    $region22: #{_lambda_.10} parent=5 // pred_check_branch
      %158 = sbr.rel (%p156) target = $region24
    $region23: #{_lambda_.10} parent=5 // pred_region
      // Predicated region
      $region25: #{_lambda_.10} parent=23 // pred_check
        %p159 = pneg %p30
      $region26: #{_lambda_.10} parent=23 // pred_check_branch
        %161 = sbr.rel (%p159) target = $region28
      $region27: #{_lambda_.10} parent=23 // pred_region
        %s162 = smul.u32 12, %s10
        %s163 = ssub.s32 54, %s162
        %p164 = scmp.lt.s32.totalorder %s163, 12
        %s165 = scalar_select %p164, %s163, 12
        %s166 = smul.u32 128, %s165
        %p167 = scmp.lt.s32.totalorder %s162, 53
        %s168 = scalar_select %p167, %s162, 53
        %s169 = smul.addr %s168, 8
        %s170 = scalar_lea.vmem %s0, %s169
        %s171 = smul.u32 12, %s10
        %s172 = ssub.s32 54, %s171
        %p173 = scmp.lt.s32.totalorder %s172, 12
        %s174 = scalar_select %p173, %s172, 12
        %s175 = smul.u32 128, %s174
      $region28: #{_lambda_.10} parent=23 // pred_fallthru
        _
      // Predicated region
      $region29: #{_lambda_.10} parent=23 // pred_check
        %p176 = pneg %p60
      $region30: #{_lambda_.10} parent=23 // pred_check_branch
        %178 = sbr.rel (%p176) target = $region32
      $region31: #{_lambda_.10} parent=23 // pred_region
        %s179 = sadd.s32 %s10, 1
        %s180 = smul.u32 %s179, 2
        %s181 = smul.u32 6, %s180
        %p182 = scmp.lt.s32.totalorder %s181, 53
        %s183 = scalar_select %p182, %s181, 53
        %s184 = smul.addr %s183, 8
        %s185 = scalar_lea.vmem %s1, %s184
        %s186 = sadd.s32 %s10, 1
        %s187 = smul.u32 %s186, 2
        %s188 = smul.u32 6, %s187
      $region32: #{_lambda_.10} parent=23 // pred_fallthru
        _
    $region24: #{_lambda_.10} parent=5 // pred_fallthru
      _
    %p189 = scmp.le.s32.totalorder 1, %s10
    %p190 = scmp.lt.s32.totalorder %s10, 5
    %p191 = pnand %p189, %p190
    %p192 = pneg %p191
    // Predicated region
    $region33: #{_lambda_.10} parent=5 // pred_check
      _
    $region34: #{_lambda_.10} parent=5 // pred_check_branch
      %194 = sbr.rel (%p191) target = $region36
    $region35: #{_lambda_.10} parent=5 // pred_region
      %s195 = ssub.s32 %s10, 1
      %s196 = smul.u32 12, %s15
      %s197 = ssub.s32 54, %s196
      %p198 = scmp.lt.s32.totalorder %s197, 12
      %s199 = scalar_select %p198, %s197, 12
      %s200 = smul.u32 128, %s199
      %p201 = scmp.lt.s32.totalorder %s196, 53
      %s202 = scalar_select %p201, %s196, 53
      %s203 = smul.addr %s202, 8
      %s204 = scalar_lea.vmem %s0, %s203
      %p205 = pneg %p36
      %p206 = pneg %p33
      %s207 = sadd.s32 %s15, 1
      %s208 = smul.u32 %s207, 2
      %s209 = smul.u32 6, %s208
      %p210 = scmp.lt.s32.totalorder %s209, 53
      %s211 = scalar_select %p210, %s209, 53
      %s212 = smul.addr %s211, 8
      %s213 = scalar_lea.vmem %s1, %s212
      %p214 = pneg %p66
      %p215 = pneg %p63
      %p216 = pneg %p87
      %p217 = pneg %p84
      %p218 = pneg %p108
      %p219 = pneg %p105
      %p220 = pneg %p134
      %p221 = pneg %p131
      %s222 = smul.u32 12, %s15
      %p223 = scmp.lt.s32.totalorder %s222, 47
      %s224 = scalar_select %p223, %s222, 47
      %s225 = smul.addr %s224, 8
      %s226 = scalar_lea.vmem %s4, %s225
      %s227 = smul.u32 12, %s15
      %s228 = ssub.s32 54, %s227
      %p229 = scmp.lt.s32.totalorder %s228, 12
      %s230 = scalar_select %p229, %s228, 12
      %s231 = smul.u32 128, %s230
      %p232 = scmp.lt.s32.totalorder %s227, 53
      %s233 = scalar_select %p232, %s227, 53
      %s234 = smul.addr %s233, 8
      %s235 = scalar_lea.vmem %s0, %s234
      %s236 = smul.u32 12, %s15
      %s237 = ssub.s32 54, %s236
      %p238 = scmp.lt.s32.totalorder %s237, 12
      %s239 = scalar_select %p238, %s237, 12
      %s240 = smul.u32 128, %s239
      %s241 = sadd.s32 %s15, 1
      %s242 = smul.u32 %s241, 2
      %s243 = smul.u32 6, %s242
      %p244 = scmp.lt.s32.totalorder %s243, 53
      %s245 = scalar_select %p244, %s243, 53
      %s246 = smul.addr %s245, 8
      %s247 = scalar_lea.vmem %s1, %s246
      %s248 = sadd.s32 %s15, 1
      %s249 = smul.u32 %s248, 2
      %s250 = smul.u32 6, %s249
      %s251 = smul.u32 12, %s15
      %p252 = scmp.lt.s32.totalorder %s251, 47
      %s253 = scalar_select %p252, %s251, 47
      %s254 = smul.addr %s253, 8
      %s255 = scalar_lea.vmem %s4, %s254
      %s256 = smul.u32 12, %s15
      %v257 = vld [vmem:[%s235] sm:$0xff]
      %v258 = vld [vmem:[%s235 + $0x8] sm:$0xff]
      %v259 = vld [vmem:[%s235 + $0x10] sm:$0xff]
      %v260 = vld [vmem:[%s235 + $0x18] sm:$0xff]
      %v261 = vld [vmem:[%s235 + $0x20] sm:$0xff]
      %v262 = vld [vmem:[%s235 + $0x28] sm:$0xff]
      %v263 = vld [vmem:[%s235 + $0x30] sm:$0xff]
      %v264 = vld [vmem:[%s235 + $0x38] sm:$0xff]
      %v265 = vld [vmem:[%s235 + $0x40] sm:$0xff]
      %v266 = vld [vmem:[%s235 + $0x48] sm:$0xff]
      %v267 = vld [vmem:[%s235 + $0x50] sm:$0xff]
      %v268 = vld [vmem:[%s235 + $0x58] sm:$0xff]
      %v269 = vld [vmem:[%s247] sm:$0xff]
      %v270 = vld [vmem:[%s247 + $0x8] sm:$0xff]
      %v271 = vld [vmem:[%s247 + $0x10] sm:$0xff]
      %v272 = vld [vmem:[%s247 + $0x18] sm:$0xff]
      %v273 = vld [vmem:[%s247 + $0x20] sm:$0xff]
      %v274 = vld [vmem:[%s2] sm:$0xff]
      %v275 = vld [vmem:[%s2 + $0x8] sm:$0xff]
      %v276 = vld [vmem:[%s2 + $0x10] sm:$0xff]
      %v277 = vld [vmem:[%s2 + $0x18] sm:$0xff]
      %v278 = vld [vmem:[%s2 + $0x20] sm:$0xff]
      %v279 = vld [vmem:[%s2 + $0x28] sm:$0xff]
      %v280 = vld [vmem:[%s2 + $0x30] sm:$0xff]
      %v281 = vld [vmem:[%s2 + $0x38] sm:$0xff]
      %v282 = vld [vmem:[%s2 + $0x40] sm:$0xff]
      %v283 = vld [vmem:[%s2 + $0x48] sm:$0xff]
      %v284 = vld [vmem:[%s2 + $0x50] sm:$0xff]
      %v285 = vld [vmem:[%s2 + $0x58] sm:$0xff]
      %v286 = vld [vmem:[%s2 + $0x60] sm:$0xff]
      %v287 = vld [vmem:[%s2 + $0x68] sm:$0xff]
      %v288 = vld [vmem:[%s2 + $0x70] sm:$0xff]
      %v289 = vld [vmem:[%s2 + $0x78] sm:$0xff]
      %s290 = scalar_lea.vmem %s2, 128
      %v291 = vld [vmem:[%s290] sm:$0xff]
      %v292 = vld [vmem:[%s290 + $0x8] sm:$0xff]
      %v293 = vld [vmem:[%s290 + $0x10] sm:$0xff]
      %v294 = vld [vmem:[%s290 + $0x18] sm:$0xff]
      %v295 = vld [vmem:[%s290 + $0x20] sm:$0xff]
      %v296 = vld [vmem:[%s290 + $0x28] sm:$0xff]
      %v297 = vld [vmem:[%s290 + $0x30] sm:$0xff]
      %v298 = vld [vmem:[%s290 + $0x38] sm:$0xff]
      %v299 = vld [vmem:[%s290 + $0x40] sm:$0xff]
      %v300 = vld [vmem:[%s290 + $0x48] sm:$0xff]
      %v301 = vld [vmem:[%s290 + $0x50] sm:$0xff]
      %v302 = vld [vmem:[%s290 + $0x58] sm:$0xff]
      %v303 = vld [vmem:[%s290 + $0x60] sm:$0xff]
      %v304 = vld [vmem:[%s290 + $0x68] sm:$0xff]
      %v305 = vld [vmem:[%s290 + $0x70] sm:$0xff]
      %v306 = vld [vmem:[%s290 + $0x78] sm:$0xff]
      %vm320 = vcmask 1046528
      %v321 = vrot.slane %v257, 1
      %v322 = vrot.slane %v258, 1
      %v323 = vsel %vm320, %v321, %v322
      %v324 = vrot.slane %v259, 1
      %v325 = vsel %vm320, %v322, %v324
      %v326 = vrot.slane %v260, 1
      %v327 = vsel %vm320, %v324, %v326
      %v328 = vrot.slane %v261, 1
      %v329 = vsel %vm320, %v326, %v328
      %v330 = vrot.slane %v262, 1
      %v331 = vsel %vm320, %v328, %v330
      %v332 = vrot.slane %v263, 1
      %v333 = vsel %vm320, %v330, %v332
      %v334 = vrot.slane %v264, 1
      %v335 = vsel %vm320, %v332, %v334
      %v336 = vrot.slane %v265, 1
      %v337 = vsel %vm320, %v334, %v336
      %v338 = vrot.slane %v266, 1
      %v339 = vsel %vm320, %v336, %v338
      %v340 = vrot.slane %v267, 1
      %v341 = vsel %vm320, %v338, %v340
      %v342 = vrot.slane %v268, 1
      %v343 = vsel %vm320, %v340, %v342
      %v344 = vrot.slane %v269, 1
      %v345 = vsel %vm320, %v342, %v344
      %358 = vmatprep.subr.mxu0 0.0
      %359 = vmatpush1.msra.mxu0 %v306
      %360 = vmatprep.subr.mxu0 0.0
      %361 = vmatpush1.msra.mxu0 %v305
      %362 = vmatprep.subr.mxu0 0.0
      %363 = vmatpush1.msra.mxu0 %v304
      %364 = vmatprep.subr.mxu0 0.0
      %365 = vmatpush1.msra.mxu0 %v303
      %366 = vmatprep.subr.mxu0 0.0
      %367 = vmatpush1.msra.mxu0 %v302
      %368 = vmatprep.subr.mxu0 0.0
      %369 = vmatpush1.msra.mxu0 %v301
      %370 = vmatprep.subr.mxu0 0.0
      %371 = vmatpush1.msra.mxu0 %v300
      %372 = vmatprep.subr.mxu0 0.0
      %373 = vmatpush1.msra.mxu0 %v299
      %374 = vmatprep.subr.mxu0 0.0
      %375 = vmatpush1.msra.mxu0 %v298
      %376 = vmatprep.subr.mxu0 0.0
      %377 = vmatpush1.msra.mxu0 %v297
      %378 = vmatprep.subr.mxu0 0.0
      %379 = vmatpush1.msra.mxu0 %v296
      %380 = vmatprep.subr.mxu0 0.0
      %381 = vmatpush1.msra.mxu0 %v295
      %382 = vmatprep.subr.mxu0 0.0
      %383 = vmatpush1.msra.mxu0 %v294
      %384 = vmatprep.subr.mxu0 0.0
      %385 = vmatpush1.msra.mxu0 %v293
      %386 = vmatprep.subr.mxu0 0.0
      %387 = vmatpush1.msra.mxu0 %v292
      %388 = vmatprep.subr.mxu0 0.0
      %389 = vmatpush1.msra.mxu0 %v291
      %390 = vmatprep.subr.mxu0 0.0
      %391 = vmatpush2.msra.mxu0 0.0
      %392 = vmatprep.subr.mxu0 0.0
      %393 = vmatpush2.msra.mxu0 0.0
      %394 = vmatprep.subr.mxu0 0.0
      %395 = vmatpush2.msra.mxu0 0.0
      %396 = vmatprep.subr.mxu0 0.0
      %397 = vmatpush2.msra.mxu0 0.0
      %398 = vmatprep.subr.mxu0 0.0
      %399 = vmatpush2.msra.mxu0 0.0
      %400 = vmatprep.subr.mxu0 0.0
      %401 = vmatpush2.msra.mxu0 0.0
      %402 = vmatprep.subr.mxu0 0.0
      %403 = vmatpush2.msra.mxu0 0.0
      %404 = vmatprep.subr.mxu0 0.0
      %405 = vmatpush2.msra.mxu0 0.0
      %406 = vmatprep.subr.mxu0 0.0
      %407 = vmatpush2.msra.mxu0 0.0
      %408 = vmatprep.subr.mxu0 0.0
      %409 = vmatpush2.msra.mxu0 0.0
      %410 = vmatprep.subr.mxu0 0.0
      %411 = vmatpush2.msra.mxu0 0.0
      %412 = vmatprep.subr.mxu0 0.0
      %413 = vmatpush2.msra.mxu0 0.0
      %414 = vmatprep.subr.mxu0 0.0
      %415 = vmatpush2.msra.mxu0 0.0
      %416 = vmatprep.subr.mxu0 0.0
      %417 = vmatpush2.msra.mxu0 0.0
      %418 = vmatprep.subr.mxu0 0.0
      %419 = vmatpush2.msra.mxu0 0.0
      %420 = vmatprep.subr.mxu0 0.0
      %421 = vmatpush2.msra.mxu0 0.0
      %422 = vmatprep.mubr.f32.mxu0 0.0
      %423 = vmatmul.mubr.f32.gmra.mxu0 %v323
      %v424 = vpop.f32.mrf.mxu0
      %v425 = vadd.f32 0.0, %v424
      %v426 = vpop.f32.mrf.mxu0
      %427 = vmatprep.mubr.f32.mxu0 0.0
      %428 = vmatmul.mubr.f32.gmra.mxu0 %v325
      %v429 = vpop.f32.mrf.mxu0
      %v430 = vadd.f32 0.0, %v429
      %v431 = vpop.f32.mrf.mxu0
      %432 = vmatprep.mubr.f32.mxu0 0.0
      %433 = vmatmul.mubr.f32.gmra.mxu0 %v327
      %v434 = vpop.f32.mrf.mxu0
      %v435 = vadd.f32 0.0, %v434
      %v436 = vpop.f32.mrf.mxu0
      %437 = vmatprep.mubr.f32.mxu0 0.0
      %438 = vmatmul.mubr.f32.gmra.mxu0 %v329
      %v439 = vpop.f32.mrf.mxu0
      %v440 = vadd.f32 0.0, %v439
      %v441 = vpop.f32.mrf.mxu0
      %442 = vmatprep.mubr.f32.mxu0 0.0
      %443 = vmatmul.mubr.f32.gmra.mxu0 %v331
      %v444 = vpop.f32.mrf.mxu0
      %v445 = vadd.f32 0.0, %v444
      %v446 = vpop.f32.mrf.mxu0
      %447 = vmatprep.mubr.f32.mxu0 0.0
      %448 = vmatmul.mubr.f32.gmra.mxu0 %v333
      %v449 = vpop.f32.mrf.mxu0
      %v450 = vadd.f32 0.0, %v449
      %v451 = vpop.f32.mrf.mxu0
      %452 = vmatprep.mubr.f32.mxu0 0.0
      %453 = vmatmul.mubr.f32.gmra.mxu0 %v335
      %v454 = vpop.f32.mrf.mxu0
      %v455 = vadd.f32 0.0, %v454
      %v456 = vpop.f32.mrf.mxu0
      %457 = vmatprep.mubr.f32.mxu0 0.0
      %458 = vmatmul.mubr.f32.gmra.mxu0 %v337
      %v459 = vpop.f32.mrf.mxu0
      %v460 = vadd.f32 0.0, %v459
      %v461 = vpop.f32.mrf.mxu0
      %462 = vmatprep.mubr.f32.mxu0 0.0
      %463 = vmatmul.mubr.f32.gmra.mxu0 %v339
      %v464 = vpop.f32.mrf.mxu0
      %v465 = vadd.f32 0.0, %v464
      %v466 = vpop.f32.mrf.mxu0
      %467 = vmatprep.mubr.f32.mxu0 0.0
      %468 = vmatmul.mubr.f32.gmra.mxu0 %v341
      %v469 = vpop.f32.mrf.mxu0
      %v470 = vadd.f32 0.0, %v469
      %v471 = vpop.f32.mrf.mxu0
      %472 = vmatprep.mubr.f32.mxu0 0.0
      %473 = vmatmul.mubr.f32.gmra.mxu0 %v343
      %v474 = vpop.f32.mrf.mxu0
      %v475 = vadd.f32 0.0, %v474
      %v476 = vpop.f32.mrf.mxu0
      %477 = vmatprep.mubr.f32.mxu0 0.0
      %478 = vmatmul.mubr.f32.gmra.mxu0 %v345
      %v479 = vpop.f32.mrf.mxu0
      %v480 = vadd.f32 0.0, %v479
      %v481 = vpop.f32.mrf.mxu0
      %482 = vdwg.mxu0
      %483 = vmatprep.subr.mxu0 0.0
      %484 = vmatpush1.msra.mxu0 %v289
      %485 = vmatprep.subr.mxu0 0.0
      %486 = vmatpush1.msra.mxu0 %v288
      %487 = vmatprep.subr.mxu0 0.0
      %488 = vmatpush1.msra.mxu0 %v287
      %489 = vmatprep.subr.mxu0 0.0
      %490 = vmatpush1.msra.mxu0 %v286
      %491 = vmatprep.subr.mxu0 0.0
      %492 = vmatpush1.msra.mxu0 %v285
      %493 = vmatprep.subr.mxu0 0.0
      %494 = vmatpush1.msra.mxu0 %v284
      %495 = vmatprep.subr.mxu0 0.0
      %496 = vmatpush1.msra.mxu0 %v283
      %497 = vmatprep.subr.mxu0 0.0
      %498 = vmatpush1.msra.mxu0 %v282
      %499 = vmatprep.subr.mxu0 0.0
      %500 = vmatpush1.msra.mxu0 %v281
      %501 = vmatprep.subr.mxu0 0.0
      %502 = vmatpush1.msra.mxu0 %v280
      %503 = vmatprep.subr.mxu0 0.0
      %504 = vmatpush1.msra.mxu0 %v279
      %505 = vmatprep.subr.mxu0 0.0
      %506 = vmatpush1.msra.mxu0 %v278
      %507 = vmatprep.subr.mxu0 0.0
      %508 = vmatpush1.msra.mxu0 %v277
      %509 = vmatprep.subr.mxu0 0.0
      %510 = vmatpush1.msra.mxu0 %v276
      %511 = vmatprep.subr.mxu0 0.0
      %512 = vmatpush1.msra.mxu0 %v275
      %513 = vmatprep.subr.mxu0 0.0
      %514 = vmatpush1.msra.mxu0 %v274
      %515 = vmatprep.subr.mxu0 0.0
      %516 = vmatpush2.msra.mxu0 0.0
      %517 = vmatprep.subr.mxu0 0.0
      %518 = vmatpush2.msra.mxu0 0.0
      %519 = vmatprep.subr.mxu0 0.0
      %520 = vmatpush2.msra.mxu0 0.0
      %521 = vmatprep.subr.mxu0 0.0
      %522 = vmatpush2.msra.mxu0 0.0
      %523 = vmatprep.subr.mxu0 0.0
      %524 = vmatpush2.msra.mxu0 0.0
      %525 = vmatprep.subr.mxu0 0.0
      %526 = vmatpush2.msra.mxu0 0.0
      %527 = vmatprep.subr.mxu0 0.0
      %528 = vmatpush2.msra.mxu0 0.0
      %529 = vmatprep.subr.mxu0 0.0
      %530 = vmatpush2.msra.mxu0 0.0
      %531 = vmatprep.subr.mxu0 0.0
      %532 = vmatpush2.msra.mxu0 0.0
      %533 = vmatprep.subr.mxu0 0.0
      %534 = vmatpush2.msra.mxu0 0.0
      %535 = vmatprep.subr.mxu0 0.0
      %536 = vmatpush2.msra.mxu0 0.0
      %537 = vmatprep.subr.mxu0 0.0
      %538 = vmatpush2.msra.mxu0 0.0
      %539 = vmatprep.subr.mxu0 0.0
      %540 = vmatpush2.msra.mxu0 0.0
      %541 = vmatprep.subr.mxu0 0.0
      %542 = vmatpush2.msra.mxu0 0.0
      %543 = vmatprep.subr.mxu0 0.0
      %544 = vmatpush2.msra.mxu0 0.0
      %545 = vmatprep.subr.mxu0 0.0
      %546 = vmatpush2.msra.mxu0 0.0
      %547 = vmatprep.mubr.f32.mxu0 0.0
      %548 = vmatmul.mubr.f32.gmra.mxu0 %v257
      %v549 = vpop.f32.mrf.mxu0
      %v550 = vadd.f32 %v425, %v549
      %v551 = vpop.f32.mrf.mxu0
      %552 = vmatprep.mubr.f32.mxu0 0.0
      %553 = vmatmul.mubr.f32.gmra.mxu0 %v258
      %v554 = vpop.f32.mrf.mxu0
      %v555 = vadd.f32 %v430, %v554
      %v556 = vpop.f32.mrf.mxu0
      %557 = vmatprep.mubr.f32.mxu0 0.0
      %558 = vmatmul.mubr.f32.gmra.mxu0 %v259
      %v559 = vpop.f32.mrf.mxu0
      %v560 = vadd.f32 %v435, %v559
      %v561 = vpop.f32.mrf.mxu0
      %562 = vmatprep.mubr.f32.mxu0 0.0
      %563 = vmatmul.mubr.f32.gmra.mxu0 %v260
      %v564 = vpop.f32.mrf.mxu0
      %v565 = vadd.f32 %v440, %v564
      %v566 = vpop.f32.mrf.mxu0
      %567 = vmatprep.mubr.f32.mxu0 0.0
      %568 = vmatmul.mubr.f32.gmra.mxu0 %v261
      %v569 = vpop.f32.mrf.mxu0
      %v570 = vadd.f32 %v445, %v569
      %v571 = vpop.f32.mrf.mxu0
      %572 = vmatprep.mubr.f32.mxu0 0.0
      %573 = vmatmul.mubr.f32.gmra.mxu0 %v262
      %v574 = vpop.f32.mrf.mxu0
      %v575 = vadd.f32 %v450, %v574
      %v576 = vpop.f32.mrf.mxu0
      %577 = vmatprep.mubr.f32.mxu0 0.0
      %578 = vmatmul.mubr.f32.gmra.mxu0 %v263
      %v579 = vpop.f32.mrf.mxu0
      %v580 = vadd.f32 %v455, %v579
      %v581 = vpop.f32.mrf.mxu0
      %582 = vmatprep.mubr.f32.mxu0 0.0
      %583 = vmatmul.mubr.f32.gmra.mxu0 %v264
      %v584 = vpop.f32.mrf.mxu0
      %v585 = vadd.f32 %v460, %v584
      %v586 = vpop.f32.mrf.mxu0
      %587 = vmatprep.mubr.f32.mxu0 0.0
      %588 = vmatmul.mubr.f32.gmra.mxu0 %v265
      %v589 = vpop.f32.mrf.mxu0
      %v590 = vadd.f32 %v465, %v589
      %v591 = vpop.f32.mrf.mxu0
      %592 = vmatprep.mubr.f32.mxu0 0.0
      %593 = vmatmul.mubr.f32.gmra.mxu0 %v266
      %v594 = vpop.f32.mrf.mxu0
      %v595 = vadd.f32 %v470, %v594
      %v596 = vpop.f32.mrf.mxu0
      %597 = vmatprep.mubr.f32.mxu0 0.0
      %598 = vmatmul.mubr.f32.gmra.mxu0 %v267
      %v599 = vpop.f32.mrf.mxu0
      %v600 = vadd.f32 %v475, %v599
      %v601 = vpop.f32.mrf.mxu0
      %602 = vmatprep.mubr.f32.mxu0 0.0
      %603 = vmatmul.mubr.f32.gmra.mxu0 %v268
      %v604 = vpop.f32.mrf.mxu0
      %v605 = vadd.f32 %v480, %v604
      %v606 = vpop.f32.mrf.mxu0
      %607 = vdwg.mxu0
      %s608 = scalar_lea.vmem %s2, 256
      %v609 = vld [vmem:[%s608] sm:$0xff]
      %v610 = vld [vmem:[%s608 + $0x8] sm:$0xff]
      %v611 = vld [vmem:[%s608 + $0x10] sm:$0xff]
      %v612 = vld [vmem:[%s608 + $0x18] sm:$0xff]
      %v613 = vld [vmem:[%s608 + $0x20] sm:$0xff]
      %v614 = vld [vmem:[%s608 + $0x28] sm:$0xff]
      %v615 = vld [vmem:[%s608 + $0x30] sm:$0xff]
      %v616 = vld [vmem:[%s608 + $0x38] sm:$0xff]
      %v617 = vld [vmem:[%s608 + $0x40] sm:$0xff]
      %v618 = vld [vmem:[%s608 + $0x48] sm:$0xff]
      %v619 = vld [vmem:[%s608 + $0x50] sm:$0xff]
      %v620 = vld [vmem:[%s608 + $0x58] sm:$0xff]
      %v621 = vld [vmem:[%s608 + $0x60] sm:$0xff]
      %v622 = vld [vmem:[%s608 + $0x68] sm:$0xff]
      %v623 = vld [vmem:[%s608 + $0x70] sm:$0xff]
      %v624 = vld [vmem:[%s608 + $0x78] sm:$0xff]
      %vm625 = vcmask 1045504
      %v626 = vrot.slane %v257, 2
      %v627 = vrot.slane %v258, 2
      %v628 = vsel %vm625, %v626, %v627
      %v629 = vrot.slane %v259, 2
      %v630 = vsel %vm625, %v627, %v629
      %v631 = vrot.slane %v260, 2
      %v632 = vsel %vm625, %v629, %v631
      %v633 = vrot.slane %v261, 2
      %v634 = vsel %vm625, %v631, %v633
      %v635 = vrot.slane %v262, 2
      %v636 = vsel %vm625, %v633, %v635
      %v637 = vrot.slane %v263, 2
      %v638 = vsel %vm625, %v635, %v637
      %v639 = vrot.slane %v264, 2
      %v640 = vsel %vm625, %v637, %v639
      %v641 = vrot.slane %v265, 2
      %v642 = vsel %vm625, %v639, %v641
      %v643 = vrot.slane %v266, 2
      %v644 = vsel %vm625, %v641, %v643
      %v645 = vrot.slane %v267, 2
      %v646 = vsel %vm625, %v643, %v645
      %v647 = vrot.slane %v268, 2
      %v648 = vsel %vm625, %v645, %v647
      %v649 = vrot.slane %v269, 2
      %v650 = vsel %vm625, %v647, %v649
      %663 = vmatprep.subr.mxu0 0.0
      %664 = vmatpush1.msra.mxu0 %v624
      %665 = vmatprep.subr.mxu0 0.0
      %666 = vmatpush1.msra.mxu0 %v623
      %667 = vmatprep.subr.mxu0 0.0
      %668 = vmatpush1.msra.mxu0 %v622
      %669 = vmatprep.subr.mxu0 0.0
      %670 = vmatpush1.msra.mxu0 %v621
      %671 = vmatprep.subr.mxu0 0.0
      %672 = vmatpush1.msra.mxu0 %v620
      %673 = vmatprep.subr.mxu0 0.0
      %674 = vmatpush1.msra.mxu0 %v619
      %675 = vmatprep.subr.mxu0 0.0
      %676 = vmatpush1.msra.mxu0 %v618
      %677 = vmatprep.subr.mxu0 0.0
      %678 = vmatpush1.msra.mxu0 %v617
      %679 = vmatprep.subr.mxu0 0.0
      %680 = vmatpush1.msra.mxu0 %v616
      %681 = vmatprep.subr.mxu0 0.0
      %682 = vmatpush1.msra.mxu0 %v615
      %683 = vmatprep.subr.mxu0 0.0
      %684 = vmatpush1.msra.mxu0 %v614
      %685 = vmatprep.subr.mxu0 0.0
      %686 = vmatpush1.msra.mxu0 %v613
      %687 = vmatprep.subr.mxu0 0.0
      %688 = vmatpush1.msra.mxu0 %v612
      %689 = vmatprep.subr.mxu0 0.0
      %690 = vmatpush1.msra.mxu0 %v611
      %691 = vmatprep.subr.mxu0 0.0
      %692 = vmatpush1.msra.mxu0 %v610
      %693 = vmatprep.subr.mxu0 0.0
      %694 = vmatpush1.msra.mxu0 %v609
      %695 = vmatprep.subr.mxu0 0.0
      %696 = vmatpush2.msra.mxu0 0.0
      %697 = vmatprep.subr.mxu0 0.0
      %698 = vmatpush2.msra.mxu0 0.0
      %699 = vmatprep.subr.mxu0 0.0
      %700 = vmatpush2.msra.mxu0 0.0
      %701 = vmatprep.subr.mxu0 0.0
      %702 = vmatpush2.msra.mxu0 0.0
      %703 = vmatprep.subr.mxu0 0.0
      %704 = vmatpush2.msra.mxu0 0.0
      %705 = vmatprep.subr.mxu0 0.0
      %706 = vmatpush2.msra.mxu0 0.0
      %707 = vmatprep.subr.mxu0 0.0
      %708 = vmatpush2.msra.mxu0 0.0
      %709 = vmatprep.subr.mxu0 0.0
      %710 = vmatpush2.msra.mxu0 0.0
      %711 = vmatprep.subr.mxu0 0.0
      %712 = vmatpush2.msra.mxu0 0.0
      %713 = vmatprep.subr.mxu0 0.0
      %714 = vmatpush2.msra.mxu0 0.0
      %715 = vmatprep.subr.mxu0 0.0
      %716 = vmatpush2.msra.mxu0 0.0
      %717 = vmatprep.subr.mxu0 0.0
      %718 = vmatpush2.msra.mxu0 0.0
      %719 = vmatprep.subr.mxu0 0.0
      %720 = vmatpush2.msra.mxu0 0.0
      %721 = vmatprep.subr.mxu0 0.0
      %722 = vmatpush2.msra.mxu0 0.0
      %723 = vmatprep.subr.mxu0 0.0
      %724 = vmatpush2.msra.mxu0 0.0
      %725 = vmatprep.subr.mxu0 0.0
      %726 = vmatpush2.msra.mxu0 0.0
      %727 = vmatprep.mubr.f32.mxu0 0.0
      %728 = vmatmul.mubr.f32.gmra.mxu0 %v628
      %v729 = vpop.f32.mrf.mxu0
      %v730 = vadd.f32 0.0, %v729
      %v731 = vpop.f32.mrf.mxu0
      %732 = vmatprep.mubr.f32.mxu0 0.0
      %733 = vmatmul.mubr.f32.gmra.mxu0 %v630
      %v734 = vpop.f32.mrf.mxu0
      %v735 = vadd.f32 0.0, %v734
      %v736 = vpop.f32.mrf.mxu0
      %737 = vmatprep.mubr.f32.mxu0 0.0
      %738 = vmatmul.mubr.f32.gmra.mxu0 %v632
      %v739 = vpop.f32.mrf.mxu0
      %v740 = vadd.f32 0.0, %v739
      %v741 = vpop.f32.mrf.mxu0
      %742 = vmatprep.mubr.f32.mxu0 0.0
      %743 = vmatmul.mubr.f32.gmra.mxu0 %v634
      %v744 = vpop.f32.mrf.mxu0
      %v745 = vadd.f32 0.0, %v744
      %v746 = vpop.f32.mrf.mxu0
      %747 = vmatprep.mubr.f32.mxu0 0.0
      %748 = vmatmul.mubr.f32.gmra.mxu0 %v636
      %v749 = vpop.f32.mrf.mxu0
      %v750 = vadd.f32 0.0, %v749
      %v751 = vpop.f32.mrf.mxu0
      %752 = vmatprep.mubr.f32.mxu0 0.0
      %753 = vmatmul.mubr.f32.gmra.mxu0 %v638
      %v754 = vpop.f32.mrf.mxu0
      %v755 = vadd.f32 0.0, %v754
      %v756 = vpop.f32.mrf.mxu0
      %757 = vmatprep.mubr.f32.mxu0 0.0
      %758 = vmatmul.mubr.f32.gmra.mxu0 %v640
      %v759 = vpop.f32.mrf.mxu0
      %v760 = vadd.f32 0.0, %v759
      %v761 = vpop.f32.mrf.mxu0
      %762 = vmatprep.mubr.f32.mxu0 0.0
      %763 = vmatmul.mubr.f32.gmra.mxu0 %v642
      %v764 = vpop.f32.mrf.mxu0
      %v765 = vadd.f32 0.0, %v764
      %v766 = vpop.f32.mrf.mxu0
      %767 = vmatprep.mubr.f32.mxu0 0.0
      %768 = vmatmul.mubr.f32.gmra.mxu0 %v644
      %v769 = vpop.f32.mrf.mxu0
      %v770 = vadd.f32 0.0, %v769
      %v771 = vpop.f32.mrf.mxu0
      %772 = vmatprep.mubr.f32.mxu0 0.0
      %773 = vmatmul.mubr.f32.gmra.mxu0 %v646
      %v774 = vpop.f32.mrf.mxu0
      %v775 = vadd.f32 0.0, %v774
      %v776 = vpop.f32.mrf.mxu0
      %777 = vmatprep.mubr.f32.mxu0 0.0
      %778 = vmatmul.mubr.f32.gmra.mxu0 %v648
      %v779 = vpop.f32.mrf.mxu0
      %v780 = vadd.f32 0.0, %v779
      %v781 = vpop.f32.mrf.mxu0
      %782 = vmatprep.mubr.f32.mxu0 0.0
      %783 = vmatmul.mubr.f32.gmra.mxu0 %v650
      %v784 = vpop.f32.mrf.mxu0
      %v785 = vadd.f32 0.0, %v784
      %v786 = vpop.f32.mrf.mxu0
      %787 = vdwg.mxu0
      %v788 = vadd.f32 %v550, %v730
      %v789 = vadd.f32 %v555, %v735
      %v790 = vadd.f32 %v560, %v740
      %v791 = vadd.f32 %v565, %v745
      %v792 = vadd.f32 %v570, %v750
      %v793 = vadd.f32 %v575, %v755
      %v794 = vadd.f32 %v580, %v760
      %v795 = vadd.f32 %v585, %v765
      %v796 = vadd.f32 %v590, %v770
      %v797 = vadd.f32 %v595, %v775
      %v798 = vadd.f32 %v600, %v780
      %v799 = vadd.f32 %v605, %v785
      %s800 = scalar_lea.vmem %s2, 384
      %v801 = vld [vmem:[%s800] sm:$0xff]
      %v802 = vld [vmem:[%s800 + $0x8] sm:$0xff]
      %v803 = vld [vmem:[%s800 + $0x10] sm:$0xff]
      %v804 = vld [vmem:[%s800 + $0x18] sm:$0xff]
      %v805 = vld [vmem:[%s800 + $0x20] sm:$0xff]
      %v806 = vld [vmem:[%s800 + $0x28] sm:$0xff]
      %v807 = vld [vmem:[%s800 + $0x30] sm:$0xff]
      %v808 = vld [vmem:[%s800 + $0x38] sm:$0xff]
      %v809 = vld [vmem:[%s800 + $0x40] sm:$0xff]
      %v810 = vld [vmem:[%s800 + $0x48] sm:$0xff]
      %v811 = vld [vmem:[%s800 + $0x50] sm:$0xff]
      %v812 = vld [vmem:[%s800 + $0x58] sm:$0xff]
      %v813 = vld [vmem:[%s800 + $0x60] sm:$0xff]
      %v814 = vld [vmem:[%s800 + $0x68] sm:$0xff]
      %v815 = vld [vmem:[%s800 + $0x70] sm:$0xff]
      %v816 = vld [vmem:[%s800 + $0x78] sm:$0xff]
      %817 = vmatprep.subr.mxu0 0.0
      %818 = vmatpush1.msra.mxu0 %v816
      %819 = vmatprep.subr.mxu0 0.0
      %820 = vmatpush1.msra.mxu0 %v815
      %821 = vmatprep.subr.mxu0 0.0
      %822 = vmatpush1.msra.mxu0 %v814
      %823 = vmatprep.subr.mxu0 0.0
      %824 = vmatpush1.msra.mxu0 %v813
      %825 = vmatprep.subr.mxu0 0.0
      %826 = vmatpush1.msra.mxu0 %v812
      %827 = vmatprep.subr.mxu0 0.0
      %828 = vmatpush1.msra.mxu0 %v811
      %829 = vmatprep.subr.mxu0 0.0
      %830 = vmatpush1.msra.mxu0 %v810
      %831 = vmatprep.subr.mxu0 0.0
      %832 = vmatpush1.msra.mxu0 %v809
      %833 = vmatprep.subr.mxu0 0.0
      %834 = vmatpush1.msra.mxu0 %v808
      %835 = vmatprep.subr.mxu0 0.0
      %836 = vmatpush1.msra.mxu0 %v807
      %837 = vmatprep.subr.mxu0 0.0
      %838 = vmatpush1.msra.mxu0 %v806
      %839 = vmatprep.subr.mxu0 0.0
      %840 = vmatpush1.msra.mxu0 %v805
      %841 = vmatprep.subr.mxu0 0.0
      %842 = vmatpush1.msra.mxu0 %v804
      %843 = vmatprep.subr.mxu0 0.0
      %844 = vmatpush1.msra.mxu0 %v803
      %845 = vmatprep.subr.mxu0 0.0
      %846 = vmatpush1.msra.mxu0 %v802
      %847 = vmatprep.subr.mxu0 0.0
      %848 = vmatpush1.msra.mxu0 %v801
      %849 = vmatprep.subr.mxu0 0.0
      %850 = vmatpush2.msra.mxu0 0.0
      %851 = vmatprep.subr.mxu0 0.0
      %852 = vmatpush2.msra.mxu0 0.0
      %853 = vmatprep.subr.mxu0 0.0
      %854 = vmatpush2.msra.mxu0 0.0
      %855 = vmatprep.subr.mxu0 0.0
      %856 = vmatpush2.msra.mxu0 0.0
      %857 = vmatprep.subr.mxu0 0.0
      %858 = vmatpush2.msra.mxu0 0.0
      %859 = vmatprep.subr.mxu0 0.0
      %860 = vmatpush2.msra.mxu0 0.0
      %861 = vmatprep.subr.mxu0 0.0
      %862 = vmatpush2.msra.mxu0 0.0
      %863 = vmatprep.subr.mxu0 0.0
      %864 = vmatpush2.msra.mxu0 0.0
      %865 = vmatprep.subr.mxu0 0.0
      %866 = vmatpush2.msra.mxu0 0.0
      %867 = vmatprep.subr.mxu0 0.0
      %868 = vmatpush2.msra.mxu0 0.0
      %869 = vmatprep.subr.mxu0 0.0
      %870 = vmatpush2.msra.mxu0 0.0
      %871 = vmatprep.subr.mxu0 0.0
      %872 = vmatpush2.msra.mxu0 0.0
      %873 = vmatprep.subr.mxu0 0.0
      %874 = vmatpush2.msra.mxu0 0.0
      %875 = vmatprep.subr.mxu0 0.0
      %876 = vmatpush2.msra.mxu0 0.0
      %877 = vmatprep.subr.mxu0 0.0
      %878 = vmatpush2.msra.mxu0 0.0
      %879 = vmatprep.subr.mxu0 0.0
      %880 = vmatpush2.msra.mxu0 0.0
      %881 = vmatprep.mubr.f32.mxu0 0.0
      %882 = vmatmul.mubr.f32.gmra.mxu0 %v259
      %v883 = vpop.f32.mrf.mxu0
      %v884 = vadd.f32 0.0, %v883
      %v885 = vpop.f32.mrf.mxu0
      %886 = vmatprep.mubr.f32.mxu0 0.0
      %887 = vmatmul.mubr.f32.gmra.mxu0 %v260
      %v888 = vpop.f32.mrf.mxu0
      %v889 = vadd.f32 0.0, %v888
      %v890 = vpop.f32.mrf.mxu0
      %891 = vmatprep.mubr.f32.mxu0 0.0
      %892 = vmatmul.mubr.f32.gmra.mxu0 %v261
      %v893 = vpop.f32.mrf.mxu0
      %v894 = vadd.f32 0.0, %v893
      %v895 = vpop.f32.mrf.mxu0
      %896 = vmatprep.mubr.f32.mxu0 0.0
      %897 = vmatmul.mubr.f32.gmra.mxu0 %v262
      %v898 = vpop.f32.mrf.mxu0
      %v899 = vadd.f32 0.0, %v898
      %v900 = vpop.f32.mrf.mxu0
      %901 = vmatprep.mubr.f32.mxu0 0.0
      %902 = vmatmul.mubr.f32.gmra.mxu0 %v263
      %v903 = vpop.f32.mrf.mxu0
      %v904 = vadd.f32 0.0, %v903
      %v905 = vpop.f32.mrf.mxu0
      %906 = vmatprep.mubr.f32.mxu0 0.0
      %907 = vmatmul.mubr.f32.gmra.mxu0 %v264
      %v908 = vpop.f32.mrf.mxu0
      %v909 = vadd.f32 0.0, %v908
      %v910 = vpop.f32.mrf.mxu0
      %911 = vmatprep.mubr.f32.mxu0 0.0
      %912 = vmatmul.mubr.f32.gmra.mxu0 %v265
      %v913 = vpop.f32.mrf.mxu0
      %v914 = vadd.f32 0.0, %v913
      %v915 = vpop.f32.mrf.mxu0
      %916 = vmatprep.mubr.f32.mxu0 0.0
      %917 = vmatmul.mubr.f32.gmra.mxu0 %v266
      %v918 = vpop.f32.mrf.mxu0
      %v919 = vadd.f32 0.0, %v918
      %v920 = vpop.f32.mrf.mxu0
      %921 = vmatprep.mubr.f32.mxu0 0.0
      %922 = vmatmul.mubr.f32.gmra.mxu0 %v267
      %v923 = vpop.f32.mrf.mxu0
      %v924 = vadd.f32 0.0, %v923
      %v925 = vpop.f32.mrf.mxu0
      %926 = vmatprep.mubr.f32.mxu0 0.0
      %927 = vmatmul.mubr.f32.gmra.mxu0 %v268
      %v928 = vpop.f32.mrf.mxu0
      %v929 = vadd.f32 0.0, %v928
      %v930 = vpop.f32.mrf.mxu0
      %931 = vmatprep.mubr.f32.mxu0 0.0
      %932 = vmatmul.mubr.f32.gmra.mxu0 %v269
      %v933 = vpop.f32.mrf.mxu0
      %v934 = vadd.f32 0.0, %v933
      %v935 = vpop.f32.mrf.mxu0
      %936 = vmatprep.mubr.f32.mxu0 0.0
      %937 = vmatmul.mubr.f32.gmra.mxu0 %v270
      %v938 = vpop.f32.mrf.mxu0
      %v939 = vadd.f32 0.0, %v938
      %v940 = vpop.f32.mrf.mxu0
      %941 = vdwg.mxu0
      %v942 = vadd.f32 %v788, %v884
      %v943 = vadd.f32 %v789, %v889
      %v944 = vadd.f32 %v790, %v894
      %v945 = vadd.f32 %v791, %v899
      %v946 = vadd.f32 %v792, %v904
      %v947 = vadd.f32 %v793, %v909
      %v948 = vadd.f32 %v794, %v914
      %v949 = vadd.f32 %v795, %v919
      %v950 = vadd.f32 %v796, %v924
      %v951 = vadd.f32 %v797, %v929
      %v952 = vadd.f32 %v798, %v934
      %v953 = vadd.f32 %v799, %v939
      %s954 = scalar_lea.vmem %s2, 512
      %v955 = vld [vmem:[%s954] sm:$0xff]
      %v956 = vld [vmem:[%s954 + $0x8] sm:$0xff]
      %v957 = vld [vmem:[%s954 + $0x10] sm:$0xff]
      %v958 = vld [vmem:[%s954 + $0x18] sm:$0xff]
      %v959 = vld [vmem:[%s954 + $0x20] sm:$0xff]
      %v960 = vld [vmem:[%s954 + $0x28] sm:$0xff]
      %v961 = vld [vmem:[%s954 + $0x30] sm:$0xff]
      %v962 = vld [vmem:[%s954 + $0x38] sm:$0xff]
      %v963 = vld [vmem:[%s954 + $0x40] sm:$0xff]
      %v964 = vld [vmem:[%s954 + $0x48] sm:$0xff]
      %v965 = vld [vmem:[%s954 + $0x50] sm:$0xff]
      %v966 = vld [vmem:[%s954 + $0x58] sm:$0xff]
      %v967 = vld [vmem:[%s954 + $0x60] sm:$0xff]
      %v968 = vld [vmem:[%s954 + $0x68] sm:$0xff]
      %v969 = vld [vmem:[%s954 + $0x70] sm:$0xff]
      %v970 = vld [vmem:[%s954 + $0x78] sm:$0xff]
      %v973 = vrot.slane %v270, 1
      %v974 = vsel %vm320, %v344, %v973
      %v975 = vrot.slane %v271, 1
      %v976 = vsel %vm320, %v973, %v975
      %979 = vmatprep.subr.mxu0 0.0
      %980 = vmatpush1.msra.mxu0 %v970
      %981 = vmatprep.subr.mxu0 0.0
      %982 = vmatpush1.msra.mxu0 %v969
      %983 = vmatprep.subr.mxu0 0.0
      %984 = vmatpush1.msra.mxu0 %v968
      %985 = vmatprep.subr.mxu0 0.0
      %986 = vmatpush1.msra.mxu0 %v967
      %987 = vmatprep.subr.mxu0 0.0
      %988 = vmatpush1.msra.mxu0 %v966
      %989 = vmatprep.subr.mxu0 0.0
      %990 = vmatpush1.msra.mxu0 %v965
      %991 = vmatprep.subr.mxu0 0.0
      %992 = vmatpush1.msra.mxu0 %v964
      %993 = vmatprep.subr.mxu0 0.0
      %994 = vmatpush1.msra.mxu0 %v963
      %995 = vmatprep.subr.mxu0 0.0
      %996 = vmatpush1.msra.mxu0 %v962
      %997 = vmatprep.subr.mxu0 0.0
      %998 = vmatpush1.msra.mxu0 %v961
      %999 = vmatprep.subr.mxu0 0.0
      %1000 = vmatpush1.msra.mxu0 %v960
      %1001 = vmatprep.subr.mxu0 0.0
      %1002 = vmatpush1.msra.mxu0 %v959
      %1003 = vmatprep.subr.mxu0 0.0
      %1004 = vmatpush1.msra.mxu0 %v958
      %1005 = vmatprep.subr.mxu0 0.0
      %1006 = vmatpush1.msra.mxu0 %v957
      %1007 = vmatprep.subr.mxu0 0.0
      %1008 = vmatpush1.msra.mxu0 %v956
      %1009 = vmatprep.subr.mxu0 0.0
      %1010 = vmatpush1.msra.mxu0 %v955
      %1011 = vmatprep.subr.mxu0 0.0
      %1012 = vmatpush2.msra.mxu0 0.0
      %1013 = vmatprep.subr.mxu0 0.0
      %1014 = vmatpush2.msra.mxu0 0.0
      %1015 = vmatprep.subr.mxu0 0.0
      %1016 = vmatpush2.msra.mxu0 0.0
      %1017 = vmatprep.subr.mxu0 0.0
      %1018 = vmatpush2.msra.mxu0 0.0
      %1019 = vmatprep.subr.mxu0 0.0
      %1020 = vmatpush2.msra.mxu0 0.0
      %1021 = vmatprep.subr.mxu0 0.0
      %1022 = vmatpush2.msra.mxu0 0.0
      %1023 = vmatprep.subr.mxu0 0.0
      %1024 = vmatpush2.msra.mxu0 0.0
      %1025 = vmatprep.subr.mxu0 0.0
      %1026 = vmatpush2.msra.mxu0 0.0
      %1027 = vmatprep.subr.mxu0 0.0
      %1028 = vmatpush2.msra.mxu0 0.0
      %1029 = vmatprep.subr.mxu0 0.0
      %1030 = vmatpush2.msra.mxu0 0.0
      %1031 = vmatprep.subr.mxu0 0.0
      %1032 = vmatpush2.msra.mxu0 0.0
      %1033 = vmatprep.subr.mxu0 0.0
      %1034 = vmatpush2.msra.mxu0 0.0
      %1035 = vmatprep.subr.mxu0 0.0
      %1036 = vmatpush2.msra.mxu0 0.0
      %1037 = vmatprep.subr.mxu0 0.0
      %1038 = vmatpush2.msra.mxu0 0.0
      %1039 = vmatprep.subr.mxu0 0.0
      %1040 = vmatpush2.msra.mxu0 0.0
      %1041 = vmatprep.subr.mxu0 0.0
      %1042 = vmatpush2.msra.mxu0 0.0
      %1043 = vmatprep.mubr.f32.mxu0 0.0
      %1044 = vmatmul.mubr.f32.gmra.mxu0 %v327
      %v1045 = vpop.f32.mrf.mxu0
      %v1046 = vadd.f32 0.0, %v1045
      %v1047 = vpop.f32.mrf.mxu0
      %1048 = vmatprep.mubr.f32.mxu0 0.0
      %1049 = vmatmul.mubr.f32.gmra.mxu0 %v329
      %v1050 = vpop.f32.mrf.mxu0
      %v1051 = vadd.f32 0.0, %v1050
      %v1052 = vpop.f32.mrf.mxu0
      %1053 = vmatprep.mubr.f32.mxu0 0.0
      %1054 = vmatmul.mubr.f32.gmra.mxu0 %v331
      %v1055 = vpop.f32.mrf.mxu0
      %v1056 = vadd.f32 0.0, %v1055
      %v1057 = vpop.f32.mrf.mxu0
      %1058 = vmatprep.mubr.f32.mxu0 0.0
      %1059 = vmatmul.mubr.f32.gmra.mxu0 %v333
      %v1060 = vpop.f32.mrf.mxu0
      %v1061 = vadd.f32 0.0, %v1060
      %v1062 = vpop.f32.mrf.mxu0
      %1063 = vmatprep.mubr.f32.mxu0 0.0
      %1064 = vmatmul.mubr.f32.gmra.mxu0 %v335
      %v1065 = vpop.f32.mrf.mxu0
      %v1066 = vadd.f32 0.0, %v1065
      %v1067 = vpop.f32.mrf.mxu0
      %1068 = vmatprep.mubr.f32.mxu0 0.0
      %1069 = vmatmul.mubr.f32.gmra.mxu0 %v337
      %v1070 = vpop.f32.mrf.mxu0
      %v1071 = vadd.f32 0.0, %v1070
      %v1072 = vpop.f32.mrf.mxu0
      %1073 = vmatprep.mubr.f32.mxu0 0.0
      %1074 = vmatmul.mubr.f32.gmra.mxu0 %v339
      %v1075 = vpop.f32.mrf.mxu0
      %v1076 = vadd.f32 0.0, %v1075
      %v1077 = vpop.f32.mrf.mxu0
      %1078 = vmatprep.mubr.f32.mxu0 0.0
      %1079 = vmatmul.mubr.f32.gmra.mxu0 %v341
      %v1080 = vpop.f32.mrf.mxu0
      %v1081 = vadd.f32 0.0, %v1080
      %v1082 = vpop.f32.mrf.mxu0
      %1083 = vmatprep.mubr.f32.mxu0 0.0
      %1084 = vmatmul.mubr.f32.gmra.mxu0 %v343
      %v1085 = vpop.f32.mrf.mxu0
      %v1086 = vadd.f32 0.0, %v1085
      %v1087 = vpop.f32.mrf.mxu0
      %1088 = vmatprep.mubr.f32.mxu0 0.0
      %1089 = vmatmul.mubr.f32.gmra.mxu0 %v345
      %v1090 = vpop.f32.mrf.mxu0
      %v1091 = vadd.f32 0.0, %v1090
      %v1092 = vpop.f32.mrf.mxu0
      %1093 = vmatprep.mubr.f32.mxu0 0.0
      %1094 = vmatmul.mubr.f32.gmra.mxu0 %v974
      %v1095 = vpop.f32.mrf.mxu0
      %v1096 = vadd.f32 0.0, %v1095
      %v1097 = vpop.f32.mrf.mxu0
      %1098 = vmatprep.mubr.f32.mxu0 0.0
      %1099 = vmatmul.mubr.f32.gmra.mxu0 %v976
      %v1100 = vpop.f32.mrf.mxu0
      %v1101 = vadd.f32 0.0, %v1100
      %v1102 = vpop.f32.mrf.mxu0
      %1103 = vdwg.mxu0
      %v1104 = vadd.f32 %v942, %v1046
      %v1105 = vadd.f32 %v943, %v1051
      %v1106 = vadd.f32 %v944, %v1056
      %v1107 = vadd.f32 %v945, %v1061
      %v1108 = vadd.f32 %v946, %v1066
      %v1109 = vadd.f32 %v947, %v1071
      %v1110 = vadd.f32 %v948, %v1076
      %v1111 = vadd.f32 %v949, %v1081
      %v1112 = vadd.f32 %v950, %v1086
      %v1113 = vadd.f32 %v951, %v1091
      %v1114 = vadd.f32 %v952, %v1096
      %v1115 = vadd.f32 %v953, %v1101
      %s1116 = scalar_lea.vmem %s2, 640
      %v1117 = vld [vmem:[%s1116] sm:$0xff]
      %v1118 = vld [vmem:[%s1116 + $0x8] sm:$0xff]
      %v1119 = vld [vmem:[%s1116 + $0x10] sm:$0xff]
      %v1120 = vld [vmem:[%s1116 + $0x18] sm:$0xff]
      %v1121 = vld [vmem:[%s1116 + $0x20] sm:$0xff]
      %v1122 = vld [vmem:[%s1116 + $0x28] sm:$0xff]
      %v1123 = vld [vmem:[%s1116 + $0x30] sm:$0xff]
      %v1124 = vld [vmem:[%s1116 + $0x38] sm:$0xff]
      %v1125 = vld [vmem:[%s1116 + $0x40] sm:$0xff]
      %v1126 = vld [vmem:[%s1116 + $0x48] sm:$0xff]
      %v1127 = vld [vmem:[%s1116 + $0x50] sm:$0xff]
      %v1128 = vld [vmem:[%s1116 + $0x58] sm:$0xff]
      %v1129 = vld [vmem:[%s1116 + $0x60] sm:$0xff]
      %v1130 = vld [vmem:[%s1116 + $0x68] sm:$0xff]
      %v1131 = vld [vmem:[%s1116 + $0x70] sm:$0xff]
      %v1132 = vld [vmem:[%s1116 + $0x78] sm:$0xff]
      %v1133 = vrot.slane %v270, 2
      %v1134 = vsel %vm625, %v649, %v1133
      %v1135 = vrot.slane %v271, 2
      %v1136 = vsel %vm625, %v1133, %v1135
      %1139 = vmatprep.subr.mxu0 0.0
      %1140 = vmatpush1.msra.mxu0 %v1132
      %1141 = vmatprep.subr.mxu0 0.0
      %1142 = vmatpush1.msra.mxu0 %v1131
      %1143 = vmatprep.subr.mxu0 0.0
      %1144 = vmatpush1.msra.mxu0 %v1130
      %1145 = vmatprep.subr.mxu0 0.0
      %1146 = vmatpush1.msra.mxu0 %v1129
      %1147 = vmatprep.subr.mxu0 0.0
      %1148 = vmatpush1.msra.mxu0 %v1128
      %1149 = vmatprep.subr.mxu0 0.0
      %1150 = vmatpush1.msra.mxu0 %v1127
      %1151 = vmatprep.subr.mxu0 0.0
      %1152 = vmatpush1.msra.mxu0 %v1126
      %1153 = vmatprep.subr.mxu0 0.0
      %1154 = vmatpush1.msra.mxu0 %v1125
      %1155 = vmatprep.subr.mxu0 0.0
      %1156 = vmatpush1.msra.mxu0 %v1124
      %1157 = vmatprep.subr.mxu0 0.0
      %1158 = vmatpush1.msra.mxu0 %v1123
      %1159 = vmatprep.subr.mxu0 0.0
      %1160 = vmatpush1.msra.mxu0 %v1122
      %1161 = vmatprep.subr.mxu0 0.0
      %1162 = vmatpush1.msra.mxu0 %v1121
      %1163 = vmatprep.subr.mxu0 0.0
      %1164 = vmatpush1.msra.mxu0 %v1120
      %1165 = vmatprep.subr.mxu0 0.0
      %1166 = vmatpush1.msra.mxu0 %v1119
      %1167 = vmatprep.subr.mxu0 0.0
      %1168 = vmatpush1.msra.mxu0 %v1118
      %1169 = vmatprep.subr.mxu0 0.0
      %1170 = vmatpush1.msra.mxu0 %v1117
      %1171 = vmatprep.subr.mxu0 0.0
      %1172 = vmatpush2.msra.mxu0 0.0
      %1173 = vmatprep.subr.mxu0 0.0
      %1174 = vmatpush2.msra.mxu0 0.0
      %1175 = vmatprep.subr.mxu0 0.0
      %1176 = vmatpush2.msra.mxu0 0.0
      %1177 = vmatprep.subr.mxu0 0.0
      %1178 = vmatpush2.msra.mxu0 0.0
      %1179 = vmatprep.subr.mxu0 0.0
      %1180 = vmatpush2.msra.mxu0 0.0
      %1181 = vmatprep.subr.mxu0 0.0
      %1182 = vmatpush2.msra.mxu0 0.0
      %1183 = vmatprep.subr.mxu0 0.0
      %1184 = vmatpush2.msra.mxu0 0.0
      %1185 = vmatprep.subr.mxu0 0.0
      %1186 = vmatpush2.msra.mxu0 0.0
      %1187 = vmatprep.subr.mxu0 0.0
      %1188 = vmatpush2.msra.mxu0 0.0
      %1189 = vmatprep.subr.mxu0 0.0
      %1190 = vmatpush2.msra.mxu0 0.0
      %1191 = vmatprep.subr.mxu0 0.0
      %1192 = vmatpush2.msra.mxu0 0.0
      %1193 = vmatprep.subr.mxu0 0.0
      %1194 = vmatpush2.msra.mxu0 0.0
      %1195 = vmatprep.subr.mxu0 0.0
      %1196 = vmatpush2.msra.mxu0 0.0
      %1197 = vmatprep.subr.mxu0 0.0
      %1198 = vmatpush2.msra.mxu0 0.0
      %1199 = vmatprep.subr.mxu0 0.0
      %1200 = vmatpush2.msra.mxu0 0.0
      %1201 = vmatprep.subr.mxu0 0.0
      %1202 = vmatpush2.msra.mxu0 0.0
      %1203 = vmatprep.mubr.f32.mxu0 0.0
      %1204 = vmatmul.mubr.f32.gmra.mxu0 %v632
      %v1205 = vpop.f32.mrf.mxu0
      %v1206 = vadd.f32 0.0, %v1205
      %v1207 = vpop.f32.mrf.mxu0
      %1208 = vmatprep.mubr.f32.mxu0 0.0
      %1209 = vmatmul.mubr.f32.gmra.mxu0 %v634
      %v1210 = vpop.f32.mrf.mxu0
      %v1211 = vadd.f32 0.0, %v1210
      %v1212 = vpop.f32.mrf.mxu0
      %1213 = vmatprep.mubr.f32.mxu0 0.0
      %1214 = vmatmul.mubr.f32.gmra.mxu0 %v636
      %v1215 = vpop.f32.mrf.mxu0
      %v1216 = vadd.f32 0.0, %v1215
      %v1217 = vpop.f32.mrf.mxu0
      %1218 = vmatprep.mubr.f32.mxu0 0.0
      %1219 = vmatmul.mubr.f32.gmra.mxu0 %v638
      %v1220 = vpop.f32.mrf.mxu0
      %v1221 = vadd.f32 0.0, %v1220
      %v1222 = vpop.f32.mrf.mxu0
      %1223 = vmatprep.mubr.f32.mxu0 0.0
      %1224 = vmatmul.mubr.f32.gmra.mxu0 %v640
      %v1225 = vpop.f32.mrf.mxu0
      %v1226 = vadd.f32 0.0, %v1225
      %v1227 = vpop.f32.mrf.mxu0
      %1228 = vmatprep.mubr.f32.mxu0 0.0
      %1229 = vmatmul.mubr.f32.gmra.mxu0 %v642
      %v1230 = vpop.f32.mrf.mxu0
      %v1231 = vadd.f32 0.0, %v1230
      %v1232 = vpop.f32.mrf.mxu0
      %1233 = vmatprep.mubr.f32.mxu0 0.0
      %1234 = vmatmul.mubr.f32.gmra.mxu0 %v644
      %v1235 = vpop.f32.mrf.mxu0
      %v1236 = vadd.f32 0.0, %v1235
      %v1237 = vpop.f32.mrf.mxu0
      %1238 = vmatprep.mubr.f32.mxu0 0.0
      %1239 = vmatmul.mubr.f32.gmra.mxu0 %v646
      %v1240 = vpop.f32.mrf.mxu0
      %v1241 = vadd.f32 0.0, %v1240
      %v1242 = vpop.f32.mrf.mxu0
      %1243 = vmatprep.mubr.f32.mxu0 0.0
      %1244 = vmatmul.mubr.f32.gmra.mxu0 %v648
      %v1245 = vpop.f32.mrf.mxu0
      %v1246 = vadd.f32 0.0, %v1245
      %v1247 = vpop.f32.mrf.mxu0
      %1248 = vmatprep.mubr.f32.mxu0 0.0
      %1249 = vmatmul.mubr.f32.gmra.mxu0 %v650
      %v1250 = vpop.f32.mrf.mxu0
      %v1251 = vadd.f32 0.0, %v1250
      %v1252 = vpop.f32.mrf.mxu0
      %1253 = vmatprep.mubr.f32.mxu0 0.0
      %1254 = vmatmul.mubr.f32.gmra.mxu0 %v1134
      %v1255 = vpop.f32.mrf.mxu0
      %v1256 = vadd.f32 0.0, %v1255
      %v1257 = vpop.f32.mrf.mxu0
      %1258 = vmatprep.mubr.f32.mxu0 0.0
      %1259 = vmatmul.mubr.f32.gmra.mxu0 %v1136
      %v1260 = vpop.f32.mrf.mxu0
      %v1261 = vadd.f32 0.0, %v1260
      %v1262 = vpop.f32.mrf.mxu0
      %1263 = vdwg.mxu0
      %v1264 = vadd.f32 %v1104, %v1206
      %v1265 = vadd.f32 %v1105, %v1211
      %v1266 = vadd.f32 %v1106, %v1216
      %v1267 = vadd.f32 %v1107, %v1221
      %v1268 = vadd.f32 %v1108, %v1226
      %v1269 = vadd.f32 %v1109, %v1231
      %v1270 = vadd.f32 %v1110, %v1236
      %v1271 = vadd.f32 %v1111, %v1241
      %v1272 = vadd.f32 %v1112, %v1246
      %v1273 = vadd.f32 %v1113, %v1251
      %v1274 = vadd.f32 %v1114, %v1256
      %v1275 = vadd.f32 %v1115, %v1261
      %s1276 = scalar_lea.vmem %s2, 768
      %v1277 = vld [vmem:[%s1276] sm:$0xff]
      %v1278 = vld [vmem:[%s1276 + $0x8] sm:$0xff]
      %v1279 = vld [vmem:[%s1276 + $0x10] sm:$0xff]
      %v1280 = vld [vmem:[%s1276 + $0x18] sm:$0xff]
      %v1281 = vld [vmem:[%s1276 + $0x20] sm:$0xff]
      %v1282 = vld [vmem:[%s1276 + $0x28] sm:$0xff]
      %v1283 = vld [vmem:[%s1276 + $0x30] sm:$0xff]
      %v1284 = vld [vmem:[%s1276 + $0x38] sm:$0xff]
      %v1285 = vld [vmem:[%s1276 + $0x40] sm:$0xff]
      %v1286 = vld [vmem:[%s1276 + $0x48] sm:$0xff]
      %v1287 = vld [vmem:[%s1276 + $0x50] sm:$0xff]
      %v1288 = vld [vmem:[%s1276 + $0x58] sm:$0xff]
      %v1289 = vld [vmem:[%s1276 + $0x60] sm:$0xff]
      %v1290 = vld [vmem:[%s1276 + $0x68] sm:$0xff]
      %v1291 = vld [vmem:[%s1276 + $0x70] sm:$0xff]
      %v1292 = vld [vmem:[%s1276 + $0x78] sm:$0xff]
      %1293 = vmatprep.subr.mxu0 0.0
      %1294 = vmatpush1.msra.mxu0 %v1292
      %1295 = vmatprep.subr.mxu0 0.0
      %1296 = vmatpush1.msra.mxu0 %v1291
      %1297 = vmatprep.subr.mxu0 0.0
      %1298 = vmatpush1.msra.mxu0 %v1290
      %1299 = vmatprep.subr.mxu0 0.0
      %1300 = vmatpush1.msra.mxu0 %v1289
      %1301 = vmatprep.subr.mxu0 0.0
      %1302 = vmatpush1.msra.mxu0 %v1288
      %1303 = vmatprep.subr.mxu0 0.0
      %1304 = vmatpush1.msra.mxu0 %v1287
      %1305 = vmatprep.subr.mxu0 0.0
      %1306 = vmatpush1.msra.mxu0 %v1286
      %1307 = vmatprep.subr.mxu0 0.0
      %1308 = vmatpush1.msra.mxu0 %v1285
      %1309 = vmatprep.subr.mxu0 0.0
      %1310 = vmatpush1.msra.mxu0 %v1284
      %1311 = vmatprep.subr.mxu0 0.0
      %1312 = vmatpush1.msra.mxu0 %v1283
      %1313 = vmatprep.subr.mxu0 0.0
      %1314 = vmatpush1.msra.mxu0 %v1282
      %1315 = vmatprep.subr.mxu0 0.0
      %1316 = vmatpush1.msra.mxu0 %v1281
      %1317 = vmatprep.subr.mxu0 0.0
      %1318 = vmatpush1.msra.mxu0 %v1280
      %1319 = vmatprep.subr.mxu0 0.0
      %1320 = vmatpush1.msra.mxu0 %v1279
      %1321 = vmatprep.subr.mxu0 0.0
      %1322 = vmatpush1.msra.mxu0 %v1278
      %1323 = vmatprep.subr.mxu0 0.0
      %1324 = vmatpush1.msra.mxu0 %v1277
      %1325 = vmatprep.subr.mxu0 0.0
      %1326 = vmatpush2.msra.mxu0 0.0
      %1327 = vmatprep.subr.mxu0 0.0
      %1328 = vmatpush2.msra.mxu0 0.0
      %1329 = vmatprep.subr.mxu0 0.0
      %1330 = vmatpush2.msra.mxu0 0.0
      %1331 = vmatprep.subr.mxu0 0.0
      %1332 = vmatpush2.msra.mxu0 0.0
      %1333 = vmatprep.subr.mxu0 0.0
      %1334 = vmatpush2.msra.mxu0 0.0
      %1335 = vmatprep.subr.mxu0 0.0
      %1336 = vmatpush2.msra.mxu0 0.0
      %1337 = vmatprep.subr.mxu0 0.0
      %1338 = vmatpush2.msra.mxu0 0.0
      %1339 = vmatprep.subr.mxu0 0.0
      %1340 = vmatpush2.msra.mxu0 0.0
      %1341 = vmatprep.subr.mxu0 0.0
      %1342 = vmatpush2.msra.mxu0 0.0
      %1343 = vmatprep.subr.mxu0 0.0
      %1344 = vmatpush2.msra.mxu0 0.0
      %1345 = vmatprep.subr.mxu0 0.0
      %1346 = vmatpush2.msra.mxu0 0.0
      %1347 = vmatprep.subr.mxu0 0.0
      %1348 = vmatpush2.msra.mxu0 0.0
      %1349 = vmatprep.subr.mxu0 0.0
      %1350 = vmatpush2.msra.mxu0 0.0
      %1351 = vmatprep.subr.mxu0 0.0
      %1352 = vmatpush2.msra.mxu0 0.0
      %1353 = vmatprep.subr.mxu0 0.0
      %1354 = vmatpush2.msra.mxu0 0.0
      %1355 = vmatprep.subr.mxu0 0.0
      %1356 = vmatpush2.msra.mxu0 0.0
      %1357 = vmatprep.mubr.f32.mxu0 0.0
      %1358 = vmatmul.mubr.f32.gmra.mxu0 %v261
      %v1359 = vpop.f32.mrf.mxu0
      %v1360 = vadd.f32 0.0, %v1359
      %v1361 = vpop.f32.mrf.mxu0
      %1362 = vmatprep.mubr.f32.mxu0 0.0
      %1363 = vmatmul.mubr.f32.gmra.mxu0 %v262
      %v1364 = vpop.f32.mrf.mxu0
      %v1365 = vadd.f32 0.0, %v1364
      %v1366 = vpop.f32.mrf.mxu0
      %1367 = vmatprep.mubr.f32.mxu0 0.0
      %1368 = vmatmul.mubr.f32.gmra.mxu0 %v263
      %v1369 = vpop.f32.mrf.mxu0
      %v1370 = vadd.f32 0.0, %v1369
      %v1371 = vpop.f32.mrf.mxu0
      %1372 = vmatprep.mubr.f32.mxu0 0.0
      %1373 = vmatmul.mubr.f32.gmra.mxu0 %v264
      %v1374 = vpop.f32.mrf.mxu0
      %v1375 = vadd.f32 0.0, %v1374
      %v1376 = vpop.f32.mrf.mxu0
      %1377 = vmatprep.mubr.f32.mxu0 0.0
      %1378 = vmatmul.mubr.f32.gmra.mxu0 %v265
      %v1379 = vpop.f32.mrf.mxu0
      %v1380 = vadd.f32 0.0, %v1379
      %v1381 = vpop.f32.mrf.mxu0
      %1382 = vmatprep.mubr.f32.mxu0 0.0
      %1383 = vmatmul.mubr.f32.gmra.mxu0 %v266
      %v1384 = vpop.f32.mrf.mxu0
      %v1385 = vadd.f32 0.0, %v1384
      %v1386 = vpop.f32.mrf.mxu0
      %1387 = vmatprep.mubr.f32.mxu0 0.0
      %1388 = vmatmul.mubr.f32.gmra.mxu0 %v267
      %v1389 = vpop.f32.mrf.mxu0
      %v1390 = vadd.f32 0.0, %v1389
      %v1391 = vpop.f32.mrf.mxu0
      %1392 = vmatprep.mubr.f32.mxu0 0.0
      %1393 = vmatmul.mubr.f32.gmra.mxu0 %v268
      %v1394 = vpop.f32.mrf.mxu0
      %v1395 = vadd.f32 0.0, %v1394
      %v1396 = vpop.f32.mrf.mxu0
      %1397 = vmatprep.mubr.f32.mxu0 0.0
      %1398 = vmatmul.mubr.f32.gmra.mxu0 %v269
      %v1399 = vpop.f32.mrf.mxu0
      %v1400 = vadd.f32 0.0, %v1399
      %v1401 = vpop.f32.mrf.mxu0
      %1402 = vmatprep.mubr.f32.mxu0 0.0
      %1403 = vmatmul.mubr.f32.gmra.mxu0 %v270
      %v1404 = vpop.f32.mrf.mxu0
      %v1405 = vadd.f32 0.0, %v1404
      %v1406 = vpop.f32.mrf.mxu0
      %1407 = vmatprep.mubr.f32.mxu0 0.0
      %1408 = vmatmul.mubr.f32.gmra.mxu0 %v271
      %v1409 = vpop.f32.mrf.mxu0
      %v1410 = vadd.f32 0.0, %v1409
      %v1411 = vpop.f32.mrf.mxu0
      %1412 = vmatprep.mubr.f32.mxu0 0.0
      %1413 = vmatmul.mubr.f32.gmra.mxu0 %v272
      %v1414 = vpop.f32.mrf.mxu0
      %v1415 = vadd.f32 0.0, %v1414
      %v1416 = vpop.f32.mrf.mxu0
      %1417 = vdwg.mxu0
      %v1418 = vadd.f32 %v1264, %v1360
      %v1419 = vadd.f32 %v1265, %v1365
      %v1420 = vadd.f32 %v1266, %v1370
      %v1421 = vadd.f32 %v1267, %v1375
      %v1422 = vadd.f32 %v1268, %v1380
      %v1423 = vadd.f32 %v1269, %v1385
      %v1424 = vadd.f32 %v1270, %v1390
      %v1425 = vadd.f32 %v1271, %v1395
      %v1426 = vadd.f32 %v1272, %v1400
      %v1427 = vadd.f32 %v1273, %v1405
      %v1428 = vadd.f32 %v1274, %v1410
      %v1429 = vadd.f32 %v1275, %v1415
      %s1430 = scalar_lea.vmem %s2, 896
      %v1431 = vld [vmem:[%s1430] sm:$0xff]
      %v1432 = vld [vmem:[%s1430 + $0x8] sm:$0xff]
      %v1433 = vld [vmem:[%s1430 + $0x10] sm:$0xff]
      %v1434 = vld [vmem:[%s1430 + $0x18] sm:$0xff]
      %v1435 = vld [vmem:[%s1430 + $0x20] sm:$0xff]
      %v1436 = vld [vmem:[%s1430 + $0x28] sm:$0xff]
      %v1437 = vld [vmem:[%s1430 + $0x30] sm:$0xff]
      %v1438 = vld [vmem:[%s1430 + $0x38] sm:$0xff]
      %v1439 = vld [vmem:[%s1430 + $0x40] sm:$0xff]
      %v1440 = vld [vmem:[%s1430 + $0x48] sm:$0xff]
      %v1441 = vld [vmem:[%s1430 + $0x50] sm:$0xff]
      %v1442 = vld [vmem:[%s1430 + $0x58] sm:$0xff]
      %v1443 = vld [vmem:[%s1430 + $0x60] sm:$0xff]
      %v1444 = vld [vmem:[%s1430 + $0x68] sm:$0xff]
      %v1445 = vld [vmem:[%s1430 + $0x70] sm:$0xff]
      %v1446 = vld [vmem:[%s1430 + $0x78] sm:$0xff]
      %v1449 = vrot.slane %v272, 1
      %v1450 = vsel %vm320, %v975, %v1449
      %v1451 = vrot.slane %v273, 1
      %v1452 = vsel %vm320, %v1449, %v1451
      %1455 = vmatprep.subr.mxu0 0.0
      %1456 = vmatpush1.msra.mxu0 %v1446
      %1457 = vmatprep.subr.mxu0 0.0
      %1458 = vmatpush1.msra.mxu0 %v1445
      %1459 = vmatprep.subr.mxu0 0.0
      %1460 = vmatpush1.msra.mxu0 %v1444
      %1461 = vmatprep.subr.mxu0 0.0
      %1462 = vmatpush1.msra.mxu0 %v1443
      %1463 = vmatprep.subr.mxu0 0.0
      %1464 = vmatpush1.msra.mxu0 %v1442
      %1465 = vmatprep.subr.mxu0 0.0
      %1466 = vmatpush1.msra.mxu0 %v1441
      %1467 = vmatprep.subr.mxu0 0.0
      %1468 = vmatpush1.msra.mxu0 %v1440
      %1469 = vmatprep.subr.mxu0 0.0
      %1470 = vmatpush1.msra.mxu0 %v1439
      %1471 = vmatprep.subr.mxu0 0.0
      %1472 = vmatpush1.msra.mxu0 %v1438
      %1473 = vmatprep.subr.mxu0 0.0
      %1474 = vmatpush1.msra.mxu0 %v1437
      %1475 = vmatprep.subr.mxu0 0.0
      %1476 = vmatpush1.msra.mxu0 %v1436
      %1477 = vmatprep.subr.mxu0 0.0
      %1478 = vmatpush1.msra.mxu0 %v1435
      %1479 = vmatprep.subr.mxu0 0.0
      %1480 = vmatpush1.msra.mxu0 %v1434
      %1481 = vmatprep.subr.mxu0 0.0
      %1482 = vmatpush1.msra.mxu0 %v1433
      %1483 = vmatprep.subr.mxu0 0.0
      %1484 = vmatpush1.msra.mxu0 %v1432
      %1485 = vmatprep.subr.mxu0 0.0
      %1486 = vmatpush1.msra.mxu0 %v1431
      %1487 = vmatprep.subr.mxu0 0.0
      %1488 = vmatpush2.msra.mxu0 0.0
      %1489 = vmatprep.subr.mxu0 0.0
      %1490 = vmatpush2.msra.mxu0 0.0
      %1491 = vmatprep.subr.mxu0 0.0
      %1492 = vmatpush2.msra.mxu0 0.0
      %1493 = vmatprep.subr.mxu0 0.0
      %1494 = vmatpush2.msra.mxu0 0.0
      %1495 = vmatprep.subr.mxu0 0.0
      %1496 = vmatpush2.msra.mxu0 0.0
      %1497 = vmatprep.subr.mxu0 0.0
      %1498 = vmatpush2.msra.mxu0 0.0
      %1499 = vmatprep.subr.mxu0 0.0
      %1500 = vmatpush2.msra.mxu0 0.0
      %1501 = vmatprep.subr.mxu0 0.0
      %1502 = vmatpush2.msra.mxu0 0.0
      %1503 = vmatprep.subr.mxu0 0.0
      %1504 = vmatpush2.msra.mxu0 0.0
      %1505 = vmatprep.subr.mxu0 0.0
      %1506 = vmatpush2.msra.mxu0 0.0
      %1507 = vmatprep.subr.mxu0 0.0
      %1508 = vmatpush2.msra.mxu0 0.0
      %1509 = vmatprep.subr.mxu0 0.0
      %1510 = vmatpush2.msra.mxu0 0.0
      %1511 = vmatprep.subr.mxu0 0.0
      %1512 = vmatpush2.msra.mxu0 0.0
      %1513 = vmatprep.subr.mxu0 0.0
      %1514 = vmatpush2.msra.mxu0 0.0
      %1515 = vmatprep.subr.mxu0 0.0
      %1516 = vmatpush2.msra.mxu0 0.0
      %1517 = vmatprep.subr.mxu0 0.0
      %1518 = vmatpush2.msra.mxu0 0.0
      %1519 = vmatprep.mubr.f32.mxu0 0.0
      %1520 = vmatmul.mubr.f32.gmra.mxu0 %v331
      %v1521 = vpop.f32.mrf.mxu0
      %v1522 = vadd.f32 0.0, %v1521
      %v1523 = vpop.f32.mrf.mxu0
      %1524 = vmatprep.mubr.f32.mxu0 0.0
      %1525 = vmatmul.mubr.f32.gmra.mxu0 %v333
      %v1526 = vpop.f32.mrf.mxu0
      %v1527 = vadd.f32 0.0, %v1526
      %v1528 = vpop.f32.mrf.mxu0
      %1529 = vmatprep.mubr.f32.mxu0 0.0
      %1530 = vmatmul.mubr.f32.gmra.mxu0 %v335
      %v1531 = vpop.f32.mrf.mxu0
      %v1532 = vadd.f32 0.0, %v1531
      %v1533 = vpop.f32.mrf.mxu0
      %1534 = vmatprep.mubr.f32.mxu0 0.0
      %1535 = vmatmul.mubr.f32.gmra.mxu0 %v337
      %v1536 = vpop.f32.mrf.mxu0
      %v1537 = vadd.f32 0.0, %v1536
      %v1538 = vpop.f32.mrf.mxu0
      %1539 = vmatprep.mubr.f32.mxu0 0.0
      %1540 = vmatmul.mubr.f32.gmra.mxu0 %v339
      %v1541 = vpop.f32.mrf.mxu0
      %v1542 = vadd.f32 0.0, %v1541
      %v1543 = vpop.f32.mrf.mxu0
      %1544 = vmatprep.mubr.f32.mxu0 0.0
      %1545 = vmatmul.mubr.f32.gmra.mxu0 %v341
      %v1546 = vpop.f32.mrf.mxu0
      %v1547 = vadd.f32 0.0, %v1546
      %v1548 = vpop.f32.mrf.mxu0
      %1549 = vmatprep.mubr.f32.mxu0 0.0
      %1550 = vmatmul.mubr.f32.gmra.mxu0 %v343
      %v1551 = vpop.f32.mrf.mxu0
      %v1552 = vadd.f32 0.0, %v1551
      %v1553 = vpop.f32.mrf.mxu0
      %1554 = vmatprep.mubr.f32.mxu0 0.0
      %1555 = vmatmul.mubr.f32.gmra.mxu0 %v345
      %v1556 = vpop.f32.mrf.mxu0
      %v1557 = vadd.f32 0.0, %v1556
      %v1558 = vpop.f32.mrf.mxu0
      %1559 = vmatprep.mubr.f32.mxu0 0.0
      %1560 = vmatmul.mubr.f32.gmra.mxu0 %v974
      %v1561 = vpop.f32.mrf.mxu0
      %v1562 = vadd.f32 0.0, %v1561
      %v1563 = vpop.f32.mrf.mxu0
      %1564 = vmatprep.mubr.f32.mxu0 0.0
      %1565 = vmatmul.mubr.f32.gmra.mxu0 %v976
      %v1566 = vpop.f32.mrf.mxu0
      %v1567 = vadd.f32 0.0, %v1566
      %v1568 = vpop.f32.mrf.mxu0
      %1569 = vmatprep.mubr.f32.mxu0 0.0
      %1570 = vmatmul.mubr.f32.gmra.mxu0 %v1450
      %v1571 = vpop.f32.mrf.mxu0
      %v1572 = vadd.f32 0.0, %v1571
      %v1573 = vpop.f32.mrf.mxu0
      %1574 = vmatprep.mubr.f32.mxu0 0.0
      %1575 = vmatmul.mubr.f32.gmra.mxu0 %v1452
      %v1576 = vpop.f32.mrf.mxu0
      %v1577 = vadd.f32 0.0, %v1576
      %v1578 = vpop.f32.mrf.mxu0
      %1579 = vdwg.mxu0
      %v1580 = vadd.f32 %v1418, %v1522
      %v1581 = vadd.f32 %v1419, %v1527
      %v1582 = vadd.f32 %v1420, %v1532
      %v1583 = vadd.f32 %v1421, %v1537
      %v1584 = vadd.f32 %v1422, %v1542
      %v1585 = vadd.f32 %v1423, %v1547
      %v1586 = vadd.f32 %v1424, %v1552
      %v1587 = vadd.f32 %v1425, %v1557
      %v1588 = vadd.f32 %v1426, %v1562
      %v1589 = vadd.f32 %v1427, %v1567
      %v1590 = vadd.f32 %v1428, %v1572
      %v1591 = vadd.f32 %v1429, %v1577
      %s1592 = scalar_lea.vmem %s2, 1024
      %v1593 = vld [vmem:[%s1592] sm:$0xff]
      %v1594 = vld [vmem:[%s1592 + $0x8] sm:$0xff]
      %v1595 = vld [vmem:[%s1592 + $0x10] sm:$0xff]
      %v1596 = vld [vmem:[%s1592 + $0x18] sm:$0xff]
      %v1597 = vld [vmem:[%s1592 + $0x20] sm:$0xff]
      %v1598 = vld [vmem:[%s1592 + $0x28] sm:$0xff]
      %v1599 = vld [vmem:[%s1592 + $0x30] sm:$0xff]
      %v1600 = vld [vmem:[%s1592 + $0x38] sm:$0xff]
      %v1601 = vld [vmem:[%s1592 + $0x40] sm:$0xff]
      %v1602 = vld [vmem:[%s1592 + $0x48] sm:$0xff]
      %v1603 = vld [vmem:[%s1592 + $0x50] sm:$0xff]
      %v1604 = vld [vmem:[%s1592 + $0x58] sm:$0xff]
      %v1605 = vld [vmem:[%s1592 + $0x60] sm:$0xff]
      %v1606 = vld [vmem:[%s1592 + $0x68] sm:$0xff]
      %v1607 = vld [vmem:[%s1592 + $0x70] sm:$0xff]
      %v1608 = vld [vmem:[%s1592 + $0x78] sm:$0xff]
      %v1609 = vrot.slane %v272, 2
      %v1610 = vsel %vm625, %v1135, %v1609
      %v1611 = vrot.slane %v273, 2
      %v1612 = vsel %vm625, %v1609, %v1611
      %1615 = vmatprep.subr.mxu0 0.0
      %1616 = vmatpush1.msra.mxu0 %v1608
      %1617 = vmatprep.subr.mxu0 0.0
      %1618 = vmatpush1.msra.mxu0 %v1607
      %1619 = vmatprep.subr.mxu0 0.0
      %1620 = vmatpush1.msra.mxu0 %v1606
      %1621 = vmatprep.subr.mxu0 0.0
      %1622 = vmatpush1.msra.mxu0 %v1605
      %1623 = vmatprep.subr.mxu0 0.0
      %1624 = vmatpush1.msra.mxu0 %v1604
      %1625 = vmatprep.subr.mxu0 0.0
      %1626 = vmatpush1.msra.mxu0 %v1603
      %1627 = vmatprep.subr.mxu0 0.0
      %1628 = vmatpush1.msra.mxu0 %v1602
      %1629 = vmatprep.subr.mxu0 0.0
      %1630 = vmatpush1.msra.mxu0 %v1601
      %1631 = vmatprep.subr.mxu0 0.0
      %1632 = vmatpush1.msra.mxu0 %v1600
      %1633 = vmatprep.subr.mxu0 0.0
      %1634 = vmatpush1.msra.mxu0 %v1599
      %1635 = vmatprep.subr.mxu0 0.0
      %1636 = vmatpush1.msra.mxu0 %v1598
      %1637 = vmatprep.subr.mxu0 0.0
      %1638 = vmatpush1.msra.mxu0 %v1597
      %1639 = vmatprep.subr.mxu0 0.0
      %1640 = vmatpush1.msra.mxu0 %v1596
      %1641 = vmatprep.subr.mxu0 0.0
      %1642 = vmatpush1.msra.mxu0 %v1595
      %1643 = vmatprep.subr.mxu0 0.0
      %1644 = vmatpush1.msra.mxu0 %v1594
      %1645 = vmatprep.subr.mxu0 0.0
      %1646 = vmatpush1.msra.mxu0 %v1593
      %1647 = vmatprep.subr.mxu0 0.0
      %1648 = vmatpush2.msra.mxu0 0.0
      %1649 = vmatprep.subr.mxu0 0.0
      %1650 = vmatpush2.msra.mxu0 0.0
      %1651 = vmatprep.subr.mxu0 0.0
      %1652 = vmatpush2.msra.mxu0 0.0
      %1653 = vmatprep.subr.mxu0 0.0
      %1654 = vmatpush2.msra.mxu0 0.0
      %1655 = vmatprep.subr.mxu0 0.0
      %1656 = vmatpush2.msra.mxu0 0.0
      %1657 = vmatprep.subr.mxu0 0.0
      %1658 = vmatpush2.msra.mxu0 0.0
      %1659 = vmatprep.subr.mxu0 0.0
      %1660 = vmatpush2.msra.mxu0 0.0
      %1661 = vmatprep.subr.mxu0 0.0
      %1662 = vmatpush2.msra.mxu0 0.0
      %1663 = vmatprep.subr.mxu0 0.0
      %1664 = vmatpush2.msra.mxu0 0.0
      %1665 = vmatprep.subr.mxu0 0.0
      %1666 = vmatpush2.msra.mxu0 0.0
      %1667 = vmatprep.subr.mxu0 0.0
      %1668 = vmatpush2.msra.mxu0 0.0
      %1669 = vmatprep.subr.mxu0 0.0
      %1670 = vmatpush2.msra.mxu0 0.0
      %1671 = vmatprep.subr.mxu0 0.0
      %1672 = vmatpush2.msra.mxu0 0.0
      %1673 = vmatprep.subr.mxu0 0.0
      %1674 = vmatpush2.msra.mxu0 0.0
      %1675 = vmatprep.subr.mxu0 0.0
      %1676 = vmatpush2.msra.mxu0 0.0
      %1677 = vmatprep.subr.mxu0 0.0
      %1678 = vmatpush2.msra.mxu0 0.0
      %1679 = vmatprep.mubr.f32.mxu0 0.0
      %1680 = vmatmul.mubr.f32.gmra.mxu0 %v636
      %v1681 = vpop.f32.mrf.mxu0
      %v1682 = vadd.f32 0.0, %v1681
      %v1683 = vpop.f32.mrf.mxu0
      %1684 = vmatprep.mubr.f32.mxu0 0.0
      %1685 = vmatmul.mubr.f32.gmra.mxu0 %v638
      %v1686 = vpop.f32.mrf.mxu0
      %v1687 = vadd.f32 0.0, %v1686
      %v1688 = vpop.f32.mrf.mxu0
      %1689 = vmatprep.mubr.f32.mxu0 0.0
      %1690 = vmatmul.mubr.f32.gmra.mxu0 %v640
      %v1691 = vpop.f32.mrf.mxu0
      %v1692 = vadd.f32 0.0, %v1691
      %v1693 = vpop.f32.mrf.mxu0
      %1694 = vmatprep.mubr.f32.mxu0 0.0
      %1695 = vmatmul.mubr.f32.gmra.mxu0 %v642
      %v1696 = vpop.f32.mrf.mxu0
      %v1697 = vadd.f32 0.0, %v1696
      %v1698 = vpop.f32.mrf.mxu0
      %1699 = vmatprep.mubr.f32.mxu0 0.0
      %1700 = vmatmul.mubr.f32.gmra.mxu0 %v644
      %v1701 = vpop.f32.mrf.mxu0
      %v1702 = vadd.f32 0.0, %v1701
      %v1703 = vpop.f32.mrf.mxu0
      %1704 = vmatprep.mubr.f32.mxu0 0.0
      %1705 = vmatmul.mubr.f32.gmra.mxu0 %v646
      %v1706 = vpop.f32.mrf.mxu0
      %v1707 = vadd.f32 0.0, %v1706
      %v1708 = vpop.f32.mrf.mxu0
      %1709 = vmatprep.mubr.f32.mxu0 0.0
      %1710 = vmatmul.mubr.f32.gmra.mxu0 %v648
      %v1711 = vpop.f32.mrf.mxu0
      %v1712 = vadd.f32 0.0, %v1711
      %v1713 = vpop.f32.mrf.mxu0
      %1714 = vmatprep.mubr.f32.mxu0 0.0
      %1715 = vmatmul.mubr.f32.gmra.mxu0 %v650
      %v1716 = vpop.f32.mrf.mxu0
      %v1717 = vadd.f32 0.0, %v1716
      %v1718 = vpop.f32.mrf.mxu0
      %1719 = vmatprep.mubr.f32.mxu0 0.0
      %1720 = vmatmul.mubr.f32.gmra.mxu0 %v1134
      %v1721 = vpop.f32.mrf.mxu0
      %v1722 = vadd.f32 0.0, %v1721
      %v1723 = vpop.f32.mrf.mxu0
      %1724 = vmatprep.mubr.f32.mxu0 0.0
      %1725 = vmatmul.mubr.f32.gmra.mxu0 %v1136
      %v1726 = vpop.f32.mrf.mxu0
      %v1727 = vadd.f32 0.0, %v1726
      %v1728 = vpop.f32.mrf.mxu0
      %1729 = vmatprep.mubr.f32.mxu0 0.0
      %1730 = vmatmul.mubr.f32.gmra.mxu0 %v1610
      %v1731 = vpop.f32.mrf.mxu0
      %v1732 = vadd.f32 0.0, %v1731
      %v1733 = vpop.f32.mrf.mxu0
      %1734 = vmatprep.mubr.f32.mxu0 0.0
      %1735 = vmatmul.mubr.f32.gmra.mxu0 %v1612
      %v1736 = vpop.f32.mrf.mxu0
      %v1737 = vadd.f32 0.0, %v1736
      %v1738 = vpop.f32.mrf.mxu0
      %1739 = vdwg.mxu0
      %v1740 = vadd.f32 %v1580, %v1682
      %v1741 = vadd.f32 %v1581, %v1687
      %v1742 = vadd.f32 %v1582, %v1692
      %v1743 = vadd.f32 %v1583, %v1697
      %v1744 = vadd.f32 %v1584, %v1702
      %v1745 = vadd.f32 %v1585, %v1707
      %v1746 = vadd.f32 %v1586, %v1712
      %v1747 = vadd.f32 %v1587, %v1717
      %v1748 = vadd.f32 %v1588, %v1722
      %v1749 = vadd.f32 %v1589, %v1727
      %v1750 = vadd.f32 %v1590, %v1732
      %v1751 = vadd.f32 %v1591, %v1737
      %v1752 = vld [vmem:[%s3] sm:$0x1]
      %v1754 = vlaneseq
      %v1755 = vshrl.u32 %v1754, 7
      %v1756 = vsub.s32 0, %v1755
      %v1757 = vrot.slane %v1752, %v1756
      %v1759 = vadd.f32 %v1740, %v1757
      %v1760 = vadd.f32 %v1741, %v1757
      %v1761 = vadd.f32 %v1742, %v1757
      %v1762 = vadd.f32 %v1743, %v1757
      %v1763 = vadd.f32 %v1744, %v1757
      %v1764 = vadd.f32 %v1745, %v1757
      %v1765 = vadd.f32 %v1746, %v1757
      %v1766 = vadd.f32 %v1747, %v1757
      %v1767 = vadd.f32 %v1748, %v1757
      %v1768 = vadd.f32 %v1749, %v1757
      %v1769 = vadd.f32 %v1750, %v1757
      %v1770 = vadd.f32 %v1751, %v1757
      %v1771 = vmax.f32 %v1759, 0.0
      %v1772 = vmax.f32 %v1760, 0.0
      %v1773 = vmax.f32 %v1761, 0.0
      %v1774 = vmax.f32 %v1762, 0.0
      %v1775 = vmax.f32 %v1763, 0.0
      %v1776 = vmax.f32 %v1764, 0.0
      %v1777 = vmax.f32 %v1765, 0.0
      %v1778 = vmax.f32 %v1766, 0.0
      %v1779 = vmax.f32 %v1767, 0.0
      %v1780 = vmax.f32 %v1768, 0.0
      %v1781 = vmax.f32 %v1769, 0.0
      %v1782 = vmax.f32 %v1770, 0.0
      %1783 = vst [vmem:[%s255] sm:$0xff] %v1771
      %1784 = vst [vmem:[%s255 + $0x8] sm:$0xff] %v1772
      %1785 = vst [vmem:[%s255 + $0x10] sm:$0xff] %v1773
      %1786 = vst [vmem:[%s255 + $0x18] sm:$0xff] %v1774
      %1787 = vst [vmem:[%s255 + $0x20] sm:$0xff] %v1775
      %1788 = vst [vmem:[%s255 + $0x28] sm:$0xff] %v1776
      %1789 = vst [vmem:[%s255 + $0x30] sm:$0xff] %v1777
      %1790 = vst [vmem:[%s255 + $0x38] sm:$0xff] %v1778
      %1791 = vst [vmem:[%s255 + $0x40] sm:$0xff] %v1779
      %1792 = vst [vmem:[%s255 + $0x48] sm:$0xff] %v1780
      %1793 = vst [vmem:[%s255 + $0x50] sm:$0xff] %v1781
      %1794 = vst [vmem:[%s255 + $0x58] sm:$0xff] %v1782
      %s1795 = smul.u32 12, %s15
      %p1796 = scmp.lt.s32.totalorder %s1795, 47
      %s1797 = scalar_select %p1796, %s1795, 47
      %s1798 = smul.addr %s1797, 8
      %s1799 = scalar_lea.vmem %s4, %s1798
      // Predicated region
      $region37: #{_lambda_.10} parent=35 // pred_check
        %p1800 = pneg %p131
      $region38: #{_lambda_.10} parent=35 // pred_check_branch
        %1802 = sbr.rel (%p1800) target = $region40
      $region39: #{_lambda_.10} parent=35 // pred_region
        %s1803 = smul.u32 12, %s15
      $region40: #{_lambda_.10} parent=35 // pred_fallthru
        _
    $region36: #{_lambda_.10} parent=5 // pred_fallthru
      _
    %p1804 = scmp.le.s32.totalorder 2, %s10
    // Predicated region
    $region41: #{_lambda_.10} parent=5 // pred_check
      %p1805 = pneg %p1804
    $region42: #{_lambda_.10} parent=5 // pred_check_branch
      %1807 = sbr.rel (%p1805) target = $region44
    $region43: #{_lambda_.10} parent=5 // pred_region
      %s1808 = ssub.s32 %s10, 2
      // Predicated region
      $region45: #{_lambda_.10} parent=43 // pred_check
        %p1809 = pneg %p137
      $region46: #{_lambda_.10} parent=43 // pred_check_branch
        %1811 = sbr.rel (%p1809) target = $region48
      $region47: #{_lambda_.10} parent=43 // pred_region
        %s1812 = smul.u32 12, %s16
        %p1813 = scmp.lt.s32.totalorder %s1812, 47
        %s1814 = scalar_select %p1813, %s1812, 47
        %s1815 = smul.addr %s1814, 8
        %s1816 = scalar_lea.vmem %s4, %s1815
      $region48: #{_lambda_.10} parent=43 // pred_fallthru
        _
    $region44: #{_lambda_.10} parent=5 // pred_fallthru
      _
  $region6: #{_lambda_.10} parent=0 // loop_footer
    %s14 = sadd.s32 1, %s10
  $region7: #{_lambda_.10} parent=0 // loop_footer_branch
    %9 = sbr.rel target = $region3
  $region8: #{_lambda_.10} parent=0 // loop_exit
    _

// kernel: _lambda_.14
$region0: #{_lambda_.14}
  #allocation0 [shape = 'u32[]', space=smem, size = 0x4, offset = 0x4, fixed_abs, tag = 'smem constant byte address 0x4 - core index']
  #allocation1 [shape = 'u32[144,128]{1,0:T(1,128)}', space=vmem, size = 0x12000, scoped, tag = 'internal scratch']
  %s0 = inlined_call_operand.vmem [shape: f32[1024,128], index: 0, kind: input, shape index: {}]
  %s1 = inlined_call_operand.vmem [shape: f32[128,128], index: 1, kind: input, shape index: {}]
  %s2 = inlined_call_operand.vmem [shape: f32[1,128], index: 2, kind: input, shape index: {}]
  %s3 = inlined_call_operand.vmem [shape: f32[1024,128], index: 3, kind: output, shape index: {}]
  %s4 = sld [smem:[#allocation0]]
  $region45: #{_lambda_.14} parent=0
    _
  %s6 = ssub.s32 1, %s4
  %s7 = scalar_select 0, %s6, %s4
  loop: start=0, step=1, limit=6
  $region2: #{_lambda_.14} parent=0 // loop_pre_header
    _
  $region3: #{_lambda_.14} parent=0 // loop_header
    %s9 = sphi 0, %s13
    %p10 = scmp.ge.s32.totalorder %s9, 6
    %s19 = sphi 0, %s21
    %s22 = sphi 0, %s19
    %s23 = sphi 0, %s22
    %s39 = sphi 0, %s23
    %s43 = sphi 0, %s43
    %s45 = sphi 0, %s43
    %s46 = sphi 0, %s45
    %s60 = sphi 0, %s46
    %s64 = sphi 0, %s64
    %s66 = sphi 0, %s64
    %s67 = sphi 0, %s66
    %s81 = sphi 0, %s67
    %s87 = sphi 0, %s89
    %s90 = sphi 0, %s87
    %s91 = sphi 0, %s90
    %s107 = sphi 0, %s91
  $region4: #{_lambda_.14} parent=0 // loop_header_branch
    %12 = sbr.rel (%p10) target = $region8
  $region5: #{_lambda_.14} parent=0 // loop_body
    %s14 = ssub.s32 %s9, 1
    %s15 = ssub.s32 %s9, 2
    %s16 = sadd.s32 %s9, 1
    %s17 = ssub.s32 %s9, %s16
    %p18 = scmp.eq.s32.totalorder %s17, 0
    %s20 = sadd.s32 %s19, 1
    %s21 = scalar_select %p18, %s19, %s20
    %p24 = pneg %p18
    %p25 = scmp.eq.s32.totalorder %s9, 3
    %p26 = por %p24, %p25
    %p27 = scmp.ne.s32.totalorder %s19, %s22
    %p28 = scmp.eq.s32.totalorder %s9, 0
    %p29 = por %p27, %p28
    %p30 = scmp.ne.s32.totalorder %s19, %s22
    %p31 = scmp.eq.s32.totalorder %s14, 3
    %p32 = por %p30, %p31
    %p33 = scmp.ne.s32.totalorder %s22, %s23
    %p34 = scmp.eq.s32.totalorder %s14, 0
    %p35 = por %p33, %p34
    %p36 = scmp.ne.s32.totalorder %s22, %s23
    %p37 = scmp.eq.s32.totalorder %s15, 3
    %p38 = por %p36, %p37
    %p40 = scmp.ne.s32.totalorder %s23, %s39
    %p41 = scmp.eq.s32.totalorder %s15, 0
    %p42 = por %p40, %p41
    %s44 = sadd.s32 %s43, 1
    %p47 = scmp.eq.s32.totalorder %s9, 3
    %p48 = scmp.ne.s32.totalorder %s43, %s45
    %p49 = scmp.eq.s32.totalorder %s9, 0
    %p50 = por %p48, %p49
    %p51 = scmp.ne.s32.totalorder %s43, %s45
    %p52 = scmp.eq.s32.totalorder %s14, 3
    %p53 = por %p51, %p52
    %p54 = scmp.ne.s32.totalorder %s45, %s46
    %p55 = scmp.eq.s32.totalorder %s14, 0
    %p56 = por %p54, %p55
    %p57 = scmp.ne.s32.totalorder %s45, %s46
    %p58 = scmp.eq.s32.totalorder %s15, 3
    %p59 = por %p57, %p58
    %p61 = scmp.ne.s32.totalorder %s46, %s60
    %p62 = scmp.eq.s32.totalorder %s15, 0
    %p63 = por %p61, %p62
    %s65 = sadd.s32 %s64, 1
    %p68 = scmp.eq.s32.totalorder %s9, 3
    %p69 = scmp.ne.s32.totalorder %s64, %s66
    %p70 = scmp.eq.s32.totalorder %s9, 0
    %p71 = por %p69, %p70
    %p72 = scmp.ne.s32.totalorder %s64, %s66
    %p73 = scmp.eq.s32.totalorder %s14, 3
    %p74 = por %p72, %p73
    %p75 = scmp.ne.s32.totalorder %s66, %s67
    %p76 = scmp.eq.s32.totalorder %s14, 0
    %p77 = por %p75, %p76
    %p78 = scmp.ne.s32.totalorder %s66, %s67
    %p79 = scmp.eq.s32.totalorder %s15, 3
    %p80 = por %p78, %p79
    %p82 = scmp.ne.s32.totalorder %s67, %s81
    %p83 = scmp.eq.s32.totalorder %s15, 0
    %p84 = por %p82, %p83
    %s85 = ssub.s32 %s9, %s16
    %p86 = scmp.eq.s32.totalorder %s85, 0
    %s88 = sadd.s32 %s87, 1
    %s89 = scalar_select %p86, %s87, %s88
    %p92 = pneg %p86
    %p93 = scmp.eq.s32.totalorder %s9, 3
    %p94 = por %p92, %p93
    %p95 = scmp.ne.s32.totalorder %s87, %s90
    %p96 = scmp.eq.s32.totalorder %s9, 0
    %p97 = por %p95, %p96
    %p98 = scmp.ne.s32.totalorder %s87, %s90
    %p99 = scmp.eq.s32.totalorder %s14, 3
    %p100 = por %p98, %p99
    %p101 = scmp.ne.s32.totalorder %s90, %s91
    %p102 = scmp.eq.s32.totalorder %s14, 0
    %p103 = por %p101, %p102
    %p104 = scmp.ne.s32.totalorder %s90, %s91
    %p105 = scmp.eq.s32.totalorder %s15, 3
    %p106 = por %p104, %p105
    %p108 = scmp.ne.s32.totalorder %s91, %s107
    %p109 = scmp.eq.s32.totalorder %s15, 0
    %p110 = por %p108, %p109
    %p111 = scmp.le.s32.totalorder 1, %s9
    %p112 = scmp.lt.s32.totalorder %s9, 5
    %p113 = pnand %p111, %p112
    %p114 = pneg %p113
    // Predicated region
    $region9: #{_lambda_.14} parent=5 // pred_check
      _
    $region10: #{_lambda_.14} parent=5 // pred_check_branch
      %116 = sbr.rel (%p113) target = $region12
    $region11: #{_lambda_.14} parent=5 // pred_region
      %s117 = ssub.s32 %s9, 1
      // Predicated region
      $region13: #{_lambda_.14} parent=11 // pred_check
        %p118 = pneg %p56
      $region14: #{_lambda_.14} parent=11 // pred_check_branch
        %120 = sbr.rel (%p118) target = $region16
      $region15: #{_lambda_.14} parent=11 // pred_region
        _
      $region16: #{_lambda_.14} parent=11 // pred_fallthru
        _
      // Predicated region
      $region17: #{_lambda_.14} parent=11 // pred_check
        %p121 = pneg %p77
      $region18: #{_lambda_.14} parent=11 // pred_check_branch
        %123 = sbr.rel (%p121) target = $region20
      $region19: #{_lambda_.14} parent=11 // pred_region
        _
      $region20: #{_lambda_.14} parent=11 // pred_fallthru
        _
    $region12: #{_lambda_.14} parent=5 // pred_fallthru
      _
    %p124 = scmp.lt.s32.totalorder %s9, 4
    // Predicated region
    $region21: #{_lambda_.14} parent=5 // pred_check
      %p125 = pneg %p124
    $region22: #{_lambda_.14} parent=5 // pred_check_branch
      %127 = sbr.rel (%p125) target = $region24
    $region23: #{_lambda_.14} parent=5 // pred_region
      // Predicated region
      $region25: #{_lambda_.14} parent=23 // pred_check
        %p128 = pneg %p29
      $region26: #{_lambda_.14} parent=23 // pred_check_branch
        %130 = sbr.rel (%p128) target = $region28
      $region27: #{_lambda_.14} parent=23 // pred_region
        %s131 = smul.u32 32, %s9
        %p132 = scmp.lt.s32.totalorder %s131, 127
        %s133 = scalar_select %p132, %s131, 127
        %s134 = smul.addr %s133, 8
        %s135 = scalar_lea.vmem %s0, %s134
        %s136 = smul.u32 32, %s9
      $region28: #{_lambda_.14} parent=23 // pred_fallthru
        _
    $region24: #{_lambda_.14} parent=5 // pred_fallthru
      _
    %p137 = scmp.le.s32.totalorder 1, %s9
    %p138 = scmp.lt.s32.totalorder %s9, 5
    %p139 = pnand %p137, %p138
    %p140 = pneg %p139
    // Predicated region
    $region29: #{_lambda_.14} parent=5 // pred_check
      _
    $region30: #{_lambda_.14} parent=5 // pred_check_branch
      %142 = sbr.rel (%p139) target = $region32
    $region31: #{_lambda_.14} parent=5 // pred_region
      %s143 = ssub.s32 %s9, 1
      %s144 = smul.u32 32, %s14
      %p145 = scmp.lt.s32.totalorder %s144, 127
      %s146 = scalar_select %p145, %s144, 127
      %s147 = smul.addr %s146, 8
      %s148 = scalar_lea.vmem %s0, %s147
      %p149 = pneg %p35
      %p150 = pneg %p32
      %p151 = pneg %p56
      %p152 = pneg %p53
      %p153 = pneg %p77
      %p154 = pneg %p74
      %p155 = pneg %p103
      %p156 = pneg %p100
      %s157 = smul.u32 32, %s14
      %p158 = scmp.lt.s32.totalorder %s157, 127
      %s159 = scalar_select %p158, %s157, 127
      %s160 = smul.addr %s159, 8
      %s161 = scalar_lea.vmem %s3, %s160
      %s162 = smul.u32 32, %s14
      %p163 = scmp.lt.s32.totalorder %s162, 127
      %s164 = scalar_select %p163, %s162, 127
      %s165 = smul.addr %s164, 8
      %s166 = scalar_lea.vmem %s0, %s165
      %s167 = smul.u32 32, %s14
      %s168 = smul.u32 32, %s14
      %p169 = scmp.lt.s32.totalorder %s168, 127
      %s170 = scalar_select %p169, %s168, 127
      %s171 = smul.addr %s170, 8
      %s172 = scalar_lea.vmem %s3, %s171
      %s173 = smul.u32 32, %s14
      %v174 = vld [vmem:[%s166] sm:$0xff]
      %v175 = vld [vmem:[%s166 + $0x8] sm:$0xff]
      %v176 = vld [vmem:[%s166 + $0x10] sm:$0xff]
      %v177 = vld [vmem:[%s166 + $0x18] sm:$0xff]
      %v178 = vld [vmem:[%s166 + $0x20] sm:$0xff]
      %v179 = vld [vmem:[%s166 + $0x28] sm:$0xff]
      %v180 = vld [vmem:[%s166 + $0x30] sm:$0xff]
      %v181 = vld [vmem:[%s166 + $0x38] sm:$0xff]
      %v182 = vld [vmem:[%s166 + $0x40] sm:$0xff]
      %v183 = vld [vmem:[%s166 + $0x48] sm:$0xff]
      %v184 = vld [vmem:[%s166 + $0x50] sm:$0xff]
      %v185 = vld [vmem:[%s166 + $0x58] sm:$0xff]
      %v186 = vld [vmem:[%s166 + $0x60] sm:$0xff]
      %v187 = vld [vmem:[%s166 + $0x68] sm:$0xff]
      %v188 = vld [vmem:[%s166 + $0x70] sm:$0xff]
      %v189 = vld [vmem:[%s166 + $0x78] sm:$0xff]
      %v190 = vld [vmem:[%s166 + $0x80] sm:$0xff]
      %v191 = vld [vmem:[%s166 + $0x88] sm:$0xff]
      %v192 = vld [vmem:[%s166 + $0x90] sm:$0xff]
      %v193 = vld [vmem:[%s166 + $0x98] sm:$0xff]
      %v194 = vld [vmem:[%s166 + $0xa0] sm:$0xff]
      %v195 = vld [vmem:[%s166 + $0xa8] sm:$0xff]
      %v196 = vld [vmem:[%s166 + $0xb0] sm:$0xff]
      %v197 = vld [vmem:[%s166 + $0xb8] sm:$0xff]
      %v198 = vld [vmem:[%s166 + $0xc0] sm:$0xff]
      %v199 = vld [vmem:[%s166 + $0xc8] sm:$0xff]
      %v200 = vld [vmem:[%s166 + $0xd0] sm:$0xff]
      %v201 = vld [vmem:[%s166 + $0xd8] sm:$0xff]
      %v202 = vld [vmem:[%s166 + $0xe0] sm:$0xff]
      %v203 = vld [vmem:[%s166 + $0xe8] sm:$0xff]
      %v204 = vld [vmem:[%s166 + $0xf0] sm:$0xff]
      %v205 = vld [vmem:[%s166 + $0xf8] sm:$0xff]
      %v206 = vld [vmem:[%s1] sm:$0xff]
      %v207 = vld [vmem:[%s1 + $0x8] sm:$0xff]
      %v208 = vld [vmem:[%s1 + $0x10] sm:$0xff]
      %v209 = vld [vmem:[%s1 + $0x18] sm:$0xff]
      %v210 = vld [vmem:[%s1 + $0x20] sm:$0xff]
      %v211 = vld [vmem:[%s1 + $0x28] sm:$0xff]
      %v212 = vld [vmem:[%s1 + $0x30] sm:$0xff]
      %v213 = vld [vmem:[%s1 + $0x38] sm:$0xff]
      %v214 = vld [vmem:[%s1 + $0x40] sm:$0xff]
      %v215 = vld [vmem:[%s1 + $0x48] sm:$0xff]
      %v216 = vld [vmem:[%s1 + $0x50] sm:$0xff]
      %v217 = vld [vmem:[%s1 + $0x58] sm:$0xff]
      %v218 = vld [vmem:[%s1 + $0x60] sm:$0xff]
      %v219 = vld [vmem:[%s1 + $0x68] sm:$0xff]
      %v220 = vld [vmem:[%s1 + $0x70] sm:$0xff]
      %v221 = vld [vmem:[%s1 + $0x78] sm:$0xff]
      %v222 = vld [vmem:[%s2] sm:$0x1]
      %v224 = vlaneseq
      %v225 = vshrl.u32 %v224, 7
      %v226 = vsub.s32 0, %v225
      %v227 = vrot.slane %v222, %v226
      %229 = vmatprep.subr.mxu0 0.0
      %230 = vmatpush1.msra.mxu0 %v221
      %231 = vmatprep.subr.mxu0 0.0
      %232 = vmatpush1.msra.mxu0 %v220
      %233 = vmatprep.subr.mxu0 0.0
      %234 = vmatpush1.msra.mxu0 %v219
      %235 = vmatprep.subr.mxu0 0.0
      %236 = vmatpush1.msra.mxu0 %v218
      %237 = vmatprep.subr.mxu0 0.0
      %238 = vmatpush1.msra.mxu0 %v217
      %239 = vmatprep.subr.mxu0 0.0
      %240 = vmatpush1.msra.mxu0 %v216
      %241 = vmatprep.subr.mxu0 0.0
      %242 = vmatpush1.msra.mxu0 %v215
      %243 = vmatprep.subr.mxu0 0.0
      %244 = vmatpush1.msra.mxu0 %v214
      %245 = vmatprep.subr.mxu0 0.0
      %246 = vmatpush1.msra.mxu0 %v213
      %247 = vmatprep.subr.mxu0 0.0
      %248 = vmatpush1.msra.mxu0 %v212
      %249 = vmatprep.subr.mxu0 0.0
      %250 = vmatpush1.msra.mxu0 %v211
      %251 = vmatprep.subr.mxu0 0.0
      %252 = vmatpush1.msra.mxu0 %v210
      %253 = vmatprep.subr.mxu0 0.0
      %254 = vmatpush1.msra.mxu0 %v209
      %255 = vmatprep.subr.mxu0 0.0
      %256 = vmatpush1.msra.mxu0 %v208
      %257 = vmatprep.subr.mxu0 0.0
      %258 = vmatpush1.msra.mxu0 %v207
      %259 = vmatprep.subr.mxu0 0.0
      %260 = vmatpush1.msra.mxu0 %v206
      %261 = vmatprep.subr.mxu0 0.0
      %262 = vmatpush2.msra.mxu0 0.0
      %263 = vmatprep.subr.mxu0 0.0
      %264 = vmatpush2.msra.mxu0 0.0
      %265 = vmatprep.subr.mxu0 0.0
      %266 = vmatpush2.msra.mxu0 0.0
      %267 = vmatprep.subr.mxu0 0.0
      %268 = vmatpush2.msra.mxu0 0.0
      %269 = vmatprep.subr.mxu0 0.0
      %270 = vmatpush2.msra.mxu0 0.0
      %271 = vmatprep.subr.mxu0 0.0
      %272 = vmatpush2.msra.mxu0 0.0
      %273 = vmatprep.subr.mxu0 0.0
      %274 = vmatpush2.msra.mxu0 0.0
      %275 = vmatprep.subr.mxu0 0.0
      %276 = vmatpush2.msra.mxu0 0.0
      %277 = vmatprep.subr.mxu0 0.0
      %278 = vmatpush2.msra.mxu0 0.0
      %279 = vmatprep.subr.mxu0 0.0
      %280 = vmatpush2.msra.mxu0 0.0
      %281 = vmatprep.subr.mxu0 0.0
      %282 = vmatpush2.msra.mxu0 0.0
      %283 = vmatprep.subr.mxu0 0.0
      %284 = vmatpush2.msra.mxu0 0.0
      %285 = vmatprep.subr.mxu0 0.0
      %286 = vmatpush2.msra.mxu0 0.0
      %287 = vmatprep.subr.mxu0 0.0
      %288 = vmatpush2.msra.mxu0 0.0
      %289 = vmatprep.subr.mxu0 0.0
      %290 = vmatpush2.msra.mxu0 0.0
      %291 = vmatprep.subr.mxu0 0.0
      %292 = vmatpush2.msra.mxu0 0.0
      %293 = vmatprep.mubr.f32.mxu0 0.0
      %294 = vmatmul.mubr.f32.gmra.mxu0 %v174
      %v295 = vpop.f32.mrf.mxu0
      %v296 = vadd.f32 %v227, %v295
      %v297 = vpop.f32.mrf.mxu0
      %298 = vmatprep.mubr.f32.mxu0 0.0
      %299 = vmatmul.mubr.f32.gmra.mxu0 %v175
      %v300 = vpop.f32.mrf.mxu0
      %v301 = vadd.f32 %v227, %v300
      %v302 = vpop.f32.mrf.mxu0
      %303 = vmatprep.mubr.f32.mxu0 0.0
      %304 = vmatmul.mubr.f32.gmra.mxu0 %v176
      %v305 = vpop.f32.mrf.mxu0
      %v306 = vadd.f32 %v227, %v305
      %v307 = vpop.f32.mrf.mxu0
      %308 = vmatprep.mubr.f32.mxu0 0.0
      %309 = vmatmul.mubr.f32.gmra.mxu0 %v177
      %v310 = vpop.f32.mrf.mxu0
      %v311 = vadd.f32 %v227, %v310
      %v312 = vpop.f32.mrf.mxu0
      %313 = vmatprep.mubr.f32.mxu0 0.0
      %314 = vmatmul.mubr.f32.gmra.mxu0 %v178
      %v315 = vpop.f32.mrf.mxu0
      %v316 = vadd.f32 %v227, %v315
      %v317 = vpop.f32.mrf.mxu0
      %318 = vmatprep.mubr.f32.mxu0 0.0
      %319 = vmatmul.mubr.f32.gmra.mxu0 %v179
      %v320 = vpop.f32.mrf.mxu0
      %v321 = vadd.f32 %v227, %v320
      %v322 = vpop.f32.mrf.mxu0
      %323 = vmatprep.mubr.f32.mxu0 0.0
      %324 = vmatmul.mubr.f32.gmra.mxu0 %v180
      %v325 = vpop.f32.mrf.mxu0
      %v326 = vadd.f32 %v227, %v325
      %v327 = vpop.f32.mrf.mxu0
      %328 = vmatprep.mubr.f32.mxu0 0.0
      %329 = vmatmul.mubr.f32.gmra.mxu0 %v181
      %v330 = vpop.f32.mrf.mxu0
      %v331 = vadd.f32 %v227, %v330
      %v332 = vpop.f32.mrf.mxu0
      %333 = vmatprep.mubr.f32.mxu0 0.0
      %334 = vmatmul.mubr.f32.gmra.mxu0 %v182
      %v335 = vpop.f32.mrf.mxu0
      %v336 = vadd.f32 %v227, %v335
      %v337 = vpop.f32.mrf.mxu0
      %338 = vmatprep.mubr.f32.mxu0 0.0
      %339 = vmatmul.mubr.f32.gmra.mxu0 %v183
      %v340 = vpop.f32.mrf.mxu0
      %v341 = vadd.f32 %v227, %v340
      %v342 = vpop.f32.mrf.mxu0
      %343 = vmatprep.mubr.f32.mxu0 0.0
      %344 = vmatmul.mubr.f32.gmra.mxu0 %v184
      %v345 = vpop.f32.mrf.mxu0
      %v346 = vadd.f32 %v227, %v345
      %v347 = vpop.f32.mrf.mxu0
      %348 = vmatprep.mubr.f32.mxu0 0.0
      %349 = vmatmul.mubr.f32.gmra.mxu0 %v185
      %v350 = vpop.f32.mrf.mxu0
      %v351 = vadd.f32 %v227, %v350
      %v352 = vpop.f32.mrf.mxu0
      %353 = vmatprep.mubr.f32.mxu0 0.0
      %354 = vmatmul.mubr.f32.gmra.mxu0 %v186
      %v355 = vpop.f32.mrf.mxu0
      %v356 = vadd.f32 %v227, %v355
      %v357 = vpop.f32.mrf.mxu0
      %358 = vmatprep.mubr.f32.mxu0 0.0
      %359 = vmatmul.mubr.f32.gmra.mxu0 %v187
      %v360 = vpop.f32.mrf.mxu0
      %v361 = vadd.f32 %v227, %v360
      %v362 = vpop.f32.mrf.mxu0
      %363 = vmatprep.mubr.f32.mxu0 0.0
      %364 = vmatmul.mubr.f32.gmra.mxu0 %v188
      %v365 = vpop.f32.mrf.mxu0
      %v366 = vadd.f32 %v227, %v365
      %v367 = vpop.f32.mrf.mxu0
      %368 = vmatprep.mubr.f32.mxu0 0.0
      %369 = vmatmul.mubr.f32.gmra.mxu0 %v189
      %v370 = vpop.f32.mrf.mxu0
      %v371 = vadd.f32 %v227, %v370
      %v372 = vpop.f32.mrf.mxu0
      %373 = vmatprep.mubr.f32.mxu0 0.0
      %374 = vmatmul.mubr.f32.gmra.mxu0 %v190
      %v375 = vpop.f32.mrf.mxu0
      %v376 = vadd.f32 %v227, %v375
      %v377 = vpop.f32.mrf.mxu0
      %378 = vmatprep.mubr.f32.mxu0 0.0
      %379 = vmatmul.mubr.f32.gmra.mxu0 %v191
      %v380 = vpop.f32.mrf.mxu0
      %v381 = vadd.f32 %v227, %v380
      %v382 = vpop.f32.mrf.mxu0
      %383 = vmatprep.mubr.f32.mxu0 0.0
      %384 = vmatmul.mubr.f32.gmra.mxu0 %v192
      %v385 = vpop.f32.mrf.mxu0
      %v386 = vadd.f32 %v227, %v385
      %v387 = vpop.f32.mrf.mxu0
      %388 = vmatprep.mubr.f32.mxu0 0.0
      %389 = vmatmul.mubr.f32.gmra.mxu0 %v193
      %v390 = vpop.f32.mrf.mxu0
      %v391 = vadd.f32 %v227, %v390
      %v392 = vpop.f32.mrf.mxu0
      %393 = vmatprep.mubr.f32.mxu0 0.0
      %394 = vmatmul.mubr.f32.gmra.mxu0 %v194
      %v395 = vpop.f32.mrf.mxu0
      %v396 = vadd.f32 %v227, %v395
      %v397 = vpop.f32.mrf.mxu0
      %398 = vmatprep.mubr.f32.mxu0 0.0
      %399 = vmatmul.mubr.f32.gmra.mxu0 %v195
      %v400 = vpop.f32.mrf.mxu0
      %v401 = vadd.f32 %v227, %v400
      %v402 = vpop.f32.mrf.mxu0
      %403 = vmatprep.mubr.f32.mxu0 0.0
      %404 = vmatmul.mubr.f32.gmra.mxu0 %v196
      %v405 = vpop.f32.mrf.mxu0
      %v406 = vadd.f32 %v227, %v405
      %v407 = vpop.f32.mrf.mxu0
      %408 = vmatprep.mubr.f32.mxu0 0.0
      %409 = vmatmul.mubr.f32.gmra.mxu0 %v197
      %v410 = vpop.f32.mrf.mxu0
      %v411 = vadd.f32 %v227, %v410
      %v412 = vpop.f32.mrf.mxu0
      %413 = vmatprep.mubr.f32.mxu0 0.0
      %414 = vmatmul.mubr.f32.gmra.mxu0 %v198
      %v415 = vpop.f32.mrf.mxu0
      %v416 = vadd.f32 %v227, %v415
      %v417 = vpop.f32.mrf.mxu0
      %418 = vmatprep.mubr.f32.mxu0 0.0
      %419 = vmatmul.mubr.f32.gmra.mxu0 %v199
      %v420 = vpop.f32.mrf.mxu0
      %v421 = vadd.f32 %v227, %v420
      %v422 = vpop.f32.mrf.mxu0
      %423 = vmatprep.mubr.f32.mxu0 0.0
      %424 = vmatmul.mubr.f32.gmra.mxu0 %v200
      %v425 = vpop.f32.mrf.mxu0
      %v426 = vadd.f32 %v227, %v425
      %v427 = vpop.f32.mrf.mxu0
      %428 = vmatprep.mubr.f32.mxu0 0.0
      %429 = vmatmul.mubr.f32.gmra.mxu0 %v201
      %v430 = vpop.f32.mrf.mxu0
      %v431 = vadd.f32 %v227, %v430
      %v432 = vpop.f32.mrf.mxu0
      %433 = vmatprep.mubr.f32.mxu0 0.0
      %434 = vmatmul.mubr.f32.gmra.mxu0 %v202
      %v435 = vpop.f32.mrf.mxu0
      %v436 = vadd.f32 %v227, %v435
      %v437 = vpop.f32.mrf.mxu0
      %438 = vmatprep.mubr.f32.mxu0 0.0
      %439 = vmatmul.mubr.f32.gmra.mxu0 %v203
      %v440 = vpop.f32.mrf.mxu0
      %v441 = vadd.f32 %v227, %v440
      %v442 = vpop.f32.mrf.mxu0
      %443 = vmatprep.mubr.f32.mxu0 0.0
      %444 = vmatmul.mubr.f32.gmra.mxu0 %v204
      %v445 = vpop.f32.mrf.mxu0
      %v446 = vadd.f32 %v227, %v445
      %v447 = vpop.f32.mrf.mxu0
      %448 = vmatprep.mubr.f32.mxu0 0.0
      %449 = vmatmul.mubr.f32.gmra.mxu0 %v205
      %v450 = vpop.f32.mrf.mxu0
      %v451 = vadd.f32 %v227, %v450
      %v452 = vpop.f32.mrf.mxu0
      %453 = vdwg.mxu0
      %454 = vst [vmem:[%s172] sm:$0xff] %v296
      %455 = vst [vmem:[%s172 + $0x8] sm:$0xff] %v301
      %456 = vst [vmem:[%s172 + $0x10] sm:$0xff] %v306
      %457 = vst [vmem:[%s172 + $0x18] sm:$0xff] %v311
      %458 = vst [vmem:[%s172 + $0x20] sm:$0xff] %v316
      %459 = vst [vmem:[%s172 + $0x28] sm:$0xff] %v321
      %460 = vst [vmem:[%s172 + $0x30] sm:$0xff] %v326
      %461 = vst [vmem:[%s172 + $0x38] sm:$0xff] %v331
      %462 = vst [vmem:[%s172 + $0x40] sm:$0xff] %v336
      %463 = vst [vmem:[%s172 + $0x48] sm:$0xff] %v341
      %464 = vst [vmem:[%s172 + $0x50] sm:$0xff] %v346
      %465 = vst [vmem:[%s172 + $0x58] sm:$0xff] %v351
      %466 = vst [vmem:[%s172 + $0x60] sm:$0xff] %v356
      %467 = vst [vmem:[%s172 + $0x68] sm:$0xff] %v361
      %468 = vst [vmem:[%s172 + $0x70] sm:$0xff] %v366
      %469 = vst [vmem:[%s172 + $0x78] sm:$0xff] %v371
      %470 = vst [vmem:[%s172 + $0x80] sm:$0xff] %v376
      %471 = vst [vmem:[%s172 + $0x88] sm:$0xff] %v381
      %472 = vst [vmem:[%s172 + $0x90] sm:$0xff] %v386
      %473 = vst [vmem:[%s172 + $0x98] sm:$0xff] %v391
      %474 = vst [vmem:[%s172 + $0xa0] sm:$0xff] %v396
      %475 = vst [vmem:[%s172 + $0xa8] sm:$0xff] %v401
      %476 = vst [vmem:[%s172 + $0xb0] sm:$0xff] %v406
      %477 = vst [vmem:[%s172 + $0xb8] sm:$0xff] %v411
      %478 = vst [vmem:[%s172 + $0xc0] sm:$0xff] %v416
      %479 = vst [vmem:[%s172 + $0xc8] sm:$0xff] %v421
      %480 = vst [vmem:[%s172 + $0xd0] sm:$0xff] %v426
      %481 = vst [vmem:[%s172 + $0xd8] sm:$0xff] %v431
      %482 = vst [vmem:[%s172 + $0xe0] sm:$0xff] %v436
      %483 = vst [vmem:[%s172 + $0xe8] sm:$0xff] %v441
      %484 = vst [vmem:[%s172 + $0xf0] sm:$0xff] %v446
      %485 = vst [vmem:[%s172 + $0xf8] sm:$0xff] %v451
      %s486 = smul.u32 32, %s14
      %p487 = scmp.lt.s32.totalorder %s486, 127
      %s488 = scalar_select %p487, %s486, 127
      %s489 = smul.addr %s488, 8
      %s490 = scalar_lea.vmem %s3, %s489
      // Predicated region
      $region33: #{_lambda_.14} parent=31 // pred_check
        %p491 = pneg %p100
      $region34: #{_lambda_.14} parent=31 // pred_check_branch
        %493 = sbr.rel (%p491) target = $region36
      $region35: #{_lambda_.14} parent=31 // pred_region
        %s494 = smul.u32 32, %s14
      $region36: #{_lambda_.14} parent=31 // pred_fallthru
        _
    $region32: #{_lambda_.14} parent=5 // pred_fallthru
      _
    %p495 = scmp.le.s32.totalorder 2, %s9
    // Predicated region
    $region37: #{_lambda_.14} parent=5 // pred_check
      %p496 = pneg %p495
    $region38: #{_lambda_.14} parent=5 // pred_check_branch
      %498 = sbr.rel (%p496) target = $region40
    $region39: #{_lambda_.14} parent=5 // pred_region
      %s499 = ssub.s32 %s9, 2
      // Predicated region
      $region41: #{_lambda_.14} parent=39 // pred_check
        %p500 = pneg %p106
      $region42: #{_lambda_.14} parent=39 // pred_check_branch
        %502 = sbr.rel (%p500) target = $region44
      $region43: #{_lambda_.14} parent=39 // pred_region
        %s503 = smul.u32 32, %s15
        %p504 = scmp.lt.s32.totalorder %s503, 127
        %s505 = scalar_select %p504, %s503, 127
        %s506 = smul.addr %s505, 8
        %s507 = scalar_lea.vmem %s3, %s506
      $region44: #{_lambda_.14} parent=39 // pred_fallthru
        _
    $region40: #{_lambda_.14} parent=5 // pred_fallthru
      _
  $region6: #{_lambda_.14} parent=0 // loop_footer
    %s13 = sadd.s32 1, %s9
  $region7: #{_lambda_.14} parent=0 // loop_footer_branch
    %8 = sbr.rel target = $region3
  $region8: #{_lambda_.14} parent=0 // loop_exit
    _

// kernel: _lambda_.12
$region0: #{_lambda_.12}
  #allocation0 [shape = 'u32[]', space=smem, size = 0x4, offset = 0x4, fixed_abs, tag = 'smem constant byte address 0x4 - core index']
  #allocation1 [shape = 'u32[144,128]{1,0:T(1,128)}', space=vmem, size = 0x12000, scoped, tag = 'internal scratch']
  %s0 = inlined_call_operand.vmem [shape: f32[1088,128], index: 0, kind: input, shape index: {}, may-alias: {0,1}]
  %s1 = inlined_call_operand.vmem [shape: f32[1088,128], index: 1, kind: input, shape index: {}, may-alias: {0,1}]
  %s2 = inlined_call_operand.vmem [shape: f32[9,128,128], index: 2, kind: input, shape index: {}]
  %s3 = inlined_call_operand.vmem [shape: f32[1,128], index: 3, kind: input, shape index: {}]
  %s4 = inlined_call_operand.vmem [shape: f32[1024,128], index: 4, kind: output, shape index: {}]
  %s5 = sld [smem:[#allocation0]]
  $region49: #{_lambda_.12} parent=0
    _
  %s7 = ssub.s32 1, %s5
  %s8 = scalar_select 0, %s7, %s5
  loop: start=0, step=1, limit=6
  $region2: #{_lambda_.12} parent=0 // loop_pre_header
    _
  $region3: #{_lambda_.12} parent=0 // loop_header
    %s10 = sphi 0, %s14
    %p11 = scmp.ge.s32.totalorder %s10, 6
    %s20 = sphi 0, %s22
    %s23 = sphi 0, %s20
    %s24 = sphi 0, %s23
    %s40 = sphi 0, %s24
    %s50 = sphi 0, %s52
    %s53 = sphi 0, %s50
    %s54 = sphi 0, %s53
    %s70 = sphi 0, %s54
    %s74 = sphi 0, %s74
    %s76 = sphi 0, %s74
    %s77 = sphi 0, %s76
    %s91 = sphi 0, %s77
    %s95 = sphi 0, %s95
    %s97 = sphi 0, %s95
    %s98 = sphi 0, %s97
    %s112 = sphi 0, %s98
    %s118 = sphi 0, %s120
    %s121 = sphi 0, %s118
    %s122 = sphi 0, %s121
    %s138 = sphi 0, %s122
  $region4: #{_lambda_.12} parent=0 // loop_header_branch
    %13 = sbr.rel (%p11) target = $region8
  $region5: #{_lambda_.12} parent=0 // loop_body
    %s15 = ssub.s32 %s10, 1
    %s16 = ssub.s32 %s10, 2
    %s17 = sadd.s32 %s10, 1
    %s18 = ssub.s32 %s10, %s17
    %p19 = scmp.eq.s32.totalorder %s18, 0
    %s21 = sadd.s32 %s20, 1
    %s22 = scalar_select %p19, %s20, %s21
    %p25 = pneg %p19
    %p26 = scmp.eq.s32.totalorder %s10, 3
    %p27 = por %p25, %p26
    %p28 = scmp.ne.s32.totalorder %s20, %s23
    %p29 = scmp.eq.s32.totalorder %s10, 0
    %p30 = por %p28, %p29
    %p31 = scmp.ne.s32.totalorder %s20, %s23
    %p32 = scmp.eq.s32.totalorder %s15, 3
    %p33 = por %p31, %p32
    %p34 = scmp.ne.s32.totalorder %s23, %s24
    %p35 = scmp.eq.s32.totalorder %s15, 0
    %p36 = por %p34, %p35
    %p37 = scmp.ne.s32.totalorder %s23, %s24
    %p38 = scmp.eq.s32.totalorder %s16, 3
    %p39 = por %p37, %p38
    %p41 = scmp.ne.s32.totalorder %s24, %s40
    %p42 = scmp.eq.s32.totalorder %s16, 0
    %p43 = por %p41, %p42
    %s44 = sadd.s32 %s10, 1
    %s45 = smul.u32 %s44, 4
    %s46 = sadd.s32 %s17, 1
    %s47 = smul.u32 %s46, 4
    %s48 = ssub.s32 %s45, %s47
    %p49 = scmp.eq.s32.totalorder %s48, 0
    %s51 = sadd.s32 %s50, 1
    %s52 = scalar_select %p49, %s50, %s51
    %p55 = pneg %p49
    %p56 = scmp.eq.s32.totalorder %s10, 3
    %p57 = por %p55, %p56
    %p58 = scmp.ne.s32.totalorder %s50, %s53
    %p59 = scmp.eq.s32.totalorder %s10, 0
    %p60 = por %p58, %p59
    %p61 = scmp.ne.s32.totalorder %s50, %s53
    %p62 = scmp.eq.s32.totalorder %s15, 3
    %p63 = por %p61, %p62
    %p64 = scmp.ne.s32.totalorder %s53, %s54
    %p65 = scmp.eq.s32.totalorder %s15, 0
    %p66 = por %p64, %p65
    %p67 = scmp.ne.s32.totalorder %s53, %s54
    %p68 = scmp.eq.s32.totalorder %s16, 3
    %p69 = por %p67, %p68
    %p71 = scmp.ne.s32.totalorder %s54, %s70
    %p72 = scmp.eq.s32.totalorder %s16, 0
    %p73 = por %p71, %p72
    %s75 = sadd.s32 %s74, 1
    %p78 = scmp.eq.s32.totalorder %s10, 3
    %p79 = scmp.ne.s32.totalorder %s74, %s76
    %p80 = scmp.eq.s32.totalorder %s10, 0
    %p81 = por %p79, %p80
    %p82 = scmp.ne.s32.totalorder %s74, %s76
    %p83 = scmp.eq.s32.totalorder %s15, 3
    %p84 = por %p82, %p83
    %p85 = scmp.ne.s32.totalorder %s76, %s77
    %p86 = scmp.eq.s32.totalorder %s15, 0
    %p87 = por %p85, %p86
    %p88 = scmp.ne.s32.totalorder %s76, %s77
    %p89 = scmp.eq.s32.totalorder %s16, 3
    %p90 = por %p88, %p89
    %p92 = scmp.ne.s32.totalorder %s77, %s91
    %p93 = scmp.eq.s32.totalorder %s16, 0
    %p94 = por %p92, %p93
    %s96 = sadd.s32 %s95, 1
    %p99 = scmp.eq.s32.totalorder %s10, 3
    %p100 = scmp.ne.s32.totalorder %s95, %s97
    %p101 = scmp.eq.s32.totalorder %s10, 0
    %p102 = por %p100, %p101
    %p103 = scmp.ne.s32.totalorder %s95, %s97
    %p104 = scmp.eq.s32.totalorder %s15, 3
    %p105 = por %p103, %p104
    %p106 = scmp.ne.s32.totalorder %s97, %s98
    %p107 = scmp.eq.s32.totalorder %s15, 0
    %p108 = por %p106, %p107
    %p109 = scmp.ne.s32.totalorder %s97, %s98
    %p110 = scmp.eq.s32.totalorder %s16, 3
    %p111 = por %p109, %p110
    %p113 = scmp.ne.s32.totalorder %s98, %s112
    %p114 = scmp.eq.s32.totalorder %s16, 0
    %p115 = por %p113, %p114
    %s116 = ssub.s32 %s10, %s17
    %p117 = scmp.eq.s32.totalorder %s116, 0
    %s119 = sadd.s32 %s118, 1
    %s120 = scalar_select %p117, %s118, %s119
    %p123 = pneg %p117
    %p124 = scmp.eq.s32.totalorder %s10, 3
    %p125 = por %p123, %p124
    %p126 = scmp.ne.s32.totalorder %s118, %s121
    %p127 = scmp.eq.s32.totalorder %s10, 0
    %p128 = por %p126, %p127
    %p129 = scmp.ne.s32.totalorder %s118, %s121
    %p130 = scmp.eq.s32.totalorder %s15, 3
    %p131 = por %p129, %p130
    %p132 = scmp.ne.s32.totalorder %s121, %s122
    %p133 = scmp.eq.s32.totalorder %s15, 0
    %p134 = por %p132, %p133
    %p135 = scmp.ne.s32.totalorder %s121, %s122
    %p136 = scmp.eq.s32.totalorder %s16, 3
    %p137 = por %p135, %p136
    %p139 = scmp.ne.s32.totalorder %s122, %s138
    %p140 = scmp.eq.s32.totalorder %s16, 0
    %p141 = por %p139, %p140
    %p142 = scmp.le.s32.totalorder 1, %s10
    %p143 = scmp.lt.s32.totalorder %s10, 5
    %p144 = pnand %p142, %p143
    %p145 = pneg %p144
    // Predicated region
    $region9: #{_lambda_.12} parent=5 // pred_check
      _
    $region10: #{_lambda_.12} parent=5 // pred_check_branch
      %147 = sbr.rel (%p144) target = $region12
    $region11: #{_lambda_.12} parent=5 // pred_region
      %s148 = ssub.s32 %s10, 1
      // Predicated region
      $region13: #{_lambda_.12} parent=11 // pred_check
        %p149 = pneg %p87
      $region14: #{_lambda_.12} parent=11 // pred_check_branch
        %151 = sbr.rel (%p149) target = $region16
      $region15: #{_lambda_.12} parent=11 // pred_region
        _
      $region16: #{_lambda_.12} parent=11 // pred_fallthru
        _
      // Predicated region
      $region17: #{_lambda_.12} parent=11 // pred_check
        %p152 = pneg %p108
      $region18: #{_lambda_.12} parent=11 // pred_check_branch
        %154 = sbr.rel (%p152) target = $region20
      $region19: #{_lambda_.12} parent=11 // pred_region
        _
      $region20: #{_lambda_.12} parent=11 // pred_fallthru
        _
    $region12: #{_lambda_.12} parent=5 // pred_fallthru
      _
    %p155 = scmp.lt.s32.totalorder %s10, 4
    // Predicated region
    $region21: #{_lambda_.12} parent=5 // pred_check
      %p156 = pneg %p155
    $region22: #{_lambda_.12} parent=5 // pred_check_branch
      %158 = sbr.rel (%p156) target = $region24
    $region23: #{_lambda_.12} parent=5 // pred_region
      // Predicated region
      $region25: #{_lambda_.12} parent=23 // pred_check
        %p159 = pneg %p30
      $region26: #{_lambda_.12} parent=23 // pred_check_branch
        %161 = sbr.rel (%p159) target = $region28
      $region27: #{_lambda_.12} parent=23 // pred_region
        %s162 = smul.u32 32, %s10
        %s163 = ssub.s32 136, %s162
        %p164 = scmp.lt.s32.totalorder %s163, 32
        %s165 = scalar_select %p164, %s163, 32
        %s166 = smul.u32 128, %s165
        %p167 = scmp.lt.s32.totalorder %s162, 135
        %s168 = scalar_select %p167, %s162, 135
        %s169 = smul.addr %s168, 8
        %s170 = scalar_lea.vmem %s0, %s169
        %s171 = smul.u32 32, %s10
        %s172 = ssub.s32 136, %s171
        %p173 = scmp.lt.s32.totalorder %s172, 32
        %s174 = scalar_select %p173, %s172, 32
        %s175 = smul.u32 128, %s174
      $region28: #{_lambda_.12} parent=23 // pred_fallthru
        _
      // Predicated region
      $region29: #{_lambda_.12} parent=23 // pred_check
        %p176 = pneg %p60
      $region30: #{_lambda_.12} parent=23 // pred_check_branch
        %178 = sbr.rel (%p176) target = $region32
      $region31: #{_lambda_.12} parent=23 // pred_region
        %s179 = sadd.s32 %s10, 1
        %s180 = smul.u32 %s179, 4
        %s181 = smul.u32 8, %s180
        %p182 = scmp.lt.s32.totalorder %s181, 135
        %s183 = scalar_select %p182, %s181, 135
        %s184 = smul.addr %s183, 8
        %s185 = scalar_lea.vmem %s1, %s184
        %s186 = sadd.s32 %s10, 1
        %s187 = smul.u32 %s186, 4
        %s188 = smul.u32 8, %s187
      $region32: #{_lambda_.12} parent=23 // pred_fallthru
        _
    $region24: #{_lambda_.12} parent=5 // pred_fallthru
      _
    %p189 = scmp.le.s32.totalorder 1, %s10
    %p190 = scmp.lt.s32.totalorder %s10, 5
    %p191 = pnand %p189, %p190
    %p192 = pneg %p191
    // Predicated region
    $region33: #{_lambda_.12} parent=5 // pred_check
      _
    $region34: #{_lambda_.12} parent=5 // pred_check_branch
      %194 = sbr.rel (%p191) target = $region36
    $region35: #{_lambda_.12} parent=5 // pred_region
      %s195 = ssub.s32 %s10, 1
      %s196 = smul.u32 32, %s15
      %s197 = ssub.s32 136, %s196
      %p198 = scmp.lt.s32.totalorder %s197, 32
      %s199 = scalar_select %p198, %s197, 32
      %s200 = smul.u32 128, %s199
      %p201 = scmp.lt.s32.totalorder %s196, 135
      %s202 = scalar_select %p201, %s196, 135
      %s203 = smul.addr %s202, 8
      %s204 = scalar_lea.vmem %s0, %s203
      %p205 = pneg %p36
      %p206 = pneg %p33
      %s207 = sadd.s32 %s15, 1
      %s208 = smul.u32 %s207, 4
      %s209 = smul.u32 8, %s208
      %p210 = scmp.lt.s32.totalorder %s209, 135
      %s211 = scalar_select %p210, %s209, 135
      %s212 = smul.addr %s211, 8
      %s213 = scalar_lea.vmem %s1, %s212
      %p214 = pneg %p66
      %p215 = pneg %p63
      %p216 = pneg %p87
      %p217 = pneg %p84
      %p218 = pneg %p108
      %p219 = pneg %p105
      %p220 = pneg %p134
      %p221 = pneg %p131
      %s222 = smul.u32 32, %s15
      %p223 = scmp.lt.s32.totalorder %s222, 127
      %s224 = scalar_select %p223, %s222, 127
      %s225 = smul.addr %s224, 8
      %s226 = scalar_lea.vmem %s4, %s225
      %s227 = smul.u32 32, %s15
      %s228 = ssub.s32 136, %s227
      %p229 = scmp.lt.s32.totalorder %s228, 32
      %s230 = scalar_select %p229, %s228, 32
      %s231 = smul.u32 128, %s230
      %p232 = scmp.lt.s32.totalorder %s227, 135
      %s233 = scalar_select %p232, %s227, 135
      %s234 = smul.addr %s233, 8
      %s235 = scalar_lea.vmem %s0, %s234
      %s236 = smul.u32 32, %s15
      %s237 = ssub.s32 136, %s236
      %p238 = scmp.lt.s32.totalorder %s237, 32
      %s239 = scalar_select %p238, %s237, 32
      %s240 = smul.u32 128, %s239
      %s241 = sadd.s32 %s15, 1
      %s242 = smul.u32 %s241, 4
      %s243 = smul.u32 8, %s242
      %p244 = scmp.lt.s32.totalorder %s243, 135
      %s245 = scalar_select %p244, %s243, 135
      %s246 = smul.addr %s245, 8
      %s247 = scalar_lea.vmem %s1, %s246
      %s248 = sadd.s32 %s15, 1
      %s249 = smul.u32 %s248, 4
      %s250 = smul.u32 8, %s249
      %s251 = smul.u32 32, %s15
      %p252 = scmp.lt.s32.totalorder %s251, 127
      %s253 = scalar_select %p252, %s251, 127
      %s254 = smul.addr %s253, 8
      %s255 = scalar_lea.vmem %s4, %s254
      %s256 = smul.u32 32, %s15
      %v257 = vld [vmem:[%s235] sm:$0xff]
      %v258 = vld [vmem:[%s235 + $0x8] sm:$0xff]
      %v259 = vld [vmem:[%s235 + $0x10] sm:$0xff]
      %v260 = vld [vmem:[%s235 + $0x18] sm:$0xff]
      %v261 = vld [vmem:[%s235 + $0x20] sm:$0xff]
      %v262 = vld [vmem:[%s235 + $0x28] sm:$0xff]
      %v263 = vld [vmem:[%s235 + $0x30] sm:$0xff]
      %v264 = vld [vmem:[%s235 + $0x38] sm:$0xff]
      %v265 = vld [vmem:[%s235 + $0x40] sm:$0xff]
      %v266 = vld [vmem:[%s235 + $0x48] sm:$0xff]
      %v267 = vld [vmem:[%s235 + $0x50] sm:$0xff]
      %v268 = vld [vmem:[%s235 + $0x58] sm:$0xff]
      %v269 = vld [vmem:[%s235 + $0x60] sm:$0xff]
      %v270 = vld [vmem:[%s235 + $0x68] sm:$0xff]
      %v271 = vld [vmem:[%s235 + $0x70] sm:$0xff]
      %v272 = vld [vmem:[%s235 + $0x78] sm:$0xff]
      %v273 = vld [vmem:[%s235 + $0x80] sm:$0xff]
      %v274 = vld [vmem:[%s235 + $0x88] sm:$0xff]
      %v275 = vld [vmem:[%s235 + $0x90] sm:$0xff]
      %v276 = vld [vmem:[%s235 + $0x98] sm:$0xff]
      %v277 = vld [vmem:[%s235 + $0xa0] sm:$0xff]
      %v278 = vld [vmem:[%s235 + $0xa8] sm:$0xff]
      %v279 = vld [vmem:[%s235 + $0xb0] sm:$0xff]
      %v280 = vld [vmem:[%s235 + $0xb8] sm:$0xff]
      %v281 = vld [vmem:[%s235 + $0xc0] sm:$0xff]
      %v282 = vld [vmem:[%s235 + $0xc8] sm:$0xff]
      %v283 = vld [vmem:[%s235 + $0xd0] sm:$0xff]
      %v284 = vld [vmem:[%s235 + $0xd8] sm:$0xff]
      %v285 = vld [vmem:[%s235 + $0xe0] sm:$0xff]
      %v286 = vld [vmem:[%s235 + $0xe8] sm:$0xff]
      %v287 = vld [vmem:[%s235 + $0xf0] sm:$0xff]
      %v288 = vld [vmem:[%s235 + $0xf8] sm:$0xff]
      %v289 = vld [vmem:[%s247] sm:$0xff]
      %v290 = vld [vmem:[%s247 + $0x8] sm:$0xff]
      %v291 = vld [vmem:[%s247 + $0x10] sm:$0xff]
      %v292 = vld [vmem:[%s247 + $0x18] sm:$0xff]
      %v293 = vld [vmem:[%s247 + $0x20] sm:$0xff]
      %v294 = vld [vmem:[%s247 + $0x28] sm:$0xff]
      %v295 = vld [vmem:[%s247 + $0x30] sm:$0xff]
      %v296 = vld [vmem:[%s2] sm:$0xff]
      %v297 = vld [vmem:[%s2 + $0x8] sm:$0xff]
      %v298 = vld [vmem:[%s2 + $0x10] sm:$0xff]
      %v299 = vld [vmem:[%s2 + $0x18] sm:$0xff]
      %v300 = vld [vmem:[%s2 + $0x20] sm:$0xff]
      %v301 = vld [vmem:[%s2 + $0x28] sm:$0xff]
      %v302 = vld [vmem:[%s2 + $0x30] sm:$0xff]
      %v303 = vld [vmem:[%s2 + $0x38] sm:$0xff]
      %v304 = vld [vmem:[%s2 + $0x40] sm:$0xff]
      %v305 = vld [vmem:[%s2 + $0x48] sm:$0xff]
      %v306 = vld [vmem:[%s2 + $0x50] sm:$0xff]
      %v307 = vld [vmem:[%s2 + $0x58] sm:$0xff]
      %v308 = vld [vmem:[%s2 + $0x60] sm:$0xff]
      %v309 = vld [vmem:[%s2 + $0x68] sm:$0xff]
      %v310 = vld [vmem:[%s2 + $0x70] sm:$0xff]
      %v311 = vld [vmem:[%s2 + $0x78] sm:$0xff]
      %s312 = scalar_lea.vmem %s2, 128
      %v313 = vld [vmem:[%s312] sm:$0xff]
      %v314 = vld [vmem:[%s312 + $0x8] sm:$0xff]
      %v315 = vld [vmem:[%s312 + $0x10] sm:$0xff]
      %v316 = vld [vmem:[%s312 + $0x18] sm:$0xff]
      %v317 = vld [vmem:[%s312 + $0x20] sm:$0xff]
      %v318 = vld [vmem:[%s312 + $0x28] sm:$0xff]
      %v319 = vld [vmem:[%s312 + $0x30] sm:$0xff]
      %v320 = vld [vmem:[%s312 + $0x38] sm:$0xff]
      %v321 = vld [vmem:[%s312 + $0x40] sm:$0xff]
      %v322 = vld [vmem:[%s312 + $0x48] sm:$0xff]
      %v323 = vld [vmem:[%s312 + $0x50] sm:$0xff]
      %v324 = vld [vmem:[%s312 + $0x58] sm:$0xff]
      %v325 = vld [vmem:[%s312 + $0x60] sm:$0xff]
      %v326 = vld [vmem:[%s312 + $0x68] sm:$0xff]
      %v327 = vld [vmem:[%s312 + $0x70] sm:$0xff]
      %v328 = vld [vmem:[%s312 + $0x78] sm:$0xff]
      %vm362 = vcmask 1046528
      %v363 = vrot.slane %v257, 1
      %v364 = vrot.slane %v258, 1
      %v365 = vsel %vm362, %v363, %v364
      %v366 = vrot.slane %v259, 1
      %v367 = vsel %vm362, %v364, %v366
      %v368 = vrot.slane %v260, 1
      %v369 = vsel %vm362, %v366, %v368
      %v370 = vrot.slane %v261, 1
      %v371 = vsel %vm362, %v368, %v370
      %v372 = vrot.slane %v262, 1
      %v373 = vsel %vm362, %v370, %v372
      %v374 = vrot.slane %v263, 1
      %v375 = vsel %vm362, %v372, %v374
      %v376 = vrot.slane %v264, 1
      %v377 = vsel %vm362, %v374, %v376
      %v378 = vrot.slane %v265, 1
      %v379 = vsel %vm362, %v376, %v378
      %v380 = vrot.slane %v266, 1
      %v381 = vsel %vm362, %v378, %v380
      %v382 = vrot.slane %v267, 1
      %v383 = vsel %vm362, %v380, %v382
      %v384 = vrot.slane %v268, 1
      %v385 = vsel %vm362, %v382, %v384
      %v386 = vrot.slane %v269, 1
      %v387 = vsel %vm362, %v384, %v386
      %v388 = vrot.slane %v270, 1
      %v389 = vsel %vm362, %v386, %v388
      %v390 = vrot.slane %v271, 1
      %v391 = vsel %vm362, %v388, %v390
      %v392 = vrot.slane %v272, 1
      %v393 = vsel %vm362, %v390, %v392
      %v394 = vrot.slane %v273, 1
      %v395 = vsel %vm362, %v392, %v394
      %v396 = vrot.slane %v274, 1
      %v397 = vsel %vm362, %v394, %v396
      %v398 = vrot.slane %v275, 1
      %v399 = vsel %vm362, %v396, %v398
      %v400 = vrot.slane %v276, 1
      %v401 = vsel %vm362, %v398, %v400
      %v402 = vrot.slane %v277, 1
      %v403 = vsel %vm362, %v400, %v402
      %v404 = vrot.slane %v278, 1
      %v405 = vsel %vm362, %v402, %v404
      %v406 = vrot.slane %v279, 1
      %v407 = vsel %vm362, %v404, %v406
      %v408 = vrot.slane %v280, 1
      %v409 = vsel %vm362, %v406, %v408
      %v410 = vrot.slane %v281, 1
      %v411 = vsel %vm362, %v408, %v410
      %v412 = vrot.slane %v282, 1
      %v413 = vsel %vm362, %v410, %v412
      %v414 = vrot.slane %v283, 1
      %v415 = vsel %vm362, %v412, %v414
      %v416 = vrot.slane %v284, 1
      %v417 = vsel %vm362, %v414, %v416
      %v418 = vrot.slane %v285, 1
      %v419 = vsel %vm362, %v416, %v418
      %v420 = vrot.slane %v286, 1
      %v421 = vsel %vm362, %v418, %v420
      %v422 = vrot.slane %v287, 1
      %v423 = vsel %vm362, %v420, %v422
      %v424 = vrot.slane %v288, 1
      %v425 = vsel %vm362, %v422, %v424
      %v426 = vrot.slane %v289, 1
      %v427 = vsel %vm362, %v424, %v426
      %460 = vmatprep.subr.mxu0 0.0
      %461 = vmatpush1.msra.mxu0 %v328
      %462 = vmatprep.subr.mxu0 0.0
      %463 = vmatpush1.msra.mxu0 %v327
      %464 = vmatprep.subr.mxu0 0.0
      %465 = vmatpush1.msra.mxu0 %v326
      %466 = vmatprep.subr.mxu0 0.0
      %467 = vmatpush1.msra.mxu0 %v325
      %468 = vmatprep.subr.mxu0 0.0
      %469 = vmatpush1.msra.mxu0 %v324
      %470 = vmatprep.subr.mxu0 0.0
      %471 = vmatpush1.msra.mxu0 %v323
      %472 = vmatprep.subr.mxu0 0.0
      %473 = vmatpush1.msra.mxu0 %v322
      %474 = vmatprep.subr.mxu0 0.0
      %475 = vmatpush1.msra.mxu0 %v321
      %476 = vmatprep.subr.mxu0 0.0
      %477 = vmatpush1.msra.mxu0 %v320
      %478 = vmatprep.subr.mxu0 0.0
      %479 = vmatpush1.msra.mxu0 %v319
      %480 = vmatprep.subr.mxu0 0.0
      %481 = vmatpush1.msra.mxu0 %v318
      %482 = vmatprep.subr.mxu0 0.0
      %483 = vmatpush1.msra.mxu0 %v317
      %484 = vmatprep.subr.mxu0 0.0
      %485 = vmatpush1.msra.mxu0 %v316
      %486 = vmatprep.subr.mxu0 0.0
      %487 = vmatpush1.msra.mxu0 %v315
      %488 = vmatprep.subr.mxu0 0.0
      %489 = vmatpush1.msra.mxu0 %v314
      %490 = vmatprep.subr.mxu0 0.0
      %491 = vmatpush1.msra.mxu0 %v313
      %492 = vmatprep.subr.mxu0 0.0
      %493 = vmatpush2.msra.mxu0 0.0
      %494 = vmatprep.subr.mxu0 0.0
      %495 = vmatpush2.msra.mxu0 0.0
      %496 = vmatprep.subr.mxu0 0.0
      %497 = vmatpush2.msra.mxu0 0.0
      %498 = vmatprep.subr.mxu0 0.0
      %499 = vmatpush2.msra.mxu0 0.0
      %500 = vmatprep.subr.mxu0 0.0
      %501 = vmatpush2.msra.mxu0 0.0
      %502 = vmatprep.subr.mxu0 0.0
      %503 = vmatpush2.msra.mxu0 0.0
      %504 = vmatprep.subr.mxu0 0.0
      %505 = vmatpush2.msra.mxu0 0.0
      %506 = vmatprep.subr.mxu0 0.0
      %507 = vmatpush2.msra.mxu0 0.0
      %508 = vmatprep.subr.mxu0 0.0
      %509 = vmatpush2.msra.mxu0 0.0
      %510 = vmatprep.subr.mxu0 0.0
      %511 = vmatpush2.msra.mxu0 0.0
      %512 = vmatprep.subr.mxu0 0.0
      %513 = vmatpush2.msra.mxu0 0.0
      %514 = vmatprep.subr.mxu0 0.0
      %515 = vmatpush2.msra.mxu0 0.0
      %516 = vmatprep.subr.mxu0 0.0
      %517 = vmatpush2.msra.mxu0 0.0
      %518 = vmatprep.subr.mxu0 0.0
      %519 = vmatpush2.msra.mxu0 0.0
      %520 = vmatprep.subr.mxu0 0.0
      %521 = vmatpush2.msra.mxu0 0.0
      %522 = vmatprep.subr.mxu0 0.0
      %523 = vmatpush2.msra.mxu0 0.0
      %524 = vmatprep.mubr.f32.mxu0 0.0
      %525 = vmatmul.mubr.f32.gmra.mxu0 %v365
      %v526 = vpop.f32.mrf.mxu0
      %v527 = vadd.f32 0.0, %v526
      %v528 = vpop.f32.mrf.mxu0
      %529 = vmatprep.mubr.f32.mxu0 0.0
      %530 = vmatmul.mubr.f32.gmra.mxu0 %v367
      %v531 = vpop.f32.mrf.mxu0
      %v532 = vadd.f32 0.0, %v531
      %v533 = vpop.f32.mrf.mxu0
      %534 = vmatprep.mubr.f32.mxu0 0.0
      %535 = vmatmul.mubr.f32.gmra.mxu0 %v369
      %v536 = vpop.f32.mrf.mxu0
      %v537 = vadd.f32 0.0, %v536
      %v538 = vpop.f32.mrf.mxu0
      %539 = vmatprep.mubr.f32.mxu0 0.0
      %540 = vmatmul.mubr.f32.gmra.mxu0 %v371
      %v541 = vpop.f32.mrf.mxu0
      %v542 = vadd.f32 0.0, %v541
      %v543 = vpop.f32.mrf.mxu0
      %544 = vmatprep.mubr.f32.mxu0 0.0
      %545 = vmatmul.mubr.f32.gmra.mxu0 %v373
      %v546 = vpop.f32.mrf.mxu0
      %v547 = vadd.f32 0.0, %v546
      %v548 = vpop.f32.mrf.mxu0
      %549 = vmatprep.mubr.f32.mxu0 0.0
      %550 = vmatmul.mubr.f32.gmra.mxu0 %v375
      %v551 = vpop.f32.mrf.mxu0
      %v552 = vadd.f32 0.0, %v551
      %v553 = vpop.f32.mrf.mxu0
      %554 = vmatprep.mubr.f32.mxu0 0.0
      %555 = vmatmul.mubr.f32.gmra.mxu0 %v377
      %v556 = vpop.f32.mrf.mxu0
      %v557 = vadd.f32 0.0, %v556
      %v558 = vpop.f32.mrf.mxu0
      %559 = vmatprep.mubr.f32.mxu0 0.0
      %560 = vmatmul.mubr.f32.gmra.mxu0 %v379
      %v561 = vpop.f32.mrf.mxu0
      %v562 = vadd.f32 0.0, %v561
      %v563 = vpop.f32.mrf.mxu0
      %564 = vmatprep.mubr.f32.mxu0 0.0
      %565 = vmatmul.mubr.f32.gmra.mxu0 %v381
      %v566 = vpop.f32.mrf.mxu0
      %v567 = vadd.f32 0.0, %v566
      %v568 = vpop.f32.mrf.mxu0
      %569 = vmatprep.mubr.f32.mxu0 0.0
      %570 = vmatmul.mubr.f32.gmra.mxu0 %v383
      %v571 = vpop.f32.mrf.mxu0
      %v572 = vadd.f32 0.0, %v571
      %v573 = vpop.f32.mrf.mxu0
      %574 = vmatprep.mubr.f32.mxu0 0.0
      %575 = vmatmul.mubr.f32.gmra.mxu0 %v385
      %v576 = vpop.f32.mrf.mxu0
      %v577 = vadd.f32 0.0, %v576
      %v578 = vpop.f32.mrf.mxu0
      %579 = vmatprep.mubr.f32.mxu0 0.0
      %580 = vmatmul.mubr.f32.gmra.mxu0 %v387
      %v581 = vpop.f32.mrf.mxu0
      %v582 = vadd.f32 0.0, %v581
      %v583 = vpop.f32.mrf.mxu0
      %584 = vmatprep.mubr.f32.mxu0 0.0
      %585 = vmatmul.mubr.f32.gmra.mxu0 %v389
      %v586 = vpop.f32.mrf.mxu0
      %v587 = vadd.f32 0.0, %v586
      %v588 = vpop.f32.mrf.mxu0
      %589 = vmatprep.mubr.f32.mxu0 0.0
      %590 = vmatmul.mubr.f32.gmra.mxu0 %v391
      %v591 = vpop.f32.mrf.mxu0
      %v592 = vadd.f32 0.0, %v591
      %v593 = vpop.f32.mrf.mxu0
      %594 = vmatprep.mubr.f32.mxu0 0.0
      %595 = vmatmul.mubr.f32.gmra.mxu0 %v393
      %v596 = vpop.f32.mrf.mxu0
      %v597 = vadd.f32 0.0, %v596
      %v598 = vpop.f32.mrf.mxu0
      %599 = vmatprep.mubr.f32.mxu0 0.0
      %600 = vmatmul.mubr.f32.gmra.mxu0 %v395
      %v601 = vpop.f32.mrf.mxu0
      %v602 = vadd.f32 0.0, %v601
      %v603 = vpop.f32.mrf.mxu0
      %604 = vmatprep.mubr.f32.mxu0 0.0
      %605 = vmatmul.mubr.f32.gmra.mxu0 %v397
      %v606 = vpop.f32.mrf.mxu0
      %v607 = vadd.f32 0.0, %v606
      %v608 = vpop.f32.mrf.mxu0
      %609 = vmatprep.mubr.f32.mxu0 0.0
      %610 = vmatmul.mubr.f32.gmra.mxu0 %v399
      %v611 = vpop.f32.mrf.mxu0
      %v612 = vadd.f32 0.0, %v611
      %v613 = vpop.f32.mrf.mxu0
      %614 = vmatprep.mubr.f32.mxu0 0.0
      %615 = vmatmul.mubr.f32.gmra.mxu0 %v401
      %v616 = vpop.f32.mrf.mxu0
      %v617 = vadd.f32 0.0, %v616
      %v618 = vpop.f32.mrf.mxu0
      %619 = vmatprep.mubr.f32.mxu0 0.0
      %620 = vmatmul.mubr.f32.gmra.mxu0 %v403
      %v621 = vpop.f32.mrf.mxu0
      %v622 = vadd.f32 0.0, %v621
      %v623 = vpop.f32.mrf.mxu0
      %624 = vmatprep.mubr.f32.mxu0 0.0
      %625 = vmatmul.mubr.f32.gmra.mxu0 %v405
      %v626 = vpop.f32.mrf.mxu0
      %v627 = vadd.f32 0.0, %v626
      %v628 = vpop.f32.mrf.mxu0
      %629 = vmatprep.mubr.f32.mxu0 0.0
      %630 = vmatmul.mubr.f32.gmra.mxu0 %v407
      %v631 = vpop.f32.mrf.mxu0
      %v632 = vadd.f32 0.0, %v631
      %v633 = vpop.f32.mrf.mxu0
      %634 = vmatprep.mubr.f32.mxu0 0.0
      %635 = vmatmul.mubr.f32.gmra.mxu0 %v409
      %v636 = vpop.f32.mrf.mxu0
      %v637 = vadd.f32 0.0, %v636
      %v638 = vpop.f32.mrf.mxu0
      %639 = vmatprep.mubr.f32.mxu0 0.0
      %640 = vmatmul.mubr.f32.gmra.mxu0 %v411
      %v641 = vpop.f32.mrf.mxu0
      %v642 = vadd.f32 0.0, %v641
      %v643 = vpop.f32.mrf.mxu0
      %644 = vmatprep.mubr.f32.mxu0 0.0
      %645 = vmatmul.mubr.f32.gmra.mxu0 %v413
      %v646 = vpop.f32.mrf.mxu0
      %v647 = vadd.f32 0.0, %v646
      %v648 = vpop.f32.mrf.mxu0
      %649 = vmatprep.mubr.f32.mxu0 0.0
      %650 = vmatmul.mubr.f32.gmra.mxu0 %v415
      %v651 = vpop.f32.mrf.mxu0
      %v652 = vadd.f32 0.0, %v651
      %v653 = vpop.f32.mrf.mxu0
      %654 = vmatprep.mubr.f32.mxu0 0.0
      %655 = vmatmul.mubr.f32.gmra.mxu0 %v417
      %v656 = vpop.f32.mrf.mxu0
      %v657 = vadd.f32 0.0, %v656
      %v658 = vpop.f32.mrf.mxu0
      %659 = vmatprep.mubr.f32.mxu0 0.0
      %660 = vmatmul.mubr.f32.gmra.mxu0 %v419
      %v661 = vpop.f32.mrf.mxu0
      %v662 = vadd.f32 0.0, %v661
      %v663 = vpop.f32.mrf.mxu0
      %664 = vmatprep.mubr.f32.mxu0 0.0
      %665 = vmatmul.mubr.f32.gmra.mxu0 %v421
      %v666 = vpop.f32.mrf.mxu0
      %v667 = vadd.f32 0.0, %v666
      %v668 = vpop.f32.mrf.mxu0
      %669 = vmatprep.mubr.f32.mxu0 0.0
      %670 = vmatmul.mubr.f32.gmra.mxu0 %v423
      %v671 = vpop.f32.mrf.mxu0
      %v672 = vadd.f32 0.0, %v671
      %v673 = vpop.f32.mrf.mxu0
      %674 = vmatprep.mubr.f32.mxu0 0.0
      %675 = vmatmul.mubr.f32.gmra.mxu0 %v425
      %v676 = vpop.f32.mrf.mxu0
      %v677 = vadd.f32 0.0, %v676
      %v678 = vpop.f32.mrf.mxu0
      %679 = vmatprep.mubr.f32.mxu0 0.0
      %680 = vmatmul.mubr.f32.gmra.mxu0 %v427
      %v681 = vpop.f32.mrf.mxu0
      %v682 = vadd.f32 0.0, %v681
      %v683 = vpop.f32.mrf.mxu0
      %684 = vdwg.mxu0
      %685 = vmatprep.subr.mxu0 0.0
      %686 = vmatpush1.msra.mxu0 %v311
      %687 = vmatprep.subr.mxu0 0.0
      %688 = vmatpush1.msra.mxu0 %v310
      %689 = vmatprep.subr.mxu0 0.0
      %690 = vmatpush1.msra.mxu0 %v309
      %691 = vmatprep.subr.mxu0 0.0
      %692 = vmatpush1.msra.mxu0 %v308
      %693 = vmatprep.subr.mxu0 0.0
      %694 = vmatpush1.msra.mxu0 %v307
      %695 = vmatprep.subr.mxu0 0.0
      %696 = vmatpush1.msra.mxu0 %v306
      %697 = vmatprep.subr.mxu0 0.0
      %698 = vmatpush1.msra.mxu0 %v305
      %699 = vmatprep.subr.mxu0 0.0
      %700 = vmatpush1.msra.mxu0 %v304
      %701 = vmatprep.subr.mxu0 0.0
      %702 = vmatpush1.msra.mxu0 %v303
      %703 = vmatprep.subr.mxu0 0.0
      %704 = vmatpush1.msra.mxu0 %v302
      %705 = vmatprep.subr.mxu0 0.0
      %706 = vmatpush1.msra.mxu0 %v301
      %707 = vmatprep.subr.mxu0 0.0
      %708 = vmatpush1.msra.mxu0 %v300
      %709 = vmatprep.subr.mxu0 0.0
      %710 = vmatpush1.msra.mxu0 %v299
      %711 = vmatprep.subr.mxu0 0.0
      %712 = vmatpush1.msra.mxu0 %v298
      %713 = vmatprep.subr.mxu0 0.0
      %714 = vmatpush1.msra.mxu0 %v297
      %715 = vmatprep.subr.mxu0 0.0
      %716 = vmatpush1.msra.mxu0 %v296
      %717 = vmatprep.subr.mxu0 0.0
      %718 = vmatpush2.msra.mxu0 0.0
      %719 = vmatprep.subr.mxu0 0.0
      %720 = vmatpush2.msra.mxu0 0.0
      %721 = vmatprep.subr.mxu0 0.0
      %722 = vmatpush2.msra.mxu0 0.0
      %723 = vmatprep.subr.mxu0 0.0
      %724 = vmatpush2.msra.mxu0 0.0
      %725 = vmatprep.subr.mxu0 0.0
      %726 = vmatpush2.msra.mxu0 0.0
      %727 = vmatprep.subr.mxu0 0.0
      %728 = vmatpush2.msra.mxu0 0.0
      %729 = vmatprep.subr.mxu0 0.0
      %730 = vmatpush2.msra.mxu0 0.0
      %731 = vmatprep.subr.mxu0 0.0
      %732 = vmatpush2.msra.mxu0 0.0
      %733 = vmatprep.subr.mxu0 0.0
      %734 = vmatpush2.msra.mxu0 0.0
      %735 = vmatprep.subr.mxu0 0.0
      %736 = vmatpush2.msra.mxu0 0.0
      %737 = vmatprep.subr.mxu0 0.0
      %738 = vmatpush2.msra.mxu0 0.0
      %739 = vmatprep.subr.mxu0 0.0
      %740 = vmatpush2.msra.mxu0 0.0
      %741 = vmatprep.subr.mxu0 0.0
      %742 = vmatpush2.msra.mxu0 0.0
      %743 = vmatprep.subr.mxu0 0.0
      %744 = vmatpush2.msra.mxu0 0.0
      %745 = vmatprep.subr.mxu0 0.0
      %746 = vmatpush2.msra.mxu0 0.0
      %747 = vmatprep.subr.mxu0 0.0
      %748 = vmatpush2.msra.mxu0 0.0
      %749 = vmatprep.mubr.f32.mxu0 0.0
      %750 = vmatmul.mubr.f32.gmra.mxu0 %v257
      %v751 = vpop.f32.mrf.mxu0
      %v752 = vadd.f32 %v527, %v751
      %v753 = vpop.f32.mrf.mxu0
      %754 = vmatprep.mubr.f32.mxu0 0.0
      %755 = vmatmul.mubr.f32.gmra.mxu0 %v258
      %v756 = vpop.f32.mrf.mxu0
      %v757 = vadd.f32 %v532, %v756
      %v758 = vpop.f32.mrf.mxu0
      %759 = vmatprep.mubr.f32.mxu0 0.0
      %760 = vmatmul.mubr.f32.gmra.mxu0 %v259
      %v761 = vpop.f32.mrf.mxu0
      %v762 = vadd.f32 %v537, %v761
      %v763 = vpop.f32.mrf.mxu0
      %764 = vmatprep.mubr.f32.mxu0 0.0
      %765 = vmatmul.mubr.f32.gmra.mxu0 %v260
      %v766 = vpop.f32.mrf.mxu0
      %v767 = vadd.f32 %v542, %v766
      %v768 = vpop.f32.mrf.mxu0
      %769 = vmatprep.mubr.f32.mxu0 0.0
      %770 = vmatmul.mubr.f32.gmra.mxu0 %v261
      %v771 = vpop.f32.mrf.mxu0
      %v772 = vadd.f32 %v547, %v771
      %v773 = vpop.f32.mrf.mxu0
      %774 = vmatprep.mubr.f32.mxu0 0.0
      %775 = vmatmul.mubr.f32.gmra.mxu0 %v262
      %v776 = vpop.f32.mrf.mxu0
      %v777 = vadd.f32 %v552, %v776
      %v778 = vpop.f32.mrf.mxu0
      %779 = vmatprep.mubr.f32.mxu0 0.0
      %780 = vmatmul.mubr.f32.gmra.mxu0 %v263
      %v781 = vpop.f32.mrf.mxu0
      %v782 = vadd.f32 %v557, %v781
      %v783 = vpop.f32.mrf.mxu0
      %784 = vmatprep.mubr.f32.mxu0 0.0
      %785 = vmatmul.mubr.f32.gmra.mxu0 %v264
      %v786 = vpop.f32.mrf.mxu0
      %v787 = vadd.f32 %v562, %v786
      %v788 = vpop.f32.mrf.mxu0
      %789 = vmatprep.mubr.f32.mxu0 0.0
      %790 = vmatmul.mubr.f32.gmra.mxu0 %v265
      %v791 = vpop.f32.mrf.mxu0
      %v792 = vadd.f32 %v567, %v791
      %v793 = vpop.f32.mrf.mxu0
      %794 = vmatprep.mubr.f32.mxu0 0.0
      %795 = vmatmul.mubr.f32.gmra.mxu0 %v266
      %v796 = vpop.f32.mrf.mxu0
      %v797 = vadd.f32 %v572, %v796
      %v798 = vpop.f32.mrf.mxu0
      %799 = vmatprep.mubr.f32.mxu0 0.0
      %800 = vmatmul.mubr.f32.gmra.mxu0 %v267
      %v801 = vpop.f32.mrf.mxu0
      %v802 = vadd.f32 %v577, %v801
      %v803 = vpop.f32.mrf.mxu0
      %804 = vmatprep.mubr.f32.mxu0 0.0
      %805 = vmatmul.mubr.f32.gmra.mxu0 %v268
      %v806 = vpop.f32.mrf.mxu0
      %v807 = vadd.f32 %v582, %v806
      %v808 = vpop.f32.mrf.mxu0
      %809 = vmatprep.mubr.f32.mxu0 0.0
      %810 = vmatmul.mubr.f32.gmra.mxu0 %v269
      %v811 = vpop.f32.mrf.mxu0
      %v812 = vadd.f32 %v587, %v811
      %v813 = vpop.f32.mrf.mxu0
      %814 = vmatprep.mubr.f32.mxu0 0.0
      %815 = vmatmul.mubr.f32.gmra.mxu0 %v270
      %v816 = vpop.f32.mrf.mxu0
      %v817 = vadd.f32 %v592, %v816
      %v818 = vpop.f32.mrf.mxu0
      %819 = vmatprep.mubr.f32.mxu0 0.0
      %820 = vmatmul.mubr.f32.gmra.mxu0 %v271
      %v821 = vpop.f32.mrf.mxu0
      %v822 = vadd.f32 %v597, %v821
      %v823 = vpop.f32.mrf.mxu0
      %824 = vmatprep.mubr.f32.mxu0 0.0
      %825 = vmatmul.mubr.f32.gmra.mxu0 %v272
      %v826 = vpop.f32.mrf.mxu0
      %v827 = vadd.f32 %v602, %v826
      %v828 = vpop.f32.mrf.mxu0
      %829 = vmatprep.mubr.f32.mxu0 0.0
      %830 = vmatmul.mubr.f32.gmra.mxu0 %v273
      %v831 = vpop.f32.mrf.mxu0
      %v832 = vadd.f32 %v607, %v831
      %v833 = vpop.f32.mrf.mxu0
      %834 = vmatprep.mubr.f32.mxu0 0.0
      %835 = vmatmul.mubr.f32.gmra.mxu0 %v274
      %v836 = vpop.f32.mrf.mxu0
      %v837 = vadd.f32 %v612, %v836
      %v838 = vpop.f32.mrf.mxu0
      %839 = vmatprep.mubr.f32.mxu0 0.0
      %840 = vmatmul.mubr.f32.gmra.mxu0 %v275
      %v841 = vpop.f32.mrf.mxu0
      %v842 = vadd.f32 %v617, %v841
      %v843 = vpop.f32.mrf.mxu0
      %844 = vmatprep.mubr.f32.mxu0 0.0
      %845 = vmatmul.mubr.f32.gmra.mxu0 %v276
      %v846 = vpop.f32.mrf.mxu0
      %v847 = vadd.f32 %v622, %v846
      %v848 = vpop.f32.mrf.mxu0
      %849 = vmatprep.mubr.f32.mxu0 0.0
      %850 = vmatmul.mubr.f32.gmra.mxu0 %v277
      %v851 = vpop.f32.mrf.mxu0
      %v852 = vadd.f32 %v627, %v851
      %v853 = vpop.f32.mrf.mxu0
      %854 = vmatprep.mubr.f32.mxu0 0.0
      %855 = vmatmul.mubr.f32.gmra.mxu0 %v278
      %v856 = vpop.f32.mrf.mxu0
      %v857 = vadd.f32 %v632, %v856
      %v858 = vpop.f32.mrf.mxu0
      %859 = vmatprep.mubr.f32.mxu0 0.0
      %860 = vmatmul.mubr.f32.gmra.mxu0 %v279
      %v861 = vpop.f32.mrf.mxu0
      %v862 = vadd.f32 %v637, %v861
      %v863 = vpop.f32.mrf.mxu0
      %864 = vmatprep.mubr.f32.mxu0 0.0
      %865 = vmatmul.mubr.f32.gmra.mxu0 %v280
      %v866 = vpop.f32.mrf.mxu0
      %v867 = vadd.f32 %v642, %v866
      %v868 = vpop.f32.mrf.mxu0
      %869 = vmatprep.mubr.f32.mxu0 0.0
      %870 = vmatmul.mubr.f32.gmra.mxu0 %v281
      %v871 = vpop.f32.mrf.mxu0
      %v872 = vadd.f32 %v647, %v871
      %v873 = vpop.f32.mrf.mxu0
      %874 = vmatprep.mubr.f32.mxu0 0.0
      %875 = vmatmul.mubr.f32.gmra.mxu0 %v282
      %v876 = vpop.f32.mrf.mxu0
      %v877 = vadd.f32 %v652, %v876
      %v878 = vpop.f32.mrf.mxu0
      %879 = vmatprep.mubr.f32.mxu0 0.0
      %880 = vmatmul.mubr.f32.gmra.mxu0 %v283
      %v881 = vpop.f32.mrf.mxu0
      %v882 = vadd.f32 %v657, %v881
      %v883 = vpop.f32.mrf.mxu0
      %884 = vmatprep.mubr.f32.mxu0 0.0
      %885 = vmatmul.mubr.f32.gmra.mxu0 %v284
      %v886 = vpop.f32.mrf.mxu0
      %v887 = vadd.f32 %v662, %v886
      %v888 = vpop.f32.mrf.mxu0
      %889 = vmatprep.mubr.f32.mxu0 0.0
      %890 = vmatmul.mubr.f32.gmra.mxu0 %v285
      %v891 = vpop.f32.mrf.mxu0
      %v892 = vadd.f32 %v667, %v891
      %v893 = vpop.f32.mrf.mxu0
      %894 = vmatprep.mubr.f32.mxu0 0.0
      %895 = vmatmul.mubr.f32.gmra.mxu0 %v286
      %v896 = vpop.f32.mrf.mxu0
      %v897 = vadd.f32 %v672, %v896
      %v898 = vpop.f32.mrf.mxu0
      %899 = vmatprep.mubr.f32.mxu0 0.0
      %900 = vmatmul.mubr.f32.gmra.mxu0 %v287
      %v901 = vpop.f32.mrf.mxu0
      %v902 = vadd.f32 %v677, %v901
      %v903 = vpop.f32.mrf.mxu0
      %904 = vmatprep.mubr.f32.mxu0 0.0
      %905 = vmatmul.mubr.f32.gmra.mxu0 %v288
      %v906 = vpop.f32.mrf.mxu0
      %v907 = vadd.f32 %v682, %v906
      %v908 = vpop.f32.mrf.mxu0
      %909 = vdwg.mxu0
      %s910 = scalar_lea.vmem %s2, 256
      %v911 = vld [vmem:[%s910] sm:$0xff]
      %v912 = vld [vmem:[%s910 + $0x8] sm:$0xff]
      %v913 = vld [vmem:[%s910 + $0x10] sm:$0xff]
      %v914 = vld [vmem:[%s910 + $0x18] sm:$0xff]
      %v915 = vld [vmem:[%s910 + $0x20] sm:$0xff]
      %v916 = vld [vmem:[%s910 + $0x28] sm:$0xff]
      %v917 = vld [vmem:[%s910 + $0x30] sm:$0xff]
      %v918 = vld [vmem:[%s910 + $0x38] sm:$0xff]
      %v919 = vld [vmem:[%s910 + $0x40] sm:$0xff]
      %v920 = vld [vmem:[%s910 + $0x48] sm:$0xff]
      %v921 = vld [vmem:[%s910 + $0x50] sm:$0xff]
      %v922 = vld [vmem:[%s910 + $0x58] sm:$0xff]
      %v923 = vld [vmem:[%s910 + $0x60] sm:$0xff]
      %v924 = vld [vmem:[%s910 + $0x68] sm:$0xff]
      %v925 = vld [vmem:[%s910 + $0x70] sm:$0xff]
      %v926 = vld [vmem:[%s910 + $0x78] sm:$0xff]
      %vm927 = vcmask 1045504
      %v928 = vrot.slane %v257, 2
      %v929 = vrot.slane %v258, 2
      %v930 = vsel %vm927, %v928, %v929
      %v931 = vrot.slane %v259, 2
      %v932 = vsel %vm927, %v929, %v931
      %v933 = vrot.slane %v260, 2
      %v934 = vsel %vm927, %v931, %v933
      %v935 = vrot.slane %v261, 2
      %v936 = vsel %vm927, %v933, %v935
      %v937 = vrot.slane %v262, 2
      %v938 = vsel %vm927, %v935, %v937
      %v939 = vrot.slane %v263, 2
      %v940 = vsel %vm927, %v937, %v939
      %v941 = vrot.slane %v264, 2
      %v942 = vsel %vm927, %v939, %v941
      %v943 = vrot.slane %v265, 2
      %v944 = vsel %vm927, %v941, %v943
      %v945 = vrot.slane %v266, 2
      %v946 = vsel %vm927, %v943, %v945
      %v947 = vrot.slane %v267, 2
      %v948 = vsel %vm927, %v945, %v947
      %v949 = vrot.slane %v268, 2
      %v950 = vsel %vm927, %v947, %v949
      %v951 = vrot.slane %v269, 2
      %v952 = vsel %vm927, %v949, %v951
      %v953 = vrot.slane %v270, 2
      %v954 = vsel %vm927, %v951, %v953
      %v955 = vrot.slane %v271, 2
      %v956 = vsel %vm927, %v953, %v955
      %v957 = vrot.slane %v272, 2
      %v958 = vsel %vm927, %v955, %v957
      %v959 = vrot.slane %v273, 2
      %v960 = vsel %vm927, %v957, %v959
      %v961 = vrot.slane %v274, 2
      %v962 = vsel %vm927, %v959, %v961
      %v963 = vrot.slane %v275, 2
      %v964 = vsel %vm927, %v961, %v963
      %v965 = vrot.slane %v276, 2
      %v966 = vsel %vm927, %v963, %v965
      %v967 = vrot.slane %v277, 2
      %v968 = vsel %vm927, %v965, %v967
      %v969 = vrot.slane %v278, 2
      %v970 = vsel %vm927, %v967, %v969
      %v971 = vrot.slane %v279, 2
      %v972 = vsel %vm927, %v969, %v971
      %v973 = vrot.slane %v280, 2
      %v974 = vsel %vm927, %v971, %v973
      %v975 = vrot.slane %v281, 2
      %v976 = vsel %vm927, %v973, %v975
      %v977 = vrot.slane %v282, 2
      %v978 = vsel %vm927, %v975, %v977
      %v979 = vrot.slane %v283, 2
      %v980 = vsel %vm927, %v977, %v979
      %v981 = vrot.slane %v284, 2
      %v982 = vsel %vm927, %v979, %v981
      %v983 = vrot.slane %v285, 2
      %v984 = vsel %vm927, %v981, %v983
      %v985 = vrot.slane %v286, 2
      %v986 = vsel %vm927, %v983, %v985
      %v987 = vrot.slane %v287, 2
      %v988 = vsel %vm927, %v985, %v987
      %v989 = vrot.slane %v288, 2
      %v990 = vsel %vm927, %v987, %v989
      %v991 = vrot.slane %v289, 2
      %v992 = vsel %vm927, %v989, %v991
      %1025 = vmatprep.subr.mxu0 0.0
      %1026 = vmatpush1.msra.mxu0 %v926
      %1027 = vmatprep.subr.mxu0 0.0
      %1028 = vmatpush1.msra.mxu0 %v925
      %1029 = vmatprep.subr.mxu0 0.0
      %1030 = vmatpush1.msra.mxu0 %v924
      %1031 = vmatprep.subr.mxu0 0.0
      %1032 = vmatpush1.msra.mxu0 %v923
      %1033 = vmatprep.subr.mxu0 0.0
      %1034 = vmatpush1.msra.mxu0 %v922
      %1035 = vmatprep.subr.mxu0 0.0
      %1036 = vmatpush1.msra.mxu0 %v921
      %1037 = vmatprep.subr.mxu0 0.0
      %1038 = vmatpush1.msra.mxu0 %v920
      %1039 = vmatprep.subr.mxu0 0.0
      %1040 = vmatpush1.msra.mxu0 %v919
      %1041 = vmatprep.subr.mxu0 0.0
      %1042 = vmatpush1.msra.mxu0 %v918
      %1043 = vmatprep.subr.mxu0 0.0
      %1044 = vmatpush1.msra.mxu0 %v917
      %1045 = vmatprep.subr.mxu0 0.0
      %1046 = vmatpush1.msra.mxu0 %v916
      %1047 = vmatprep.subr.mxu0 0.0
      %1048 = vmatpush1.msra.mxu0 %v915
      %1049 = vmatprep.subr.mxu0 0.0
      %1050 = vmatpush1.msra.mxu0 %v914
      %1051 = vmatprep.subr.mxu0 0.0
      %1052 = vmatpush1.msra.mxu0 %v913
      %1053 = vmatprep.subr.mxu0 0.0
      %1054 = vmatpush1.msra.mxu0 %v912
      %1055 = vmatprep.subr.mxu0 0.0
      %1056 = vmatpush1.msra.mxu0 %v911
      %1057 = vmatprep.subr.mxu0 0.0
      %1058 = vmatpush2.msra.mxu0 0.0
      %1059 = vmatprep.subr.mxu0 0.0
      %1060 = vmatpush2.msra.mxu0 0.0
      %1061 = vmatprep.subr.mxu0 0.0
      %1062 = vmatpush2.msra.mxu0 0.0
      %1063 = vmatprep.subr.mxu0 0.0
      %1064 = vmatpush2.msra.mxu0 0.0
      %1065 = vmatprep.subr.mxu0 0.0
      %1066 = vmatpush2.msra.mxu0 0.0
      %1067 = vmatprep.subr.mxu0 0.0
      %1068 = vmatpush2.msra.mxu0 0.0
      %1069 = vmatprep.subr.mxu0 0.0
      %1070 = vmatpush2.msra.mxu0 0.0
      %1071 = vmatprep.subr.mxu0 0.0
      %1072 = vmatpush2.msra.mxu0 0.0
      %1073 = vmatprep.subr.mxu0 0.0
      %1074 = vmatpush2.msra.mxu0 0.0
      %1075 = vmatprep.subr.mxu0 0.0
      %1076 = vmatpush2.msra.mxu0 0.0
      %1077 = vmatprep.subr.mxu0 0.0
      %1078 = vmatpush2.msra.mxu0 0.0
      %1079 = vmatprep.subr.mxu0 0.0
      %1080 = vmatpush2.msra.mxu0 0.0
      %1081 = vmatprep.subr.mxu0 0.0
      %1082 = vmatpush2.msra.mxu0 0.0
      %1083 = vmatprep.subr.mxu0 0.0
      %1084 = vmatpush2.msra.mxu0 0.0
      %1085 = vmatprep.subr.mxu0 0.0
      %1086 = vmatpush2.msra.mxu0 0.0
      %1087 = vmatprep.subr.mxu0 0.0
      %1088 = vmatpush2.msra.mxu0 0.0
      %1089 = vmatprep.mubr.f32.mxu0 0.0
      %1090 = vmatmul.mubr.f32.gmra.mxu0 %v930
      %v1091 = vpop.f32.mrf.mxu0
      %v1092 = vadd.f32 0.0, %v1091
      %v1093 = vpop.f32.mrf.mxu0
      %1094 = vmatprep.mubr.f32.mxu0 0.0
      %1095 = vmatmul.mubr.f32.gmra.mxu0 %v932
      %v1096 = vpop.f32.mrf.mxu0
      %v1097 = vadd.f32 0.0, %v1096
      %v1098 = vpop.f32.mrf.mxu0
      %1099 = vmatprep.mubr.f32.mxu0 0.0
      %1100 = vmatmul.mubr.f32.gmra.mxu0 %v934
      %v1101 = vpop.f32.mrf.mxu0
      %v1102 = vadd.f32 0.0, %v1101
      %v1103 = vpop.f32.mrf.mxu0
      %1104 = vmatprep.mubr.f32.mxu0 0.0
      %1105 = vmatmul.mubr.f32.gmra.mxu0 %v936
      %v1106 = vpop.f32.mrf.mxu0
      %v1107 = vadd.f32 0.0, %v1106
      %v1108 = vpop.f32.mrf.mxu0
      %1109 = vmatprep.mubr.f32.mxu0 0.0
      %1110 = vmatmul.mubr.f32.gmra.mxu0 %v938
      %v1111 = vpop.f32.mrf.mxu0
      %v1112 = vadd.f32 0.0, %v1111
      %v1113 = vpop.f32.mrf.mxu0
      %1114 = vmatprep.mubr.f32.mxu0 0.0
      %1115 = vmatmul.mubr.f32.gmra.mxu0 %v940
      %v1116 = vpop.f32.mrf.mxu0
      %v1117 = vadd.f32 0.0, %v1116
      %v1118 = vpop.f32.mrf.mxu0
      %1119 = vmatprep.mubr.f32.mxu0 0.0
      %1120 = vmatmul.mubr.f32.gmra.mxu0 %v942
      %v1121 = vpop.f32.mrf.mxu0
      %v1122 = vadd.f32 0.0, %v1121
      %v1123 = vpop.f32.mrf.mxu0
      %1124 = vmatprep.mubr.f32.mxu0 0.0
      %1125 = vmatmul.mubr.f32.gmra.mxu0 %v944
      %v1126 = vpop.f32.mrf.mxu0
      %v1127 = vadd.f32 0.0, %v1126
      %v1128 = vpop.f32.mrf.mxu0
      %1129 = vmatprep.mubr.f32.mxu0 0.0
      %1130 = vmatmul.mubr.f32.gmra.mxu0 %v946
      %v1131 = vpop.f32.mrf.mxu0
      %v1132 = vadd.f32 0.0, %v1131
      %v1133 = vpop.f32.mrf.mxu0
      %1134 = vmatprep.mubr.f32.mxu0 0.0
      %1135 = vmatmul.mubr.f32.gmra.mxu0 %v948
      %v1136 = vpop.f32.mrf.mxu0
      %v1137 = vadd.f32 0.0, %v1136
      %v1138 = vpop.f32.mrf.mxu0
      %1139 = vmatprep.mubr.f32.mxu0 0.0
      %1140 = vmatmul.mubr.f32.gmra.mxu0 %v950
      %v1141 = vpop.f32.mrf.mxu0
      %v1142 = vadd.f32 0.0, %v1141
      %v1143 = vpop.f32.mrf.mxu0
      %1144 = vmatprep.mubr.f32.mxu0 0.0
      %1145 = vmatmul.mubr.f32.gmra.mxu0 %v952
      %v1146 = vpop.f32.mrf.mxu0
      %v1147 = vadd.f32 0.0, %v1146
      %v1148 = vpop.f32.mrf.mxu0
      %1149 = vmatprep.mubr.f32.mxu0 0.0
      %1150 = vmatmul.mubr.f32.gmra.mxu0 %v954
      %v1151 = vpop.f32.mrf.mxu0
      %v1152 = vadd.f32 0.0, %v1151
      %v1153 = vpop.f32.mrf.mxu0
      %1154 = vmatprep.mubr.f32.mxu0 0.0
      %1155 = vmatmul.mubr.f32.gmra.mxu0 %v956
      %v1156 = vpop.f32.mrf.mxu0
      %v1157 = vadd.f32 0.0, %v1156
      %v1158 = vpop.f32.mrf.mxu0
      %1159 = vmatprep.mubr.f32.mxu0 0.0
      %1160 = vmatmul.mubr.f32.gmra.mxu0 %v958
      %v1161 = vpop.f32.mrf.mxu0
      %v1162 = vadd.f32 0.0, %v1161
      %v1163 = vpop.f32.mrf.mxu0
      %1164 = vmatprep.mubr.f32.mxu0 0.0
      %1165 = vmatmul.mubr.f32.gmra.mxu0 %v960
      %v1166 = vpop.f32.mrf.mxu0
      %v1167 = vadd.f32 0.0, %v1166
      %v1168 = vpop.f32.mrf.mxu0
      %1169 = vmatprep.mubr.f32.mxu0 0.0
      %1170 = vmatmul.mubr.f32.gmra.mxu0 %v962
      %v1171 = vpop.f32.mrf.mxu0
      %v1172 = vadd.f32 0.0, %v1171
      %v1173 = vpop.f32.mrf.mxu0
      %1174 = vmatprep.mubr.f32.mxu0 0.0
      %1175 = vmatmul.mubr.f32.gmra.mxu0 %v964
      %v1176 = vpop.f32.mrf.mxu0
      %v1177 = vadd.f32 0.0, %v1176
      %v1178 = vpop.f32.mrf.mxu0
      %1179 = vmatprep.mubr.f32.mxu0 0.0
      %1180 = vmatmul.mubr.f32.gmra.mxu0 %v966
      %v1181 = vpop.f32.mrf.mxu0
      %v1182 = vadd.f32 0.0, %v1181
      %v1183 = vpop.f32.mrf.mxu0
      %1184 = vmatprep.mubr.f32.mxu0 0.0
      %1185 = vmatmul.mubr.f32.gmra.mxu0 %v968
      %v1186 = vpop.f32.mrf.mxu0
      %v1187 = vadd.f32 0.0, %v1186
      %v1188 = vpop.f32.mrf.mxu0
      %1189 = vmatprep.mubr.f32.mxu0 0.0
      %1190 = vmatmul.mubr.f32.gmra.mxu0 %v970
      %v1191 = vpop.f32.mrf.mxu0
      %v1192 = vadd.f32 0.0, %v1191
      %v1193 = vpop.f32.mrf.mxu0
      %1194 = vmatprep.mubr.f32.mxu0 0.0
      %1195 = vmatmul.mubr.f32.gmra.mxu0 %v972
      %v1196 = vpop.f32.mrf.mxu0
      %v1197 = vadd.f32 0.0, %v1196
      %v1198 = vpop.f32.mrf.mxu0
      %1199 = vmatprep.mubr.f32.mxu0 0.0
      %1200 = vmatmul.mubr.f32.gmra.mxu0 %v974
      %v1201 = vpop.f32.mrf.mxu0
      %v1202 = vadd.f32 0.0, %v1201
      %v1203 = vpop.f32.mrf.mxu0
      %1204 = vmatprep.mubr.f32.mxu0 0.0
      %1205 = vmatmul.mubr.f32.gmra.mxu0 %v976
      %v1206 = vpop.f32.mrf.mxu0
      %v1207 = vadd.f32 0.0, %v1206
      %v1208 = vpop.f32.mrf.mxu0
      %1209 = vmatprep.mubr.f32.mxu0 0.0
      %1210 = vmatmul.mubr.f32.gmra.mxu0 %v978
      %v1211 = vpop.f32.mrf.mxu0
      %v1212 = vadd.f32 0.0, %v1211
      %v1213 = vpop.f32.mrf.mxu0
      %1214 = vmatprep.mubr.f32.mxu0 0.0
      %1215 = vmatmul.mubr.f32.gmra.mxu0 %v980
      %v1216 = vpop.f32.mrf.mxu0
      %v1217 = vadd.f32 0.0, %v1216
      %v1218 = vpop.f32.mrf.mxu0
      %1219 = vmatprep.mubr.f32.mxu0 0.0
      %1220 = vmatmul.mubr.f32.gmra.mxu0 %v982
      %v1221 = vpop.f32.mrf.mxu0
      %v1222 = vadd.f32 0.0, %v1221
      %v1223 = vpop.f32.mrf.mxu0
      %1224 = vmatprep.mubr.f32.mxu0 0.0
      %1225 = vmatmul.mubr.f32.gmra.mxu0 %v984
      %v1226 = vpop.f32.mrf.mxu0
      %v1227 = vadd.f32 0.0, %v1226
      %v1228 = vpop.f32.mrf.mxu0
      %1229 = vmatprep.mubr.f32.mxu0 0.0
      %1230 = vmatmul.mubr.f32.gmra.mxu0 %v986
      %v1231 = vpop.f32.mrf.mxu0
      %v1232 = vadd.f32 0.0, %v1231
      %v1233 = vpop.f32.mrf.mxu0
      %1234 = vmatprep.mubr.f32.mxu0 0.0
      %1235 = vmatmul.mubr.f32.gmra.mxu0 %v988
      %v1236 = vpop.f32.mrf.mxu0
      %v1237 = vadd.f32 0.0, %v1236
      %v1238 = vpop.f32.mrf.mxu0
      %1239 = vmatprep.mubr.f32.mxu0 0.0
      %1240 = vmatmul.mubr.f32.gmra.mxu0 %v990
      %v1241 = vpop.f32.mrf.mxu0
      %v1242 = vadd.f32 0.0, %v1241
      %v1243 = vpop.f32.mrf.mxu0
      %1244 = vmatprep.mubr.f32.mxu0 0.0
      %1245 = vmatmul.mubr.f32.gmra.mxu0 %v992
      %v1246 = vpop.f32.mrf.mxu0
      %v1247 = vadd.f32 0.0, %v1246
      %v1248 = vpop.f32.mrf.mxu0
      %1249 = vdwg.mxu0
      %v1250 = vadd.f32 %v752, %v1092
      %v1251 = vadd.f32 %v757, %v1097
      %v1252 = vadd.f32 %v762, %v1102
      %v1253 = vadd.f32 %v767, %v1107
      %v1254 = vadd.f32 %v772, %v1112
      %v1255 = vadd.f32 %v777, %v1117
      %v1256 = vadd.f32 %v782, %v1122
      %v1257 = vadd.f32 %v787, %v1127
      %v1258 = vadd.f32 %v792, %v1132
      %v1259 = vadd.f32 %v797, %v1137
      %v1260 = vadd.f32 %v802, %v1142
      %v1261 = vadd.f32 %v807, %v1147
      %v1262 = vadd.f32 %v812, %v1152
      %v1263 = vadd.f32 %v817, %v1157
      %v1264 = vadd.f32 %v822, %v1162
      %v1265 = vadd.f32 %v827, %v1167
      %v1266 = vadd.f32 %v832, %v1172
      %v1267 = vadd.f32 %v837, %v1177
      %v1268 = vadd.f32 %v842, %v1182
      %v1269 = vadd.f32 %v847, %v1187
      %v1270 = vadd.f32 %v852, %v1192
      %v1271 = vadd.f32 %v857, %v1197
      %v1272 = vadd.f32 %v862, %v1202
      %v1273 = vadd.f32 %v867, %v1207
      %v1274 = vadd.f32 %v872, %v1212
      %v1275 = vadd.f32 %v877, %v1217
      %v1276 = vadd.f32 %v882, %v1222
      %v1277 = vadd.f32 %v887, %v1227
      %v1278 = vadd.f32 %v892, %v1232
      %v1279 = vadd.f32 %v897, %v1237
      %v1280 = vadd.f32 %v902, %v1242
      %v1281 = vadd.f32 %v907, %v1247
      %s1282 = scalar_lea.vmem %s2, 384
      %v1283 = vld [vmem:[%s1282] sm:$0xff]
      %v1284 = vld [vmem:[%s1282 + $0x8] sm:$0xff]
      %v1285 = vld [vmem:[%s1282 + $0x10] sm:$0xff]
      %v1286 = vld [vmem:[%s1282 + $0x18] sm:$0xff]
      %v1287 = vld [vmem:[%s1282 + $0x20] sm:$0xff]
      %v1288 = vld [vmem:[%s1282 + $0x28] sm:$0xff]
      %v1289 = vld [vmem:[%s1282 + $0x30] sm:$0xff]
      %v1290 = vld [vmem:[%s1282 + $0x38] sm:$0xff]
      %v1291 = vld [vmem:[%s1282 + $0x40] sm:$0xff]
      %v1292 = vld [vmem:[%s1282 + $0x48] sm:$0xff]
      %v1293 = vld [vmem:[%s1282 + $0x50] sm:$0xff]
      %v1294 = vld [vmem:[%s1282 + $0x58] sm:$0xff]
      %v1295 = vld [vmem:[%s1282 + $0x60] sm:$0xff]
      %v1296 = vld [vmem:[%s1282 + $0x68] sm:$0xff]
      %v1297 = vld [vmem:[%s1282 + $0x70] sm:$0xff]
      %v1298 = vld [vmem:[%s1282 + $0x78] sm:$0xff]
      %1299 = vmatprep.subr.mxu0 0.0
      %1300 = vmatpush1.msra.mxu0 %v1298
      %1301 = vmatprep.subr.mxu0 0.0
      %1302 = vmatpush1.msra.mxu0 %v1297
      %1303 = vmatprep.subr.mxu0 0.0
      %1304 = vmatpush1.msra.mxu0 %v1296
      %1305 = vmatprep.subr.mxu0 0.0
      %1306 = vmatpush1.msra.mxu0 %v1295
      %1307 = vmatprep.subr.mxu0 0.0
      %1308 = vmatpush1.msra.mxu0 %v1294
      %1309 = vmatprep.subr.mxu0 0.0
      %1310 = vmatpush1.msra.mxu0 %v1293
      %1311 = vmatprep.subr.mxu0 0.0
      %1312 = vmatpush1.msra.mxu0 %v1292
      %1313 = vmatprep.subr.mxu0 0.0
      %1314 = vmatpush1.msra.mxu0 %v1291
      %1315 = vmatprep.subr.mxu0 0.0
      %1316 = vmatpush1.msra.mxu0 %v1290
      %1317 = vmatprep.subr.mxu0 0.0
      %1318 = vmatpush1.msra.mxu0 %v1289
      %1319 = vmatprep.subr.mxu0 0.0
      %1320 = vmatpush1.msra.mxu0 %v1288
      %1321 = vmatprep.subr.mxu0 0.0
      %1322 = vmatpush1.msra.mxu0 %v1287
      %1323 = vmatprep.subr.mxu0 0.0
      %1324 = vmatpush1.msra.mxu0 %v1286
      %1325 = vmatprep.subr.mxu0 0.0
      %1326 = vmatpush1.msra.mxu0 %v1285
      %1327 = vmatprep.subr.mxu0 0.0
      %1328 = vmatpush1.msra.mxu0 %v1284
      %1329 = vmatprep.subr.mxu0 0.0
      %1330 = vmatpush1.msra.mxu0 %v1283
      %1331 = vmatprep.subr.mxu0 0.0
      %1332 = vmatpush2.msra.mxu0 0.0
      %1333 = vmatprep.subr.mxu0 0.0
      %1334 = vmatpush2.msra.mxu0 0.0
      %1335 = vmatprep.subr.mxu0 0.0
      %1336 = vmatpush2.msra.mxu0 0.0
      %1337 = vmatprep.subr.mxu0 0.0
      %1338 = vmatpush2.msra.mxu0 0.0
      %1339 = vmatprep.subr.mxu0 0.0
      %1340 = vmatpush2.msra.mxu0 0.0
      %1341 = vmatprep.subr.mxu0 0.0
      %1342 = vmatpush2.msra.mxu0 0.0
      %1343 = vmatprep.subr.mxu0 0.0
      %1344 = vmatpush2.msra.mxu0 0.0
      %1345 = vmatprep.subr.mxu0 0.0
      %1346 = vmatpush2.msra.mxu0 0.0
      %1347 = vmatprep.subr.mxu0 0.0
      %1348 = vmatpush2.msra.mxu0 0.0
      %1349 = vmatprep.subr.mxu0 0.0
      %1350 = vmatpush2.msra.mxu0 0.0
      %1351 = vmatprep.subr.mxu0 0.0
      %1352 = vmatpush2.msra.mxu0 0.0
      %1353 = vmatprep.subr.mxu0 0.0
      %1354 = vmatpush2.msra.mxu0 0.0
      %1355 = vmatprep.subr.mxu0 0.0
      %1356 = vmatpush2.msra.mxu0 0.0
      %1357 = vmatprep.subr.mxu0 0.0
      %1358 = vmatpush2.msra.mxu0 0.0
      %1359 = vmatprep.subr.mxu0 0.0
      %1360 = vmatpush2.msra.mxu0 0.0
      %1361 = vmatprep.subr.mxu0 0.0
      %1362 = vmatpush2.msra.mxu0 0.0
      %1363 = vmatprep.mubr.f32.mxu0 0.0
      %1364 = vmatmul.mubr.f32.gmra.mxu0 %v260
      %v1365 = vpop.f32.mrf.mxu0
      %v1366 = vadd.f32 0.0, %v1365
      %v1367 = vpop.f32.mrf.mxu0
      %1368 = vmatprep.mubr.f32.mxu0 0.0
      %1369 = vmatmul.mubr.f32.gmra.mxu0 %v261
      %v1370 = vpop.f32.mrf.mxu0
      %v1371 = vadd.f32 0.0, %v1370
      %v1372 = vpop.f32.mrf.mxu0
      %1373 = vmatprep.mubr.f32.mxu0 0.0
      %1374 = vmatmul.mubr.f32.gmra.mxu0 %v262
      %v1375 = vpop.f32.mrf.mxu0
      %v1376 = vadd.f32 0.0, %v1375
      %v1377 = vpop.f32.mrf.mxu0
      %1378 = vmatprep.mubr.f32.mxu0 0.0
      %1379 = vmatmul.mubr.f32.gmra.mxu0 %v263
      %v1380 = vpop.f32.mrf.mxu0
      %v1381 = vadd.f32 0.0, %v1380
      %v1382 = vpop.f32.mrf.mxu0
      %1383 = vmatprep.mubr.f32.mxu0 0.0
      %1384 = vmatmul.mubr.f32.gmra.mxu0 %v264
      %v1385 = vpop.f32.mrf.mxu0
      %v1386 = vadd.f32 0.0, %v1385
      %v1387 = vpop.f32.mrf.mxu0
      %1388 = vmatprep.mubr.f32.mxu0 0.0
      %1389 = vmatmul.mubr.f32.gmra.mxu0 %v265
      %v1390 = vpop.f32.mrf.mxu0
      %v1391 = vadd.f32 0.0, %v1390
      %v1392 = vpop.f32.mrf.mxu0
      %1393 = vmatprep.mubr.f32.mxu0 0.0
      %1394 = vmatmul.mubr.f32.gmra.mxu0 %v266
      %v1395 = vpop.f32.mrf.mxu0
      %v1396 = vadd.f32 0.0, %v1395
      %v1397 = vpop.f32.mrf.mxu0
      %1398 = vmatprep.mubr.f32.mxu0 0.0
      %1399 = vmatmul.mubr.f32.gmra.mxu0 %v267
      %v1400 = vpop.f32.mrf.mxu0
      %v1401 = vadd.f32 0.0, %v1400
      %v1402 = vpop.f32.mrf.mxu0
      %1403 = vmatprep.mubr.f32.mxu0 0.0
      %1404 = vmatmul.mubr.f32.gmra.mxu0 %v268
      %v1405 = vpop.f32.mrf.mxu0
      %v1406 = vadd.f32 0.0, %v1405
      %v1407 = vpop.f32.mrf.mxu0
      %1408 = vmatprep.mubr.f32.mxu0 0.0
      %1409 = vmatmul.mubr.f32.gmra.mxu0 %v269
      %v1410 = vpop.f32.mrf.mxu0
      %v1411 = vadd.f32 0.0, %v1410
      %v1412 = vpop.f32.mrf.mxu0
      %1413 = vmatprep.mubr.f32.mxu0 0.0
      %1414 = vmatmul.mubr.f32.gmra.mxu0 %v270
      %v1415 = vpop.f32.mrf.mxu0
      %v1416 = vadd.f32 0.0, %v1415
      %v1417 = vpop.f32.mrf.mxu0
      %1418 = vmatprep.mubr.f32.mxu0 0.0
      %1419 = vmatmul.mubr.f32.gmra.mxu0 %v271
      %v1420 = vpop.f32.mrf.mxu0
      %v1421 = vadd.f32 0.0, %v1420
      %v1422 = vpop.f32.mrf.mxu0
      %1423 = vmatprep.mubr.f32.mxu0 0.0
      %1424 = vmatmul.mubr.f32.gmra.mxu0 %v272
      %v1425 = vpop.f32.mrf.mxu0
      %v1426 = vadd.f32 0.0, %v1425
      %v1427 = vpop.f32.mrf.mxu0
      %1428 = vmatprep.mubr.f32.mxu0 0.0
      %1429 = vmatmul.mubr.f32.gmra.mxu0 %v273
      %v1430 = vpop.f32.mrf.mxu0
      %v1431 = vadd.f32 0.0, %v1430
      %v1432 = vpop.f32.mrf.mxu0
      %1433 = vmatprep.mubr.f32.mxu0 0.0
      %1434 = vmatmul.mubr.f32.gmra.mxu0 %v274
      %v1435 = vpop.f32.mrf.mxu0
      %v1436 = vadd.f32 0.0, %v1435
      %v1437 = vpop.f32.mrf.mxu0
      %1438 = vmatprep.mubr.f32.mxu0 0.0
      %1439 = vmatmul.mubr.f32.gmra.mxu0 %v275
      %v1440 = vpop.f32.mrf.mxu0
      %v1441 = vadd.f32 0.0, %v1440
      %v1442 = vpop.f32.mrf.mxu0
      %1443 = vmatprep.mubr.f32.mxu0 0.0
      %1444 = vmatmul.mubr.f32.gmra.mxu0 %v276
      %v1445 = vpop.f32.mrf.mxu0
      %v1446 = vadd.f32 0.0, %v1445
      %v1447 = vpop.f32.mrf.mxu0
      %1448 = vmatprep.mubr.f32.mxu0 0.0
      %1449 = vmatmul.mubr.f32.gmra.mxu0 %v277
      %v1450 = vpop.f32.mrf.mxu0
      %v1451 = vadd.f32 0.0, %v1450
      %v1452 = vpop.f32.mrf.mxu0
      %1453 = vmatprep.mubr.f32.mxu0 0.0
      %1454 = vmatmul.mubr.f32.gmra.mxu0 %v278
      %v1455 = vpop.f32.mrf.mxu0
      %v1456 = vadd.f32 0.0, %v1455
      %v1457 = vpop.f32.mrf.mxu0
      %1458 = vmatprep.mubr.f32.mxu0 0.0
      %1459 = vmatmul.mubr.f32.gmra.mxu0 %v279
      %v1460 = vpop.f32.mrf.mxu0
      %v1461 = vadd.f32 0.0, %v1460
      %v1462 = vpop.f32.mrf.mxu0
      %1463 = vmatprep.mubr.f32.mxu0 0.0
      %1464 = vmatmul.mubr.f32.gmra.mxu0 %v280
      %v1465 = vpop.f32.mrf.mxu0
      %v1466 = vadd.f32 0.0, %v1465
      %v1467 = vpop.f32.mrf.mxu0
      %1468 = vmatprep.mubr.f32.mxu0 0.0
      %1469 = vmatmul.mubr.f32.gmra.mxu0 %v281
      %v1470 = vpop.f32.mrf.mxu0
      %v1471 = vadd.f32 0.0, %v1470
      %v1472 = vpop.f32.mrf.mxu0
      %1473 = vmatprep.mubr.f32.mxu0 0.0
      %1474 = vmatmul.mubr.f32.gmra.mxu0 %v282
      %v1475 = vpop.f32.mrf.mxu0
      %v1476 = vadd.f32 0.0, %v1475
      %v1477 = vpop.f32.mrf.mxu0
      %1478 = vmatprep.mubr.f32.mxu0 0.0
      %1479 = vmatmul.mubr.f32.gmra.mxu0 %v283
      %v1480 = vpop.f32.mrf.mxu0
      %v1481 = vadd.f32 0.0, %v1480
      %v1482 = vpop.f32.mrf.mxu0
      %1483 = vmatprep.mubr.f32.mxu0 0.0
      %1484 = vmatmul.mubr.f32.gmra.mxu0 %v284
      %v1485 = vpop.f32.mrf.mxu0
      %v1486 = vadd.f32 0.0, %v1485
      %v1487 = vpop.f32.mrf.mxu0
      %1488 = vmatprep.mubr.f32.mxu0 0.0
      %1489 = vmatmul.mubr.f32.gmra.mxu0 %v285
      %v1490 = vpop.f32.mrf.mxu0
      %v1491 = vadd.f32 0.0, %v1490
      %v1492 = vpop.f32.mrf.mxu0
      %1493 = vmatprep.mubr.f32.mxu0 0.0
      %1494 = vmatmul.mubr.f32.gmra.mxu0 %v286
      %v1495 = vpop.f32.mrf.mxu0
      %v1496 = vadd.f32 0.0, %v1495
      %v1497 = vpop.f32.mrf.mxu0
      %1498 = vmatprep.mubr.f32.mxu0 0.0
      %1499 = vmatmul.mubr.f32.gmra.mxu0 %v287
      %v1500 = vpop.f32.mrf.mxu0
      %v1501 = vadd.f32 0.0, %v1500
      %v1502 = vpop.f32.mrf.mxu0
      %1503 = vmatprep.mubr.f32.mxu0 0.0
      %1504 = vmatmul.mubr.f32.gmra.mxu0 %v288
      %v1505 = vpop.f32.mrf.mxu0
      %v1506 = vadd.f32 0.0, %v1505
      %v1507 = vpop.f32.mrf.mxu0
      %1508 = vmatprep.mubr.f32.mxu0 0.0
      %1509 = vmatmul.mubr.f32.gmra.mxu0 %v289
      %v1510 = vpop.f32.mrf.mxu0
      %v1511 = vadd.f32 0.0, %v1510
      %v1512 = vpop.f32.mrf.mxu0
      %1513 = vmatprep.mubr.f32.mxu0 0.0
      %1514 = vmatmul.mubr.f32.gmra.mxu0 %v290
      %v1515 = vpop.f32.mrf.mxu0
      %v1516 = vadd.f32 0.0, %v1515
      %v1517 = vpop.f32.mrf.mxu0
      %1518 = vmatprep.mubr.f32.mxu0 0.0
      %1519 = vmatmul.mubr.f32.gmra.mxu0 %v291
      %v1520 = vpop.f32.mrf.mxu0
      %v1521 = vadd.f32 0.0, %v1520
      %v1522 = vpop.f32.mrf.mxu0
      %1523 = vdwg.mxu0
      %v1524 = vadd.f32 %v1250, %v1366
      %v1525 = vadd.f32 %v1251, %v1371
      %v1526 = vadd.f32 %v1252, %v1376
      %v1527 = vadd.f32 %v1253, %v1381
      %v1528 = vadd.f32 %v1254, %v1386
      %v1529 = vadd.f32 %v1255, %v1391
      %v1530 = vadd.f32 %v1256, %v1396
      %v1531 = vadd.f32 %v1257, %v1401
      %v1532 = vadd.f32 %v1258, %v1406
      %v1533 = vadd.f32 %v1259, %v1411
      %v1534 = vadd.f32 %v1260, %v1416
      %v1535 = vadd.f32 %v1261, %v1421
      %v1536 = vadd.f32 %v1262, %v1426
      %v1537 = vadd.f32 %v1263, %v1431
      %v1538 = vadd.f32 %v1264, %v1436
      %v1539 = vadd.f32 %v1265, %v1441
      %v1540 = vadd.f32 %v1266, %v1446
      %v1541 = vadd.f32 %v1267, %v1451
      %v1542 = vadd.f32 %v1268, %v1456
      %v1543 = vadd.f32 %v1269, %v1461
      %v1544 = vadd.f32 %v1270, %v1466
      %v1545 = vadd.f32 %v1271, %v1471
      %v1546 = vadd.f32 %v1272, %v1476
      %v1547 = vadd.f32 %v1273, %v1481
      %v1548 = vadd.f32 %v1274, %v1486
      %v1549 = vadd.f32 %v1275, %v1491
      %v1550 = vadd.f32 %v1276, %v1496
      %v1551 = vadd.f32 %v1277, %v1501
      %v1552 = vadd.f32 %v1278, %v1506
      %v1553 = vadd.f32 %v1279, %v1511
      %v1554 = vadd.f32 %v1280, %v1516
      %v1555 = vadd.f32 %v1281, %v1521
      %s1556 = scalar_lea.vmem %s2, 512
      %v1557 = vld [vmem:[%s1556] sm:$0xff]
      %v1558 = vld [vmem:[%s1556 + $0x8] sm:$0xff]
      %v1559 = vld [vmem:[%s1556 + $0x10] sm:$0xff]
      %v1560 = vld [vmem:[%s1556 + $0x18] sm:$0xff]
      %v1561 = vld [vmem:[%s1556 + $0x20] sm:$0xff]
      %v1562 = vld [vmem:[%s1556 + $0x28] sm:$0xff]
      %v1563 = vld [vmem:[%s1556 + $0x30] sm:$0xff]
      %v1564 = vld [vmem:[%s1556 + $0x38] sm:$0xff]
      %v1565 = vld [vmem:[%s1556 + $0x40] sm:$0xff]
      %v1566 = vld [vmem:[%s1556 + $0x48] sm:$0xff]
      %v1567 = vld [vmem:[%s1556 + $0x50] sm:$0xff]
      %v1568 = vld [vmem:[%s1556 + $0x58] sm:$0xff]
      %v1569 = vld [vmem:[%s1556 + $0x60] sm:$0xff]
      %v1570 = vld [vmem:[%s1556 + $0x68] sm:$0xff]
      %v1571 = vld [vmem:[%s1556 + $0x70] sm:$0xff]
      %v1572 = vld [vmem:[%s1556 + $0x78] sm:$0xff]
      %v1576 = vrot.slane %v290, 1
      %v1577 = vsel %vm362, %v426, %v1576
      %v1578 = vrot.slane %v291, 1
      %v1579 = vsel %vm362, %v1576, %v1578
      %v1580 = vrot.slane %v292, 1
      %v1581 = vsel %vm362, %v1578, %v1580
      %1585 = vmatprep.subr.mxu0 0.0
      %1586 = vmatpush1.msra.mxu0 %v1572
      %1587 = vmatprep.subr.mxu0 0.0
      %1588 = vmatpush1.msra.mxu0 %v1571
      %1589 = vmatprep.subr.mxu0 0.0
      %1590 = vmatpush1.msra.mxu0 %v1570
      %1591 = vmatprep.subr.mxu0 0.0
      %1592 = vmatpush1.msra.mxu0 %v1569
      %1593 = vmatprep.subr.mxu0 0.0
      %1594 = vmatpush1.msra.mxu0 %v1568
      %1595 = vmatprep.subr.mxu0 0.0
      %1596 = vmatpush1.msra.mxu0 %v1567
      %1597 = vmatprep.subr.mxu0 0.0
      %1598 = vmatpush1.msra.mxu0 %v1566
      %1599 = vmatprep.subr.mxu0 0.0
      %1600 = vmatpush1.msra.mxu0 %v1565
      %1601 = vmatprep.subr.mxu0 0.0
      %1602 = vmatpush1.msra.mxu0 %v1564
      %1603 = vmatprep.subr.mxu0 0.0
      %1604 = vmatpush1.msra.mxu0 %v1563
      %1605 = vmatprep.subr.mxu0 0.0
      %1606 = vmatpush1.msra.mxu0 %v1562
      %1607 = vmatprep.subr.mxu0 0.0
      %1608 = vmatpush1.msra.mxu0 %v1561
      %1609 = vmatprep.subr.mxu0 0.0
      %1610 = vmatpush1.msra.mxu0 %v1560
      %1611 = vmatprep.subr.mxu0 0.0
      %1612 = vmatpush1.msra.mxu0 %v1559
      %1613 = vmatprep.subr.mxu0 0.0
      %1614 = vmatpush1.msra.mxu0 %v1558
      %1615 = vmatprep.subr.mxu0 0.0
      %1616 = vmatpush1.msra.mxu0 %v1557
      %1617 = vmatprep.subr.mxu0 0.0
      %1618 = vmatpush2.msra.mxu0 0.0
      %1619 = vmatprep.subr.mxu0 0.0
      %1620 = vmatpush2.msra.mxu0 0.0
      %1621 = vmatprep.subr.mxu0 0.0
      %1622 = vmatpush2.msra.mxu0 0.0
      %1623 = vmatprep.subr.mxu0 0.0
      %1624 = vmatpush2.msra.mxu0 0.0
      %1625 = vmatprep.subr.mxu0 0.0
      %1626 = vmatpush2.msra.mxu0 0.0
      %1627 = vmatprep.subr.mxu0 0.0
      %1628 = vmatpush2.msra.mxu0 0.0
      %1629 = vmatprep.subr.mxu0 0.0
      %1630 = vmatpush2.msra.mxu0 0.0
      %1631 = vmatprep.subr.mxu0 0.0
      %1632 = vmatpush2.msra.mxu0 0.0
      %1633 = vmatprep.subr.mxu0 0.0
      %1634 = vmatpush2.msra.mxu0 0.0
      %1635 = vmatprep.subr.mxu0 0.0
      %1636 = vmatpush2.msra.mxu0 0.0
      %1637 = vmatprep.subr.mxu0 0.0
      %1638 = vmatpush2.msra.mxu0 0.0
      %1639 = vmatprep.subr.mxu0 0.0
      %1640 = vmatpush2.msra.mxu0 0.0
      %1641 = vmatprep.subr.mxu0 0.0
      %1642 = vmatpush2.msra.mxu0 0.0
      %1643 = vmatprep.subr.mxu0 0.0
      %1644 = vmatpush2.msra.mxu0 0.0
      %1645 = vmatprep.subr.mxu0 0.0
      %1646 = vmatpush2.msra.mxu0 0.0
      %1647 = vmatprep.subr.mxu0 0.0
      %1648 = vmatpush2.msra.mxu0 0.0
      %1649 = vmatprep.mubr.f32.mxu0 0.0
      %1650 = vmatmul.mubr.f32.gmra.mxu0 %v371
      %v1651 = vpop.f32.mrf.mxu0
      %v1652 = vadd.f32 0.0, %v1651
      %v1653 = vpop.f32.mrf.mxu0
      %1654 = vmatprep.mubr.f32.mxu0 0.0
      %1655 = vmatmul.mubr.f32.gmra.mxu0 %v373
      %v1656 = vpop.f32.mrf.mxu0
      %v1657 = vadd.f32 0.0, %v1656
      %v1658 = vpop.f32.mrf.mxu0
      %1659 = vmatprep.mubr.f32.mxu0 0.0
      %1660 = vmatmul.mubr.f32.gmra.mxu0 %v375
      %v1661 = vpop.f32.mrf.mxu0
      %v1662 = vadd.f32 0.0, %v1661
      %v1663 = vpop.f32.mrf.mxu0
      %1664 = vmatprep.mubr.f32.mxu0 0.0
      %1665 = vmatmul.mubr.f32.gmra.mxu0 %v377
      %v1666 = vpop.f32.mrf.mxu0
      %v1667 = vadd.f32 0.0, %v1666
      %v1668 = vpop.f32.mrf.mxu0
      %1669 = vmatprep.mubr.f32.mxu0 0.0
      %1670 = vmatmul.mubr.f32.gmra.mxu0 %v379
      %v1671 = vpop.f32.mrf.mxu0
      %v1672 = vadd.f32 0.0, %v1671
      %v1673 = vpop.f32.mrf.mxu0
      %1674 = vmatprep.mubr.f32.mxu0 0.0
      %1675 = vmatmul.mubr.f32.gmra.mxu0 %v381
      %v1676 = vpop.f32.mrf.mxu0
      %v1677 = vadd.f32 0.0, %v1676
      %v1678 = vpop.f32.mrf.mxu0
      %1679 = vmatprep.mubr.f32.mxu0 0.0
      %1680 = vmatmul.mubr.f32.gmra.mxu0 %v383
      %v1681 = vpop.f32.mrf.mxu0
      %v1682 = vadd.f32 0.0, %v1681
      %v1683 = vpop.f32.mrf.mxu0
      %1684 = vmatprep.mubr.f32.mxu0 0.0
      %1685 = vmatmul.mubr.f32.gmra.mxu0 %v385
      %v1686 = vpop.f32.mrf.mxu0
      %v1687 = vadd.f32 0.0, %v1686
      %v1688 = vpop.f32.mrf.mxu0
      %1689 = vmatprep.mubr.f32.mxu0 0.0
      %1690 = vmatmul.mubr.f32.gmra.mxu0 %v387
      %v1691 = vpop.f32.mrf.mxu0
      %v1692 = vadd.f32 0.0, %v1691
      %v1693 = vpop.f32.mrf.mxu0
      %1694 = vmatprep.mubr.f32.mxu0 0.0
      %1695 = vmatmul.mubr.f32.gmra.mxu0 %v389
      %v1696 = vpop.f32.mrf.mxu0
      %v1697 = vadd.f32 0.0, %v1696
      %v1698 = vpop.f32.mrf.mxu0
      %1699 = vmatprep.mubr.f32.mxu0 0.0
      %1700 = vmatmul.mubr.f32.gmra.mxu0 %v391
      %v1701 = vpop.f32.mrf.mxu0
      %v1702 = vadd.f32 0.0, %v1701
      %v1703 = vpop.f32.mrf.mxu0
      %1704 = vmatprep.mubr.f32.mxu0 0.0
      %1705 = vmatmul.mubr.f32.gmra.mxu0 %v393
      %v1706 = vpop.f32.mrf.mxu0
      %v1707 = vadd.f32 0.0, %v1706
      %v1708 = vpop.f32.mrf.mxu0
      %1709 = vmatprep.mubr.f32.mxu0 0.0
      %1710 = vmatmul.mubr.f32.gmra.mxu0 %v395
      %v1711 = vpop.f32.mrf.mxu0
      %v1712 = vadd.f32 0.0, %v1711
      %v1713 = vpop.f32.mrf.mxu0
      %1714 = vmatprep.mubr.f32.mxu0 0.0
      %1715 = vmatmul.mubr.f32.gmra.mxu0 %v397
      %v1716 = vpop.f32.mrf.mxu0
      %v1717 = vadd.f32 0.0, %v1716
      %v1718 = vpop.f32.mrf.mxu0
      %1719 = vmatprep.mubr.f32.mxu0 0.0
      %1720 = vmatmul.mubr.f32.gmra.mxu0 %v399
      %v1721 = vpop.f32.mrf.mxu0
      %v1722 = vadd.f32 0.0, %v1721
      %v1723 = vpop.f32.mrf.mxu0
      %1724 = vmatprep.mubr.f32.mxu0 0.0
      %1725 = vmatmul.mubr.f32.gmra.mxu0 %v401
      %v1726 = vpop.f32.mrf.mxu0
      %v1727 = vadd.f32 0.0, %v1726
      %v1728 = vpop.f32.mrf.mxu0
      %1729 = vmatprep.mubr.f32.mxu0 0.0
      %1730 = vmatmul.mubr.f32.gmra.mxu0 %v403
      %v1731 = vpop.f32.mrf.mxu0
      %v1732 = vadd.f32 0.0, %v1731
      %v1733 = vpop.f32.mrf.mxu0
      %1734 = vmatprep.mubr.f32.mxu0 0.0
      %1735 = vmatmul.mubr.f32.gmra.mxu0 %v405
      %v1736 = vpop.f32.mrf.mxu0
      %v1737 = vadd.f32 0.0, %v1736
      %v1738 = vpop.f32.mrf.mxu0
      %1739 = vmatprep.mubr.f32.mxu0 0.0
      %1740 = vmatmul.mubr.f32.gmra.mxu0 %v407
      %v1741 = vpop.f32.mrf.mxu0
      %v1742 = vadd.f32 0.0, %v1741
      %v1743 = vpop.f32.mrf.mxu0
      %1744 = vmatprep.mubr.f32.mxu0 0.0
      %1745 = vmatmul.mubr.f32.gmra.mxu0 %v409
      %v1746 = vpop.f32.mrf.mxu0
      %v1747 = vadd.f32 0.0, %v1746
      %v1748 = vpop.f32.mrf.mxu0
      %1749 = vmatprep.mubr.f32.mxu0 0.0
      %1750 = vmatmul.mubr.f32.gmra.mxu0 %v411
      %v1751 = vpop.f32.mrf.mxu0
      %v1752 = vadd.f32 0.0, %v1751
      %v1753 = vpop.f32.mrf.mxu0
      %1754 = vmatprep.mubr.f32.mxu0 0.0
      %1755 = vmatmul.mubr.f32.gmra.mxu0 %v413
      %v1756 = vpop.f32.mrf.mxu0
      %v1757 = vadd.f32 0.0, %v1756
      %v1758 = vpop.f32.mrf.mxu0
      %1759 = vmatprep.mubr.f32.mxu0 0.0
      %1760 = vmatmul.mubr.f32.gmra.mxu0 %v415
      %v1761 = vpop.f32.mrf.mxu0
      %v1762 = vadd.f32 0.0, %v1761
      %v1763 = vpop.f32.mrf.mxu0
      %1764 = vmatprep.mubr.f32.mxu0 0.0
      %1765 = vmatmul.mubr.f32.gmra.mxu0 %v417
      %v1766 = vpop.f32.mrf.mxu0
      %v1767 = vadd.f32 0.0, %v1766
      %v1768 = vpop.f32.mrf.mxu0
      %1769 = vmatprep.mubr.f32.mxu0 0.0
      %1770 = vmatmul.mubr.f32.gmra.mxu0 %v419
      %v1771 = vpop.f32.mrf.mxu0
      %v1772 = vadd.f32 0.0, %v1771
      %v1773 = vpop.f32.mrf.mxu0
      %1774 = vmatprep.mubr.f32.mxu0 0.0
      %1775 = vmatmul.mubr.f32.gmra.mxu0 %v421
      %v1776 = vpop.f32.mrf.mxu0
      %v1777 = vadd.f32 0.0, %v1776
      %v1778 = vpop.f32.mrf.mxu0
      %1779 = vmatprep.mubr.f32.mxu0 0.0
      %1780 = vmatmul.mubr.f32.gmra.mxu0 %v423
      %v1781 = vpop.f32.mrf.mxu0
      %v1782 = vadd.f32 0.0, %v1781
      %v1783 = vpop.f32.mrf.mxu0
      %1784 = vmatprep.mubr.f32.mxu0 0.0
      %1785 = vmatmul.mubr.f32.gmra.mxu0 %v425
      %v1786 = vpop.f32.mrf.mxu0
      %v1787 = vadd.f32 0.0, %v1786
      %v1788 = vpop.f32.mrf.mxu0
      %1789 = vmatprep.mubr.f32.mxu0 0.0
      %1790 = vmatmul.mubr.f32.gmra.mxu0 %v427
      %v1791 = vpop.f32.mrf.mxu0
      %v1792 = vadd.f32 0.0, %v1791
      %v1793 = vpop.f32.mrf.mxu0
      %1794 = vmatprep.mubr.f32.mxu0 0.0
      %1795 = vmatmul.mubr.f32.gmra.mxu0 %v1577
      %v1796 = vpop.f32.mrf.mxu0
      %v1797 = vadd.f32 0.0, %v1796
      %v1798 = vpop.f32.mrf.mxu0
      %1799 = vmatprep.mubr.f32.mxu0 0.0
      %1800 = vmatmul.mubr.f32.gmra.mxu0 %v1579
      %v1801 = vpop.f32.mrf.mxu0
      %v1802 = vadd.f32 0.0, %v1801
      %v1803 = vpop.f32.mrf.mxu0
      %1804 = vmatprep.mubr.f32.mxu0 0.0
      %1805 = vmatmul.mubr.f32.gmra.mxu0 %v1581
      %v1806 = vpop.f32.mrf.mxu0
      %v1807 = vadd.f32 0.0, %v1806
      %v1808 = vpop.f32.mrf.mxu0
      %1809 = vdwg.mxu0
      %v1810 = vadd.f32 %v1524, %v1652
      %v1811 = vadd.f32 %v1525, %v1657
      %v1812 = vadd.f32 %v1526, %v1662
      %v1813 = vadd.f32 %v1527, %v1667
      %v1814 = vadd.f32 %v1528, %v1672
      %v1815 = vadd.f32 %v1529, %v1677
      %v1816 = vadd.f32 %v1530, %v1682
      %v1817 = vadd.f32 %v1531, %v1687
      %v1818 = vadd.f32 %v1532, %v1692
      %v1819 = vadd.f32 %v1533, %v1697
      %v1820 = vadd.f32 %v1534, %v1702
      %v1821 = vadd.f32 %v1535, %v1707
      %v1822 = vadd.f32 %v1536, %v1712
      %v1823 = vadd.f32 %v1537, %v1717
      %v1824 = vadd.f32 %v1538, %v1722
      %v1825 = vadd.f32 %v1539, %v1727
      %v1826 = vadd.f32 %v1540, %v1732
      %v1827 = vadd.f32 %v1541, %v1737
      %v1828 = vadd.f32 %v1542, %v1742
      %v1829 = vadd.f32 %v1543, %v1747
      %v1830 = vadd.f32 %v1544, %v1752
      %v1831 = vadd.f32 %v1545, %v1757
      %v1832 = vadd.f32 %v1546, %v1762
      %v1833 = vadd.f32 %v1547, %v1767
      %v1834 = vadd.f32 %v1548, %v1772
      %v1835 = vadd.f32 %v1549, %v1777
      %v1836 = vadd.f32 %v1550, %v1782
      %v1837 = vadd.f32 %v1551, %v1787
      %v1838 = vadd.f32 %v1552, %v1792
      %v1839 = vadd.f32 %v1553, %v1797
      %v1840 = vadd.f32 %v1554, %v1802
      %v1841 = vadd.f32 %v1555, %v1807
      %s1842 = scalar_lea.vmem %s2, 640
      %v1843 = vld [vmem:[%s1842] sm:$0xff]
      %v1844 = vld [vmem:[%s1842 + $0x8] sm:$0xff]
      %v1845 = vld [vmem:[%s1842 + $0x10] sm:$0xff]
      %v1846 = vld [vmem:[%s1842 + $0x18] sm:$0xff]
      %v1847 = vld [vmem:[%s1842 + $0x20] sm:$0xff]
      %v1848 = vld [vmem:[%s1842 + $0x28] sm:$0xff]
      %v1849 = vld [vmem:[%s1842 + $0x30] sm:$0xff]
      %v1850 = vld [vmem:[%s1842 + $0x38] sm:$0xff]
      %v1851 = vld [vmem:[%s1842 + $0x40] sm:$0xff]
      %v1852 = vld [vmem:[%s1842 + $0x48] sm:$0xff]
      %v1853 = vld [vmem:[%s1842 + $0x50] sm:$0xff]
      %v1854 = vld [vmem:[%s1842 + $0x58] sm:$0xff]
      %v1855 = vld [vmem:[%s1842 + $0x60] sm:$0xff]
      %v1856 = vld [vmem:[%s1842 + $0x68] sm:$0xff]
      %v1857 = vld [vmem:[%s1842 + $0x70] sm:$0xff]
      %v1858 = vld [vmem:[%s1842 + $0x78] sm:$0xff]
      %v1859 = vrot.slane %v290, 2
      %v1860 = vsel %vm927, %v991, %v1859
      %v1861 = vrot.slane %v291, 2
      %v1862 = vsel %vm927, %v1859, %v1861
      %v1863 = vrot.slane %v292, 2
      %v1864 = vsel %vm927, %v1861, %v1863
      %1868 = vmatprep.subr.mxu0 0.0
      %1869 = vmatpush1.msra.mxu0 %v1858
      %1870 = vmatprep.subr.mxu0 0.0
      %1871 = vmatpush1.msra.mxu0 %v1857
      %1872 = vmatprep.subr.mxu0 0.0
      %1873 = vmatpush1.msra.mxu0 %v1856
      %1874 = vmatprep.subr.mxu0 0.0
      %1875 = vmatpush1.msra.mxu0 %v1855
      %1876 = vmatprep.subr.mxu0 0.0
      %1877 = vmatpush1.msra.mxu0 %v1854
      %1878 = vmatprep.subr.mxu0 0.0
      %1879 = vmatpush1.msra.mxu0 %v1853
      %1880 = vmatprep.subr.mxu0 0.0
      %1881 = vmatpush1.msra.mxu0 %v1852
      %1882 = vmatprep.subr.mxu0 0.0
      %1883 = vmatpush1.msra.mxu0 %v1851
      %1884 = vmatprep.subr.mxu0 0.0
      %1885 = vmatpush1.msra.mxu0 %v1850
      %1886 = vmatprep.subr.mxu0 0.0
      %1887 = vmatpush1.msra.mxu0 %v1849
      %1888 = vmatprep.subr.mxu0 0.0
      %1889 = vmatpush1.msra.mxu0 %v1848
      %1890 = vmatprep.subr.mxu0 0.0
      %1891 = vmatpush1.msra.mxu0 %v1847
      %1892 = vmatprep.subr.mxu0 0.0
      %1893 = vmatpush1.msra.mxu0 %v1846
      %1894 = vmatprep.subr.mxu0 0.0
      %1895 = vmatpush1.msra.mxu0 %v1845
      %1896 = vmatprep.subr.mxu0 0.0
      %1897 = vmatpush1.msra.mxu0 %v1844
      %1898 = vmatprep.subr.mxu0 0.0
      %1899 = vmatpush1.msra.mxu0 %v1843
      %1900 = vmatprep.subr.mxu0 0.0
      %1901 = vmatpush2.msra.mxu0 0.0
      %1902 = vmatprep.subr.mxu0 0.0
      %1903 = vmatpush2.msra.mxu0 0.0
      %1904 = vmatprep.subr.mxu0 0.0
      %1905 = vmatpush2.msra.mxu0 0.0
      %1906 = vmatprep.subr.mxu0 0.0
      %1907 = vmatpush2.msra.mxu0 0.0
      %1908 = vmatprep.subr.mxu0 0.0
      %1909 = vmatpush2.msra.mxu0 0.0
      %1910 = vmatprep.subr.mxu0 0.0
      %1911 = vmatpush2.msra.mxu0 0.0
      %1912 = vmatprep.subr.mxu0 0.0
      %1913 = vmatpush2.msra.mxu0 0.0
      %1914 = vmatprep.subr.mxu0 0.0
      %1915 = vmatpush2.msra.mxu0 0.0
      %1916 = vmatprep.subr.mxu0 0.0
      %1917 = vmatpush2.msra.mxu0 0.0
      %1918 = vmatprep.subr.mxu0 0.0
      %1919 = vmatpush2.msra.mxu0 0.0
      %1920 = vmatprep.subr.mxu0 0.0
      %1921 = vmatpush2.msra.mxu0 0.0
      %1922 = vmatprep.subr.mxu0 0.0
      %1923 = vmatpush2.msra.mxu0 0.0
      %1924 = vmatprep.subr.mxu0 0.0
      %1925 = vmatpush2.msra.mxu0 0.0
      %1926 = vmatprep.subr.mxu0 0.0
      %1927 = vmatpush2.msra.mxu0 0.0
      %1928 = vmatprep.subr.mxu0 0.0
      %1929 = vmatpush2.msra.mxu0 0.0
      %1930 = vmatprep.subr.mxu0 0.0
      %1931 = vmatpush2.msra.mxu0 0.0
      %1932 = vmatprep.mubr.f32.mxu0 0.0
      %1933 = vmatmul.mubr.f32.gmra.mxu0 %v936
      %v1934 = vpop.f32.mrf.mxu0
      %v1935 = vadd.f32 0.0, %v1934
      %v1936 = vpop.f32.mrf.mxu0
      %1937 = vmatprep.mubr.f32.mxu0 0.0
      %1938 = vmatmul.mubr.f32.gmra.mxu0 %v938
      %v1939 = vpop.f32.mrf.mxu0
      %v1940 = vadd.f32 0.0, %v1939
      %v1941 = vpop.f32.mrf.mxu0
      %1942 = vmatprep.mubr.f32.mxu0 0.0
      %1943 = vmatmul.mubr.f32.gmra.mxu0 %v940
      %v1944 = vpop.f32.mrf.mxu0
      %v1945 = vadd.f32 0.0, %v1944
      %v1946 = vpop.f32.mrf.mxu0
      %1947 = vmatprep.mubr.f32.mxu0 0.0
      %1948 = vmatmul.mubr.f32.gmra.mxu0 %v942
      %v1949 = vpop.f32.mrf.mxu0
      %v1950 = vadd.f32 0.0, %v1949
      %v1951 = vpop.f32.mrf.mxu0
      %1952 = vmatprep.mubr.f32.mxu0 0.0
      %1953 = vmatmul.mubr.f32.gmra.mxu0 %v944
      %v1954 = vpop.f32.mrf.mxu0
      %v1955 = vadd.f32 0.0, %v1954
      %v1956 = vpop.f32.mrf.mxu0
      %1957 = vmatprep.mubr.f32.mxu0 0.0
      %1958 = vmatmul.mubr.f32.gmra.mxu0 %v946
      %v1959 = vpop.f32.mrf.mxu0
      %v1960 = vadd.f32 0.0, %v1959
      %v1961 = vpop.f32.mrf.mxu0
      %1962 = vmatprep.mubr.f32.mxu0 0.0
      %1963 = vmatmul.mubr.f32.gmra.mxu0 %v948
      %v1964 = vpop.f32.mrf.mxu0
      %v1965 = vadd.f32 0.0, %v1964
      %v1966 = vpop.f32.mrf.mxu0
      %1967 = vmatprep.mubr.f32.mxu0 0.0
      %1968 = vmatmul.mubr.f32.gmra.mxu0 %v950
      %v1969 = vpop.f32.mrf.mxu0
      %v1970 = vadd.f32 0.0, %v1969
      %v1971 = vpop.f32.mrf.mxu0
      %1972 = vmatprep.mubr.f32.mxu0 0.0
      %1973 = vmatmul.mubr.f32.gmra.mxu0 %v952
      %v1974 = vpop.f32.mrf.mxu0
      %v1975 = vadd.f32 0.0, %v1974
      %v1976 = vpop.f32.mrf.mxu0
      %1977 = vmatprep.mubr.f32.mxu0 0.0
      %1978 = vmatmul.mubr.f32.gmra.mxu0 %v954
      %v1979 = vpop.f32.mrf.mxu0
      %v1980 = vadd.f32 0.0, %v1979
      %v1981 = vpop.f32.mrf.mxu0
      %1982 = vmatprep.mubr.f32.mxu0 0.0
      %1983 = vmatmul.mubr.f32.gmra.mxu0 %v956
      %v1984 = vpop.f32.mrf.mxu0
      %v1985 = vadd.f32 0.0, %v1984
      %v1986 = vpop.f32.mrf.mxu0
      %1987 = vmatprep.mubr.f32.mxu0 0.0
      %1988 = vmatmul.mubr.f32.gmra.mxu0 %v958
      %v1989 = vpop.f32.mrf.mxu0
      %v1990 = vadd.f32 0.0, %v1989
      %v1991 = vpop.f32.mrf.mxu0
      %1992 = vmatprep.mubr.f32.mxu0 0.0
      %1993 = vmatmul.mubr.f32.gmra.mxu0 %v960
      %v1994 = vpop.f32.mrf.mxu0
      %v1995 = vadd.f32 0.0, %v1994
      %v1996 = vpop.f32.mrf.mxu0
      %1997 = vmatprep.mubr.f32.mxu0 0.0
      %1998 = vmatmul.mubr.f32.gmra.mxu0 %v962
      %v1999 = vpop.f32.mrf.mxu0
      %v2000 = vadd.f32 0.0, %v1999
      %v2001 = vpop.f32.mrf.mxu0
      %2002 = vmatprep.mubr.f32.mxu0 0.0
      %2003 = vmatmul.mubr.f32.gmra.mxu0 %v964
      %v2004 = vpop.f32.mrf.mxu0
      %v2005 = vadd.f32 0.0, %v2004
      %v2006 = vpop.f32.mrf.mxu0
      %2007 = vmatprep.mubr.f32.mxu0 0.0
      %2008 = vmatmul.mubr.f32.gmra.mxu0 %v966
      %v2009 = vpop.f32.mrf.mxu0
      %v2010 = vadd.f32 0.0, %v2009
      %v2011 = vpop.f32.mrf.mxu0
      %2012 = vmatprep.mubr.f32.mxu0 0.0
      %2013 = vmatmul.mubr.f32.gmra.mxu0 %v968
      %v2014 = vpop.f32.mrf.mxu0
      %v2015 = vadd.f32 0.0, %v2014
      %v2016 = vpop.f32.mrf.mxu0
      %2017 = vmatprep.mubr.f32.mxu0 0.0
      %2018 = vmatmul.mubr.f32.gmra.mxu0 %v970
      %v2019 = vpop.f32.mrf.mxu0
      %v2020 = vadd.f32 0.0, %v2019
      %v2021 = vpop.f32.mrf.mxu0
      %2022 = vmatprep.mubr.f32.mxu0 0.0
      %2023 = vmatmul.mubr.f32.gmra.mxu0 %v972
      %v2024 = vpop.f32.mrf.mxu0
      %v2025 = vadd.f32 0.0, %v2024
      %v2026 = vpop.f32.mrf.mxu0
      %2027 = vmatprep.mubr.f32.mxu0 0.0
      %2028 = vmatmul.mubr.f32.gmra.mxu0 %v974
      %v2029 = vpop.f32.mrf.mxu0
      %v2030 = vadd.f32 0.0, %v2029
      %v2031 = vpop.f32.mrf.mxu0
      %2032 = vmatprep.mubr.f32.mxu0 0.0
      %2033 = vmatmul.mubr.f32.gmra.mxu0 %v976
      %v2034 = vpop.f32.mrf.mxu0
      %v2035 = vadd.f32 0.0, %v2034
      %v2036 = vpop.f32.mrf.mxu0
      %2037 = vmatprep.mubr.f32.mxu0 0.0
      %2038 = vmatmul.mubr.f32.gmra.mxu0 %v978
      %v2039 = vpop.f32.mrf.mxu0
      %v2040 = vadd.f32 0.0, %v2039
      %v2041 = vpop.f32.mrf.mxu0
      %2042 = vmatprep.mubr.f32.mxu0 0.0
      %2043 = vmatmul.mubr.f32.gmra.mxu0 %v980
      %v2044 = vpop.f32.mrf.mxu0
      %v2045 = vadd.f32 0.0, %v2044
      %v2046 = vpop.f32.mrf.mxu0
      %2047 = vmatprep.mubr.f32.mxu0 0.0
      %2048 = vmatmul.mubr.f32.gmra.mxu0 %v982
      %v2049 = vpop.f32.mrf.mxu0
      %v2050 = vadd.f32 0.0, %v2049
      %v2051 = vpop.f32.mrf.mxu0
      %2052 = vmatprep.mubr.f32.mxu0 0.0
      %2053 = vmatmul.mubr.f32.gmra.mxu0 %v984
      %v2054 = vpop.f32.mrf.mxu0
      %v2055 = vadd.f32 0.0, %v2054
      %v2056 = vpop.f32.mrf.mxu0
      %2057 = vmatprep.mubr.f32.mxu0 0.0
      %2058 = vmatmul.mubr.f32.gmra.mxu0 %v986
      %v2059 = vpop.f32.mrf.mxu0
      %v2060 = vadd.f32 0.0, %v2059
      %v2061 = vpop.f32.mrf.mxu0
      %2062 = vmatprep.mubr.f32.mxu0 0.0
      %2063 = vmatmul.mubr.f32.gmra.mxu0 %v988
      %v2064 = vpop.f32.mrf.mxu0
      %v2065 = vadd.f32 0.0, %v2064
      %v2066 = vpop.f32.mrf.mxu0
      %2067 = vmatprep.mubr.f32.mxu0 0.0
      %2068 = vmatmul.mubr.f32.gmra.mxu0 %v990
      %v2069 = vpop.f32.mrf.mxu0
      %v2070 = vadd.f32 0.0, %v2069
      %v2071 = vpop.f32.mrf.mxu0
      %2072 = vmatprep.mubr.f32.mxu0 0.0
      %2073 = vmatmul.mubr.f32.gmra.mxu0 %v992
      %v2074 = vpop.f32.mrf.mxu0
      %v2075 = vadd.f32 0.0, %v2074
      %v2076 = vpop.f32.mrf.mxu0
      %2077 = vmatprep.mubr.f32.mxu0 0.0
      %2078 = vmatmul.mubr.f32.gmra.mxu0 %v1860
      %v2079 = vpop.f32.mrf.mxu0
      %v2080 = vadd.f32 0.0, %v2079
      %v2081 = vpop.f32.mrf.mxu0
      %2082 = vmatprep.mubr.f32.mxu0 0.0
      %2083 = vmatmul.mubr.f32.gmra.mxu0 %v1862
      %v2084 = vpop.f32.mrf.mxu0
      %v2085 = vadd.f32 0.0, %v2084
      %v2086 = vpop.f32.mrf.mxu0
      %2087 = vmatprep.mubr.f32.mxu0 0.0
      %2088 = vmatmul.mubr.f32.gmra.mxu0 %v1864
      %v2089 = vpop.f32.mrf.mxu0
      %v2090 = vadd.f32 0.0, %v2089
      %v2091 = vpop.f32.mrf.mxu0
      %2092 = vdwg.mxu0
      %v2093 = vadd.f32 %v1810, %v1935
      %v2094 = vadd.f32 %v1811, %v1940
      %v2095 = vadd.f32 %v1812, %v1945
      %v2096 = vadd.f32 %v1813, %v1950
      %v2097 = vadd.f32 %v1814, %v1955
      %v2098 = vadd.f32 %v1815, %v1960
      %v2099 = vadd.f32 %v1816, %v1965
      %v2100 = vadd.f32 %v1817, %v1970
      %v2101 = vadd.f32 %v1818, %v1975
      %v2102 = vadd.f32 %v1819, %v1980
      %v2103 = vadd.f32 %v1820, %v1985
      %v2104 = vadd.f32 %v1821, %v1990
      %v2105 = vadd.f32 %v1822, %v1995
      %v2106 = vadd.f32 %v1823, %v2000
      %v2107 = vadd.f32 %v1824, %v2005
      %v2108 = vadd.f32 %v1825, %v2010
      %v2109 = vadd.f32 %v1826, %v2015
      %v2110 = vadd.f32 %v1827, %v2020
      %v2111 = vadd.f32 %v1828, %v2025
      %v2112 = vadd.f32 %v1829, %v2030
      %v2113 = vadd.f32 %v1830, %v2035
      %v2114 = vadd.f32 %v1831, %v2040
      %v2115 = vadd.f32 %v1832, %v2045
      %v2116 = vadd.f32 %v1833, %v2050
      %v2117 = vadd.f32 %v1834, %v2055
      %v2118 = vadd.f32 %v1835, %v2060
      %v2119 = vadd.f32 %v1836, %v2065
      %v2120 = vadd.f32 %v1837, %v2070
      %v2121 = vadd.f32 %v1838, %v2075
      %v2122 = vadd.f32 %v1839, %v2080
      %v2123 = vadd.f32 %v1840, %v2085
      %v2124 = vadd.f32 %v1841, %v2090
      %s2125 = scalar_lea.vmem %s2, 768
      %v2126 = vld [vmem:[%s2125] sm:$0xff]
      %v2127 = vld [vmem:[%s2125 + $0x8] sm:$0xff]
      %v2128 = vld [vmem:[%s2125 + $0x10] sm:$0xff]
      %v2129 = vld [vmem:[%s2125 + $0x18] sm:$0xff]
      %v2130 = vld [vmem:[%s2125 + $0x20] sm:$0xff]
      %v2131 = vld [vmem:[%s2125 + $0x28] sm:$0xff]
      %v2132 = vld [vmem:[%s2125 + $0x30] sm:$0xff]
      %v2133 = vld [vmem:[%s2125 + $0x38] sm:$0xff]
      %v2134 = vld [vmem:[%s2125 + $0x40] sm:$0xff]
      %v2135 = vld [vmem:[%s2125 + $0x48] sm:$0xff]
      %v2136 = vld [vmem:[%s2125 + $0x50] sm:$0xff]
      %v2137 = vld [vmem:[%s2125 + $0x58] sm:$0xff]
      %v2138 = vld [vmem:[%s2125 + $0x60] sm:$0xff]
      %v2139 = vld [vmem:[%s2125 + $0x68] sm:$0xff]
      %v2140 = vld [vmem:[%s2125 + $0x70] sm:$0xff]
      %v2141 = vld [vmem:[%s2125 + $0x78] sm:$0xff]
      %2142 = vmatprep.subr.mxu0 0.0
      %2143 = vmatpush1.msra.mxu0 %v2141
      %2144 = vmatprep.subr.mxu0 0.0
      %2145 = vmatpush1.msra.mxu0 %v2140
      %2146 = vmatprep.subr.mxu0 0.0
      %2147 = vmatpush1.msra.mxu0 %v2139
      %2148 = vmatprep.subr.mxu0 0.0
      %2149 = vmatpush1.msra.mxu0 %v2138
      %2150 = vmatprep.subr.mxu0 0.0
      %2151 = vmatpush1.msra.mxu0 %v2137
      %2152 = vmatprep.subr.mxu0 0.0
      %2153 = vmatpush1.msra.mxu0 %v2136
      %2154 = vmatprep.subr.mxu0 0.0
      %2155 = vmatpush1.msra.mxu0 %v2135
      %2156 = vmatprep.subr.mxu0 0.0
      %2157 = vmatpush1.msra.mxu0 %v2134
      %2158 = vmatprep.subr.mxu0 0.0
      %2159 = vmatpush1.msra.mxu0 %v2133
      %2160 = vmatprep.subr.mxu0 0.0
      %2161 = vmatpush1.msra.mxu0 %v2132
      %2162 = vmatprep.subr.mxu0 0.0
      %2163 = vmatpush1.msra.mxu0 %v2131
      %2164 = vmatprep.subr.mxu0 0.0
      %2165 = vmatpush1.msra.mxu0 %v2130
      %2166 = vmatprep.subr.mxu0 0.0
      %2167 = vmatpush1.msra.mxu0 %v2129
      %2168 = vmatprep.subr.mxu0 0.0
      %2169 = vmatpush1.msra.mxu0 %v2128
      %2170 = vmatprep.subr.mxu0 0.0
      %2171 = vmatpush1.msra.mxu0 %v2127
      %2172 = vmatprep.subr.mxu0 0.0
      %2173 = vmatpush1.msra.mxu0 %v2126
      %2174 = vmatprep.subr.mxu0 0.0
      %2175 = vmatpush2.msra.mxu0 0.0
      %2176 = vmatprep.subr.mxu0 0.0
      %2177 = vmatpush2.msra.mxu0 0.0
      %2178 = vmatprep.subr.mxu0 0.0
      %2179 = vmatpush2.msra.mxu0 0.0
      %2180 = vmatprep.subr.mxu0 0.0
      %2181 = vmatpush2.msra.mxu0 0.0
      %2182 = vmatprep.subr.mxu0 0.0
      %2183 = vmatpush2.msra.mxu0 0.0
      %2184 = vmatprep.subr.mxu0 0.0
      %2185 = vmatpush2.msra.mxu0 0.0
      %2186 = vmatprep.subr.mxu0 0.0
      %2187 = vmatpush2.msra.mxu0 0.0
      %2188 = vmatprep.subr.mxu0 0.0
      %2189 = vmatpush2.msra.mxu0 0.0
      %2190 = vmatprep.subr.mxu0 0.0
      %2191 = vmatpush2.msra.mxu0 0.0
      %2192 = vmatprep.subr.mxu0 0.0
      %2193 = vmatpush2.msra.mxu0 0.0
      %2194 = vmatprep.subr.mxu0 0.0
      %2195 = vmatpush2.msra.mxu0 0.0
      %2196 = vmatprep.subr.mxu0 0.0
      %2197 = vmatpush2.msra.mxu0 0.0
      %2198 = vmatprep.subr.mxu0 0.0
      %2199 = vmatpush2.msra.mxu0 0.0
      %2200 = vmatprep.subr.mxu0 0.0
      %2201 = vmatpush2.msra.mxu0 0.0
      %2202 = vmatprep.subr.mxu0 0.0
      %2203 = vmatpush2.msra.mxu0 0.0
      %2204 = vmatprep.subr.mxu0 0.0
      %2205 = vmatpush2.msra.mxu0 0.0
      %2206 = vmatprep.mubr.f32.mxu0 0.0
      %2207 = vmatmul.mubr.f32.gmra.mxu0 %v263
      %v2208 = vpop.f32.mrf.mxu0
      %v2209 = vadd.f32 0.0, %v2208
      %v2210 = vpop.f32.mrf.mxu0
      %2211 = vmatprep.mubr.f32.mxu0 0.0
      %2212 = vmatmul.mubr.f32.gmra.mxu0 %v264
      %v2213 = vpop.f32.mrf.mxu0
      %v2214 = vadd.f32 0.0, %v2213
      %v2215 = vpop.f32.mrf.mxu0
      %2216 = vmatprep.mubr.f32.mxu0 0.0
      %2217 = vmatmul.mubr.f32.gmra.mxu0 %v265
      %v2218 = vpop.f32.mrf.mxu0
      %v2219 = vadd.f32 0.0, %v2218
      %v2220 = vpop.f32.mrf.mxu0
      %2221 = vmatprep.mubr.f32.mxu0 0.0
      %2222 = vmatmul.mubr.f32.gmra.mxu0 %v266
      %v2223 = vpop.f32.mrf.mxu0
      %v2224 = vadd.f32 0.0, %v2223
      %v2225 = vpop.f32.mrf.mxu0
      %2226 = vmatprep.mubr.f32.mxu0 0.0
      %2227 = vmatmul.mubr.f32.gmra.mxu0 %v267
      %v2228 = vpop.f32.mrf.mxu0
      %v2229 = vadd.f32 0.0, %v2228
      %v2230 = vpop.f32.mrf.mxu0
      %2231 = vmatprep.mubr.f32.mxu0 0.0
      %2232 = vmatmul.mubr.f32.gmra.mxu0 %v268
      %v2233 = vpop.f32.mrf.mxu0
      %v2234 = vadd.f32 0.0, %v2233
      %v2235 = vpop.f32.mrf.mxu0
      %2236 = vmatprep.mubr.f32.mxu0 0.0
      %2237 = vmatmul.mubr.f32.gmra.mxu0 %v269
      %v2238 = vpop.f32.mrf.mxu0
      %v2239 = vadd.f32 0.0, %v2238
      %v2240 = vpop.f32.mrf.mxu0
      %2241 = vmatprep.mubr.f32.mxu0 0.0
      %2242 = vmatmul.mubr.f32.gmra.mxu0 %v270
      %v2243 = vpop.f32.mrf.mxu0
      %v2244 = vadd.f32 0.0, %v2243
      %v2245 = vpop.f32.mrf.mxu0
      %2246 = vmatprep.mubr.f32.mxu0 0.0
      %2247 = vmatmul.mubr.f32.gmra.mxu0 %v271
      %v2248 = vpop.f32.mrf.mxu0
      %v2249 = vadd.f32 0.0, %v2248
      %v2250 = vpop.f32.mrf.mxu0
      %2251 = vmatprep.mubr.f32.mxu0 0.0
      %2252 = vmatmul.mubr.f32.gmra.mxu0 %v272
      %v2253 = vpop.f32.mrf.mxu0
      %v2254 = vadd.f32 0.0, %v2253
      %v2255 = vpop.f32.mrf.mxu0
      %2256 = vmatprep.mubr.f32.mxu0 0.0
      %2257 = vmatmul.mubr.f32.gmra.mxu0 %v273
      %v2258 = vpop.f32.mrf.mxu0
      %v2259 = vadd.f32 0.0, %v2258
      %v2260 = vpop.f32.mrf.mxu0
      %2261 = vmatprep.mubr.f32.mxu0 0.0
      %2262 = vmatmul.mubr.f32.gmra.mxu0 %v274
      %v2263 = vpop.f32.mrf.mxu0
      %v2264 = vadd.f32 0.0, %v2263
      %v2265 = vpop.f32.mrf.mxu0
      %2266 = vmatprep.mubr.f32.mxu0 0.0
      %2267 = vmatmul.mubr.f32.gmra.mxu0 %v275
      %v2268 = vpop.f32.mrf.mxu0
      %v2269 = vadd.f32 0.0, %v2268
      %v2270 = vpop.f32.mrf.mxu0
      %2271 = vmatprep.mubr.f32.mxu0 0.0
      %2272 = vmatmul.mubr.f32.gmra.mxu0 %v276
      %v2273 = vpop.f32.mrf.mxu0
      %v2274 = vadd.f32 0.0, %v2273
      %v2275 = vpop.f32.mrf.mxu0
      %2276 = vmatprep.mubr.f32.mxu0 0.0
      %2277 = vmatmul.mubr.f32.gmra.mxu0 %v277
      %v2278 = vpop.f32.mrf.mxu0
      %v2279 = vadd.f32 0.0, %v2278
      %v2280 = vpop.f32.mrf.mxu0
      %2281 = vmatprep.mubr.f32.mxu0 0.0
      %2282 = vmatmul.mubr.f32.gmra.mxu0 %v278
      %v2283 = vpop.f32.mrf.mxu0
      %v2284 = vadd.f32 0.0, %v2283
      %v2285 = vpop.f32.mrf.mxu0
      %2286 = vmatprep.mubr.f32.mxu0 0.0
      %2287 = vmatmul.mubr.f32.gmra.mxu0 %v279
      %v2288 = vpop.f32.mrf.mxu0
      %v2289 = vadd.f32 0.0, %v2288
      %v2290 = vpop.f32.mrf.mxu0
      %2291 = vmatprep.mubr.f32.mxu0 0.0
      %2292 = vmatmul.mubr.f32.gmra.mxu0 %v280
      %v2293 = vpop.f32.mrf.mxu0
      %v2294 = vadd.f32 0.0, %v2293
      %v2295 = vpop.f32.mrf.mxu0
      %2296 = vmatprep.mubr.f32.mxu0 0.0
      %2297 = vmatmul.mubr.f32.gmra.mxu0 %v281
      %v2298 = vpop.f32.mrf.mxu0
      %v2299 = vadd.f32 0.0, %v2298
      %v2300 = vpop.f32.mrf.mxu0
      %2301 = vmatprep.mubr.f32.mxu0 0.0
      %2302 = vmatmul.mubr.f32.gmra.mxu0 %v282
      %v2303 = vpop.f32.mrf.mxu0
      %v2304 = vadd.f32 0.0, %v2303
      %v2305 = vpop.f32.mrf.mxu0
      %2306 = vmatprep.mubr.f32.mxu0 0.0
      %2307 = vmatmul.mubr.f32.gmra.mxu0 %v283
      %v2308 = vpop.f32.mrf.mxu0
      %v2309 = vadd.f32 0.0, %v2308
      %v2310 = vpop.f32.mrf.mxu0
      %2311 = vmatprep.mubr.f32.mxu0 0.0
      %2312 = vmatmul.mubr.f32.gmra.mxu0 %v284
      %v2313 = vpop.f32.mrf.mxu0
      %v2314 = vadd.f32 0.0, %v2313
      %v2315 = vpop.f32.mrf.mxu0
      %2316 = vmatprep.mubr.f32.mxu0 0.0
      %2317 = vmatmul.mubr.f32.gmra.mxu0 %v285
      %v2318 = vpop.f32.mrf.mxu0
      %v2319 = vadd.f32 0.0, %v2318
      %v2320 = vpop.f32.mrf.mxu0
      %2321 = vmatprep.mubr.f32.mxu0 0.0
      %2322 = vmatmul.mubr.f32.gmra.mxu0 %v286
      %v2323 = vpop.f32.mrf.mxu0
      %v2324 = vadd.f32 0.0, %v2323
      %v2325 = vpop.f32.mrf.mxu0
      %2326 = vmatprep.mubr.f32.mxu0 0.0
      %2327 = vmatmul.mubr.f32.gmra.mxu0 %v287
      %v2328 = vpop.f32.mrf.mxu0
      %v2329 = vadd.f32 0.0, %v2328
      %v2330 = vpop.f32.mrf.mxu0
      %2331 = vmatprep.mubr.f32.mxu0 0.0
      %2332 = vmatmul.mubr.f32.gmra.mxu0 %v288
      %v2333 = vpop.f32.mrf.mxu0
      %v2334 = vadd.f32 0.0, %v2333
      %v2335 = vpop.f32.mrf.mxu0
      %2336 = vmatprep.mubr.f32.mxu0 0.0
      %2337 = vmatmul.mubr.f32.gmra.mxu0 %v289
      %v2338 = vpop.f32.mrf.mxu0
      %v2339 = vadd.f32 0.0, %v2338
      %v2340 = vpop.f32.mrf.mxu0
      %2341 = vmatprep.mubr.f32.mxu0 0.0
      %2342 = vmatmul.mubr.f32.gmra.mxu0 %v290
      %v2343 = vpop.f32.mrf.mxu0
      %v2344 = vadd.f32 0.0, %v2343
      %v2345 = vpop.f32.mrf.mxu0
      %2346 = vmatprep.mubr.f32.mxu0 0.0
      %2347 = vmatmul.mubr.f32.gmra.mxu0 %v291
      %v2348 = vpop.f32.mrf.mxu0
      %v2349 = vadd.f32 0.0, %v2348
      %v2350 = vpop.f32.mrf.mxu0
      %2351 = vmatprep.mubr.f32.mxu0 0.0
      %2352 = vmatmul.mubr.f32.gmra.mxu0 %v292
      %v2353 = vpop.f32.mrf.mxu0
      %v2354 = vadd.f32 0.0, %v2353
      %v2355 = vpop.f32.mrf.mxu0
      %2356 = vmatprep.mubr.f32.mxu0 0.0
      %2357 = vmatmul.mubr.f32.gmra.mxu0 %v293
      %v2358 = vpop.f32.mrf.mxu0
      %v2359 = vadd.f32 0.0, %v2358
      %v2360 = vpop.f32.mrf.mxu0
      %2361 = vmatprep.mubr.f32.mxu0 0.0
      %2362 = vmatmul.mubr.f32.gmra.mxu0 %v294
      %v2363 = vpop.f32.mrf.mxu0
      %v2364 = vadd.f32 0.0, %v2363
      %v2365 = vpop.f32.mrf.mxu0
      %2366 = vdwg.mxu0
      %v2367 = vadd.f32 %v2093, %v2209
      %v2368 = vadd.f32 %v2094, %v2214
      %v2369 = vadd.f32 %v2095, %v2219
      %v2370 = vadd.f32 %v2096, %v2224
      %v2371 = vadd.f32 %v2097, %v2229
      %v2372 = vadd.f32 %v2098, %v2234
      %v2373 = vadd.f32 %v2099, %v2239
      %v2374 = vadd.f32 %v2100, %v2244
      %v2375 = vadd.f32 %v2101, %v2249
      %v2376 = vadd.f32 %v2102, %v2254
      %v2377 = vadd.f32 %v2103, %v2259
      %v2378 = vadd.f32 %v2104, %v2264
      %v2379 = vadd.f32 %v2105, %v2269
      %v2380 = vadd.f32 %v2106, %v2274
      %v2381 = vadd.f32 %v2107, %v2279
      %v2382 = vadd.f32 %v2108, %v2284
      %v2383 = vadd.f32 %v2109, %v2289
      %v2384 = vadd.f32 %v2110, %v2294
      %v2385 = vadd.f32 %v2111, %v2299
      %v2386 = vadd.f32 %v2112, %v2304
      %v2387 = vadd.f32 %v2113, %v2309
      %v2388 = vadd.f32 %v2114, %v2314
      %v2389 = vadd.f32 %v2115, %v2319
      %v2390 = vadd.f32 %v2116, %v2324
      %v2391 = vadd.f32 %v2117, %v2329
      %v2392 = vadd.f32 %v2118, %v2334
      %v2393 = vadd.f32 %v2119, %v2339
      %v2394 = vadd.f32 %v2120, %v2344
      %v2395 = vadd.f32 %v2121, %v2349
      %v2396 = vadd.f32 %v2122, %v2354
      %v2397 = vadd.f32 %v2123, %v2359
      %v2398 = vadd.f32 %v2124, %v2364
      %s2399 = scalar_lea.vmem %s2, 896
      %v2400 = vld [vmem:[%s2399] sm:$0xff]
      %v2401 = vld [vmem:[%s2399 + $0x8] sm:$0xff]
      %v2402 = vld [vmem:[%s2399 + $0x10] sm:$0xff]
      %v2403 = vld [vmem:[%s2399 + $0x18] sm:$0xff]
      %v2404 = vld [vmem:[%s2399 + $0x20] sm:$0xff]
      %v2405 = vld [vmem:[%s2399 + $0x28] sm:$0xff]
      %v2406 = vld [vmem:[%s2399 + $0x30] sm:$0xff]
      %v2407 = vld [vmem:[%s2399 + $0x38] sm:$0xff]
      %v2408 = vld [vmem:[%s2399 + $0x40] sm:$0xff]
      %v2409 = vld [vmem:[%s2399 + $0x48] sm:$0xff]
      %v2410 = vld [vmem:[%s2399 + $0x50] sm:$0xff]
      %v2411 = vld [vmem:[%s2399 + $0x58] sm:$0xff]
      %v2412 = vld [vmem:[%s2399 + $0x60] sm:$0xff]
      %v2413 = vld [vmem:[%s2399 + $0x68] sm:$0xff]
      %v2414 = vld [vmem:[%s2399 + $0x70] sm:$0xff]
      %v2415 = vld [vmem:[%s2399 + $0x78] sm:$0xff]
      %v2419 = vrot.slane %v293, 1
      %v2420 = vsel %vm362, %v1580, %v2419
      %v2421 = vrot.slane %v294, 1
      %v2422 = vsel %vm362, %v2419, %v2421
      %v2423 = vrot.slane %v295, 1
      %v2424 = vsel %vm362, %v2421, %v2423
      %2428 = vmatprep.subr.mxu0 0.0
      %2429 = vmatpush1.msra.mxu0 %v2415
      %2430 = vmatprep.subr.mxu0 0.0
      %2431 = vmatpush1.msra.mxu0 %v2414
      %2432 = vmatprep.subr.mxu0 0.0
      %2433 = vmatpush1.msra.mxu0 %v2413
      %2434 = vmatprep.subr.mxu0 0.0
      %2435 = vmatpush1.msra.mxu0 %v2412
      %2436 = vmatprep.subr.mxu0 0.0
      %2437 = vmatpush1.msra.mxu0 %v2411
      %2438 = vmatprep.subr.mxu0 0.0
      %2439 = vmatpush1.msra.mxu0 %v2410
      %2440 = vmatprep.subr.mxu0 0.0
      %2441 = vmatpush1.msra.mxu0 %v2409
      %2442 = vmatprep.subr.mxu0 0.0
      %2443 = vmatpush1.msra.mxu0 %v2408
      %2444 = vmatprep.subr.mxu0 0.0
      %2445 = vmatpush1.msra.mxu0 %v2407
      %2446 = vmatprep.subr.mxu0 0.0
      %2447 = vmatpush1.msra.mxu0 %v2406
      %2448 = vmatprep.subr.mxu0 0.0
      %2449 = vmatpush1.msra.mxu0 %v2405
      %2450 = vmatprep.subr.mxu0 0.0
      %2451 = vmatpush1.msra.mxu0 %v2404
      %2452 = vmatprep.subr.mxu0 0.0
      %2453 = vmatpush1.msra.mxu0 %v2403
      %2454 = vmatprep.subr.mxu0 0.0
      %2455 = vmatpush1.msra.mxu0 %v2402
      %2456 = vmatprep.subr.mxu0 0.0
      %2457 = vmatpush1.msra.mxu0 %v2401
      %2458 = vmatprep.subr.mxu0 0.0
      %2459 = vmatpush1.msra.mxu0 %v2400
      %2460 = vmatprep.subr.mxu0 0.0
      %2461 = vmatpush2.msra.mxu0 0.0
      %2462 = vmatprep.subr.mxu0 0.0
      %2463 = vmatpush2.msra.mxu0 0.0
      %2464 = vmatprep.subr.mxu0 0.0
      %2465 = vmatpush2.msra.mxu0 0.0
      %2466 = vmatprep.subr.mxu0 0.0
      %2467 = vmatpush2.msra.mxu0 0.0
      %2468 = vmatprep.subr.mxu0 0.0
      %2469 = vmatpush2.msra.mxu0 0.0
      %2470 = vmatprep.subr.mxu0 0.0
      %2471 = vmatpush2.msra.mxu0 0.0
      %2472 = vmatprep.subr.mxu0 0.0
      %2473 = vmatpush2.msra.mxu0 0.0
      %2474 = vmatprep.subr.mxu0 0.0
      %2475 = vmatpush2.msra.mxu0 0.0
      %2476 = vmatprep.subr.mxu0 0.0
      %2477 = vmatpush2.msra.mxu0 0.0
      %2478 = vmatprep.subr.mxu0 0.0
      %2479 = vmatpush2.msra.mxu0 0.0
      %2480 = vmatprep.subr.mxu0 0.0
      %2481 = vmatpush2.msra.mxu0 0.0
      %2482 = vmatprep.subr.mxu0 0.0
      %2483 = vmatpush2.msra.mxu0 0.0
      %2484 = vmatprep.subr.mxu0 0.0
      %2485 = vmatpush2.msra.mxu0 0.0
      %2486 = vmatprep.subr.mxu0 0.0
      %2487 = vmatpush2.msra.mxu0 0.0
      %2488 = vmatprep.subr.mxu0 0.0
      %2489 = vmatpush2.msra.mxu0 0.0
      %2490 = vmatprep.subr.mxu0 0.0
      %2491 = vmatpush2.msra.mxu0 0.0
      %2492 = vmatprep.mubr.f32.mxu0 0.0
      %2493 = vmatmul.mubr.f32.gmra.mxu0 %v377
      %v2494 = vpop.f32.mrf.mxu0
      %v2495 = vadd.f32 0.0, %v2494
      %v2496 = vpop.f32.mrf.mxu0
      %2497 = vmatprep.mubr.f32.mxu0 0.0
      %2498 = vmatmul.mubr.f32.gmra.mxu0 %v379
      %v2499 = vpop.f32.mrf.mxu0
      %v2500 = vadd.f32 0.0, %v2499
      %v2501 = vpop.f32.mrf.mxu0
      %2502 = vmatprep.mubr.f32.mxu0 0.0
      %2503 = vmatmul.mubr.f32.gmra.mxu0 %v381
      %v2504 = vpop.f32.mrf.mxu0
      %v2505 = vadd.f32 0.0, %v2504
      %v2506 = vpop.f32.mrf.mxu0
      %2507 = vmatprep.mubr.f32.mxu0 0.0
      %2508 = vmatmul.mubr.f32.gmra.mxu0 %v383
      %v2509 = vpop.f32.mrf.mxu0
      %v2510 = vadd.f32 0.0, %v2509
      %v2511 = vpop.f32.mrf.mxu0
      %2512 = vmatprep.mubr.f32.mxu0 0.0
      %2513 = vmatmul.mubr.f32.gmra.mxu0 %v385
      %v2514 = vpop.f32.mrf.mxu0
      %v2515 = vadd.f32 0.0, %v2514
      %v2516 = vpop.f32.mrf.mxu0
      %2517 = vmatprep.mubr.f32.mxu0 0.0
      %2518 = vmatmul.mubr.f32.gmra.mxu0 %v387
      %v2519 = vpop.f32.mrf.mxu0
      %v2520 = vadd.f32 0.0, %v2519
      %v2521 = vpop.f32.mrf.mxu0
      %2522 = vmatprep.mubr.f32.mxu0 0.0
      %2523 = vmatmul.mubr.f32.gmra.mxu0 %v389
      %v2524 = vpop.f32.mrf.mxu0
      %v2525 = vadd.f32 0.0, %v2524
      %v2526 = vpop.f32.mrf.mxu0
      %2527 = vmatprep.mubr.f32.mxu0 0.0
      %2528 = vmatmul.mubr.f32.gmra.mxu0 %v391
      %v2529 = vpop.f32.mrf.mxu0
      %v2530 = vadd.f32 0.0, %v2529
      %v2531 = vpop.f32.mrf.mxu0
      %2532 = vmatprep.mubr.f32.mxu0 0.0
      %2533 = vmatmul.mubr.f32.gmra.mxu0 %v393
      %v2534 = vpop.f32.mrf.mxu0
      %v2535 = vadd.f32 0.0, %v2534
      %v2536 = vpop.f32.mrf.mxu0
      %2537 = vmatprep.mubr.f32.mxu0 0.0
      %2538 = vmatmul.mubr.f32.gmra.mxu0 %v395
      %v2539 = vpop.f32.mrf.mxu0
      %v2540 = vadd.f32 0.0, %v2539
      %v2541 = vpop.f32.mrf.mxu0
      %2542 = vmatprep.mubr.f32.mxu0 0.0
      %2543 = vmatmul.mubr.f32.gmra.mxu0 %v397
      %v2544 = vpop.f32.mrf.mxu0
      %v2545 = vadd.f32 0.0, %v2544
      %v2546 = vpop.f32.mrf.mxu0
      %2547 = vmatprep.mubr.f32.mxu0 0.0
      %2548 = vmatmul.mubr.f32.gmra.mxu0 %v399
      %v2549 = vpop.f32.mrf.mxu0
      %v2550 = vadd.f32 0.0, %v2549
      %v2551 = vpop.f32.mrf.mxu0
      %2552 = vmatprep.mubr.f32.mxu0 0.0
      %2553 = vmatmul.mubr.f32.gmra.mxu0 %v401
      %v2554 = vpop.f32.mrf.mxu0
      %v2555 = vadd.f32 0.0, %v2554
      %v2556 = vpop.f32.mrf.mxu0
      %2557 = vmatprep.mubr.f32.mxu0 0.0
      %2558 = vmatmul.mubr.f32.gmra.mxu0 %v403
      %v2559 = vpop.f32.mrf.mxu0
      %v2560 = vadd.f32 0.0, %v2559
      %v2561 = vpop.f32.mrf.mxu0
      %2562 = vmatprep.mubr.f32.mxu0 0.0
      %2563 = vmatmul.mubr.f32.gmra.mxu0 %v405
      %v2564 = vpop.f32.mrf.mxu0
      %v2565 = vadd.f32 0.0, %v2564
      %v2566 = vpop.f32.mrf.mxu0
      %2567 = vmatprep.mubr.f32.mxu0 0.0
      %2568 = vmatmul.mubr.f32.gmra.mxu0 %v407
      %v2569 = vpop.f32.mrf.mxu0
      %v2570 = vadd.f32 0.0, %v2569
      %v2571 = vpop.f32.mrf.mxu0
      %2572 = vmatprep.mubr.f32.mxu0 0.0
      %2573 = vmatmul.mubr.f32.gmra.mxu0 %v409
      %v2574 = vpop.f32.mrf.mxu0
      %v2575 = vadd.f32 0.0, %v2574
      %v2576 = vpop.f32.mrf.mxu0
      %2577 = vmatprep.mubr.f32.mxu0 0.0
      %2578 = vmatmul.mubr.f32.gmra.mxu0 %v411
      %v2579 = vpop.f32.mrf.mxu0
      %v2580 = vadd.f32 0.0, %v2579
      %v2581 = vpop.f32.mrf.mxu0
      %2582 = vmatprep.mubr.f32.mxu0 0.0
      %2583 = vmatmul.mubr.f32.gmra.mxu0 %v413
      %v2584 = vpop.f32.mrf.mxu0
      %v2585 = vadd.f32 0.0, %v2584
      %v2586 = vpop.f32.mrf.mxu0
      %2587 = vmatprep.mubr.f32.mxu0 0.0
      %2588 = vmatmul.mubr.f32.gmra.mxu0 %v415
      %v2589 = vpop.f32.mrf.mxu0
      %v2590 = vadd.f32 0.0, %v2589
      %v2591 = vpop.f32.mrf.mxu0
      %2592 = vmatprep.mubr.f32.mxu0 0.0
      %2593 = vmatmul.mubr.f32.gmra.mxu0 %v417
      %v2594 = vpop.f32.mrf.mxu0
      %v2595 = vadd.f32 0.0, %v2594
      %v2596 = vpop.f32.mrf.mxu0
      %2597 = vmatprep.mubr.f32.mxu0 0.0
      %2598 = vmatmul.mubr.f32.gmra.mxu0 %v419
      %v2599 = vpop.f32.mrf.mxu0
      %v2600 = vadd.f32 0.0, %v2599
      %v2601 = vpop.f32.mrf.mxu0
      %2602 = vmatprep.mubr.f32.mxu0 0.0
      %2603 = vmatmul.mubr.f32.gmra.mxu0 %v421
      %v2604 = vpop.f32.mrf.mxu0
      %v2605 = vadd.f32 0.0, %v2604
      %v2606 = vpop.f32.mrf.mxu0
      %2607 = vmatprep.mubr.f32.mxu0 0.0
      %2608 = vmatmul.mubr.f32.gmra.mxu0 %v423
      %v2609 = vpop.f32.mrf.mxu0
      %v2610 = vadd.f32 0.0, %v2609
      %v2611 = vpop.f32.mrf.mxu0
      %2612 = vmatprep.mubr.f32.mxu0 0.0
      %2613 = vmatmul.mubr.f32.gmra.mxu0 %v425
      %v2614 = vpop.f32.mrf.mxu0
      %v2615 = vadd.f32 0.0, %v2614
      %v2616 = vpop.f32.mrf.mxu0
      %2617 = vmatprep.mubr.f32.mxu0 0.0
      %2618 = vmatmul.mubr.f32.gmra.mxu0 %v427
      %v2619 = vpop.f32.mrf.mxu0
      %v2620 = vadd.f32 0.0, %v2619
      %v2621 = vpop.f32.mrf.mxu0
      %2622 = vmatprep.mubr.f32.mxu0 0.0
      %2623 = vmatmul.mubr.f32.gmra.mxu0 %v1577
      %v2624 = vpop.f32.mrf.mxu0
      %v2625 = vadd.f32 0.0, %v2624
      %v2626 = vpop.f32.mrf.mxu0
      %2627 = vmatprep.mubr.f32.mxu0 0.0
      %2628 = vmatmul.mubr.f32.gmra.mxu0 %v1579
      %v2629 = vpop.f32.mrf.mxu0
      %v2630 = vadd.f32 0.0, %v2629
      %v2631 = vpop.f32.mrf.mxu0
      %2632 = vmatprep.mubr.f32.mxu0 0.0
      %2633 = vmatmul.mubr.f32.gmra.mxu0 %v1581
      %v2634 = vpop.f32.mrf.mxu0
      %v2635 = vadd.f32 0.0, %v2634
      %v2636 = vpop.f32.mrf.mxu0
      %2637 = vmatprep.mubr.f32.mxu0 0.0
      %2638 = vmatmul.mubr.f32.gmra.mxu0 %v2420
      %v2639 = vpop.f32.mrf.mxu0
      %v2640 = vadd.f32 0.0, %v2639
      %v2641 = vpop.f32.mrf.mxu0
      %2642 = vmatprep.mubr.f32.mxu0 0.0
      %2643 = vmatmul.mubr.f32.gmra.mxu0 %v2422
      %v2644 = vpop.f32.mrf.mxu0
      %v2645 = vadd.f32 0.0, %v2644
      %v2646 = vpop.f32.mrf.mxu0
      %2647 = vmatprep.mubr.f32.mxu0 0.0
      %2648 = vmatmul.mubr.f32.gmra.mxu0 %v2424
      %v2649 = vpop.f32.mrf.mxu0
      %v2650 = vadd.f32 0.0, %v2649
      %v2651 = vpop.f32.mrf.mxu0
      %2652 = vdwg.mxu0
      %v2653 = vadd.f32 %v2367, %v2495
      %v2654 = vadd.f32 %v2368, %v2500
      %v2655 = vadd.f32 %v2369, %v2505
      %v2656 = vadd.f32 %v2370, %v2510
      %v2657 = vadd.f32 %v2371, %v2515
      %v2658 = vadd.f32 %v2372, %v2520
      %v2659 = vadd.f32 %v2373, %v2525
      %v2660 = vadd.f32 %v2374, %v2530
      %v2661 = vadd.f32 %v2375, %v2535
      %v2662 = vadd.f32 %v2376, %v2540
      %v2663 = vadd.f32 %v2377, %v2545
      %v2664 = vadd.f32 %v2378, %v2550
      %v2665 = vadd.f32 %v2379, %v2555
      %v2666 = vadd.f32 %v2380, %v2560
      %v2667 = vadd.f32 %v2381, %v2565
      %v2668 = vadd.f32 %v2382, %v2570
      %v2669 = vadd.f32 %v2383, %v2575
      %v2670 = vadd.f32 %v2384, %v2580
      %v2671 = vadd.f32 %v2385, %v2585
      %v2672 = vadd.f32 %v2386, %v2590
      %v2673 = vadd.f32 %v2387, %v2595
      %v2674 = vadd.f32 %v2388, %v2600
      %v2675 = vadd.f32 %v2389, %v2605
      %v2676 = vadd.f32 %v2390, %v2610
      %v2677 = vadd.f32 %v2391, %v2615
      %v2678 = vadd.f32 %v2392, %v2620
      %v2679 = vadd.f32 %v2393, %v2625
      %v2680 = vadd.f32 %v2394, %v2630
      %v2681 = vadd.f32 %v2395, %v2635
      %v2682 = vadd.f32 %v2396, %v2640
      %v2683 = vadd.f32 %v2397, %v2645
      %v2684 = vadd.f32 %v2398, %v2650
      %s2685 = scalar_lea.vmem %s2, 1024
      %v2686 = vld [vmem:[%s2685] sm:$0xff]
      %v2687 = vld [vmem:[%s2685 + $0x8] sm:$0xff]
      %v2688 = vld [vmem:[%s2685 + $0x10] sm:$0xff]
      %v2689 = vld [vmem:[%s2685 + $0x18] sm:$0xff]
      %v2690 = vld [vmem:[%s2685 + $0x20] sm:$0xff]
      %v2691 = vld [vmem:[%s2685 + $0x28] sm:$0xff]
      %v2692 = vld [vmem:[%s2685 + $0x30] sm:$0xff]
      %v2693 = vld [vmem:[%s2685 + $0x38] sm:$0xff]
      %v2694 = vld [vmem:[%s2685 + $0x40] sm:$0xff]
      %v2695 = vld [vmem:[%s2685 + $0x48] sm:$0xff]
      %v2696 = vld [vmem:[%s2685 + $0x50] sm:$0xff]
      %v2697 = vld [vmem:[%s2685 + $0x58] sm:$0xff]
      %v2698 = vld [vmem:[%s2685 + $0x60] sm:$0xff]
      %v2699 = vld [vmem:[%s2685 + $0x68] sm:$0xff]
      %v2700 = vld [vmem:[%s2685 + $0x70] sm:$0xff]
      %v2701 = vld [vmem:[%s2685 + $0x78] sm:$0xff]
      %v2702 = vrot.slane %v293, 2
      %v2703 = vsel %vm927, %v1863, %v2702
      %v2704 = vrot.slane %v294, 2
      %v2705 = vsel %vm927, %v2702, %v2704
      %v2706 = vrot.slane %v295, 2
      %v2707 = vsel %vm927, %v2704, %v2706
      %2711 = vmatprep.subr.mxu0 0.0
      %2712 = vmatpush1.msra.mxu0 %v2701
      %2713 = vmatprep.subr.mxu0 0.0
      %2714 = vmatpush1.msra.mxu0 %v2700
      %2715 = vmatprep.subr.mxu0 0.0
      %2716 = vmatpush1.msra.mxu0 %v2699
      %2717 = vmatprep.subr.mxu0 0.0
      %2718 = vmatpush1.msra.mxu0 %v2698
      %2719 = vmatprep.subr.mxu0 0.0
      %2720 = vmatpush1.msra.mxu0 %v2697
      %2721 = vmatprep.subr.mxu0 0.0
      %2722 = vmatpush1.msra.mxu0 %v2696
      %2723 = vmatprep.subr.mxu0 0.0
      %2724 = vmatpush1.msra.mxu0 %v2695
      %2725 = vmatprep.subr.mxu0 0.0
      %2726 = vmatpush1.msra.mxu0 %v2694
      %2727 = vmatprep.subr.mxu0 0.0
      %2728 = vmatpush1.msra.mxu0 %v2693
      %2729 = vmatprep.subr.mxu0 0.0
      %2730 = vmatpush1.msra.mxu0 %v2692
      %2731 = vmatprep.subr.mxu0 0.0
      %2732 = vmatpush1.msra.mxu0 %v2691
      %2733 = vmatprep.subr.mxu0 0.0
      %2734 = vmatpush1.msra.mxu0 %v2690
      %2735 = vmatprep.subr.mxu0 0.0
      %2736 = vmatpush1.msra.mxu0 %v2689
      %2737 = vmatprep.subr.mxu0 0.0
      %2738 = vmatpush1.msra.mxu0 %v2688
      %2739 = vmatprep.subr.mxu0 0.0
      %2740 = vmatpush1.msra.mxu0 %v2687
      %2741 = vmatprep.subr.mxu0 0.0
      %2742 = vmatpush1.msra.mxu0 %v2686
      %2743 = vmatprep.subr.mxu0 0.0
      %2744 = vmatpush2.msra.mxu0 0.0
      %2745 = vmatprep.subr.mxu0 0.0
      %2746 = vmatpush2.msra.mxu0 0.0
      %2747 = vmatprep.subr.mxu0 0.0
      %2748 = vmatpush2.msra.mxu0 0.0
      %2749 = vmatprep.subr.mxu0 0.0
      %2750 = vmatpush2.msra.mxu0 0.0
      %2751 = vmatprep.subr.mxu0 0.0
      %2752 = vmatpush2.msra.mxu0 0.0
      %2753 = vmatprep.subr.mxu0 0.0
      %2754 = vmatpush2.msra.mxu0 0.0
      %2755 = vmatprep.subr.mxu0 0.0
      %2756 = vmatpush2.msra.mxu0 0.0
      %2757 = vmatprep.subr.mxu0 0.0
      %2758 = vmatpush2.msra.mxu0 0.0
      %2759 = vmatprep.subr.mxu0 0.0
      %2760 = vmatpush2.msra.mxu0 0.0
      %2761 = vmatprep.subr.mxu0 0.0
      %2762 = vmatpush2.msra.mxu0 0.0
      %2763 = vmatprep.subr.mxu0 0.0
      %2764 = vmatpush2.msra.mxu0 0.0
      %2765 = vmatprep.subr.mxu0 0.0
      %2766 = vmatpush2.msra.mxu0 0.0
      %2767 = vmatprep.subr.mxu0 0.0
      %2768 = vmatpush2.msra.mxu0 0.0
      %2769 = vmatprep.subr.mxu0 0.0
      %2770 = vmatpush2.msra.mxu0 0.0
      %2771 = vmatprep.subr.mxu0 0.0
      %2772 = vmatpush2.msra.mxu0 0.0
      %2773 = vmatprep.subr.mxu0 0.0
      %2774 = vmatpush2.msra.mxu0 0.0
      %2775 = vmatprep.mubr.f32.mxu0 0.0
      %2776 = vmatmul.mubr.f32.gmra.mxu0 %v942
      %v2777 = vpop.f32.mrf.mxu0
      %v2778 = vadd.f32 0.0, %v2777
      %v2779 = vpop.f32.mrf.mxu0
      %2780 = vmatprep.mubr.f32.mxu0 0.0
      %2781 = vmatmul.mubr.f32.gmra.mxu0 %v944
      %v2782 = vpop.f32.mrf.mxu0
      %v2783 = vadd.f32 0.0, %v2782
      %v2784 = vpop.f32.mrf.mxu0
      %2785 = vmatprep.mubr.f32.mxu0 0.0
      %2786 = vmatmul.mubr.f32.gmra.mxu0 %v946
      %v2787 = vpop.f32.mrf.mxu0
      %v2788 = vadd.f32 0.0, %v2787
      %v2789 = vpop.f32.mrf.mxu0
      %2790 = vmatprep.mubr.f32.mxu0 0.0
      %2791 = vmatmul.mubr.f32.gmra.mxu0 %v948
      %v2792 = vpop.f32.mrf.mxu0
      %v2793 = vadd.f32 0.0, %v2792
      %v2794 = vpop.f32.mrf.mxu0
      %2795 = vmatprep.mubr.f32.mxu0 0.0
      %2796 = vmatmul.mubr.f32.gmra.mxu0 %v950
      %v2797 = vpop.f32.mrf.mxu0
      %v2798 = vadd.f32 0.0, %v2797
      %v2799 = vpop.f32.mrf.mxu0
      %2800 = vmatprep.mubr.f32.mxu0 0.0
      %2801 = vmatmul.mubr.f32.gmra.mxu0 %v952
      %v2802 = vpop.f32.mrf.mxu0
      %v2803 = vadd.f32 0.0, %v2802
      %v2804 = vpop.f32.mrf.mxu0
      %2805 = vmatprep.mubr.f32.mxu0 0.0
      %2806 = vmatmul.mubr.f32.gmra.mxu0 %v954
      %v2807 = vpop.f32.mrf.mxu0
      %v2808 = vadd.f32 0.0, %v2807
      %v2809 = vpop.f32.mrf.mxu0
      %2810 = vmatprep.mubr.f32.mxu0 0.0
      %2811 = vmatmul.mubr.f32.gmra.mxu0 %v956
      %v2812 = vpop.f32.mrf.mxu0
      %v2813 = vadd.f32 0.0, %v2812
      %v2814 = vpop.f32.mrf.mxu0
      %2815 = vmatprep.mubr.f32.mxu0 0.0
      %2816 = vmatmul.mubr.f32.gmra.mxu0 %v958
      %v2817 = vpop.f32.mrf.mxu0
      %v2818 = vadd.f32 0.0, %v2817
      %v2819 = vpop.f32.mrf.mxu0
      %2820 = vmatprep.mubr.f32.mxu0 0.0
      %2821 = vmatmul.mubr.f32.gmra.mxu0 %v960
      %v2822 = vpop.f32.mrf.mxu0
      %v2823 = vadd.f32 0.0, %v2822
      %v2824 = vpop.f32.mrf.mxu0
      %2825 = vmatprep.mubr.f32.mxu0 0.0
      %2826 = vmatmul.mubr.f32.gmra.mxu0 %v962
      %v2827 = vpop.f32.mrf.mxu0
      %v2828 = vadd.f32 0.0, %v2827
      %v2829 = vpop.f32.mrf.mxu0
      %2830 = vmatprep.mubr.f32.mxu0 0.0
      %2831 = vmatmul.mubr.f32.gmra.mxu0 %v964
      %v2832 = vpop.f32.mrf.mxu0
      %v2833 = vadd.f32 0.0, %v2832
      %v2834 = vpop.f32.mrf.mxu0
      %2835 = vmatprep.mubr.f32.mxu0 0.0
      %2836 = vmatmul.mubr.f32.gmra.mxu0 %v966
      %v2837 = vpop.f32.mrf.mxu0
      %v2838 = vadd.f32 0.0, %v2837
      %v2839 = vpop.f32.mrf.mxu0
      %2840 = vmatprep.mubr.f32.mxu0 0.0
      %2841 = vmatmul.mubr.f32.gmra.mxu0 %v968
      %v2842 = vpop.f32.mrf.mxu0
      %v2843 = vadd.f32 0.0, %v2842
      %v2844 = vpop.f32.mrf.mxu0
      %2845 = vmatprep.mubr.f32.mxu0 0.0
      %2846 = vmatmul.mubr.f32.gmra.mxu0 %v970
      %v2847 = vpop.f32.mrf.mxu0
      %v2848 = vadd.f32 0.0, %v2847
      %v2849 = vpop.f32.mrf.mxu0
      %2850 = vmatprep.mubr.f32.mxu0 0.0
      %2851 = vmatmul.mubr.f32.gmra.mxu0 %v972
      %v2852 = vpop.f32.mrf.mxu0
      %v2853 = vadd.f32 0.0, %v2852
      %v2854 = vpop.f32.mrf.mxu0
      %2855 = vmatprep.mubr.f32.mxu0 0.0
      %2856 = vmatmul.mubr.f32.gmra.mxu0 %v974
      %v2857 = vpop.f32.mrf.mxu0
      %v2858 = vadd.f32 0.0, %v2857
      %v2859 = vpop.f32.mrf.mxu0
      %2860 = vmatprep.mubr.f32.mxu0 0.0
      %2861 = vmatmul.mubr.f32.gmra.mxu0 %v976
      %v2862 = vpop.f32.mrf.mxu0
      %v2863 = vadd.f32 0.0, %v2862
      %v2864 = vpop.f32.mrf.mxu0
      %2865 = vmatprep.mubr.f32.mxu0 0.0
      %2866 = vmatmul.mubr.f32.gmra.mxu0 %v978
      %v2867 = vpop.f32.mrf.mxu0
      %v2868 = vadd.f32 0.0, %v2867
      %v2869 = vpop.f32.mrf.mxu0
      %2870 = vmatprep.mubr.f32.mxu0 0.0
      %2871 = vmatmul.mubr.f32.gmra.mxu0 %v980
      %v2872 = vpop.f32.mrf.mxu0
      %v2873 = vadd.f32 0.0, %v2872
      %v2874 = vpop.f32.mrf.mxu0
      %2875 = vmatprep.mubr.f32.mxu0 0.0
      %2876 = vmatmul.mubr.f32.gmra.mxu0 %v982
      %v2877 = vpop.f32.mrf.mxu0
      %v2878 = vadd.f32 0.0, %v2877
      %v2879 = vpop.f32.mrf.mxu0
      %2880 = vmatprep.mubr.f32.mxu0 0.0
      %2881 = vmatmul.mubr.f32.gmra.mxu0 %v984
      %v2882 = vpop.f32.mrf.mxu0
      %v2883 = vadd.f32 0.0, %v2882
      %v2884 = vpop.f32.mrf.mxu0
      %2885 = vmatprep.mubr.f32.mxu0 0.0
      %2886 = vmatmul.mubr.f32.gmra.mxu0 %v986
      %v2887 = vpop.f32.mrf.mxu0
      %v2888 = vadd.f32 0.0, %v2887
      %v2889 = vpop.f32.mrf.mxu0
      %2890 = vmatprep.mubr.f32.mxu0 0.0
      %2891 = vmatmul.mubr.f32.gmra.mxu0 %v988
      %v2892 = vpop.f32.mrf.mxu0
      %v2893 = vadd.f32 0.0, %v2892
      %v2894 = vpop.f32.mrf.mxu0
      %2895 = vmatprep.mubr.f32.mxu0 0.0
      %2896 = vmatmul.mubr.f32.gmra.mxu0 %v990
      %v2897 = vpop.f32.mrf.mxu0
      %v2898 = vadd.f32 0.0, %v2897
      %v2899 = vpop.f32.mrf.mxu0
      %2900 = vmatprep.mubr.f32.mxu0 0.0
      %2901 = vmatmul.mubr.f32.gmra.mxu0 %v992
      %v2902 = vpop.f32.mrf.mxu0
      %v2903 = vadd.f32 0.0, %v2902
      %v2904 = vpop.f32.mrf.mxu0
      %2905 = vmatprep.mubr.f32.mxu0 0.0
      %2906 = vmatmul.mubr.f32.gmra.mxu0 %v1860
      %v2907 = vpop.f32.mrf.mxu0
      %v2908 = vadd.f32 0.0, %v2907
      %v2909 = vpop.f32.mrf.mxu0
      %2910 = vmatprep.mubr.f32.mxu0 0.0
      %2911 = vmatmul.mubr.f32.gmra.mxu0 %v1862
      %v2912 = vpop.f32.mrf.mxu0
      %v2913 = vadd.f32 0.0, %v2912
      %v2914 = vpop.f32.mrf.mxu0
      %2915 = vmatprep.mubr.f32.mxu0 0.0
      %2916 = vmatmul.mubr.f32.gmra.mxu0 %v1864
      %v2917 = vpop.f32.mrf.mxu0
      %v2918 = vadd.f32 0.0, %v2917
      %v2919 = vpop.f32.mrf.mxu0
      %2920 = vmatprep.mubr.f32.mxu0 0.0
      %2921 = vmatmul.mubr.f32.gmra.mxu0 %v2703
      %v2922 = vpop.f32.mrf.mxu0
      %v2923 = vadd.f32 0.0, %v2922
      %v2924 = vpop.f32.mrf.mxu0
      %2925 = vmatprep.mubr.f32.mxu0 0.0
      %2926 = vmatmul.mubr.f32.gmra.mxu0 %v2705
      %v2927 = vpop.f32.mrf.mxu0
      %v2928 = vadd.f32 0.0, %v2927
      %v2929 = vpop.f32.mrf.mxu0
      %2930 = vmatprep.mubr.f32.mxu0 0.0
      %2931 = vmatmul.mubr.f32.gmra.mxu0 %v2707
      %v2932 = vpop.f32.mrf.mxu0
      %v2933 = vadd.f32 0.0, %v2932
      %v2934 = vpop.f32.mrf.mxu0
      %2935 = vdwg.mxu0
      %v2936 = vadd.f32 %v2653, %v2778
      %v2937 = vadd.f32 %v2654, %v2783
      %v2938 = vadd.f32 %v2655, %v2788
      %v2939 = vadd.f32 %v2656, %v2793
      %v2940 = vadd.f32 %v2657, %v2798
      %v2941 = vadd.f32 %v2658, %v2803
      %v2942 = vadd.f32 %v2659, %v2808
      %v2943 = vadd.f32 %v2660, %v2813
      %v2944 = vadd.f32 %v2661, %v2818
      %v2945 = vadd.f32 %v2662, %v2823
      %v2946 = vadd.f32 %v2663, %v2828
      %v2947 = vadd.f32 %v2664, %v2833
      %v2948 = vadd.f32 %v2665, %v2838
      %v2949 = vadd.f32 %v2666, %v2843
      %v2950 = vadd.f32 %v2667, %v2848
      %v2951 = vadd.f32 %v2668, %v2853
      %v2952 = vadd.f32 %v2669, %v2858
      %v2953 = vadd.f32 %v2670, %v2863
      %v2954 = vadd.f32 %v2671, %v2868
      %v2955 = vadd.f32 %v2672, %v2873
      %v2956 = vadd.f32 %v2673, %v2878
      %v2957 = vadd.f32 %v2674, %v2883
      %v2958 = vadd.f32 %v2675, %v2888
      %v2959 = vadd.f32 %v2676, %v2893
      %v2960 = vadd.f32 %v2677, %v2898
      %v2961 = vadd.f32 %v2678, %v2903
      %v2962 = vadd.f32 %v2679, %v2908
      %v2963 = vadd.f32 %v2680, %v2913
      %v2964 = vadd.f32 %v2681, %v2918
      %v2965 = vadd.f32 %v2682, %v2923
      %v2966 = vadd.f32 %v2683, %v2928
      %v2967 = vadd.f32 %v2684, %v2933
      %v2968 = vld [vmem:[%s3] sm:$0x1]
      %v2970 = vlaneseq
      %v2971 = vshrl.u32 %v2970, 7
      %v2972 = vsub.s32 0, %v2971
      %v2973 = vrot.slane %v2968, %v2972
      %v2975 = vadd.f32 %v2936, %v2973
      %v2976 = vadd.f32 %v2937, %v2973
      %v2977 = vadd.f32 %v2938, %v2973
      %v2978 = vadd.f32 %v2939, %v2973
      %v2979 = vadd.f32 %v2940, %v2973
      %v2980 = vadd.f32 %v2941, %v2973
      %v2981 = vadd.f32 %v2942, %v2973
      %v2982 = vadd.f32 %v2943, %v2973
      %v2983 = vadd.f32 %v2944, %v2973
      %v2984 = vadd.f32 %v2945, %v2973
      %v2985 = vadd.f32 %v2946, %v2973
      %v2986 = vadd.f32 %v2947, %v2973
      %v2987 = vadd.f32 %v2948, %v2973
      %v2988 = vadd.f32 %v2949, %v2973
      %v2989 = vadd.f32 %v2950, %v2973
      %v2990 = vadd.f32 %v2951, %v2973
      %v2991 = vadd.f32 %v2952, %v2973
      %v2992 = vadd.f32 %v2953, %v2973
      %v2993 = vadd.f32 %v2954, %v2973
      %v2994 = vadd.f32 %v2955, %v2973
      %v2995 = vadd.f32 %v2956, %v2973
      %v2996 = vadd.f32 %v2957, %v2973
      %v2997 = vadd.f32 %v2958, %v2973
      %v2998 = vadd.f32 %v2959, %v2973
      %v2999 = vadd.f32 %v2960, %v2973
      %v3000 = vadd.f32 %v2961, %v2973
      %v3001 = vadd.f32 %v2962, %v2973
      %v3002 = vadd.f32 %v2963, %v2973
      %v3003 = vadd.f32 %v2964, %v2973
      %v3004 = vadd.f32 %v2965, %v2973
      %v3005 = vadd.f32 %v2966, %v2973
      %v3006 = vadd.f32 %v2967, %v2973
      %v3007 = vmax.f32 %v2975, 0.0
      %v3008 = vmax.f32 %v2976, 0.0
      %v3009 = vmax.f32 %v2977, 0.0
      %v3010 = vmax.f32 %v2978, 0.0
      %v3011 = vmax.f32 %v2979, 0.0
      %v3012 = vmax.f32 %v2980, 0.0
      %v3013 = vmax.f32 %v2981, 0.0
      %v3014 = vmax.f32 %v2982, 0.0
      %v3015 = vmax.f32 %v2983, 0.0
      %v3016 = vmax.f32 %v2984, 0.0
      %v3017 = vmax.f32 %v2985, 0.0
      %v3018 = vmax.f32 %v2986, 0.0
      %v3019 = vmax.f32 %v2987, 0.0
      %v3020 = vmax.f32 %v2988, 0.0
      %v3021 = vmax.f32 %v2989, 0.0
      %v3022 = vmax.f32 %v2990, 0.0
      %v3023 = vmax.f32 %v2991, 0.0
      %v3024 = vmax.f32 %v2992, 0.0
      %v3025 = vmax.f32 %v2993, 0.0
      %v3026 = vmax.f32 %v2994, 0.0
      %v3027 = vmax.f32 %v2995, 0.0
      %v3028 = vmax.f32 %v2996, 0.0
      %v3029 = vmax.f32 %v2997, 0.0
      %v3030 = vmax.f32 %v2998, 0.0
      %v3031 = vmax.f32 %v2999, 0.0
      %v3032 = vmax.f32 %v3000, 0.0
      %v3033 = vmax.f32 %v3001, 0.0
      %v3034 = vmax.f32 %v3002, 0.0
      %v3035 = vmax.f32 %v3003, 0.0
      %v3036 = vmax.f32 %v3004, 0.0
      %v3037 = vmax.f32 %v3005, 0.0
      %v3038 = vmax.f32 %v3006, 0.0
      %3039 = vst [vmem:[%s255] sm:$0xff] %v3007
      %3040 = vst [vmem:[%s255 + $0x8] sm:$0xff] %v3008
      %3041 = vst [vmem:[%s255 + $0x10] sm:$0xff] %v3009
      %3042 = vst [vmem:[%s255 + $0x18] sm:$0xff] %v3010
      %3043 = vst [vmem:[%s255 + $0x20] sm:$0xff] %v3011
      %3044 = vst [vmem:[%s255 + $0x28] sm:$0xff] %v3012
      %3045 = vst [vmem:[%s255 + $0x30] sm:$0xff] %v3013
      %3046 = vst [vmem:[%s255 + $0x38] sm:$0xff] %v3014
      %3047 = vst [vmem:[%s255 + $0x40] sm:$0xff] %v3015
      %3048 = vst [vmem:[%s255 + $0x48] sm:$0xff] %v3016
      %3049 = vst [vmem:[%s255 + $0x50] sm:$0xff] %v3017
      %3050 = vst [vmem:[%s255 + $0x58] sm:$0xff] %v3018
      %3051 = vst [vmem:[%s255 + $0x60] sm:$0xff] %v3019
      %3052 = vst [vmem:[%s255 + $0x68] sm:$0xff] %v3020
      %3053 = vst [vmem:[%s255 + $0x70] sm:$0xff] %v3021
      %3054 = vst [vmem:[%s255 + $0x78] sm:$0xff] %v3022
      %3055 = vst [vmem:[%s255 + $0x80] sm:$0xff] %v3023
      %3056 = vst [vmem:[%s255 + $0x88] sm:$0xff] %v3024
      %3057 = vst [vmem:[%s255 + $0x90] sm:$0xff] %v3025
      %3058 = vst [vmem:[%s255 + $0x98] sm:$0xff] %v3026
      %3059 = vst [vmem:[%s255 + $0xa0] sm:$0xff] %v3027
      %3060 = vst [vmem:[%s255 + $0xa8] sm:$0xff] %v3028
      %3061 = vst [vmem:[%s255 + $0xb0] sm:$0xff] %v3029
      %3062 = vst [vmem:[%s255 + $0xb8] sm:$0xff] %v3030
      %3063 = vst [vmem:[%s255 + $0xc0] sm:$0xff] %v3031
      %3064 = vst [vmem:[%s255 + $0xc8] sm:$0xff] %v3032
      %3065 = vst [vmem:[%s255 + $0xd0] sm:$0xff] %v3033
      %3066 = vst [vmem:[%s255 + $0xd8] sm:$0xff] %v3034
      %3067 = vst [vmem:[%s255 + $0xe0] sm:$0xff] %v3035
      %3068 = vst [vmem:[%s255 + $0xe8] sm:$0xff] %v3036
      %3069 = vst [vmem:[%s255 + $0xf0] sm:$0xff] %v3037
      %3070 = vst [vmem:[%s255 + $0xf8] sm:$0xff] %v3038
      %s3071 = smul.u32 32, %s15
      %p3072 = scmp.lt.s32.totalorder %s3071, 127
      %s3073 = scalar_select %p3072, %s3071, 127
      %s3074 = smul.addr %s3073, 8
      %s3075 = scalar_lea.vmem %s4, %s3074
      // Predicated region
      $region37: #{_lambda_.12} parent=35 // pred_check
        %p3076 = pneg %p131
      $region38: #{_lambda_.12} parent=35 // pred_check_branch
        %3078 = sbr.rel (%p3076) target = $region40
      $region39: #{_lambda_.12} parent=35 // pred_region
        %s3079 = smul.u32 32, %s15
      $region40: #{_lambda_.12} parent=35 // pred_fallthru
        _
    $region36: #{_lambda_.12} parent=5 // pred_fallthru
      _
    %p3080 = scmp.le.s32.totalorder 2, %s10
    // Predicated region
    $region41: #{_lambda_.12} parent=5 // pred_check
      %p3081 = pneg %p3080
    $region42: #{_lambda_.12} parent=5 // pred_check_branch
      %3083 = sbr.rel (%p3081) target = $region44
    $region43: #{_lambda_.12} parent=5 // pred_region
      %s3084 = ssub.s32 %s10, 2
      // Predicated region
      $region45: #{_lambda_.12} parent=43 // pred_check
        %p3085 = pneg %p137
      $region46: #{_lambda_.12} parent=43 // pred_check_branch
        %3087 = sbr.rel (%p3085) target = $region48
      $region47: #{_lambda_.12} parent=43 // pred_region
        %s3088 = smul.u32 32, %s16
        %p3089 = scmp.lt.s32.totalorder %s3088, 127
        %s3090 = scalar_select %p3089, %s3088, 127
        %s3091 = smul.addr %s3090, 8
        %s3092 = scalar_lea.vmem %s4, %s3091
      $region48: #{_lambda_.12} parent=43 // pred_fallthru
        _
    $region44: #{_lambda_.12} parent=5 // pred_fallthru
      _
  $region6: #{_lambda_.12} parent=0 // loop_footer
    %s14 = sadd.s32 1, %s10
  $region7: #{_lambda_.12} parent=0 // loop_footer_branch
    %9 = sbr.rel target = $region3
  $region8: #{_lambda_.12} parent=0 // loop_exit
    _

</llo_original>
